<compile_context>
chip_gen: v6e
topology: v6e:2x2x1
jax: 0.10.0
libtpu: 0.0.40
codegen_flags: <defaults>
</compile_context>

<pallas_src>
import functools

import jax
import jax.numpy as jnp
from jax.experimental import pallas as pl
from jax.experimental.pallas import tpu as pltpu

COUT_PAD = 128            # conv2 output channels padded to a full MXU lane width
OUT_SLICE = 8             # lanes kept in the epilogue (>= real cout, one sublane tile)
LPAD = 16                 # left pad (cols): one bf16 sublane tile -> aligned interior writes
RPAD = 1                  # right pad (cols): just the 1-px conv halo
IM2COL_MAX_CHANNELS = 64  # packed-K im2col only below this channel count


def _zero_border(pad_ref, H, W):
    """Zero the 1-px logical conv border of a padded (H+2, W+LPAD+RPAD, C) buffer.

    Only the border is touched: the interior is fully overwritten every grid
    step, and physical columns < LPAD-1 are never read by any tap.  O(H+W)
    stores per step; safe under any grid sharding (no program_id dependence).
    """
    C = pad_ref.shape[-1]
    dt = pad_ref.dtype
    pad_ref[0:1, LPAD - 1:LPAD + W + 1, :] = jnp.zeros((1, W + 2, C), dt)
    pad_ref[H + 1:H + 2, LPAD - 1:LPAD + W + 1, :] = jnp.zeros((1, W + 2, C), dt)
    pad_ref[1:H + 1, LPAD - 1:LPAD, :] = jnp.zeros((H, 1, C), dt)
    pad_ref[1:H + 1, LPAD + W:LPAD + W + 1, :] = jnp.zeros((H, 1, C), dt)


def _conv3x3(pad_ref, w_ref, cat_ref, H, W):
    """3x3 'SAME' conv over a zero-bordered bf16 VMEM buffer -> (H*W, Cout) f32.

    pad_ref: (H+2, W+LPAD+RPAD, C) bf16, interior at [1:H+1, LPAD:LPAD+W].
    w_ref  : (9*C, Cout) bf16, tap-major rows (tap t = kh*3+kw).
    cat_ref: (H, W, 9*C) bf16 im2col scratch, or None (per-tap accumulation).
    """
    C = pad_ref.shape[-1]
    if cat_ref is not None:
        # Narrow channels: pack all 9 taps onto the lane axis, one big-K matmul.
        for kh in range(3):
            for kw in range(3):
                t = kh * 3 + kw
                cat_ref[:, :, t * C:(t + 1) * C] = (
                    pad_ref[kh:kh + H, LPAD - 1 + kw:LPAD - 1 + kw + W, :])
        return jnp.dot(cat_ref[...].reshape(H * W, 9 * C), w_ref[...],
                       preferred_element_type=jnp.float32)
    # Wide channels: each tap already fills the MXU K dimension -- accumulate
    # 9 matmuls straight from the padded buffer (no im2col copies / scratch).
    acc = None
    for kh in range(3):
        for kw in range(3):
            t = kh * 3 + kw
            lhs = pad_ref[kh:kh + H,
                          LPAD - 1 + kw:LPAD - 1 + kw + W, :].reshape(H * W, C)
            part = jnp.dot(lhs, w_ref[t * C:(t + 1) * C, :],
                           preferred_element_type=jnp.float32)
            acc = part if acc is None else acc + part
    return acc


def _flow_head_kernel(x_ref, w1_ref, b1_ref, w2_ref, b2_ref, o_ref,
                      xpad_ref, hpad_ref, *cat_refs,
                      H, W, cout, negative_slope,
                      use_im2col_1, use_im2col_2):
    # x_ref   : (H, W, Cin)              bf16  one batch element, NHWC
    # w1_ref  : (9*Cin, Hid)             bf16  im2col-flattened conv1 weight
    # b1_ref  : (1, Hid)                 f32
    # w2_ref  : (9*Hid, COUT_PAD)        bf16  im2col-flattened, lane-padded
    # b2_ref  : (1, OUT_SLICE)           f32   real bias in lanes [0, cout)
    # o_ref   : (cout, H*W)              f32   lane-dense NCHW-flattened output
    # xpad_ref: (H+2, W+LPAD+RPAD, Cin)  bf16  zero-bordered input   (scratch)
    # hpad_ref: (H+2, W+LPAD+RPAD, Hid)  bf16  zero-bordered hidden  (scratch)
    # cat_refs: optional bf16 im2col scratch (narrow-channel path only)
    hid = hpad_ref.shape[-1]

    idx = 0
    xcat_ref = None
    hcat_ref = None
    if use_im2col_1:
        xcat_ref = cat_refs[idx]
        idx += 1
    if use_im2col_2:
        hcat_ref = cat_refs[idx]
        idx += 1

    # Zero only the conv halo border (interiors are fully rewritten below).
    _zero_border(xpad_ref, H, W)
    _zero_border(hpad_ref, H, W)

    # Tile-aligned interior write of the (already bf16) input.
    xpad_ref[1:H + 1, LPAD:LPAD + W, :] = x_ref[...]

    # ---- conv1 + bias + LeakyReLU(0.1); hidden activation stays in VMEM ----
    acc1 = _conv3x3(xpad_ref, w1_ref, xcat_ref, H, W)          # (H*W, Hid) f32
    acc1 = acc1 + b1_ref[...]
    acc1 = jnp.where(acc1 > 0, acc1, negative_slope * acc1)
    hpad_ref[1:H + 1, LPAD:LPAD + W, :] = (
        acc1.reshape(H, W, hid).astype(hpad_ref.dtype))

    # ---- conv2 over the VMEM-resident hidden activation ---------------------
    acc2 = _conv3x3(hpad_ref, w2_ref, hcat_ref, H, W)          # (H*W, 128) f32

    # Epilogue: only the first OUT_SLICE lanes are real -- slice BEFORE the
    # transpose so the XLU moves 8 lanes instead of 128.
    out8 = acc2[:, :OUT_SLICE] + b2_ref[...]                   # (H*W, 8) f32
    o_ref[...] = jnp.transpose(out8)[:cout, :].astype(o_ref.dtype)


def flow_head_forward(x_nchw, params):
    """Fused Pallas FlowHead forward: NCHW in, NCHW out (matches PyTorch)."""
    B, cin, H, W = x_nchw.shape
    hid = params["w1"].shape[-1]
    cout = params["w2"].shape[-1]
    assert W % 8 == 0, "W must be a multiple of 8 for the in-kernel reshapes"
    assert cout <= OUT_SLICE

    use_im2col_1 = cin < IM2COL_MAX_CHANNELS
    use_im2col_2 = hid < IM2COL_MAX_CHANNELS

    # Layout plumbing done once on the host side of the kernel.  bf16 input
    # halves the per-batch HBM->VMEM DMA; the MXU operands were bf16 anyway.
    x_nhwc = jnp.transpose(x_nchw, (0, 2, 3, 1)).astype(jnp.bfloat16)
    w1 = params["w1"].reshape(9 * cin, hid).astype(jnp.bfloat16)
    b1 = params["b1"].reshape(1, hid).astype(jnp.float32)
    w2 = jnp.zeros((9 * hid, COUT_PAD), jnp.bfloat16)
    w2 = w2.at[:, :cout].set(
        params["w2"].reshape(9 * hid, cout).astype(jnp.bfloat16))
    b2 = jnp.zeros((1, OUT_SLICE), jnp.float32)
    b2 = b2.at[0, :cout].set(params["b2"].astype(jnp.float32))

    wp = W + LPAD + RPAD
    scratch_shapes = [
        pltpu.VMEM((H + 2, wp, cin), jnp.bfloat16),   # zero-bordered input
        pltpu.VMEM((H + 2, wp, hid), jnp.bfloat16),   # zero-bordered hidden
    ]
    if use_im2col_1:
        scratch_shapes.append(pltpu.VMEM((H, W, 9 * cin), jnp.bfloat16))
    if use_im2col_2:
        scratch_shapes.append(pltpu.VMEM((H, W, 9 * hid), jnp.bfloat16))

    kernel = functools.partial(
        _flow_head_kernel, H=H, W=W, cout=cout, negative_slope=0.1,
        use_im2col_1=use_im2col_1, use_im2col_2=use_im2col_2)

    out = pl.pallas_call(
        kernel,
        out_shape=jax.ShapeDtypeStruct((B, cout, H * W), jnp.float32),
        grid_spec=pltpu.PrefetchScalarGridSpec(
            num_scalar_prefetch=0,
            grid=(B,),
            in_specs=[
                pl.BlockSpec((None, H, W, cin), lambda b: (b, 0, 0, 0)),
                pl.BlockSpec((9 * cin, hid), lambda b: (0, 0)),
                pl.BlockSpec((1, hid), lambda b: (0, 0)),
                pl.BlockSpec((9 * hid, COUT_PAD), lambda b: (0, 0)),
                pl.BlockSpec((1, OUT_SLICE), lambda b: (0, 0)),
            ],
            out_specs=pl.BlockSpec((None, cout, H * W), lambda b: (b, 0, 0)),
            scratch_shapes=scratch_shapes,
        ),
        compiler_params=pltpu.CompilerParams(
            dimension_semantics=("parallel",),
            vmem_limit_bytes=64 * 1024 * 1024),
    )(x_nhwc, w1, b1, w2, b2)

    # Output is already NCHW-flattened; cheap reshape, no transpose.
    return out.reshape(B, cout, H, W)


def init_flow_head_params(key, input_dim, hidden_dim):
    k1, k2, k3, k4 = jax.random.split(key, 4)
    # HWIO weight layouts (3, 3, Cin, Cout).
    return {
        "w1": jax.random.normal(k1, (3, 3, input_dim, hidden_dim),
                                jnp.float32) * 0.05,
        "b1": jax.random.normal(k2, (hidden_dim,), jnp.float32) * 0.05,
        "w2": jax.random.normal(k3, (3, 3, hidden_dim, 3), jnp.float32) * 0.05,
        "b2": jax.random.normal(k4, (3,), jnp.float32) * 0.05,
    }


def flow_head_reference(x_nchw, params):
    """Pure-JAX f32 reference (lax.conv) matching the PyTorch module."""
    dn = ("NCHW", "HWIO", "NCHW")
    y1 = jax.lax.conv_general_dilated(
        x_nchw, params["w1"], (1, 1), "SAME", dimension_numbers=dn)
    y1 = y1 + params["b1"].reshape(1, -1, 1, 1)
    y1 = jnp.where(y1 > 0, y1, 0.1 * y1)
    y2 = jax.lax.conv_general_dilated(
        y1, params["w2"], (1, 1), "SAME", dimension_numbers=dn)
    y2 = y2 + params["b2"].reshape(1, -1, 1, 1)
    return y2


if __name__ == "__main__":
    B, C_IN, HID, H, W = 2, 16, 32, 16, 16

    key = jax.random.PRNGKey(0)
    kx, kp = jax.random.split(key)
    x = jax.random.normal(kx, (B, C_IN, H, W), jnp.float32)   # NCHW like PyTorch
    params = init_flow_head_params(kp, C_IN, HID)

    out = jax.block_until_ready(flow_head_forward(x, params))
    assert out.shape == (B, 3, H, W), out.shape

    ref = jax.block_until_ready(flow_head_reference(x, params))
    # bf16 MXU operands => slightly looser tolerance than pure f32.
    if not jnp.allclose(out, ref, atol=5e-2, rtol=5e-2):
        err = float(jnp.max(jnp.abs(out - ref)))
        raise RuntimeError(
            f"Pallas FlowHead output mismatch vs reference (max abs err {err})")

    print("KERNEL_OK")
</pallas_src>

<mosaic_0001>
module attributes {stable_mosaic.version = 11 : i64} {
  func.func @_flow_head_kernel(%arg0: i32, %arg1: memref<1x16x16x16xbf16, #tpu.memory_space<vmem>>, %arg2: memref<144x32xbf16, #tpu.memory_space<vmem>>, %arg3: memref<1x32xf32, #tpu.memory_space<vmem>>, %arg4: memref<288x128xbf16, #tpu.memory_space<vmem>>, %arg5: memref<1x8xf32, #tpu.memory_space<vmem>>, %arg6: memref<1x3x256xf32, #tpu.memory_space<vmem>>, %arg7: memref<18x33x16xbf16, #tpu.memory_space<vmem>>, %arg8: memref<18x33x32xbf16, #tpu.memory_space<vmem>>, %arg9: memref<16x16x144xbf16, #tpu.memory_space<vmem>>, %arg10: memref<16x16x288xbf16, #tpu.memory_space<vmem>>) attributes {dimension_semantics = [#tpu.dimension_semantics<parallel>], iteration_bounds = array<i64: 2>, scalar_prefetch = 0 : i64, scratch_operands = 4 : i64, tpu.core_type = #tpu.core_type<tc>, window_params = [{transform_indices = @transform_0, window_bounds = array<i64: 1, 16, 16, 16>}, {pipeline_mode = #tpu.pipeline_mode<synchronous>, transform_indices = @transform_1, window_bounds = array<i64: 144, 32>}, {pipeline_mode = #tpu.pipeline_mode<synchronous>, transform_indices = @transform_2, window_bounds = array<i64: 1, 32>}, {pipeline_mode = #tpu.pipeline_mode<synchronous>, transform_indices = @transform_3, window_bounds = array<i64: 288, 128>}, {pipeline_mode = #tpu.pipeline_mode<synchronous>, transform_indices = @transform_4, window_bounds = array<i64: 1, 8>}, {transform_indices = @transform_5, window_bounds = array<i64: 1, 3, 256>}]} {
    %cst = arith.constant 0.000000e+00 : bf16
    %0 = vector.broadcast %cst : bf16 to vector<1x18x16xbf16>
    %c0 = arith.constant 0 : index
    %c15 = arith.constant 15 : index
    %c0_0 = arith.constant 0 : index
    %1 = vector.load %arg7[%c0, %c15, %c0_0] : memref<18x33x16xbf16, #tpu.memory_space<vmem>>, vector<1x18x16xbf16>
    tpu.vector_store %arg7[%c0, %c15, %c0_0], %0 {strides = array<i32>} : memref<18x33x16xbf16, #tpu.memory_space<vmem>>, vector<1x18x16xbf16>,
    %cst_1 = arith.constant 0.000000e+00 : bf16
    %2 = vector.broadcast %cst_1 : bf16 to vector<1x18x16xbf16>
    %c17 = arith.constant 17 : index
    %c15_2 = arith.constant 15 : index
    %c0_3 = arith.constant 0 : index
    %3 = vector.load %arg7[%c17, %c15_2, %c0_3] : memref<18x33x16xbf16, #tpu.memory_space<vmem>>, vector<1x18x16xbf16>
    tpu.vector_store %arg7[%c17, %c15_2, %c0_3], %2 {strides = array<i32>} : memref<18x33x16xbf16, #tpu.memory_space<vmem>>, vector<1x18x16xbf16>,
    %cst_4 = arith.constant 0.000000e+00 : bf16
    %4 = vector.broadcast %cst_4 : bf16 to vector<16x1x16xbf16>
    %c1 = arith.constant 1 : index
    %c15_5 = arith.constant 15 : index
    %c0_6 = arith.constant 0 : index
    %5 = vector.load %arg7[%c1, %c15_5, %c0_6] : memref<18x33x16xbf16, #tpu.memory_space<vmem>>, vector<16x1x16xbf16>
    tpu.vector_store %arg7[%c1, %c15_5, %c0_6], %4 {strides = array<i32>} : memref<18x33x16xbf16, #tpu.memory_space<vmem>>, vector<16x1x16xbf16>,
    %cst_7 = arith.constant 0.000000e+00 : bf16
    %6 = vector.broadcast %cst_7 : bf16 to vector<16x1x16xbf16>
    %c1_8 = arith.constant 1 : index
    %c32 = arith.constant 32 : index
    %c0_9 = arith.constant 0 : index
    %7 = vector.load %arg7[%c1_8, %c32, %c0_9] : memref<18x33x16xbf16, #tpu.memory_space<vmem>>, vector<16x1x16xbf16>
    tpu.vector_store %arg7[%c1_8, %c32, %c0_9], %6 {strides = array<i32>} : memref<18x33x16xbf16, #tpu.memory_space<vmem>>, vector<16x1x16xbf16>,
    %cst_10 = arith.constant 0.000000e+00 : bf16
    %8 = vector.broadcast %cst_10 : bf16 to vector<1x18x32xbf16>
    %c0_11 = arith.constant 0 : index
    %c15_12 = arith.constant 15 : index
    %c0_13 = arith.constant 0 : index
    %9 = vector.load %arg8[%c0_11, %c15_12, %c0_13] : memref<18x33x32xbf16, #tpu.memory_space<vmem>>, vector<1x18x32xbf16>
    tpu.vector_store %arg8[%c0_11, %c15_12, %c0_13], %8 {strides = array<i32>} : memref<18x33x32xbf16, #tpu.memory_space<vmem>>, vector<1x18x32xbf16>,
    %cst_14 = arith.constant 0.000000e+00 : bf16
    %10 = vector.broadcast %cst_14 : bf16 to vector<1x18x32xbf16>
    %c17_15 = arith.constant 17 : index
    %c15_16 = arith.constant 15 : index
    %c0_17 = arith.constant 0 : index
    %11 = vector.load %arg8[%c17_15, %c15_16, %c0_17] : memref<18x33x32xbf16, #tpu.memory_space<vmem>>, vector<1x18x32xbf16>
    tpu.vector_store %arg8[%c17_15, %c15_16, %c0_17], %10 {strides = array<i32>} : memref<18x33x32xbf16, #tpu.memory_space<vmem>>, vector<1x18x32xbf16>,
    %cst_18 = arith.constant 0.000000e+00 : bf16
    %12 = vector.broadcast %cst_18 : bf16 to vector<16x1x32xbf16>
    %c1_19 = arith.constant 1 : index
    %c15_20 = arith.constant 15 : index
    %c0_21 = arith.constant 0 : index
    %13 = vector.load %arg8[%c1_19, %c15_20, %c0_21] : memref<18x33x32xbf16, #tpu.memory_space<vmem>>, vector<16x1x32xbf16>
    tpu.vector_store %arg8[%c1_19, %c15_20, %c0_21], %12 {strides = array<i32>} : memref<18x33x32xbf16, #tpu.memory_space<vmem>>, vector<16x1x32xbf16>,
    %cst_22 = arith.constant 0.000000e+00 : bf16
    %14 = vector.broadcast %cst_22 : bf16 to vector<16x1x32xbf16>
    %c1_23 = arith.constant 1 : index
    %c32_24 = arith.constant 32 : index
    %c0_25 = arith.constant 0 : index
    %15 = vector.load %arg8[%c1_23, %c32_24, %c0_25] : memref<18x33x32xbf16, #tpu.memory_space<vmem>>, vector<16x1x32xbf16>
    tpu.vector_store %arg8[%c1_23, %c32_24, %c0_25], %14 {strides = array<i32>} : memref<18x33x32xbf16, #tpu.memory_space<vmem>>, vector<16x1x32xbf16>,
    %c0_26 = arith.constant 0 : index
    %c0_27 = arith.constant 0 : index
    %c0_28 = arith.constant 0 : index
    %c0_29 = arith.constant 0 : index
    %16 = vector.load %arg1[%c0_26, %c0_27, %c0_28, %c0_29] : memref<1x16x16x16xbf16, #tpu.memory_space<vmem>>, vector<1x16x16x16xbf16>
    %17 = vector.shape_cast %16 : vector<1x16x16x16xbf16> to vector<16x16x16xbf16>
    %c1_30 = arith.constant 1 : index
    %c16 = arith.constant 16 : index
    %c0_31 = arith.constant 0 : index
    %18 = vector.load %arg7[%c1_30, %c16, %c0_31] : memref<18x33x16xbf16, #tpu.memory_space<vmem>>, vector<16x16x16xbf16>
    tpu.vector_store %arg7[%c1_30, %c16, %c0_31], %17 {strides = array<i32>} : memref<18x33x16xbf16, #tpu.memory_space<vmem>>, vector<16x16x16xbf16>,
    %c0_32 = arith.constant 0 : index
    %c15_33 = arith.constant 15 : index
    %c0_34 = arith.constant 0 : index
    %19 = vector.load %arg7[%c0_32, %c15_33, %c0_34] : memref<18x33x16xbf16, #tpu.memory_space<vmem>>, vector<16x16x16xbf16>
    %c0_35 = arith.constant 0 : index
    %c0_36 = arith.constant 0 : index
    %c0_37 = arith.constant 0 : index
    %20 = vector.load %arg9[%c0_35, %c0_36, %c0_37] : memref<16x16x144xbf16, #tpu.memory_space<vmem>>, vector<16x16x16xbf16>
    tpu.vector_store %arg9[%c0_35, %c0_36, %c0_37], %19 {strides = array<i32>} : memref<16x16x144xbf16, #tpu.memory_space<vmem>>, vector<16x16x16xbf16>,
    %c0_38 = arith.constant 0 : index
    %c16_39 = arith.constant 16 : index
    %c0_40 = arith.constant 0 : index
    %21 = vector.load %arg7[%c0_38, %c16_39, %c0_40] : memref<18x33x16xbf16, #tpu.memory_space<vmem>>, vector<16x16x16xbf16>
    %c0_41 = arith.constant 0 : index
    %c0_42 = arith.constant 0 : index
    %c16_43 = arith.constant 16 : index
    %22 = vector.load %arg9[%c0_41, %c0_42, %c16_43] : memref<16x16x144xbf16, #tpu.memory_space<vmem>>, vector<16x16x16xbf16>
    tpu.vector_store %arg9[%c0_41, %c0_42, %c16_43], %21 {strides = array<i32>} : memref<16x16x144xbf16, #tpu.memory_space<vmem>>, vector<16x16x16xbf16>,
    %c0_44 = arith.constant 0 : index
    %c17_45 = arith.constant 17 : index
    %c0_46 = arith.constant 0 : index
    %23 = vector.load %arg7[%c0_44, %c17_45, %c0_46] : memref<18x33x16xbf16, #tpu.memory_space<vmem>>, vector<16x16x16xbf16>
    %c0_47 = arith.constant 0 : index
    %c0_48 = arith.constant 0 : index
    %c32_49 = arith.constant 32 : index
    %24 = vector.load %arg9[%c0_47, %c0_48, %c32_49] : memref<16x16x144xbf16, #tpu.memory_space<vmem>>, vector<16x16x16xbf16>
    tpu.vector_store %arg9[%c0_47, %c0_48, %c32_49], %23 {strides = array<i32>} : memref<16x16x144xbf16, #tpu.memory_space<vmem>>, vector<16x16x16xbf16>,
    %c1_50 = arith.constant 1 : index
    %c15_51 = arith.constant 15 : index
    %c0_52 = arith.constant 0 : index
    %25 = vector.load %arg7[%c1_50, %c15_51, %c0_52] : memref<18x33x16xbf16, #tpu.memory_space<vmem>>, vector<16x16x16xbf16>
    %c0_53 = arith.constant 0 : index
    %c0_54 = arith.constant 0 : index
    %c48 = arith.constant 48 : index
    %26 = vector.load %arg9[%c0_53, %c0_54, %c48] : memref<16x16x144xbf16, #tpu.memory_space<vmem>>, vector<16x16x16xbf16>
    tpu.vector_store %arg9[%c0_53, %c0_54, %c48], %25 {strides = array<i32>} : memref<16x16x144xbf16, #tpu.memory_space<vmem>>, vector<16x16x16xbf16>,
    %c1_55 = arith.constant 1 : index
    %c16_56 = arith.constant 16 : index
    %c0_57 = arith.constant 0 : index
    %27 = vector.load %arg7[%c1_55, %c16_56, %c0_57] : memref<18x33x16xbf16, #tpu.memory_space<vmem>>, vector<16x16x16xbf16>
    %c0_58 = arith.constant 0 : index
    %c0_59 = arith.constant 0 : index
    %c64 = arith.constant 64 : index
    %28 = vector.load %arg9[%c0_58, %c0_59, %c64] : memref<16x16x144xbf16, #tpu.memory_space<vmem>>, vector<16x16x16xbf16>
    tpu.vector_store %arg9[%c0_58, %c0_59, %c64], %27 {strides = array<i32>} : memref<16x16x144xbf16, #tpu.memory_space<vmem>>, vector<16x16x16xbf16>,
    %c1_60 = arith.constant 1 : index
    %c17_61 = arith.constant 17 : index
    %c0_62 = arith.constant 0 : index
    %29 = vector.load %arg7[%c1_60, %c17_61, %c0_62] : memref<18x33x16xbf16, #tpu.memory_space<vmem>>, vector<16x16x16xbf16>
    %c0_63 = arith.constant 0 : index
    %c0_64 = arith.constant 0 : index
    %c80 = arith.constant 80 : index
    %30 = vector.load %arg9[%c0_63, %c0_64, %c80] : memref<16x16x144xbf16, #tpu.memory_space<vmem>>, vector<16x16x16xbf16>
    tpu.vector_store %arg9[%c0_63, %c0_64, %c80], %29 {strides = array<i32>} : memref<16x16x144xbf16, #tpu.memory_space<vmem>>, vector<16x16x16xbf16>,
    %c2 = arith.constant 2 : index
    %c15_65 = arith.constant 15 : index
    %c0_66 = arith.constant 0 : index
    %31 = vector.load %arg7[%c2, %c15_65, %c0_66] : memref<18x33x16xbf16, #tpu.memory_space<vmem>>, vector<16x16x16xbf16>
    %c0_67 = arith.constant 0 : index
    %c0_68 = arith.constant 0 : index
    %c96 = arith.constant 96 : index
    %32 = vector.load %arg9[%c0_67, %c0_68, %c96] : memref<16x16x144xbf16, #tpu.memory_space<vmem>>, vector<16x16x16xbf16>
    tpu.vector_store %arg9[%c0_67, %c0_68, %c96], %31 {strides = array<i32>} : memref<16x16x144xbf16, #tpu.memory_space<vmem>>, vector<16x16x16xbf16>,
    %c2_69 = arith.constant 2 : index
    %c16_70 = arith.constant 16 : index
    %c0_71 = arith.constant 0 : index
    %33 = vector.load %arg7[%c2_69, %c16_70, %c0_71] : memref<18x33x16xbf16, #tpu.memory_space<vmem>>, vector<16x16x16xbf16>
    %c0_72 = arith.constant 0 : index
    %c0_73 = arith.constant 0 : index
    %c112 = arith.constant 112 : index
    %34 = vector.load %arg9[%c0_72, %c0_73, %c112] : memref<16x16x144xbf16, #tpu.memory_space<vmem>>, vector<16x16x16xbf16>
    tpu.vector_store %arg9[%c0_72, %c0_73, %c112], %33 {strides = array<i32>} : memref<16x16x144xbf16, #tpu.memory_space<vmem>>, vector<16x16x16xbf16>,
    %c2_74 = arith.constant 2 : index
    %c17_75 = arith.constant 17 : index
    %c0_76 = arith.constant 0 : index
    %35 = vector.load %arg7[%c2_74, %c17_75, %c0_76] : memref<18x33x16xbf16, #tpu.memory_space<vmem>>, vector<16x16x16xbf16>
    %c0_77 = arith.constant 0 : index
    %c0_78 = arith.constant 0 : index
    %c128 = arith.constant 128 : index
    %36 = vector.load %arg9[%c0_77, %c0_78, %c128] : memref<16x16x144xbf16, #tpu.memory_space<vmem>>, vector<16x16x16xbf16>
    tpu.vector_store %arg9[%c0_77, %c0_78, %c128], %35 {strides = array<i32>} : memref<16x16x144xbf16, #tpu.memory_space<vmem>>, vector<16x16x16xbf16>,
    %c0_79 = arith.constant 0 : index
    %c0_80 = arith.constant 0 : index
    %c0_81 = arith.constant 0 : index
    %37 = vector.load %arg9[%c0_79, %c0_80, %c0_81] : memref<16x16x144xbf16, #tpu.memory_space<vmem>>, vector<16x16x144xbf16>
    %38 = vector.shape_cast %37 : vector<16x16x144xbf16> to vector<256x144xbf16>
    %c0_82 = arith.constant 0 : index
    %c0_83 = arith.constant 0 : index
    %39 = vector.load %arg2[%c0_82, %c0_83] : memref<144x32xbf16, #tpu.memory_space<vmem>>, vector<144x32xbf16>
    %cst_84 = arith.constant dense<0.000000e+00> : vector<256x32xf32>
    %40 = tpu.matmul %38, %39, %cst_84 {dimension_numbers = #tpu.dot_dimension_numbers<[1], [0], [0], [1], [0, 0, 1, 1], [], []>} : vector<256x144xbf16>, vector<144x32xbf16>, vector<256x32xf32> -> vector<256x32xf32>
    %c0_85 = arith.constant 0 : index
    %c0_86 = arith.constant 0 : index
    %41 = vector.load %arg3[%c0_85, %c0_86] : memref<1x32xf32, #tpu.memory_space<vmem>>, vector<1x32xf32>
    %42 = vector.broadcast %41 : vector<1x32xf32> to vector<256x32xf32>
    %43 = arith.addf %40, %42 : vector<256x32xf32>
    %cst_87 = arith.constant 0.000000e+00 : f32
    %44 = vector.broadcast %cst_87 : f32 to vector<256x32xf32>
    %45 = arith.cmpf ogt, %43, %44 : vector<256x32xf32>
    %cst_88 = arith.constant 1.000000e-01 : f32
    %46 = vector.broadcast %cst_88 : f32 to vector<256x32xf32>
    %47 = arith.mulf %46, %43 : vector<256x32xf32>
    %48 = arith.select %45, %43, %47 : vector<256x32xi1>, vector<256x32xf32>
    %49 = vector.shape_cast %48 : vector<256x32xf32> to vector<16x16x32xf32>
    %50 = arith.truncf %49 : vector<16x16x32xf32> to vector<16x16x32xbf16>
    %c1_89 = arith.constant 1 : index
    %c16_90 = arith.constant 16 : index
    %c0_91 = arith.constant 0 : index
    %51 = vector.load %arg8[%c1_89, %c16_90, %c0_91] : memref<18x33x32xbf16, #tpu.memory_space<vmem>>, vector<16x16x32xbf16>
    tpu.vector_store %arg8[%c1_89, %c16_90, %c0_91], %50 {strides = array<i32>} : memref<18x33x32xbf16, #tpu.memory_space<vmem>>, vector<16x16x32xbf16>,
    %c0_92 = arith.constant 0 : index
    %c15_93 = arith.constant 15 : index
    %c0_94 = arith.constant 0 : index
    %52 = vector.load %arg8[%c0_92, %c15_93, %c0_94] : memref<18x33x32xbf16, #tpu.memory_space<vmem>>, vector<16x16x32xbf16>
    %c0_95 = arith.constant 0 : index
    %c0_96 = arith.constant 0 : index
    %c0_97 = arith.constant 0 : index
    %53 = vector.load %arg10[%c0_95, %c0_96, %c0_97] : memref<16x16x288xbf16, #tpu.memory_space<vmem>>, vector<16x16x32xbf16>
    tpu.vector_store %arg10[%c0_95, %c0_96, %c0_97], %52 {strides = array<i32>} : memref<16x16x288xbf16, #tpu.memory_space<vmem>>, vector<16x16x32xbf16>,
    %c0_98 = arith.constant 0 : index
    %c16_99 = arith.constant 16 : index
    %c0_100 = arith.constant 0 : index
    %54 = vector.load %arg8[%c0_98, %c16_99, %c0_100] : memref<18x33x32xbf16, #tpu.memory_space<vmem>>, vector<16x16x32xbf16>
    %c0_101 = arith.constant 0 : index
    %c0_102 = arith.constant 0 : index
    %c32_103 = arith.constant 32 : index
    %55 = vector.load %arg10[%c0_101, %c0_102, %c32_103] : memref<16x16x288xbf16, #tpu.memory_space<vmem>>, vector<16x16x32xbf16>
    tpu.vector_store %arg10[%c0_101, %c0_102, %c32_103], %54 {strides = array<i32>} : memref<16x16x288xbf16, #tpu.memory_space<vmem>>, vector<16x16x32xbf16>,
    %c0_104 = arith.constant 0 : index
    %c17_105 = arith.constant 17 : index
    %c0_106 = arith.constant 0 : index
    %56 = vector.load %arg8[%c0_104, %c17_105, %c0_106] : memref<18x33x32xbf16, #tpu.memory_space<vmem>>, vector<16x16x32xbf16>
    %c0_107 = arith.constant 0 : index
    %c0_108 = arith.constant 0 : index
    %c64_109 = arith.constant 64 : index
    %57 = vector.load %arg10[%c0_107, %c0_108, %c64_109] : memref<16x16x288xbf16, #tpu.memory_space<vmem>>, vector<16x16x32xbf16>
    tpu.vector_store %arg10[%c0_107, %c0_108, %c64_109], %56 {strides = array<i32>} : memref<16x16x288xbf16, #tpu.memory_space<vmem>>, vector<16x16x32xbf16>,
    %c1_110 = arith.constant 1 : index
    %c15_111 = arith.constant 15 : index
    %c0_112 = arith.constant 0 : index
    %58 = vector.load %arg8[%c1_110, %c15_111, %c0_112] : memref<18x33x32xbf16, #tpu.memory_space<vmem>>, vector<16x16x32xbf16>
    %c0_113 = arith.constant 0 : index
    %c0_114 = arith.constant 0 : index
    %c96_115 = arith.constant 96 : index
    %59 = vector.load %arg10[%c0_113, %c0_114, %c96_115] : memref<16x16x288xbf16, #tpu.memory_space<vmem>>, vector<16x16x32xbf16>
    tpu.vector_store %arg10[%c0_113, %c0_114, %c96_115], %58 {strides = array<i32>} : memref<16x16x288xbf16, #tpu.memory_space<vmem>>, vector<16x16x32xbf16>,
    %c1_116 = arith.constant 1 : index
    %c16_117 = arith.constant 16 : index
    %c0_118 = arith.constant 0 : index
    %60 = vector.load %arg8[%c1_116, %c16_117, %c0_118] : memref<18x33x32xbf16, #tpu.memory_space<vmem>>, vector<16x16x32xbf16>
    %c0_119 = arith.constant 0 : index
    %c0_120 = arith.constant 0 : index
    %c128_121 = arith.constant 128 : index
    %61 = vector.load %arg10[%c0_119, %c0_120, %c128_121] : memref<16x16x288xbf16, #tpu.memory_space<vmem>>, vector<16x16x32xbf16>
    tpu.vector_store %arg10[%c0_119, %c0_120, %c128_121], %60 {strides = array<i32>} : memref<16x16x288xbf16, #tpu.memory_space<vmem>>, vector<16x16x32xbf16>,
    %c1_122 = arith.constant 1 : index
    %c17_123 = arith.constant 17 : index
    %c0_124 = arith.constant 0 : index
    %62 = vector.load %arg8[%c1_122, %c17_123, %c0_124] : memref<18x33x32xbf16, #tpu.memory_space<vmem>>, vector<16x16x32xbf16>
    %c0_125 = arith.constant 0 : index
    %c0_126 = arith.constant 0 : index
    %c160 = arith.constant 160 : index
    %63 = vector.load %arg10[%c0_125, %c0_126, %c160] : memref<16x16x288xbf16, #tpu.memory_space<vmem>>, vector<16x16x32xbf16>
    tpu.vector_store %arg10[%c0_125, %c0_126, %c160], %62 {strides = array<i32>} : memref<16x16x288xbf16, #tpu.memory_space<vmem>>, vector<16x16x32xbf16>,
    %c2_127 = arith.constant 2 : index
    %c15_128 = arith.constant 15 : index
    %c0_129 = arith.constant 0 : index
    %64 = vector.load %arg8[%c2_127, %c15_128, %c0_129] : memref<18x33x32xbf16, #tpu.memory_space<vmem>>, vector<16x16x32xbf16>
    %c0_130 = arith.constant 0 : index
    %c0_131 = arith.constant 0 : index
    %c192 = arith.constant 192 : index
    %65 = vector.load %arg10[%c0_130, %c0_131, %c192] : memref<16x16x288xbf16, #tpu.memory_space<vmem>>, vector<16x16x32xbf16>
    tpu.vector_store %arg10[%c0_130, %c0_131, %c192], %64 {strides = array<i32>} : memref<16x16x288xbf16, #tpu.memory_space<vmem>>, vector<16x16x32xbf16>,
    %c2_132 = arith.constant 2 : index
    %c16_133 = arith.constant 16 : index
    %c0_134 = arith.constant 0 : index
    %66 = vector.load %arg8[%c2_132, %c16_133, %c0_134] : memref<18x33x32xbf16, #tpu.memory_space<vmem>>, vector<16x16x32xbf16>
    %c0_135 = arith.constant 0 : index
    %c0_136 = arith.constant 0 : index
    %c224 = arith.constant 224 : index
    %67 = vector.load %arg10[%c0_135, %c0_136, %c224] : memref<16x16x288xbf16, #tpu.memory_space<vmem>>, vector<16x16x32xbf16>
    tpu.vector_store %arg10[%c0_135, %c0_136, %c224], %66 {strides = array<i32>} : memref<16x16x288xbf16, #tpu.memory_space<vmem>>, vector<16x16x32xbf16>,
    %c2_137 = arith.constant 2 : index
    %c17_138 = arith.constant 17 : index
    %c0_139 = arith.constant 0 : index
    %68 = vector.load %arg8[%c2_137, %c17_138, %c0_139] : memref<18x33x32xbf16, #tpu.memory_space<vmem>>, vector<16x16x32xbf16>
    %c0_140 = arith.constant 0 : index
    %c0_141 = arith.constant 0 : index
    %c256 = arith.constant 256 : index
    %69 = vector.load %arg10[%c0_140, %c0_141, %c256] : memref<16x16x288xbf16, #tpu.memory_space<vmem>>, vector<16x16x32xbf16>
    tpu.vector_store %arg10[%c0_140, %c0_141, %c256], %68 {strides = array<i32>} : memref<16x16x288xbf16, #tpu.memory_space<vmem>>, vector<16x16x32xbf16>,
    %c0_142 = arith.constant 0 : index
    %c0_143 = arith.constant 0 : index
    %c0_144 = arith.constant 0 : index
    %70 = vector.load %arg10[%c0_142, %c0_143, %c0_144] : memref<16x16x288xbf16, #tpu.memory_space<vmem>>, vector<16x16x288xbf16>
    %71 = vector.shape_cast %70 : vector<16x16x288xbf16> to vector<256x288xbf16>
    %c0_145 = arith.constant 0 : index
    %c0_146 = arith.constant 0 : index
    %72 = vector.load %arg4[%c0_145, %c0_146] : memref<288x128xbf16, #tpu.memory_space<vmem>>, vector<288x128xbf16>
    %cst_147 = arith.constant dense<0.000000e+00> : vector<256x128xf32>
    %73 = tpu.matmul %71, %72, %cst_147 {dimension_numbers = #tpu.dot_dimension_numbers<[1], [0], [0], [1], [0, 0, 1, 1], [], []>} : vector<256x288xbf16>, vector<288x128xbf16>, vector<256x128xf32> -> vector<256x128xf32>
    %74 = vector.extract_strided_slice %73 {offsets = [0, 0], sizes = [256, 8], strides = [1, 1]} : vector<256x128xf32> to vector<256x8xf32>
    %c0_148 = arith.constant 0 : index
    %c0_149 = arith.constant 0 : index
    %75 = vector.load %arg5[%c0_148, %c0_149] : memref<1x8xf32, #tpu.memory_space<vmem>>, vector<1x8xf32>
    %76 = vector.broadcast %75 : vector<1x8xf32> to vector<256x8xf32>
    %77 = arith.addf %74, %76 : vector<256x8xf32>
    %78 = tpu.transpose %77, [1, 0] : vector<256x8xf32> -> vector<8x256xf32>
    %79 = vector.extract_strided_slice %78 {offsets = [0, 0], sizes = [3, 256], strides = [1, 1]} : vector<8x256xf32> to vector<3x256xf32>
    %c0_150 = arith.constant 0 : index
    %c0_151 = arith.constant 0 : index
    %c0_152 = arith.constant 0 : index
    %80 = vector.load %arg6[%c0_150, %c0_151, %c0_152] : memref<1x3x256xf32, #tpu.memory_space<vmem>>, vector<1x3x256xf32>
    %81 = vector.shape_cast %80 : vector<1x3x256xf32> to vector<3x256xf32>
    %82 = vector.shape_cast %79 : vector<3x256xf32> to vector<1x3x256xf32>
    tpu.vector_store %arg6[%c0_150, %c0_151, %c0_152], %82 {strides = array<i32>} : memref<1x3x256xf32, #tpu.memory_space<vmem>>, vector<1x3x256xf32>,
    return
  }
  func.func @transform_0(%arg0: i32) -> (i32, i32, i32, i32) {
    %c0_i32 = arith.constant 0 : i32
    %c0_i32_0 = arith.constant 0 : i32
    %c0_i32_1 = arith.constant 0 : i32
    %c0_i32_2 = arith.constant 0 : i32
    return %arg0, %c0_i32, %c0_i32_0, %c0_i32_1 : i32, i32, i32, i32
  }
  func.func @transform_1(%arg0: i32) -> (i32, i32) {
    %c0_i32 = arith.constant 0 : i32
    %c0_i32_0 = arith.constant 0 : i32
    %c0_i32_1 = arith.constant 0 : i32
    return %c0_i32, %c0_i32_0 : i32, i32
  }
  func.func @transform_2(%arg0: i32) -> (i32, i32) {
    %c0_i32 = arith.constant 0 : i32
    %c0_i32_0 = arith.constant 0 : i32
    %c0_i32_1 = arith.constant 0 : i32
    return %c0_i32, %c0_i32_0 : i32, i32
  }
  func.func @transform_3(%arg0: i32) -> (i32, i32) {
    %c0_i32 = arith.constant 0 : i32
    %c0_i32_0 = arith.constant 0 : i32
    %c0_i32_1 = arith.constant 0 : i32
    return %c0_i32, %c0_i32_0 : i32, i32
  }
  func.func @transform_4(%arg0: i32) -> (i32, i32) {
    %c0_i32 = arith.constant 0 : i32
    %c0_i32_0 = arith.constant 0 : i32
    %c0_i32_1 = arith.constant 0 : i32
    return %c0_i32, %c0_i32_0 : i32, i32
  }
  func.func @transform_5(%arg0: i32) -> (i32, i32, i32) {
    %c0_i32 = arith.constant 0 : i32
    %c0_i32_0 = arith.constant 0 : i32
    %c0_i32_1 = arith.constant 0 : i32
    return %arg0, %c0_i32, %c0_i32_0 : i32, i32, i32
  }
}

</mosaic_0001>

<llo_original>
// kernel: tpu_custom_call.1
$region0: #{tpu_custom_call.1}
  #allocation0 [shape = 'u32[]', space=smem, size = 0x4, offset = 0x4, fixed_abs, tag = 'smem constant byte address 0x4 - core index']
  #allocation1 [shape = 'u32[144,128]{1,0:T(1,128)}', space=vmem, size = 0x12000, scoped, tag = 'internal scratch']
  #allocation2 [shape = 'bf16[18,33,16]{2,1,0:T(8,128)(2,1)}', space=vmem, size = 0x2d000, scoped, tag = 'scratch operand']
  #allocation3 [shape = 'bf16[18,33,32]{2,1,0:T(8,128)(2,1)}', space=vmem, size = 0x2d000, scoped, tag = 'scratch operand']
  #allocation4 [shape = 'bf16[16,16,144]{2,1,0:T(8,128)(2,1)}', space=vmem, size = 0x20000, scoped, tag = 'scratch operand']
  #allocation5 [shape = 'bf16[16,16,288]{2,1,0:T(8,128)(2,1)}', space=vmem, size = 0x30000, scoped, tag = 'scratch operand']
  %s0 = inlined_call_operand.hbm [shape: bf16[2,16,16,16], index: 0, kind: input, shape index: {}]
  %s1 = inlined_call_operand.vmem [shape: bf16[144,32], index: 1, kind: input, shape index: {}]
  %s2 = inlined_call_operand.vmem [shape: f32[1,32], index: 2, kind: input, shape index: {}]
  %s3 = inlined_call_operand.hbm [shape: bf16[288,128], index: 3, kind: input, shape index: {}]
  %s4 = inlined_call_operand.vmem [shape: f32[1,8], index: 4, kind: input, shape index: {}]
  %s5 = inlined_call_operand.vmem [shape: f32[2,3,256], index: 5, kind: output, shape index: {}]
  %s6 = sld [smem:[#allocation0]]
  $region61: #{tpu_custom_call.1} parent=0
    _
  %s8 = ssub.s32 1, %s6
  %s9 = scalar_select 0, %s8, %s6
  $region1: #{tpu_custom_call.1} parent=0
    #allocation6 [shape = 'u8[131072]{0}', space=vmem, size = 0x20000, scoped, tag = 'input window, operand 0']
    #allocation7 [shape = 's32[2]{0}', space=sflag, size = 0x8, scoped, tag = 'scoped memory for tpu_custom_call.1']
    #allocation8 [shape = 'u8[73728]{0}', space=vmem, size = 0x12000, scoped, tag = 'input window, operand 3, single buffered']
    #allocation9 [shape = 's32[1]{0}', space=sflag, size = 0x4, scoped, tag = 'scoped memory for tpu_custom_call.1']
    %10 = vsyncpa [#allocation7], 0
    %s11 = scalar_lea.sflag [#allocation7], 1
    %12 = vsyncpa %s11, 0
    %13 = vsyncpa [#allocation9], 0
    loop: start=0, step=1, limit=4
    $region2: #{tpu_custom_call.1} parent=1 // loop_pre_header
      _
    $region3: #{tpu_custom_call.1} parent=1 // loop_header
      %s15 = sphi 0, %s19
      %p16 = scmp.ge.s32.totalorder %s15, 4
      %s25 = sphi 0, %s27
      %s28 = sphi 0, %s25
      %s29 = sphi 0, %s28
      %s45 = sphi 0, %s29
      %s49 = sphi 0, %s49
      %s51 = sphi 0, %s49
      %s52 = sphi 0, %s51
      %s66 = sphi 0, %s52
      %s70 = sphi 0, %s70
      %s72 = sphi 0, %s70
      %s73 = sphi 0, %s72
      %s87 = sphi 0, %s73
      %s91 = sphi 0, %s91
      %s93 = sphi 0, %s91
      %s94 = sphi 0, %s93
      %s108 = sphi 0, %s94
      %s112 = sphi 0, %s112
      %s114 = sphi 0, %s112
      %s115 = sphi 0, %s114
      %s129 = sphi 0, %s115
      %s135 = sphi 0, %s137
      %s138 = sphi 0, %s135
      %s139 = sphi 0, %s138
      %s155 = sphi 0, %s139
    $region4: #{tpu_custom_call.1} parent=1 // loop_header_branch
      %18 = sbr.rel (%p16) target = $region8
    $region5: #{tpu_custom_call.1} parent=1 // loop_body
      %s20 = ssub.s32 %s15, 1
      %s21 = ssub.s32 %s15, 2
      %s22 = sadd.s32 %s15, 1
      %s23 = ssub.s32 %s15, %s22
      %p24 = scmp.eq.s32.totalorder %s23, 0
      %s26 = sadd.s32 %s25, 1
      %s27 = scalar_select %p24, %s25, %s26
      %p30 = pneg %p24
      %p31 = scmp.eq.s32.totalorder %s15, 1
      %p32 = por %p30, %p31
      %p33 = scmp.ne.s32.totalorder %s25, %s28
      %p34 = scmp.eq.s32.totalorder %s15, 0
      %p35 = por %p33, %p34
      %p36 = scmp.ne.s32.totalorder %s25, %s28
      %p37 = scmp.eq.s32.totalorder %s20, 1
      %p38 = por %p36, %p37
      %p39 = scmp.ne.s32.totalorder %s28, %s29
      %p40 = scmp.eq.s32.totalorder %s20, 0
      %p41 = por %p39, %p40
      %p42 = scmp.ne.s32.totalorder %s28, %s29
      %p43 = scmp.eq.s32.totalorder %s21, 1
      %p44 = por %p42, %p43
      %p46 = scmp.ne.s32.totalorder %s29, %s45
      %p47 = scmp.eq.s32.totalorder %s21, 0
      %p48 = por %p46, %p47
      %s50 = sadd.s32 %s49, 1
      %p53 = scmp.eq.s32.totalorder %s15, 1
      %p54 = scmp.ne.s32.totalorder %s49, %s51
      %p55 = scmp.eq.s32.totalorder %s15, 0
      %p56 = por %p54, %p55
      %p57 = scmp.ne.s32.totalorder %s49, %s51
      %p58 = scmp.eq.s32.totalorder %s20, 1
      %p59 = por %p57, %p58
      %p60 = scmp.ne.s32.totalorder %s51, %s52
      %p61 = scmp.eq.s32.totalorder %s20, 0
      %p62 = por %p60, %p61
      %p63 = scmp.ne.s32.totalorder %s51, %s52
      %p64 = scmp.eq.s32.totalorder %s21, 1
      %p65 = por %p63, %p64
      %p67 = scmp.ne.s32.totalorder %s52, %s66
      %p68 = scmp.eq.s32.totalorder %s21, 0
      %p69 = por %p67, %p68
      %s71 = sadd.s32 %s70, 1
      %p74 = scmp.eq.s32.totalorder %s15, 1
      %p75 = scmp.ne.s32.totalorder %s70, %s72
      %p76 = scmp.eq.s32.totalorder %s15, 0
      %p77 = por %p75, %p76
      %p78 = scmp.ne.s32.totalorder %s70, %s72
      %p79 = scmp.eq.s32.totalorder %s20, 1
      %p80 = por %p78, %p79
      %p81 = scmp.ne.s32.totalorder %s72, %s73
      %p82 = scmp.eq.s32.totalorder %s20, 0
      %p83 = por %p81, %p82
      %p84 = scmp.ne.s32.totalorder %s72, %s73
      %p85 = scmp.eq.s32.totalorder %s21, 1
      %p86 = por %p84, %p85
      %p88 = scmp.ne.s32.totalorder %s73, %s87
      %p89 = scmp.eq.s32.totalorder %s21, 0
      %p90 = por %p88, %p89
      %s92 = sadd.s32 %s91, 1
      %p95 = scmp.eq.s32.totalorder %s15, 1
      %p96 = scmp.ne.s32.totalorder %s91, %s93
      %p97 = scmp.eq.s32.totalorder %s15, 0
      %p98 = por %p96, %p97
      %p99 = scmp.ne.s32.totalorder %s91, %s93
      %p100 = scmp.eq.s32.totalorder %s20, 1
      %p101 = por %p99, %p100
      %p102 = scmp.ne.s32.totalorder %s93, %s94
      %p103 = scmp.eq.s32.totalorder %s20, 0
      %p104 = por %p102, %p103
      %p105 = scmp.ne.s32.totalorder %s93, %s94
      %p106 = scmp.eq.s32.totalorder %s21, 1
      %p107 = por %p105, %p106
      %p109 = scmp.ne.s32.totalorder %s94, %s108
      %p110 = scmp.eq.s32.totalorder %s21, 0
      %p111 = por %p109, %p110
      %s113 = sadd.s32 %s112, 1
      %p116 = scmp.eq.s32.totalorder %s15, 1
      %p117 = scmp.ne.s32.totalorder %s112, %s114
      %p118 = scmp.eq.s32.totalorder %s15, 0
      %p119 = por %p117, %p118
      %p120 = scmp.ne.s32.totalorder %s112, %s114
      %p121 = scmp.eq.s32.totalorder %s20, 1
      %p122 = por %p120, %p121
      %p123 = scmp.ne.s32.totalorder %s114, %s115
      %p124 = scmp.eq.s32.totalorder %s20, 0
      %p125 = por %p123, %p124
      %p126 = scmp.ne.s32.totalorder %s114, %s115
      %p127 = scmp.eq.s32.totalorder %s21, 1
      %p128 = por %p126, %p127
      %p130 = scmp.ne.s32.totalorder %s115, %s129
      %p131 = scmp.eq.s32.totalorder %s21, 0
      %p132 = por %p130, %p131
      %s133 = ssub.s32 %s15, %s22
      %p134 = scmp.eq.s32.totalorder %s133, 0
      %s136 = sadd.s32 %s135, 1
      %s137 = scalar_select %p134, %s135, %s136
      %p140 = pneg %p134
      %p141 = scmp.eq.s32.totalorder %s15, 1
      %p142 = por %p140, %p141
      %p143 = scmp.ne.s32.totalorder %s135, %s138
      %p144 = scmp.eq.s32.totalorder %s15, 0
      %p145 = por %p143, %p144
      %p146 = scmp.ne.s32.totalorder %s135, %s138
      %p147 = scmp.eq.s32.totalorder %s20, 1
      %p148 = por %p146, %p147
      %p149 = scmp.ne.s32.totalorder %s138, %s139
      %p150 = scmp.eq.s32.totalorder %s20, 0
      %p151 = por %p149, %p150
      %p152 = scmp.ne.s32.totalorder %s138, %s139
      %p153 = scmp.eq.s32.totalorder %s21, 1
      %p154 = por %p152, %p153
      %p156 = scmp.ne.s32.totalorder %s139, %s155
      %p157 = scmp.eq.s32.totalorder %s21, 0
      %p158 = por %p156, %p157
      %p159 = scmp.le.s32.totalorder 1, %s15
      %p160 = scmp.lt.s32.totalorder %s15, 3
      %p161 = pnand %p159, %p160
      %p162 = pneg %p161
      // Predicated region
      $region9: #{tpu_custom_call.1} parent=5 // pred_check
        _
      $region10: #{tpu_custom_call.1} parent=5 // pred_check_branch
        %164 = sbr.rel (%p161) target = $region12
      $region11: #{tpu_custom_call.1} parent=5 // pred_region
        %s165 = ssub.s32 %s15, 1
        // Predicated region
        $region13: #{tpu_custom_call.1} parent=11 // pred_check
          %p166 = pneg %p62
        $region14: #{tpu_custom_call.1} parent=11 // pred_check_branch
          %168 = sbr.rel (%p166) target = $region16
        $region15: #{tpu_custom_call.1} parent=11 // pred_region
          _
        $region16: #{tpu_custom_call.1} parent=11 // pred_fallthru
          _
        // Predicated region
        $region17: #{tpu_custom_call.1} parent=11 // pred_check
          %p169 = pneg %p83
        $region18: #{tpu_custom_call.1} parent=11 // pred_check_branch
          %171 = sbr.rel (%p169) target = $region20
        $region19: #{tpu_custom_call.1} parent=11 // pred_region
          _
        $region20: #{tpu_custom_call.1} parent=11 // pred_fallthru
          _
        // Predicated region
        $region21: #{tpu_custom_call.1} parent=11 // pred_check
          %p172 = pneg %p104
        $region22: #{tpu_custom_call.1} parent=11 // pred_check_branch
          %174 = sbr.rel (%p172) target = $region24
        $region23: #{tpu_custom_call.1} parent=11 // pred_region
          %s176 = ssub.s32 2304, 2304
          %177 = vsyncadd [#allocation9], %s176
          %s178 = sshll.u32 [#allocation8], 4
          %s179 = int_to_ptr.vmem [resolvable:$true] %s178
          %184 = dma.hbm_to_vmem [thread:$0]  %s3, 2304, %s179, [#allocation9], 64, 64, 4
        $region24: #{tpu_custom_call.1} parent=11 // pred_fallthru
          _
        // Predicated region
        $region25: #{tpu_custom_call.1} parent=11 // pred_check
          %p185 = pneg %p125
        $region26: #{tpu_custom_call.1} parent=11 // pred_check_branch
          %187 = sbr.rel (%p185) target = $region28
        $region27: #{tpu_custom_call.1} parent=11 // pred_region
          _
        $region28: #{tpu_custom_call.1} parent=11 // pred_fallthru
          _
      $region12: #{tpu_custom_call.1} parent=5 // pred_fallthru
        _
      %p188 = scmp.lt.s32.totalorder %s15, 2
      // Predicated region
      $region29: #{tpu_custom_call.1} parent=5 // pred_check
        %p189 = pneg %p188
      $region30: #{tpu_custom_call.1} parent=5 // pred_check_branch
        %191 = sbr.rel (%p189) target = $region32
      $region31: #{tpu_custom_call.1} parent=5 // pred_region
        // Predicated region
        $region33: #{tpu_custom_call.1} parent=31 // pred_check
          %p192 = pneg %p35
        $region34: #{tpu_custom_call.1} parent=31 // pred_check_branch
          %194 = sbr.rel (%p192) target = $region36
        $region35: #{tpu_custom_call.1} parent=31 // pred_region
          %s195 = sand.u32 %s25, 1
          %s196 = scalar_lea.sflag [#allocation7], %s195
          %s197 = sand.u32 %s25, 1
          %s198 = smul.addr %s197, 128
          %s199 = scalar_lea.vmem [#allocation6], %s198
          %s201 = ssub.s32 2048, 2048
          %202 = vsyncadd %s196, %s201
          %s203 = smul.addr %s15, 32
          %s204 = smul.addr %s203, 64
          %s205 = scalar_lea.hbm %s0, %s204
          %s206 = sshll.u32 %s199, 4
          %s207 = int_to_ptr.vmem [resolvable:$true] %s206
          %212 = dma.hbm_to_vmem [thread:$0]  %s205, 2048, %s207, %s196, 64, 64, 4
        $region36: #{tpu_custom_call.1} parent=31 // pred_fallthru
          _
      $region32: #{tpu_custom_call.1} parent=5 // pred_fallthru
        _
      %p213 = scmp.le.s32.totalorder 1, %s15
      %p214 = scmp.lt.s32.totalorder %s15, 3
      %p215 = pnand %p213, %p214
      %p216 = pneg %p215
      // Predicated region
      $region37: #{tpu_custom_call.1} parent=5 // pred_check
        _
      $region38: #{tpu_custom_call.1} parent=5 // pred_check_branch
        %218 = sbr.rel (%p215) target = $region40
      $region39: #{tpu_custom_call.1} parent=5 // pred_region
        %s219 = ssub.s32 %s15, 1
        %s220 = sand.u32 %s28, 1
        %s221 = scalar_lea.sflag [#allocation7], %s220
        %s222 = sand.u32 %s28, 1
        %s223 = smul.addr %s222, 128
        %s224 = scalar_lea.vmem [#allocation6], %s223
        // Predicated region
        $region41: #{tpu_custom_call.1} parent=39 // pred_check
          %p225 = pneg %p41
        $region42: #{tpu_custom_call.1} parent=39 // pred_check_branch
          %227 = sbr.rel (%p225) target = $region44
        $region43: #{tpu_custom_call.1} parent=39 // pred_region
          %228 = dma.done %s221, 2048
        $region44: #{tpu_custom_call.1} parent=39 // pred_fallthru
          _
        // Predicated region
        $region45: #{tpu_custom_call.1} parent=39 // pred_check
          %p229 = pneg %p104
        $region46: #{tpu_custom_call.1} parent=39 // pred_check_branch
          %231 = sbr.rel (%p229) target = $region48
        $region47: #{tpu_custom_call.1} parent=39 // pred_region
          %232 = dma.done [#allocation9], 2304
        $region48: #{tpu_custom_call.1} parent=39 // pred_fallthru
          _
        %s233 = sand.u32 %s28, 1
        %s234 = scalar_lea.sflag [#allocation7], %s233
        %s235 = sand.u32 %s28, 1
        %s236 = smul.addr %s235, 128
        %s237 = scalar_lea.vmem [#allocation6], %s236
        %p238 = pneg %p41
        %p239 = pneg %p38
        %p240 = pneg %p62
        %p241 = pneg %p59
        %p242 = pneg %p83
        %p243 = pneg %p80
        %p244 = pneg %p104
        %p245 = pneg %p101
        %p246 = pneg %p125
        %p247 = pneg %p122
        %p248 = pneg %p151
        %p249 = pneg %p148
        %p250 = scmp.lt.s32.totalorder %s20, 1
        %s251 = scalar_select %p250, %s20, 1
        %s252 = smul.addr %s251, 2
        %s253 = smul.addr %s252, 4
        %s254 = scalar_lea.vmem %s5, %s253
        %p255 = scmp.lt.s32.totalorder %s20, 1
        %s256 = scalar_select %p255, %s20, 1
        %s257 = smul.addr %s256, 2
        %s258 = smul.addr %s257, 4
        %s259 = scalar_lea.vmem %s5, %s258
        %vm261 = vcmask 125955
        %vm262 = vsmask.f32 7950
        %vm263 = vmand %vm261, %vm262
        %v264 = vld [vmem:[#allocation2 + $0x4] sm:$0x8]
        %v265 = vsel %vm263, 0, %v264
        %266 = vst [vmem:[#allocation2 + $0x4] sm:$0x8] %v265
        %vm267 = vcmask 125952
        %268 = vst.msk [vmem:[#allocation2 + $0x8] sm:$0xf] %vm267, 0
        %269 = vst.msk [vmem:[#allocation2 + $0xc] sm:$0xf] %vm267, 0
        %vm270 = vcmask 122880
        %vm271 = vsmask.f32 256
        %vm272 = vmand %vm270, %vm271
        %v273 = vld [vmem:[#allocation2 + $0x10] sm:$0x1]
        %v274 = vsel %vm272, 0, %v273
        %275 = vst [vmem:[#allocation2 + $0x10] sm:$0x1] %v274
        %s276 = scalar_lea.vmem [#allocation2], 340
        %v277 = vld [vmem:[%s276 + $0x4] sm:$0x8]
        %v278 = vsel %vm263, 0, %v277
        %279 = vst [vmem:[%s276 + $0x4] sm:$0x8] %v278
        %280 = vst.msk [vmem:[%s276 + $0x8] sm:$0xf] %vm267, 0
        %281 = vst.msk [vmem:[%s276 + $0xc] sm:$0xf] %vm267, 0
        %v282 = vld [vmem:[%s276 + $0x10] sm:$0x1]
        %v283 = vsel %vm272, 0, %v282
        %284 = vst [vmem:[%s276 + $0x10] sm:$0x1] %v283
        %s285 = scalar_lea.vmem [#allocation2], 20
        %v286 = vld [vmem:[%s285 + $0x4] sm:$0x8]
        %v287 = vsel %vm263, 0, %v286
        %288 = vst [vmem:[%s285 + $0x4] sm:$0x8] %v287
        %v289 = vld [vmem:[%s285 + $0x18] sm:$0x8]
        %v290 = vsel %vm263, 0, %v289
        %291 = vst [vmem:[%s285 + $0x18] sm:$0x8] %v290
        %v292 = vld [vmem:[%s285 + $0x2c] sm:$0x8]
        %v293 = vsel %vm263, 0, %v292
        %294 = vst [vmem:[%s285 + $0x2c] sm:$0x8] %v293
        %v295 = vld [vmem:[%s285 + $0x40] sm:$0x8]
        %v296 = vsel %vm263, 0, %v295
        %297 = vst [vmem:[%s285 + $0x40] sm:$0x8] %v296
        %v298 = vld [vmem:[%s285 + $0x54] sm:$0x8]
        %v299 = vsel %vm263, 0, %v298
        %300 = vst [vmem:[%s285 + $0x54] sm:$0x8] %v299
        %v301 = vld [vmem:[%s285 + $0x68] sm:$0x8]
        %v302 = vsel %vm263, 0, %v301
        %303 = vst [vmem:[%s285 + $0x68] sm:$0x8] %v302
        %v304 = vld [vmem:[%s285 + $0x7c] sm:$0x8]
        %v305 = vsel %vm263, 0, %v304
        %306 = vst [vmem:[%s285 + $0x7c] sm:$0x8] %v305
        %v307 = vld [vmem:[%s285 + $0x90] sm:$0x8]
        %v308 = vsel %vm263, 0, %v307
        %309 = vst [vmem:[%s285 + $0x90] sm:$0x8] %v308
        %v310 = vld [vmem:[%s285 + $0xa4] sm:$0x8]
        %v311 = vsel %vm263, 0, %v310
        %312 = vst [vmem:[%s285 + $0xa4] sm:$0x8] %v311
        %v313 = vld [vmem:[%s285 + $0xb8] sm:$0x8]
        %v314 = vsel %vm263, 0, %v313
        %315 = vst [vmem:[%s285 + $0xb8] sm:$0x8] %v314
        %v316 = vld [vmem:[%s285 + $0xcc] sm:$0x8]
        %v317 = vsel %vm263, 0, %v316
        %318 = vst [vmem:[%s285 + $0xcc] sm:$0x8] %v317
        %v319 = vld [vmem:[%s285 + $0xe0] sm:$0x8]
        %v320 = vsel %vm263, 0, %v319
        %321 = vst [vmem:[%s285 + $0xe0] sm:$0x8] %v320
        %v322 = vld [vmem:[%s285 + $0xf4] sm:$0x8]
        %v323 = vsel %vm263, 0, %v322
        %324 = vst [vmem:[%s285 + $0xf4] sm:$0x8] %v323
        %v325 = vld [vmem:[%s285 + $0x108] sm:$0x8]
        %v326 = vsel %vm263, 0, %v325
        %327 = vst [vmem:[%s285 + $0x108] sm:$0x8] %v326
        %v328 = vld [vmem:[%s285 + $0x11c] sm:$0x8]
        %v329 = vsel %vm263, 0, %v328
        %330 = vst [vmem:[%s285 + $0x11c] sm:$0x8] %v329
        %v331 = vld [vmem:[%s285 + $0x130] sm:$0x8]
        %v332 = vsel %vm263, 0, %v331
        %333 = vst [vmem:[%s285 + $0x130] sm:$0x8] %v332
        %v334 = vld [vmem:[%s285 + $0x10] sm:$0x1]
        %v335 = vsel %vm272, 0, %v334
        %336 = vst [vmem:[%s285 + $0x10] sm:$0x1] %v335
        %v337 = vld [vmem:[%s285 + $0x24] sm:$0x1]
        %v338 = vsel %vm272, 0, %v337
        %339 = vst [vmem:[%s285 + $0x24] sm:$0x1] %v338
        %v340 = vld [vmem:[%s285 + $0x38] sm:$0x1]
        %v341 = vsel %vm272, 0, %v340
        %342 = vst [vmem:[%s285 + $0x38] sm:$0x1] %v341
        %v343 = vld [vmem:[%s285 + $0x4c] sm:$0x1]
        %v344 = vsel %vm272, 0, %v343
        %345 = vst [vmem:[%s285 + $0x4c] sm:$0x1] %v344
        %v346 = vld [vmem:[%s285 + $0x60] sm:$0x1]
        %v347 = vsel %vm272, 0, %v346
        %348 = vst [vmem:[%s285 + $0x60] sm:$0x1] %v347
        %v349 = vld [vmem:[%s285 + $0x74] sm:$0x1]
        %v350 = vsel %vm272, 0, %v349
        %351 = vst [vmem:[%s285 + $0x74] sm:$0x1] %v350
        %v352 = vld [vmem:[%s285 + $0x88] sm:$0x1]
        %v353 = vsel %vm272, 0, %v352
        %354 = vst [vmem:[%s285 + $0x88] sm:$0x1] %v353
        %v355 = vld [vmem:[%s285 + $0x9c] sm:$0x1]
        %v356 = vsel %vm272, 0, %v355
        %357 = vst [vmem:[%s285 + $0x9c] sm:$0x1] %v356
        %v358 = vld [vmem:[%s285 + $0xb0] sm:$0x1]
        %v359 = vsel %vm272, 0, %v358
        %360 = vst [vmem:[%s285 + $0xb0] sm:$0x1] %v359
        %v361 = vld [vmem:[%s285 + $0xc4] sm:$0x1]
        %v362 = vsel %vm272, 0, %v361
        %363 = vst [vmem:[%s285 + $0xc4] sm:$0x1] %v362
        %v364 = vld [vmem:[%s285 + $0xd8] sm:$0x1]
        %v365 = vsel %vm272, 0, %v364
        %366 = vst [vmem:[%s285 + $0xd8] sm:$0x1] %v365
        %v367 = vld [vmem:[%s285 + $0xec] sm:$0x1]
        %v368 = vsel %vm272, 0, %v367
        %369 = vst [vmem:[%s285 + $0xec] sm:$0x1] %v368
        %v370 = vld [vmem:[%s285 + $0x100] sm:$0x1]
        %v371 = vsel %vm272, 0, %v370
        %372 = vst [vmem:[%s285 + $0x100] sm:$0x1] %v371
        %v373 = vld [vmem:[%s285 + $0x114] sm:$0x1]
        %v374 = vsel %vm272, 0, %v373
        %375 = vst [vmem:[%s285 + $0x114] sm:$0x1] %v374
        %v376 = vld [vmem:[%s285 + $0x128] sm:$0x1]
        %v377 = vsel %vm272, 0, %v376
        %378 = vst [vmem:[%s285 + $0x128] sm:$0x1] %v377
        %v379 = vld [vmem:[%s285 + $0x13c] sm:$0x1]
        %v380 = vsel %vm272, 0, %v379
        %381 = vst [vmem:[%s285 + $0x13c] sm:$0x1] %v380
        %vm382 = vcmask 257027
        %vm383 = vmand %vm382, %vm262
        %v384 = vld [vmem:[#allocation3 + $0x4] sm:$0x8]
        %v385 = vsel %vm383, 0, %v384
        %386 = vst [vmem:[#allocation3 + $0x4] sm:$0x8] %v385
        %vm387 = vcmask 257024
        %388 = vst.msk [vmem:[#allocation3 + $0x8] sm:$0xf] %vm387, 0
        %389 = vst.msk [vmem:[#allocation3 + $0xc] sm:$0xf] %vm387, 0
        %vm390 = vcmask 253952
        %vm391 = vmand %vm390, %vm271
        %v392 = vld [vmem:[#allocation3 + $0x10] sm:$0x1]
        %v393 = vsel %vm391, 0, %v392
        %394 = vst [vmem:[#allocation3 + $0x10] sm:$0x1] %v393
        %s395 = scalar_lea.vmem [#allocation3], 340
        %v396 = vld [vmem:[%s395 + $0x4] sm:$0x8]
        %v397 = vsel %vm383, 0, %v396
        %398 = vst [vmem:[%s395 + $0x4] sm:$0x8] %v397
        %399 = vst.msk [vmem:[%s395 + $0x8] sm:$0xf] %vm387, 0
        %400 = vst.msk [vmem:[%s395 + $0xc] sm:$0xf] %vm387, 0
        %v401 = vld [vmem:[%s395 + $0x10] sm:$0x1]
        %v402 = vsel %vm391, 0, %v401
        %403 = vst [vmem:[%s395 + $0x10] sm:$0x1] %v402
        %s404 = scalar_lea.vmem [#allocation3], 20
        %v405 = vld [vmem:[%s404 + $0x4] sm:$0x8]
        %v406 = vsel %vm383, 0, %v405
        %407 = vst [vmem:[%s404 + $0x4] sm:$0x8] %v406
        %v408 = vld [vmem:[%s404 + $0x18] sm:$0x8]
        %v409 = vsel %vm383, 0, %v408
        %410 = vst [vmem:[%s404 + $0x18] sm:$0x8] %v409
        %v411 = vld [vmem:[%s404 + $0x2c] sm:$0x8]
        %v412 = vsel %vm383, 0, %v411
        %413 = vst [vmem:[%s404 + $0x2c] sm:$0x8] %v412
        %v414 = vld [vmem:[%s404 + $0x40] sm:$0x8]
        %v415 = vsel %vm383, 0, %v414
        %416 = vst [vmem:[%s404 + $0x40] sm:$0x8] %v415
        %v417 = vld [vmem:[%s404 + $0x54] sm:$0x8]
        %v418 = vsel %vm383, 0, %v417
        %419 = vst [vmem:[%s404 + $0x54] sm:$0x8] %v418
        %v420 = vld [vmem:[%s404 + $0x68] sm:$0x8]
        %v421 = vsel %vm383, 0, %v420
        %422 = vst [vmem:[%s404 + $0x68] sm:$0x8] %v421
        %v423 = vld [vmem:[%s404 + $0x7c] sm:$0x8]
        %v424 = vsel %vm383, 0, %v423
        %425 = vst [vmem:[%s404 + $0x7c] sm:$0x8] %v424
        %v426 = vld [vmem:[%s404 + $0x90] sm:$0x8]
        %v427 = vsel %vm383, 0, %v426
        %428 = vst [vmem:[%s404 + $0x90] sm:$0x8] %v427
        %v429 = vld [vmem:[%s404 + $0xa4] sm:$0x8]
        %v430 = vsel %vm383, 0, %v429
        %431 = vst [vmem:[%s404 + $0xa4] sm:$0x8] %v430
        %v432 = vld [vmem:[%s404 + $0xb8] sm:$0x8]
        %v433 = vsel %vm383, 0, %v432
        %434 = vst [vmem:[%s404 + $0xb8] sm:$0x8] %v433
        %v435 = vld [vmem:[%s404 + $0xcc] sm:$0x8]
        %v436 = vsel %vm383, 0, %v435
        %437 = vst [vmem:[%s404 + $0xcc] sm:$0x8] %v436
        %v438 = vld [vmem:[%s404 + $0xe0] sm:$0x8]
        %v439 = vsel %vm383, 0, %v438
        %440 = vst [vmem:[%s404 + $0xe0] sm:$0x8] %v439
        %v441 = vld [vmem:[%s404 + $0xf4] sm:$0x8]
        %v442 = vsel %vm383, 0, %v441
        %443 = vst [vmem:[%s404 + $0xf4] sm:$0x8] %v442
        %v444 = vld [vmem:[%s404 + $0x108] sm:$0x8]
        %v445 = vsel %vm383, 0, %v444
        %446 = vst [vmem:[%s404 + $0x108] sm:$0x8] %v445
        %v447 = vld [vmem:[%s404 + $0x11c] sm:$0x8]
        %v448 = vsel %vm383, 0, %v447
        %449 = vst [vmem:[%s404 + $0x11c] sm:$0x8] %v448
        %v450 = vld [vmem:[%s404 + $0x130] sm:$0x8]
        %v451 = vsel %vm383, 0, %v450
        %452 = vst [vmem:[%s404 + $0x130] sm:$0x8] %v451
        %v453 = vld [vmem:[%s404 + $0x10] sm:$0x1]
        %v454 = vsel %vm391, 0, %v453
        %455 = vst [vmem:[%s404 + $0x10] sm:$0x1] %v454
        %v456 = vld [vmem:[%s404 + $0x24] sm:$0x1]
        %v457 = vsel %vm391, 0, %v456
        %458 = vst [vmem:[%s404 + $0x24] sm:$0x1] %v457
        %v459 = vld [vmem:[%s404 + $0x38] sm:$0x1]
        %v460 = vsel %vm391, 0, %v459
        %461 = vst [vmem:[%s404 + $0x38] sm:$0x1] %v460
        %v462 = vld [vmem:[%s404 + $0x4c] sm:$0x1]
        %v463 = vsel %vm391, 0, %v462
        %464 = vst [vmem:[%s404 + $0x4c] sm:$0x1] %v463
        %v465 = vld [vmem:[%s404 + $0x60] sm:$0x1]
        %v466 = vsel %vm391, 0, %v465
        %467 = vst [vmem:[%s404 + $0x60] sm:$0x1] %v466
        %v468 = vld [vmem:[%s404 + $0x74] sm:$0x1]
        %v469 = vsel %vm391, 0, %v468
        %470 = vst [vmem:[%s404 + $0x74] sm:$0x1] %v469
        %v471 = vld [vmem:[%s404 + $0x88] sm:$0x1]
        %v472 = vsel %vm391, 0, %v471
        %473 = vst [vmem:[%s404 + $0x88] sm:$0x1] %v472
        %v474 = vld [vmem:[%s404 + $0x9c] sm:$0x1]
        %v475 = vsel %vm391, 0, %v474
        %476 = vst [vmem:[%s404 + $0x9c] sm:$0x1] %v475
        %v477 = vld [vmem:[%s404 + $0xb0] sm:$0x1]
        %v478 = vsel %vm391, 0, %v477
        %479 = vst [vmem:[%s404 + $0xb0] sm:$0x1] %v478
        %v480 = vld [vmem:[%s404 + $0xc4] sm:$0x1]
        %v481 = vsel %vm391, 0, %v480
        %482 = vst [vmem:[%s404 + $0xc4] sm:$0x1] %v481
        %v483 = vld [vmem:[%s404 + $0xd8] sm:$0x1]
        %v484 = vsel %vm391, 0, %v483
        %485 = vst [vmem:[%s404 + $0xd8] sm:$0x1] %v484
        %v486 = vld [vmem:[%s404 + $0xec] sm:$0x1]
        %v487 = vsel %vm391, 0, %v486
        %488 = vst [vmem:[%s404 + $0xec] sm:$0x1] %v487
        %v489 = vld [vmem:[%s404 + $0x100] sm:$0x1]
        %v490 = vsel %vm391, 0, %v489
        %491 = vst [vmem:[%s404 + $0x100] sm:$0x1] %v490
        %v492 = vld [vmem:[%s404 + $0x114] sm:$0x1]
        %v493 = vsel %vm391, 0, %v492
        %494 = vst [vmem:[%s404 + $0x114] sm:$0x1] %v493
        %v495 = vld [vmem:[%s404 + $0x128] sm:$0x1]
        %v496 = vsel %vm391, 0, %v495
        %497 = vst [vmem:[%s404 + $0x128] sm:$0x1] %v496
        %v498 = vld [vmem:[%s404 + $0x13c] sm:$0x1]
        %v499 = vsel %vm391, 0, %v498
        %500 = vst [vmem:[%s404 + $0x13c] sm:$0x1] %v499
        %v501 = vld [vmem:[%s224] sm:$0xf]
        %v502 = vld [vmem:[%s224 + $0x4] sm:$0xf]
        %v503 = vld [vmem:[%s224 + $0x8] sm:$0xf]
        %v504 = vld [vmem:[%s224 + $0xc] sm:$0xf]
        %v505 = vld [vmem:[%s224 + $0x10] sm:$0xf]
        %v506 = vld [vmem:[%s224 + $0x14] sm:$0xf]
        %v507 = vld [vmem:[%s224 + $0x18] sm:$0xf]
        %v508 = vld [vmem:[%s224 + $0x1c] sm:$0xf]
        %v509 = vld [vmem:[%s224 + $0x20] sm:$0xf]
        %v510 = vld [vmem:[%s224 + $0x24] sm:$0xf]
        %v511 = vld [vmem:[%s224 + $0x28] sm:$0xf]
        %v512 = vld [vmem:[%s224 + $0x2c] sm:$0xf]
        %v513 = vld [vmem:[%s224 + $0x30] sm:$0xf]
        %v514 = vld [vmem:[%s224 + $0x34] sm:$0xf]
        %v515 = vld [vmem:[%s224 + $0x38] sm:$0xf]
        %v516 = vld [vmem:[%s224 + $0x3c] sm:$0xf]
        %v517 = vld [vmem:[%s224 + $0x40] sm:$0xf]
        %v518 = vld [vmem:[%s224 + $0x44] sm:$0xf]
        %v519 = vld [vmem:[%s224 + $0x48] sm:$0xf]
        %v520 = vld [vmem:[%s224 + $0x4c] sm:$0xf]
        %v521 = vld [vmem:[%s224 + $0x50] sm:$0xf]
        %v522 = vld [vmem:[%s224 + $0x54] sm:$0xf]
        %v523 = vld [vmem:[%s224 + $0x58] sm:$0xf]
        %v524 = vld [vmem:[%s224 + $0x5c] sm:$0xf]
        %v525 = vld [vmem:[%s224 + $0x60] sm:$0xf]
        %v526 = vld [vmem:[%s224 + $0x64] sm:$0xf]
        %v527 = vld [vmem:[%s224 + $0x68] sm:$0xf]
        %v528 = vld [vmem:[%s224 + $0x6c] sm:$0xf]
        %v529 = vld [vmem:[%s224 + $0x70] sm:$0xf]
        %v530 = vld [vmem:[%s224 + $0x74] sm:$0xf]
        %v531 = vld [vmem:[%s224 + $0x78] sm:$0xf]
        %v532 = vld [vmem:[%s224 + $0x7c] sm:$0xf]
        %533 = vst.msk [vmem:[%s285 + $0x8] sm:$0xf] %vm267, %v501
        %534 = vst.msk [vmem:[%s285 + $0xc] sm:$0xf] %vm267, %v502
        %535 = vst.msk [vmem:[%s285 + $0x1c] sm:$0xf] %vm267, %v503
        %536 = vst.msk [vmem:[%s285 + $0x20] sm:$0xf] %vm267, %v504
        %537 = vst.msk [vmem:[%s285 + $0x30] sm:$0xf] %vm267, %v505
        %538 = vst.msk [vmem:[%s285 + $0x34] sm:$0xf] %vm267, %v506
        %539 = vst.msk [vmem:[%s285 + $0x44] sm:$0xf] %vm267, %v507
        %540 = vst.msk [vmem:[%s285 + $0x48] sm:$0xf] %vm267, %v508
        %541 = vst.msk [vmem:[%s285 + $0x58] sm:$0xf] %vm267, %v509
        %542 = vst.msk [vmem:[%s285 + $0x5c] sm:$0xf] %vm267, %v510
        %543 = vst.msk [vmem:[%s285 + $0x6c] sm:$0xf] %vm267, %v511
        %544 = vst.msk [vmem:[%s285 + $0x70] sm:$0xf] %vm267, %v512
        %545 = vst.msk [vmem:[%s285 + $0x80] sm:$0xf] %vm267, %v513
        %546 = vst.msk [vmem:[%s285 + $0x84] sm:$0xf] %vm267, %v514
        %547 = vst.msk [vmem:[%s285 + $0x94] sm:$0xf] %vm267, %v515
        %548 = vst.msk [vmem:[%s285 + $0x98] sm:$0xf] %vm267, %v516
        %549 = vst.msk [vmem:[%s285 + $0xa8] sm:$0xf] %vm267, %v517
        %550 = vst.msk [vmem:[%s285 + $0xac] sm:$0xf] %vm267, %v518
        %551 = vst.msk [vmem:[%s285 + $0xbc] sm:$0xf] %vm267, %v519
        %552 = vst.msk [vmem:[%s285 + $0xc0] sm:$0xf] %vm267, %v520
        %553 = vst.msk [vmem:[%s285 + $0xd0] sm:$0xf] %vm267, %v521
        %554 = vst.msk [vmem:[%s285 + $0xd4] sm:$0xf] %vm267, %v522
        %555 = vst.msk [vmem:[%s285 + $0xe4] sm:$0xf] %vm267, %v523
        %556 = vst.msk [vmem:[%s285 + $0xe8] sm:$0xf] %vm267, %v524
        %557 = vst.msk [vmem:[%s285 + $0xf8] sm:$0xf] %vm267, %v525
        %558 = vst.msk [vmem:[%s285 + $0xfc] sm:$0xf] %vm267, %v526
        %559 = vst.msk [vmem:[%s285 + $0x10c] sm:$0xf] %vm267, %v527
        %560 = vst.msk [vmem:[%s285 + $0x110] sm:$0xf] %vm267, %v528
        %561 = vst.msk [vmem:[%s285 + $0x120] sm:$0xf] %vm267, %v529
        %562 = vst.msk [vmem:[%s285 + $0x124] sm:$0xf] %vm267, %v530
        %563 = vst.msk [vmem:[%s285 + $0x134] sm:$0xf] %vm267, %v531
        %564 = vst.msk [vmem:[%s285 + $0x138] sm:$0xf] %vm267, %v532
        %v565 = vld [vmem:[#allocation2 + $0x4] sm:$0x8]
        %v566 = vld [vmem:[#allocation2 + $0x8] sm:$0xf]
        %v567 = vld [vmem:[#allocation2 + $0xc] sm:$0xf]
        %v568 = vld [vmem:[#allocation2 + $0x18] sm:$0x8]
        %v569 = vld [vmem:[#allocation2 + $0x1c] sm:$0xf]
        %v570 = vld [vmem:[#allocation2 + $0x20] sm:$0xf]
        %v571 = vld [vmem:[#allocation2 + $0x2c] sm:$0x8]
        %v572 = vld [vmem:[#allocation2 + $0x30] sm:$0xf]
        %v573 = vld [vmem:[#allocation2 + $0x34] sm:$0xf]
        %v574 = vld [vmem:[#allocation2 + $0x40] sm:$0x8]
        %v575 = vld [vmem:[#allocation2 + $0x44] sm:$0xf]
        %v576 = vld [vmem:[#allocation2 + $0x48] sm:$0xf]
        %v577 = vld [vmem:[#allocation2 + $0x54] sm:$0x8]
        %v578 = vld [vmem:[#allocation2 + $0x58] sm:$0xf]
        %v579 = vld [vmem:[#allocation2 + $0x5c] sm:$0xf]
        %v580 = vld [vmem:[#allocation2 + $0x68] sm:$0x8]
        %v581 = vld [vmem:[#allocation2 + $0x6c] sm:$0xf]
        %v582 = vld [vmem:[#allocation2 + $0x70] sm:$0xf]
        %v583 = vld [vmem:[#allocation2 + $0x7c] sm:$0x8]
        %v584 = vld [vmem:[#allocation2 + $0x80] sm:$0xf]
        %v585 = vld [vmem:[#allocation2 + $0x84] sm:$0xf]
        %v586 = vld [vmem:[#allocation2 + $0x90] sm:$0x8]
        %v587 = vld [vmem:[#allocation2 + $0x94] sm:$0xf]
        %v588 = vld [vmem:[#allocation2 + $0x98] sm:$0xf]
        %v589 = vld [vmem:[#allocation2 + $0xa4] sm:$0x8]
        %v590 = vld [vmem:[#allocation2 + $0xa8] sm:$0xf]
        %v591 = vld [vmem:[#allocation2 + $0xac] sm:$0xf]
        %v592 = vld [vmem:[#allocation2 + $0xb8] sm:$0x8]
        %v593 = vld [vmem:[#allocation2 + $0xbc] sm:$0xf]
        %v594 = vld [vmem:[#allocation2 + $0xc0] sm:$0xf]
        %v595 = vld [vmem:[#allocation2 + $0xcc] sm:$0x8]
        %v596 = vld [vmem:[#allocation2 + $0xd0] sm:$0xf]
        %v597 = vld [vmem:[#allocation2 + $0xd4] sm:$0xf]
        %v598 = vld [vmem:[#allocation2 + $0xe0] sm:$0x8]
        %v599 = vld [vmem:[#allocation2 + $0xe4] sm:$0xf]
        %v600 = vld [vmem:[#allocation2 + $0xe8] sm:$0xf]
        %v601 = vld [vmem:[#allocation2 + $0xf4] sm:$0x8]
        %v602 = vld [vmem:[#allocation2 + $0xf8] sm:$0xf]
        %v603 = vld [vmem:[#allocation2 + $0xfc] sm:$0xf]
        %v604 = vld [vmem:[#allocation2 + $0x108] sm:$0x8]
        %v605 = vld [vmem:[#allocation2 + $0x10c] sm:$0xf]
        %v606 = vld [vmem:[#allocation2 + $0x110] sm:$0xf]
        %v607 = vld [vmem:[#allocation2 + $0x11c] sm:$0x8]
        %v608 = vld [vmem:[#allocation2 + $0x120] sm:$0xf]
        %v609 = vld [vmem:[#allocation2 + $0x124] sm:$0xf]
        %v610 = vld [vmem:[#allocation2 + $0x130] sm:$0x8]
        %v611 = vld [vmem:[#allocation2 + $0x134] sm:$0xf]
        %v612 = vld [vmem:[#allocation2 + $0x138] sm:$0xf]
        %vm613 = vsmask.f32 4368
        %vm614 = vmor %vm271, %vm613
        %v616 = vshrl.u32 %v565, 16
        %v618 = vrot.slane %v616, 7
        %v619 = vrot.slane %v618, 4
        %v621 = vshrl.u32 %v566, 16
        %v623 = vrot.slane %v621, 7
        %v624 = vshll.u32 %v566, 16
        %v626 = vor.u32 %v623, %v624
        %v627 = vsel %vm614, %v619, %v626
        %v628 = vrot.slane %v623, 4
        %v630 = vshrl.u32 %v567, 16
        %v632 = vrot.slane %v630, 7
        %v633 = vshll.u32 %v567, 16
        %v635 = vor.u32 %v632, %v633
        %v636 = vsel %vm614, %v628, %v635
        %v638 = vshrl.u32 %v568, 16
        %v640 = vrot.slane %v638, 7
        %v641 = vrot.slane %v640, 4
        %v643 = vshrl.u32 %v569, 16
        %v645 = vrot.slane %v643, 7
        %v646 = vshll.u32 %v569, 16
        %v648 = vor.u32 %v645, %v646
        %v649 = vsel %vm614, %v641, %v648
        %v650 = vrot.slane %v645, 4
        %v652 = vshrl.u32 %v570, 16
        %v654 = vrot.slane %v652, 7
        %v655 = vshll.u32 %v570, 16
        %v657 = vor.u32 %v654, %v655
        %v658 = vsel %vm614, %v650, %v657
        %v660 = vshrl.u32 %v571, 16
        %v662 = vrot.slane %v660, 7
        %v663 = vrot.slane %v662, 4
        %v665 = vshrl.u32 %v572, 16
        %v667 = vrot.slane %v665, 7
        %v668 = vshll.u32 %v572, 16
        %v670 = vor.u32 %v667, %v668
        %v671 = vsel %vm614, %v663, %v670
        %v672 = vrot.slane %v667, 4
        %v674 = vshrl.u32 %v573, 16
        %v676 = vrot.slane %v674, 7
        %v677 = vshll.u32 %v573, 16
        %v679 = vor.u32 %v676, %v677
        %v680 = vsel %vm614, %v672, %v679
        %v682 = vshrl.u32 %v574, 16
        %v684 = vrot.slane %v682, 7
        %v685 = vrot.slane %v684, 4
        %v687 = vshrl.u32 %v575, 16
        %v689 = vrot.slane %v687, 7
        %v690 = vshll.u32 %v575, 16
        %v692 = vor.u32 %v689, %v690
        %v693 = vsel %vm614, %v685, %v692
        %v694 = vrot.slane %v689, 4
        %v696 = vshrl.u32 %v576, 16
        %v698 = vrot.slane %v696, 7
        %v699 = vshll.u32 %v576, 16
        %v701 = vor.u32 %v698, %v699
        %v702 = vsel %vm614, %v694, %v701
        %v704 = vshrl.u32 %v577, 16
        %v706 = vrot.slane %v704, 7
        %v707 = vrot.slane %v706, 4
        %v709 = vshrl.u32 %v578, 16
        %v711 = vrot.slane %v709, 7
        %v712 = vshll.u32 %v578, 16
        %v714 = vor.u32 %v711, %v712
        %v715 = vsel %vm614, %v707, %v714
        %v716 = vrot.slane %v711, 4
        %v718 = vshrl.u32 %v579, 16
        %v720 = vrot.slane %v718, 7
        %v721 = vshll.u32 %v579, 16
        %v723 = vor.u32 %v720, %v721
        %v724 = vsel %vm614, %v716, %v723
        %v726 = vshrl.u32 %v580, 16
        %v728 = vrot.slane %v726, 7
        %v729 = vrot.slane %v728, 4
        %v731 = vshrl.u32 %v581, 16
        %v733 = vrot.slane %v731, 7
        %v734 = vshll.u32 %v581, 16
        %v736 = vor.u32 %v733, %v734
        %v737 = vsel %vm614, %v729, %v736
        %v738 = vrot.slane %v733, 4
        %v740 = vshrl.u32 %v582, 16
        %v742 = vrot.slane %v740, 7
        %v743 = vshll.u32 %v582, 16
        %v745 = vor.u32 %v742, %v743
        %v746 = vsel %vm614, %v738, %v745
        %v748 = vshrl.u32 %v583, 16
        %v750 = vrot.slane %v748, 7
        %v751 = vrot.slane %v750, 4
        %v753 = vshrl.u32 %v584, 16
        %v755 = vrot.slane %v753, 7
        %v756 = vshll.u32 %v584, 16
        %v758 = vor.u32 %v755, %v756
        %v759 = vsel %vm614, %v751, %v758
        %v760 = vrot.slane %v755, 4
        %v762 = vshrl.u32 %v585, 16
        %v764 = vrot.slane %v762, 7
        %v765 = vshll.u32 %v585, 16
        %v767 = vor.u32 %v764, %v765
        %v768 = vsel %vm614, %v760, %v767
        %v770 = vshrl.u32 %v586, 16
        %v772 = vrot.slane %v770, 7
        %v773 = vrot.slane %v772, 4
        %v775 = vshrl.u32 %v587, 16
        %v777 = vrot.slane %v775, 7
        %v778 = vshll.u32 %v587, 16
        %v780 = vor.u32 %v777, %v778
        %v781 = vsel %vm614, %v773, %v780
        %v782 = vrot.slane %v777, 4
        %v784 = vshrl.u32 %v588, 16
        %v786 = vrot.slane %v784, 7
        %v787 = vshll.u32 %v588, 16
        %v789 = vor.u32 %v786, %v787
        %v790 = vsel %vm614, %v782, %v789
        %v792 = vshrl.u32 %v589, 16
        %v794 = vrot.slane %v792, 7
        %v795 = vrot.slane %v794, 4
        %v797 = vshrl.u32 %v590, 16
        %v799 = vrot.slane %v797, 7
        %v800 = vshll.u32 %v590, 16
        %v802 = vor.u32 %v799, %v800
        %v803 = vsel %vm614, %v795, %v802
        %v804 = vrot.slane %v799, 4
        %v806 = vshrl.u32 %v591, 16
        %v808 = vrot.slane %v806, 7
        %v809 = vshll.u32 %v591, 16
        %v811 = vor.u32 %v808, %v809
        %v812 = vsel %vm614, %v804, %v811
        %v814 = vshrl.u32 %v592, 16
        %v816 = vrot.slane %v814, 7
        %v817 = vrot.slane %v816, 4
        %v819 = vshrl.u32 %v593, 16
        %v821 = vrot.slane %v819, 7
        %v822 = vshll.u32 %v593, 16
        %v824 = vor.u32 %v821, %v822
        %v825 = vsel %vm614, %v817, %v824
        %v826 = vrot.slane %v821, 4
        %v828 = vshrl.u32 %v594, 16
        %v830 = vrot.slane %v828, 7
        %v831 = vshll.u32 %v594, 16
        %v833 = vor.u32 %v830, %v831
        %v834 = vsel %vm614, %v826, %v833
        %v836 = vshrl.u32 %v595, 16
        %v838 = vrot.slane %v836, 7
        %v839 = vrot.slane %v838, 4
        %v841 = vshrl.u32 %v596, 16
        %v843 = vrot.slane %v841, 7
        %v844 = vshll.u32 %v596, 16
        %v846 = vor.u32 %v843, %v844
        %v847 = vsel %vm614, %v839, %v846
        %v848 = vrot.slane %v843, 4
        %v850 = vshrl.u32 %v597, 16
        %v852 = vrot.slane %v850, 7
        %v853 = vshll.u32 %v597, 16
        %v855 = vor.u32 %v852, %v853
        %v856 = vsel %vm614, %v848, %v855
        %v858 = vshrl.u32 %v598, 16
        %v860 = vrot.slane %v858, 7
        %v861 = vrot.slane %v860, 4
        %v863 = vshrl.u32 %v599, 16
        %v865 = vrot.slane %v863, 7
        %v866 = vshll.u32 %v599, 16
        %v868 = vor.u32 %v865, %v866
        %v869 = vsel %vm614, %v861, %v868
        %v870 = vrot.slane %v865, 4
        %v872 = vshrl.u32 %v600, 16
        %v874 = vrot.slane %v872, 7
        %v875 = vshll.u32 %v600, 16
        %v877 = vor.u32 %v874, %v875
        %v878 = vsel %vm614, %v870, %v877
        %v880 = vshrl.u32 %v601, 16
        %v882 = vrot.slane %v880, 7
        %v883 = vrot.slane %v882, 4
        %v885 = vshrl.u32 %v602, 16
        %v887 = vrot.slane %v885, 7
        %v888 = vshll.u32 %v602, 16
        %v890 = vor.u32 %v887, %v888
        %v891 = vsel %vm614, %v883, %v890
        %v892 = vrot.slane %v887, 4
        %v894 = vshrl.u32 %v603, 16
        %v896 = vrot.slane %v894, 7
        %v897 = vshll.u32 %v603, 16
        %v899 = vor.u32 %v896, %v897
        %v900 = vsel %vm614, %v892, %v899
        %v902 = vshrl.u32 %v604, 16
        %v904 = vrot.slane %v902, 7
        %v905 = vrot.slane %v904, 4
        %v907 = vshrl.u32 %v605, 16
        %v909 = vrot.slane %v907, 7
        %v910 = vshll.u32 %v605, 16
        %v912 = vor.u32 %v909, %v910
        %v913 = vsel %vm614, %v905, %v912
        %v914 = vrot.slane %v909, 4
        %v916 = vshrl.u32 %v606, 16
        %v918 = vrot.slane %v916, 7
        %v919 = vshll.u32 %v606, 16
        %v921 = vor.u32 %v918, %v919
        %v922 = vsel %vm614, %v914, %v921
        %v924 = vshrl.u32 %v607, 16
        %v926 = vrot.slane %v924, 7
        %v927 = vrot.slane %v926, 4
        %v929 = vshrl.u32 %v608, 16
        %v931 = vrot.slane %v929, 7
        %v932 = vshll.u32 %v608, 16
        %v934 = vor.u32 %v931, %v932
        %v935 = vsel %vm614, %v927, %v934
        %v936 = vrot.slane %v931, 4
        %v938 = vshrl.u32 %v609, 16
        %v940 = vrot.slane %v938, 7
        %v941 = vshll.u32 %v609, 16
        %v943 = vor.u32 %v940, %v941
        %v944 = vsel %vm614, %v936, %v943
        %v946 = vshrl.u32 %v610, 16
        %v948 = vrot.slane %v946, 7
        %v949 = vrot.slane %v948, 4
        %v951 = vshrl.u32 %v611, 16
        %v953 = vrot.slane %v951, 7
        %v954 = vshll.u32 %v611, 16
        %v956 = vor.u32 %v953, %v954
        %v957 = vsel %vm614, %v949, %v956
        %v958 = vrot.slane %v953, 4
        %v960 = vshrl.u32 %v612, 16
        %v962 = vrot.slane %v960, 7
        %v963 = vshll.u32 %v612, 16
        %v965 = vor.u32 %v962, %v963
        %v966 = vsel %vm614, %v958, %v965
        %999 = vst.msk [vmem:[#allocation4] sm:$0xf] %vm267, %v627
        %1000 = vst.msk [vmem:[#allocation4 + $0x8] sm:$0xf] %vm267, %v636
        %1001 = vst.msk [vmem:[#allocation4 + $0x10] sm:$0xf] %vm267, %v649
        %1002 = vst.msk [vmem:[#allocation4 + $0x18] sm:$0xf] %vm267, %v658
        %1003 = vst.msk [vmem:[#allocation4 + $0x20] sm:$0xf] %vm267, %v671
        %1004 = vst.msk [vmem:[#allocation4 + $0x28] sm:$0xf] %vm267, %v680
        %1005 = vst.msk [vmem:[#allocation4 + $0x30] sm:$0xf] %vm267, %v693
        %1006 = vst.msk [vmem:[#allocation4 + $0x38] sm:$0xf] %vm267, %v702
        %1007 = vst.msk [vmem:[#allocation4 + $0x40] sm:$0xf] %vm267, %v715
        %1008 = vst.msk [vmem:[#allocation4 + $0x48] sm:$0xf] %vm267, %v724
        %1009 = vst.msk [vmem:[#allocation4 + $0x50] sm:$0xf] %vm267, %v737
        %1010 = vst.msk [vmem:[#allocation4 + $0x58] sm:$0xf] %vm267, %v746
        %1011 = vst.msk [vmem:[#allocation4 + $0x60] sm:$0xf] %vm267, %v759
        %1012 = vst.msk [vmem:[#allocation4 + $0x68] sm:$0xf] %vm267, %v768
        %1013 = vst.msk [vmem:[#allocation4 + $0x70] sm:$0xf] %vm267, %v781
        %1014 = vst.msk [vmem:[#allocation4 + $0x78] sm:$0xf] %vm267, %v790
        %1015 = vst.msk [vmem:[#allocation4 + $0x80] sm:$0xf] %vm267, %v803
        %1016 = vst.msk [vmem:[#allocation4 + $0x88] sm:$0xf] %vm267, %v812
        %1017 = vst.msk [vmem:[#allocation4 + $0x90] sm:$0xf] %vm267, %v825
        %1018 = vst.msk [vmem:[#allocation4 + $0x98] sm:$0xf] %vm267, %v834
        %1019 = vst.msk [vmem:[#allocation4 + $0xa0] sm:$0xf] %vm267, %v847
        %1020 = vst.msk [vmem:[#allocation4 + $0xa8] sm:$0xf] %vm267, %v856
        %1021 = vst.msk [vmem:[#allocation4 + $0xb0] sm:$0xf] %vm267, %v869
        %1022 = vst.msk [vmem:[#allocation4 + $0xb8] sm:$0xf] %vm267, %v878
        %1023 = vst.msk [vmem:[#allocation4 + $0xc0] sm:$0xf] %vm267, %v891
        %1024 = vst.msk [vmem:[#allocation4 + $0xc8] sm:$0xf] %vm267, %v900
        %1025 = vst.msk [vmem:[#allocation4 + $0xd0] sm:$0xf] %vm267, %v913
        %1026 = vst.msk [vmem:[#allocation4 + $0xd8] sm:$0xf] %vm267, %v922
        %1027 = vst.msk [vmem:[#allocation4 + $0xe0] sm:$0xf] %vm267, %v935
        %1028 = vst.msk [vmem:[#allocation4 + $0xe8] sm:$0xf] %vm267, %v944
        %1029 = vst.msk [vmem:[#allocation4 + $0xf0] sm:$0xf] %vm267, %v957
        %1030 = vst.msk [vmem:[#allocation4 + $0xf8] sm:$0xf] %vm267, %v966
        %v1031 = vld [vmem:[#allocation2 + $0x8] sm:$0xf]
        %v1032 = vld [vmem:[#allocation2 + $0xc] sm:$0xf]
        %v1033 = vld [vmem:[#allocation2 + $0x1c] sm:$0xf]
        %v1034 = vld [vmem:[#allocation2 + $0x20] sm:$0xf]
        %v1035 = vld [vmem:[#allocation2 + $0x30] sm:$0xf]
        %v1036 = vld [vmem:[#allocation2 + $0x34] sm:$0xf]
        %v1037 = vld [vmem:[#allocation2 + $0x44] sm:$0xf]
        %v1038 = vld [vmem:[#allocation2 + $0x48] sm:$0xf]
        %v1039 = vld [vmem:[#allocation2 + $0x58] sm:$0xf]
        %v1040 = vld [vmem:[#allocation2 + $0x5c] sm:$0xf]
        %v1041 = vld [vmem:[#allocation2 + $0x6c] sm:$0xf]
        %v1042 = vld [vmem:[#allocation2 + $0x70] sm:$0xf]
        %v1043 = vld [vmem:[#allocation2 + $0x80] sm:$0xf]
        %v1044 = vld [vmem:[#allocation2 + $0x84] sm:$0xf]
        %v1045 = vld [vmem:[#allocation2 + $0x94] sm:$0xf]
        %v1046 = vld [vmem:[#allocation2 + $0x98] sm:$0xf]
        %v1047 = vld [vmem:[#allocation2 + $0xa8] sm:$0xf]
        %v1048 = vld [vmem:[#allocation2 + $0xac] sm:$0xf]
        %v1049 = vld [vmem:[#allocation2 + $0xbc] sm:$0xf]
        %v1050 = vld [vmem:[#allocation2 + $0xc0] sm:$0xf]
        %v1051 = vld [vmem:[#allocation2 + $0xd0] sm:$0xf]
        %v1052 = vld [vmem:[#allocation2 + $0xd4] sm:$0xf]
        %v1053 = vld [vmem:[#allocation2 + $0xe4] sm:$0xf]
        %v1054 = vld [vmem:[#allocation2 + $0xe8] sm:$0xf]
        %v1055 = vld [vmem:[#allocation2 + $0xf8] sm:$0xf]
        %v1056 = vld [vmem:[#allocation2 + $0xfc] sm:$0xf]
        %v1057 = vld [vmem:[#allocation2 + $0x10c] sm:$0xf]
        %v1058 = vld [vmem:[#allocation2 + $0x110] sm:$0xf]
        %v1059 = vld [vmem:[#allocation2 + $0x120] sm:$0xf]
        %v1060 = vld [vmem:[#allocation2 + $0x124] sm:$0xf]
        %v1061 = vld [vmem:[#allocation2 + $0x134] sm:$0xf]
        %v1062 = vld [vmem:[#allocation2 + $0x138] sm:$0xf]
        %1095 = vrot.lane.b32.xlu0 %v1031, 16
        %v1096 = vpop.permute.xlu0 %1095
        %1097 = vrot.lane.b32.xlu0 %v1032, 16
        %v1098 = vpop.permute.xlu0 %1097
        %1099 = vrot.lane.b32.xlu0 %v1033, 16
        %v1100 = vpop.permute.xlu0 %1099
        %1101 = vrot.lane.b32.xlu0 %v1034, 16
        %v1102 = vpop.permute.xlu0 %1101
        %1103 = vrot.lane.b32.xlu0 %v1035, 16
        %v1104 = vpop.permute.xlu0 %1103
        %1105 = vrot.lane.b32.xlu0 %v1036, 16
        %v1106 = vpop.permute.xlu0 %1105
        %1107 = vrot.lane.b32.xlu0 %v1037, 16
        %v1108 = vpop.permute.xlu0 %1107
        %1109 = vrot.lane.b32.xlu0 %v1038, 16
        %v1110 = vpop.permute.xlu0 %1109
        %1111 = vrot.lane.b32.xlu0 %v1039, 16
        %v1112 = vpop.permute.xlu0 %1111
        %1113 = vrot.lane.b32.xlu0 %v1040, 16
        %v1114 = vpop.permute.xlu0 %1113
        %1115 = vrot.lane.b32.xlu0 %v1041, 16
        %v1116 = vpop.permute.xlu0 %1115
        %1117 = vrot.lane.b32.xlu0 %v1042, 16
        %v1118 = vpop.permute.xlu0 %1117
        %1119 = vrot.lane.b32.xlu0 %v1043, 16
        %v1120 = vpop.permute.xlu0 %1119
        %1121 = vrot.lane.b32.xlu0 %v1044, 16
        %v1122 = vpop.permute.xlu0 %1121
        %1123 = vrot.lane.b32.xlu0 %v1045, 16
        %v1124 = vpop.permute.xlu0 %1123
        %1125 = vrot.lane.b32.xlu0 %v1046, 16
        %v1126 = vpop.permute.xlu0 %1125
        %1127 = vrot.lane.b32.xlu0 %v1047, 16
        %v1128 = vpop.permute.xlu0 %1127
        %1129 = vrot.lane.b32.xlu0 %v1048, 16
        %v1130 = vpop.permute.xlu0 %1129
        %1131 = vrot.lane.b32.xlu0 %v1049, 16
        %v1132 = vpop.permute.xlu0 %1131
        %1133 = vrot.lane.b32.xlu0 %v1050, 16
        %v1134 = vpop.permute.xlu0 %1133
        %1135 = vrot.lane.b32.xlu0 %v1051, 16
        %v1136 = vpop.permute.xlu0 %1135
        %1137 = vrot.lane.b32.xlu0 %v1052, 16
        %v1138 = vpop.permute.xlu0 %1137
        %1139 = vrot.lane.b32.xlu0 %v1053, 16
        %v1140 = vpop.permute.xlu0 %1139
        %1141 = vrot.lane.b32.xlu0 %v1054, 16
        %v1142 = vpop.permute.xlu0 %1141
        %1143 = vrot.lane.b32.xlu0 %v1055, 16
        %v1144 = vpop.permute.xlu0 %1143
        %1145 = vrot.lane.b32.xlu0 %v1056, 16
        %v1146 = vpop.permute.xlu0 %1145
        %1147 = vrot.lane.b32.xlu0 %v1057, 16
        %v1148 = vpop.permute.xlu0 %1147
        %1149 = vrot.lane.b32.xlu0 %v1058, 16
        %v1150 = vpop.permute.xlu0 %1149
        %1151 = vrot.lane.b32.xlu0 %v1059, 16
        %v1152 = vpop.permute.xlu0 %1151
        %1153 = vrot.lane.b32.xlu0 %v1060, 16
        %v1154 = vpop.permute.xlu0 %1153
        %1155 = vrot.lane.b32.xlu0 %v1061, 16
        %v1156 = vpop.permute.xlu0 %1155
        %1157 = vrot.lane.b32.xlu0 %v1062, 16
        %v1158 = vpop.permute.xlu0 %1157
        %vm1191 = vcmask 257152
        %1192 = vst.msk [vmem:[#allocation4] sm:$0xf] %vm1191, %v1096
        %1193 = vst.msk [vmem:[#allocation4 + $0x8] sm:$0xf] %vm1191, %v1098
        %1194 = vst.msk [vmem:[#allocation4 + $0x10] sm:$0xf] %vm1191, %v1100
        %1195 = vst.msk [vmem:[#allocation4 + $0x18] sm:$0xf] %vm1191, %v1102
        %1196 = vst.msk [vmem:[#allocation4 + $0x20] sm:$0xf] %vm1191, %v1104
        %1197 = vst.msk [vmem:[#allocation4 + $0x28] sm:$0xf] %vm1191, %v1106
        %1198 = vst.msk [vmem:[#allocation4 + $0x30] sm:$0xf] %vm1191, %v1108
        %1199 = vst.msk [vmem:[#allocation4 + $0x38] sm:$0xf] %vm1191, %v1110
        %1200 = vst.msk [vmem:[#allocation4 + $0x40] sm:$0xf] %vm1191, %v1112
        %1201 = vst.msk [vmem:[#allocation4 + $0x48] sm:$0xf] %vm1191, %v1114
        %1202 = vst.msk [vmem:[#allocation4 + $0x50] sm:$0xf] %vm1191, %v1116
        %1203 = vst.msk [vmem:[#allocation4 + $0x58] sm:$0xf] %vm1191, %v1118
        %1204 = vst.msk [vmem:[#allocation4 + $0x60] sm:$0xf] %vm1191, %v1120
        %1205 = vst.msk [vmem:[#allocation4 + $0x68] sm:$0xf] %vm1191, %v1122
        %1206 = vst.msk [vmem:[#allocation4 + $0x70] sm:$0xf] %vm1191, %v1124
        %1207 = vst.msk [vmem:[#allocation4 + $0x78] sm:$0xf] %vm1191, %v1126
        %1208 = vst.msk [vmem:[#allocation4 + $0x80] sm:$0xf] %vm1191, %v1128
        %1209 = vst.msk [vmem:[#allocation4 + $0x88] sm:$0xf] %vm1191, %v1130
        %1210 = vst.msk [vmem:[#allocation4 + $0x90] sm:$0xf] %vm1191, %v1132
        %1211 = vst.msk [vmem:[#allocation4 + $0x98] sm:$0xf] %vm1191, %v1134
        %1212 = vst.msk [vmem:[#allocation4 + $0xa0] sm:$0xf] %vm1191, %v1136
        %1213 = vst.msk [vmem:[#allocation4 + $0xa8] sm:$0xf] %vm1191, %v1138
        %1214 = vst.msk [vmem:[#allocation4 + $0xb0] sm:$0xf] %vm1191, %v1140
        %1215 = vst.msk [vmem:[#allocation4 + $0xb8] sm:$0xf] %vm1191, %v1142
        %1216 = vst.msk [vmem:[#allocation4 + $0xc0] sm:$0xf] %vm1191, %v1144
        %1217 = vst.msk [vmem:[#allocation4 + $0xc8] sm:$0xf] %vm1191, %v1146
        %1218 = vst.msk [vmem:[#allocation4 + $0xd0] sm:$0xf] %vm1191, %v1148
        %1219 = vst.msk [vmem:[#allocation4 + $0xd8] sm:$0xf] %vm1191, %v1150
        %1220 = vst.msk [vmem:[#allocation4 + $0xe0] sm:$0xf] %vm1191, %v1152
        %1221 = vst.msk [vmem:[#allocation4 + $0xe8] sm:$0xf] %vm1191, %v1154
        %1222 = vst.msk [vmem:[#allocation4 + $0xf0] sm:$0xf] %vm1191, %v1156
        %1223 = vst.msk [vmem:[#allocation4 + $0xf8] sm:$0xf] %vm1191, %v1158
        %v1224 = vld [vmem:[#allocation2 + $0x8] sm:$0xf]
        %v1225 = vld [vmem:[#allocation2 + $0xc] sm:$0xf]
        %v1226 = vld [vmem:[#allocation2 + $0x10] sm:$0x1]
        %v1227 = vld [vmem:[#allocation2 + $0x1c] sm:$0xf]
        %v1228 = vld [vmem:[#allocation2 + $0x20] sm:$0xf]
        %v1229 = vld [vmem:[#allocation2 + $0x24] sm:$0x1]
        %v1230 = vld [vmem:[#allocation2 + $0x30] sm:$0xf]
        %v1231 = vld [vmem:[#allocation2 + $0x34] sm:$0xf]
        %v1232 = vld [vmem:[#allocation2 + $0x38] sm:$0x1]
        %v1233 = vld [vmem:[#allocation2 + $0x44] sm:$0xf]
        %v1234 = vld [vmem:[#allocation2 + $0x48] sm:$0xf]
        %v1235 = vld [vmem:[#allocation2 + $0x4c] sm:$0x1]
        %v1236 = vld [vmem:[#allocation2 + $0x58] sm:$0xf]
        %v1237 = vld [vmem:[#allocation2 + $0x5c] sm:$0xf]
        %v1238 = vld [vmem:[#allocation2 + $0x60] sm:$0x1]
        %v1239 = vld [vmem:[#allocation2 + $0x6c] sm:$0xf]
        %v1240 = vld [vmem:[#allocation2 + $0x70] sm:$0xf]
        %v1241 = vld [vmem:[#allocation2 + $0x74] sm:$0x1]
        %v1242 = vld [vmem:[#allocation2 + $0x80] sm:$0xf]
        %v1243 = vld [vmem:[#allocation2 + $0x84] sm:$0xf]
        %v1244 = vld [vmem:[#allocation2 + $0x88] sm:$0x1]
        %v1245 = vld [vmem:[#allocation2 + $0x94] sm:$0xf]
        %v1246 = vld [vmem:[#allocation2 + $0x98] sm:$0xf]
        %v1247 = vld [vmem:[#allocation2 + $0x9c] sm:$0x1]
        %v1248 = vld [vmem:[#allocation2 + $0xa8] sm:$0xf]
        %v1249 = vld [vmem:[#allocation2 + $0xac] sm:$0xf]
        %v1250 = vld [vmem:[#allocation2 + $0xb0] sm:$0x1]
        %v1251 = vld [vmem:[#allocation2 + $0xbc] sm:$0xf]
        %v1252 = vld [vmem:[#allocation2 + $0xc0] sm:$0xf]
        %v1253 = vld [vmem:[#allocation2 + $0xc4] sm:$0x1]
        %v1254 = vld [vmem:[#allocation2 + $0xd0] sm:$0xf]
        %v1255 = vld [vmem:[#allocation2 + $0xd4] sm:$0xf]
        %v1256 = vld [vmem:[#allocation2 + $0xd8] sm:$0x1]
        %v1257 = vld [vmem:[#allocation2 + $0xe4] sm:$0xf]
        %v1258 = vld [vmem:[#allocation2 + $0xe8] sm:$0xf]
        %v1259 = vld [vmem:[#allocation2 + $0xec] sm:$0x1]
        %v1260 = vld [vmem:[#allocation2 + $0xf8] sm:$0xf]
        %v1261 = vld [vmem:[#allocation2 + $0xfc] sm:$0xf]
        %v1262 = vld [vmem:[#allocation2 + $0x100] sm:$0x1]
        %v1263 = vld [vmem:[#allocation2 + $0x10c] sm:$0xf]
        %v1264 = vld [vmem:[#allocation2 + $0x110] sm:$0xf]
        %v1265 = vld [vmem:[#allocation2 + $0x114] sm:$0x1]
        %v1266 = vld [vmem:[#allocation2 + $0x120] sm:$0xf]
        %v1267 = vld [vmem:[#allocation2 + $0x124] sm:$0xf]
        %v1268 = vld [vmem:[#allocation2 + $0x128] sm:$0x1]
        %v1269 = vld [vmem:[#allocation2 + $0x134] sm:$0xf]
        %v1270 = vld [vmem:[#allocation2 + $0x138] sm:$0xf]
        %v1271 = vld [vmem:[#allocation2 + $0x13c] sm:$0x1]
        %vm1272 = vsmask.f32 3328
        %vm1273 = vsmask.f32 7440
        %vm1274 = vmor %vm1272, %vm1273
        %v1276 = vshrl.u32 %v1224, 16
        %v1278 = vrot.slane %v1276, 4
        %v1279 = vshll.u32 %v1224, 16
        %v1281 = vrot.slane %v1279, 5
        %v1282 = vor.u32 %v1278, %v1281
        %v1283 = vrot.slane %v1282, 4
        %v1285 = vshll.u32 %v1225, 16
        %v1287 = vrot.slane %v1285, 5
        %v1288 = vsel %vm1274, %v1283, %v1287
        %v1289 = vshrl.u32 %v1225, 16
        %v1291 = vrot.slane %v1289, 4
        %v1292 = vor.u32 %v1291, %v1287
        %v1293 = vrot.slane %v1292, 4
        %v1295 = vshll.u32 %v1226, 16
        %v1297 = vrot.slane %v1295, 5
        %v1298 = vsel %vm1274, %v1293, %v1297
        %v1300 = vshrl.u32 %v1227, 16
        %v1302 = vrot.slane %v1300, 4
        %v1303 = vshll.u32 %v1227, 16
        %v1305 = vrot.slane %v1303, 5
        %v1306 = vor.u32 %v1302, %v1305
        %v1307 = vrot.slane %v1306, 4
        %v1309 = vshll.u32 %v1228, 16
        %v1311 = vrot.slane %v1309, 5
        %v1312 = vsel %vm1274, %v1307, %v1311
        %v1313 = vshrl.u32 %v1228, 16
        %v1315 = vrot.slane %v1313, 4
        %v1316 = vor.u32 %v1315, %v1311
        %v1317 = vrot.slane %v1316, 4
        %v1319 = vshll.u32 %v1229, 16
        %v1321 = vrot.slane %v1319, 5
        %v1322 = vsel %vm1274, %v1317, %v1321
        %v1324 = vshrl.u32 %v1230, 16
        %v1326 = vrot.slane %v1324, 4
        %v1327 = vshll.u32 %v1230, 16
        %v1329 = vrot.slane %v1327, 5
        %v1330 = vor.u32 %v1326, %v1329
        %v1331 = vrot.slane %v1330, 4
        %v1333 = vshll.u32 %v1231, 16
        %v1335 = vrot.slane %v1333, 5
        %v1336 = vsel %vm1274, %v1331, %v1335
        %v1337 = vshrl.u32 %v1231, 16
        %v1339 = vrot.slane %v1337, 4
        %v1340 = vor.u32 %v1339, %v1335
        %v1341 = vrot.slane %v1340, 4
        %v1343 = vshll.u32 %v1232, 16
        %v1345 = vrot.slane %v1343, 5
        %v1346 = vsel %vm1274, %v1341, %v1345
        %v1348 = vshrl.u32 %v1233, 16
        %v1350 = vrot.slane %v1348, 4
        %v1351 = vshll.u32 %v1233, 16
        %v1353 = vrot.slane %v1351, 5
        %v1354 = vor.u32 %v1350, %v1353
        %v1355 = vrot.slane %v1354, 4
        %v1357 = vshll.u32 %v1234, 16
        %v1359 = vrot.slane %v1357, 5
        %v1360 = vsel %vm1274, %v1355, %v1359
        %v1361 = vshrl.u32 %v1234, 16
        %v1363 = vrot.slane %v1361, 4
        %v1364 = vor.u32 %v1363, %v1359
        %v1365 = vrot.slane %v1364, 4
        %v1367 = vshll.u32 %v1235, 16
        %v1369 = vrot.slane %v1367, 5
        %v1370 = vsel %vm1274, %v1365, %v1369
        %v1372 = vshrl.u32 %v1236, 16
        %v1374 = vrot.slane %v1372, 4
        %v1375 = vshll.u32 %v1236, 16
        %v1377 = vrot.slane %v1375, 5
        %v1378 = vor.u32 %v1374, %v1377
        %v1379 = vrot.slane %v1378, 4
        %v1381 = vshll.u32 %v1237, 16
        %v1383 = vrot.slane %v1381, 5
        %v1384 = vsel %vm1274, %v1379, %v1383
        %v1385 = vshrl.u32 %v1237, 16
        %v1387 = vrot.slane %v1385, 4
        %v1388 = vor.u32 %v1387, %v1383
        %v1389 = vrot.slane %v1388, 4
        %v1391 = vshll.u32 %v1238, 16
        %v1393 = vrot.slane %v1391, 5
        %v1394 = vsel %vm1274, %v1389, %v1393
        %v1396 = vshrl.u32 %v1239, 16
        %v1398 = vrot.slane %v1396, 4
        %v1399 = vshll.u32 %v1239, 16
        %v1401 = vrot.slane %v1399, 5
        %v1402 = vor.u32 %v1398, %v1401
        %v1403 = vrot.slane %v1402, 4
        %v1405 = vshll.u32 %v1240, 16
        %v1407 = vrot.slane %v1405, 5
        %v1408 = vsel %vm1274, %v1403, %v1407
        %v1409 = vshrl.u32 %v1240, 16
        %v1411 = vrot.slane %v1409, 4
        %v1412 = vor.u32 %v1411, %v1407
        %v1413 = vrot.slane %v1412, 4
        %v1415 = vshll.u32 %v1241, 16
        %v1417 = vrot.slane %v1415, 5
        %v1418 = vsel %vm1274, %v1413, %v1417
        %v1420 = vshrl.u32 %v1242, 16
        %v1422 = vrot.slane %v1420, 4
        %v1423 = vshll.u32 %v1242, 16
        %v1425 = vrot.slane %v1423, 5
        %v1426 = vor.u32 %v1422, %v1425
        %v1427 = vrot.slane %v1426, 4
        %v1429 = vshll.u32 %v1243, 16
        %v1431 = vrot.slane %v1429, 5
        %v1432 = vsel %vm1274, %v1427, %v1431
        %v1433 = vshrl.u32 %v1243, 16
        %v1435 = vrot.slane %v1433, 4
        %v1436 = vor.u32 %v1435, %v1431
        %v1437 = vrot.slane %v1436, 4
        %v1439 = vshll.u32 %v1244, 16
        %v1441 = vrot.slane %v1439, 5
        %v1442 = vsel %vm1274, %v1437, %v1441
        %v1444 = vshrl.u32 %v1245, 16
        %v1446 = vrot.slane %v1444, 4
        %v1447 = vshll.u32 %v1245, 16
        %v1449 = vrot.slane %v1447, 5
        %v1450 = vor.u32 %v1446, %v1449
        %v1451 = vrot.slane %v1450, 4
        %v1453 = vshll.u32 %v1246, 16
        %v1455 = vrot.slane %v1453, 5
        %v1456 = vsel %vm1274, %v1451, %v1455
        %v1457 = vshrl.u32 %v1246, 16
        %v1459 = vrot.slane %v1457, 4
        %v1460 = vor.u32 %v1459, %v1455
        %v1461 = vrot.slane %v1460, 4
        %v1463 = vshll.u32 %v1247, 16
        %v1465 = vrot.slane %v1463, 5
        %v1466 = vsel %vm1274, %v1461, %v1465
        %v1468 = vshrl.u32 %v1248, 16
        %v1470 = vrot.slane %v1468, 4
        %v1471 = vshll.u32 %v1248, 16
        %v1473 = vrot.slane %v1471, 5
        %v1474 = vor.u32 %v1470, %v1473
        %v1475 = vrot.slane %v1474, 4
        %v1477 = vshll.u32 %v1249, 16
        %v1479 = vrot.slane %v1477, 5
        %v1480 = vsel %vm1274, %v1475, %v1479
        %v1481 = vshrl.u32 %v1249, 16
        %v1483 = vrot.slane %v1481, 4
        %v1484 = vor.u32 %v1483, %v1479
        %v1485 = vrot.slane %v1484, 4
        %v1487 = vshll.u32 %v1250, 16
        %v1489 = vrot.slane %v1487, 5
        %v1490 = vsel %vm1274, %v1485, %v1489
        %v1492 = vshrl.u32 %v1251, 16
        %v1494 = vrot.slane %v1492, 4
        %v1495 = vshll.u32 %v1251, 16
        %v1497 = vrot.slane %v1495, 5
        %v1498 = vor.u32 %v1494, %v1497
        %v1499 = vrot.slane %v1498, 4
        %v1501 = vshll.u32 %v1252, 16
        %v1503 = vrot.slane %v1501, 5
        %v1504 = vsel %vm1274, %v1499, %v1503
        %v1505 = vshrl.u32 %v1252, 16
        %v1507 = vrot.slane %v1505, 4
        %v1508 = vor.u32 %v1507, %v1503
        %v1509 = vrot.slane %v1508, 4
        %v1511 = vshll.u32 %v1253, 16
        %v1513 = vrot.slane %v1511, 5
        %v1514 = vsel %vm1274, %v1509, %v1513
        %v1516 = vshrl.u32 %v1254, 16
        %v1518 = vrot.slane %v1516, 4
        %v1519 = vshll.u32 %v1254, 16
        %v1521 = vrot.slane %v1519, 5
        %v1522 = vor.u32 %v1518, %v1521
        %v1523 = vrot.slane %v1522, 4
        %v1525 = vshll.u32 %v1255, 16
        %v1527 = vrot.slane %v1525, 5
        %v1528 = vsel %vm1274, %v1523, %v1527
        %v1529 = vshrl.u32 %v1255, 16
        %v1531 = vrot.slane %v1529, 4
        %v1532 = vor.u32 %v1531, %v1527
        %v1533 = vrot.slane %v1532, 4
        %v1535 = vshll.u32 %v1256, 16
        %v1537 = vrot.slane %v1535, 5
        %v1538 = vsel %vm1274, %v1533, %v1537
        %v1540 = vshrl.u32 %v1257, 16
        %v1542 = vrot.slane %v1540, 4
        %v1543 = vshll.u32 %v1257, 16
        %v1545 = vrot.slane %v1543, 5
        %v1546 = vor.u32 %v1542, %v1545
        %v1547 = vrot.slane %v1546, 4
        %v1549 = vshll.u32 %v1258, 16
        %v1551 = vrot.slane %v1549, 5
        %v1552 = vsel %vm1274, %v1547, %v1551
        %v1553 = vshrl.u32 %v1258, 16
        %v1555 = vrot.slane %v1553, 4
        %v1556 = vor.u32 %v1555, %v1551
        %v1557 = vrot.slane %v1556, 4
        %v1559 = vshll.u32 %v1259, 16
        %v1561 = vrot.slane %v1559, 5
        %v1562 = vsel %vm1274, %v1557, %v1561
        %v1564 = vshrl.u32 %v1260, 16
        %v1566 = vrot.slane %v1564, 4
        %v1567 = vshll.u32 %v1260, 16
        %v1569 = vrot.slane %v1567, 5
        %v1570 = vor.u32 %v1566, %v1569
        %v1571 = vrot.slane %v1570, 4
        %v1573 = vshll.u32 %v1261, 16
        %v1575 = vrot.slane %v1573, 5
        %v1576 = vsel %vm1274, %v1571, %v1575
        %v1577 = vshrl.u32 %v1261, 16
        %v1579 = vrot.slane %v1577, 4
        %v1580 = vor.u32 %v1579, %v1575
        %v1581 = vrot.slane %v1580, 4
        %v1583 = vshll.u32 %v1262, 16
        %v1585 = vrot.slane %v1583, 5
        %v1586 = vsel %vm1274, %v1581, %v1585
        %v1588 = vshrl.u32 %v1263, 16
        %v1590 = vrot.slane %v1588, 4
        %v1591 = vshll.u32 %v1263, 16
        %v1593 = vrot.slane %v1591, 5
        %v1594 = vor.u32 %v1590, %v1593
        %v1595 = vrot.slane %v1594, 4
        %v1597 = vshll.u32 %v1264, 16
        %v1599 = vrot.slane %v1597, 5
        %v1600 = vsel %vm1274, %v1595, %v1599
        %v1601 = vshrl.u32 %v1264, 16
        %v1603 = vrot.slane %v1601, 4
        %v1604 = vor.u32 %v1603, %v1599
        %v1605 = vrot.slane %v1604, 4
        %v1607 = vshll.u32 %v1265, 16
        %v1609 = vrot.slane %v1607, 5
        %v1610 = vsel %vm1274, %v1605, %v1609
        %v1612 = vshrl.u32 %v1266, 16
        %v1614 = vrot.slane %v1612, 4
        %v1615 = vshll.u32 %v1266, 16
        %v1617 = vrot.slane %v1615, 5
        %v1618 = vor.u32 %v1614, %v1617
        %v1619 = vrot.slane %v1618, 4
        %v1621 = vshll.u32 %v1267, 16
        %v1623 = vrot.slane %v1621, 5
        %v1624 = vsel %vm1274, %v1619, %v1623
        %v1625 = vshrl.u32 %v1267, 16
        %v1627 = vrot.slane %v1625, 4
        %v1628 = vor.u32 %v1627, %v1623
        %v1629 = vrot.slane %v1628, 4
        %v1631 = vshll.u32 %v1268, 16
        %v1633 = vrot.slane %v1631, 5
        %v1634 = vsel %vm1274, %v1629, %v1633
        %v1636 = vshrl.u32 %v1269, 16
        %v1638 = vrot.slane %v1636, 4
        %v1639 = vshll.u32 %v1269, 16
        %v1641 = vrot.slane %v1639, 5
        %v1642 = vor.u32 %v1638, %v1641
        %v1643 = vrot.slane %v1642, 4
        %v1645 = vshll.u32 %v1270, 16
        %v1647 = vrot.slane %v1645, 5
        %v1648 = vsel %vm1274, %v1643, %v1647
        %v1649 = vshrl.u32 %v1270, 16
        %v1651 = vrot.slane %v1649, 4
        %v1652 = vor.u32 %v1651, %v1647
        %v1653 = vrot.slane %v1652, 4
        %v1655 = vshll.u32 %v1271, 16
        %v1657 = vrot.slane %v1655, 5
        %v1658 = vsel %vm1274, %v1653, %v1657
        %1659 = vrot.lane.b32.xlu0 %v1288, 32
        %v1660 = vpop.permute.xlu0 %1659
        %1661 = vrot.lane.b32.xlu0 %v1298, 32
        %v1662 = vpop.permute.xlu0 %1661
        %1663 = vrot.lane.b32.xlu0 %v1312, 32
        %v1664 = vpop.permute.xlu0 %1663
        %1665 = vrot.lane.b32.xlu0 %v1322, 32
        %v1666 = vpop.permute.xlu0 %1665
        %1667 = vrot.lane.b32.xlu0 %v1336, 32
        %v1668 = vpop.permute.xlu0 %1667
        %1669 = vrot.lane.b32.xlu0 %v1346, 32
        %v1670 = vpop.permute.xlu0 %1669
        %1671 = vrot.lane.b32.xlu0 %v1360, 32
        %v1672 = vpop.permute.xlu0 %1671
        %1673 = vrot.lane.b32.xlu0 %v1370, 32
        %v1674 = vpop.permute.xlu0 %1673
        %1675 = vrot.lane.b32.xlu0 %v1384, 32
        %v1676 = vpop.permute.xlu0 %1675
        %1677 = vrot.lane.b32.xlu0 %v1394, 32
        %v1678 = vpop.permute.xlu0 %1677
        %1679 = vrot.lane.b32.xlu0 %v1408, 32
        %v1680 = vpop.permute.xlu0 %1679
        %1681 = vrot.lane.b32.xlu0 %v1418, 32
        %v1682 = vpop.permute.xlu0 %1681
        %1683 = vrot.lane.b32.xlu0 %v1432, 32
        %v1684 = vpop.permute.xlu0 %1683
        %1685 = vrot.lane.b32.xlu0 %v1442, 32
        %v1686 = vpop.permute.xlu0 %1685
        %1687 = vrot.lane.b32.xlu0 %v1456, 32
        %v1688 = vpop.permute.xlu0 %1687
        %1689 = vrot.lane.b32.xlu0 %v1466, 32
        %v1690 = vpop.permute.xlu0 %1689
        %1691 = vrot.lane.b32.xlu0 %v1480, 32
        %v1692 = vpop.permute.xlu0 %1691
        %1693 = vrot.lane.b32.xlu0 %v1490, 32
        %v1694 = vpop.permute.xlu0 %1693
        %1695 = vrot.lane.b32.xlu0 %v1504, 32
        %v1696 = vpop.permute.xlu0 %1695
        %1697 = vrot.lane.b32.xlu0 %v1514, 32
        %v1698 = vpop.permute.xlu0 %1697
        %1699 = vrot.lane.b32.xlu0 %v1528, 32
        %v1700 = vpop.permute.xlu0 %1699
        %1701 = vrot.lane.b32.xlu0 %v1538, 32
        %v1702 = vpop.permute.xlu0 %1701
        %1703 = vrot.lane.b32.xlu0 %v1552, 32
        %v1704 = vpop.permute.xlu0 %1703
        %1705 = vrot.lane.b32.xlu0 %v1562, 32
        %v1706 = vpop.permute.xlu0 %1705
        %1707 = vrot.lane.b32.xlu0 %v1576, 32
        %v1708 = vpop.permute.xlu0 %1707
        %1709 = vrot.lane.b32.xlu0 %v1586, 32
        %v1710 = vpop.permute.xlu0 %1709
        %1711 = vrot.lane.b32.xlu0 %v1600, 32
        %v1712 = vpop.permute.xlu0 %1711
        %1713 = vrot.lane.b32.xlu0 %v1610, 32
        %v1714 = vpop.permute.xlu0 %1713
        %1715 = vrot.lane.b32.xlu0 %v1624, 32
        %v1716 = vpop.permute.xlu0 %1715
        %1717 = vrot.lane.b32.xlu0 %v1634, 32
        %v1718 = vpop.permute.xlu0 %1717
        %1719 = vrot.lane.b32.xlu0 %v1648, 32
        %v1720 = vpop.permute.xlu0 %1719
        %1721 = vrot.lane.b32.xlu0 %v1658, 32
        %v1722 = vpop.permute.xlu0 %1721
        %vm1755 = vcmask 388352
        %1756 = vst.msk [vmem:[#allocation4] sm:$0xf] %vm1755, %v1660
        %1757 = vst.msk [vmem:[#allocation4 + $0x8] sm:$0xf] %vm1755, %v1662
        %1758 = vst.msk [vmem:[#allocation4 + $0x10] sm:$0xf] %vm1755, %v1664
        %1759 = vst.msk [vmem:[#allocation4 + $0x18] sm:$0xf] %vm1755, %v1666
        %1760 = vst.msk [vmem:[#allocation4 + $0x20] sm:$0xf] %vm1755, %v1668
        %1761 = vst.msk [vmem:[#allocation4 + $0x28] sm:$0xf] %vm1755, %v1670
        %1762 = vst.msk [vmem:[#allocation4 + $0x30] sm:$0xf] %vm1755, %v1672
        %1763 = vst.msk [vmem:[#allocation4 + $0x38] sm:$0xf] %vm1755, %v1674
        %1764 = vst.msk [vmem:[#allocation4 + $0x40] sm:$0xf] %vm1755, %v1676
        %1765 = vst.msk [vmem:[#allocation4 + $0x48] sm:$0xf] %vm1755, %v1678
        %1766 = vst.msk [vmem:[#allocation4 + $0x50] sm:$0xf] %vm1755, %v1680
        %1767 = vst.msk [vmem:[#allocation4 + $0x58] sm:$0xf] %vm1755, %v1682
        %1768 = vst.msk [vmem:[#allocation4 + $0x60] sm:$0xf] %vm1755, %v1684
        %1769 = vst.msk [vmem:[#allocation4 + $0x68] sm:$0xf] %vm1755, %v1686
        %1770 = vst.msk [vmem:[#allocation4 + $0x70] sm:$0xf] %vm1755, %v1688
        %1771 = vst.msk [vmem:[#allocation4 + $0x78] sm:$0xf] %vm1755, %v1690
        %1772 = vst.msk [vmem:[#allocation4 + $0x80] sm:$0xf] %vm1755, %v1692
        %1773 = vst.msk [vmem:[#allocation4 + $0x88] sm:$0xf] %vm1755, %v1694
        %1774 = vst.msk [vmem:[#allocation4 + $0x90] sm:$0xf] %vm1755, %v1696
        %1775 = vst.msk [vmem:[#allocation4 + $0x98] sm:$0xf] %vm1755, %v1698
        %1776 = vst.msk [vmem:[#allocation4 + $0xa0] sm:$0xf] %vm1755, %v1700
        %1777 = vst.msk [vmem:[#allocation4 + $0xa8] sm:$0xf] %vm1755, %v1702
        %1778 = vst.msk [vmem:[#allocation4 + $0xb0] sm:$0xf] %vm1755, %v1704
        %1779 = vst.msk [vmem:[#allocation4 + $0xb8] sm:$0xf] %vm1755, %v1706
        %1780 = vst.msk [vmem:[#allocation4 + $0xc0] sm:$0xf] %vm1755, %v1708
        %1781 = vst.msk [vmem:[#allocation4 + $0xc8] sm:$0xf] %vm1755, %v1710
        %1782 = vst.msk [vmem:[#allocation4 + $0xd0] sm:$0xf] %vm1755, %v1712
        %1783 = vst.msk [vmem:[#allocation4 + $0xd8] sm:$0xf] %vm1755, %v1714
        %1784 = vst.msk [vmem:[#allocation4 + $0xe0] sm:$0xf] %vm1755, %v1716
        %1785 = vst.msk [vmem:[#allocation4 + $0xe8] sm:$0xf] %vm1755, %v1718
        %1786 = vst.msk [vmem:[#allocation4 + $0xf0] sm:$0xf] %vm1755, %v1720
        %1787 = vst.msk [vmem:[#allocation4 + $0xf8] sm:$0xf] %vm1755, %v1722
        %v1788 = vld [vmem:[%s285 + $0x4] sm:$0x8]
        %v1789 = vld [vmem:[%s285 + $0x8] sm:$0xf]
        %v1790 = vld [vmem:[%s285 + $0xc] sm:$0xf]
        %v1791 = vld [vmem:[%s285 + $0x18] sm:$0x8]
        %v1792 = vld [vmem:[%s285 + $0x1c] sm:$0xf]
        %v1793 = vld [vmem:[%s285 + $0x20] sm:$0xf]
        %v1794 = vld [vmem:[%s285 + $0x2c] sm:$0x8]
        %v1795 = vld [vmem:[%s285 + $0x30] sm:$0xf]
        %v1796 = vld [vmem:[%s285 + $0x34] sm:$0xf]
        %v1797 = vld [vmem:[%s285 + $0x40] sm:$0x8]
        %v1798 = vld [vmem:[%s285 + $0x44] sm:$0xf]
        %v1799 = vld [vmem:[%s285 + $0x48] sm:$0xf]
        %v1800 = vld [vmem:[%s285 + $0x54] sm:$0x8]
        %v1801 = vld [vmem:[%s285 + $0x58] sm:$0xf]
        %v1802 = vld [vmem:[%s285 + $0x5c] sm:$0xf]
        %v1803 = vld [vmem:[%s285 + $0x68] sm:$0x8]
        %v1804 = vld [vmem:[%s285 + $0x6c] sm:$0xf]
        %v1805 = vld [vmem:[%s285 + $0x70] sm:$0xf]
        %v1806 = vld [vmem:[%s285 + $0x7c] sm:$0x8]
        %v1807 = vld [vmem:[%s285 + $0x80] sm:$0xf]
        %v1808 = vld [vmem:[%s285 + $0x84] sm:$0xf]
        %v1809 = vld [vmem:[%s285 + $0x90] sm:$0x8]
        %v1810 = vld [vmem:[%s285 + $0x94] sm:$0xf]
        %v1811 = vld [vmem:[%s285 + $0x98] sm:$0xf]
        %v1812 = vld [vmem:[%s285 + $0xa4] sm:$0x8]
        %v1813 = vld [vmem:[%s285 + $0xa8] sm:$0xf]
        %v1814 = vld [vmem:[%s285 + $0xac] sm:$0xf]
        %v1815 = vld [vmem:[%s285 + $0xb8] sm:$0x8]
        %v1816 = vld [vmem:[%s285 + $0xbc] sm:$0xf]
        %v1817 = vld [vmem:[%s285 + $0xc0] sm:$0xf]
        %v1818 = vld [vmem:[%s285 + $0xcc] sm:$0x8]
        %v1819 = vld [vmem:[%s285 + $0xd0] sm:$0xf]
        %v1820 = vld [vmem:[%s285 + $0xd4] sm:$0xf]
        %v1821 = vld [vmem:[%s285 + $0xe0] sm:$0x8]
        %v1822 = vld [vmem:[%s285 + $0xe4] sm:$0xf]
        %v1823 = vld [vmem:[%s285 + $0xe8] sm:$0xf]
        %v1824 = vld [vmem:[%s285 + $0xf4] sm:$0x8]
        %v1825 = vld [vmem:[%s285 + $0xf8] sm:$0xf]
        %v1826 = vld [vmem:[%s285 + $0xfc] sm:$0xf]
        %v1827 = vld [vmem:[%s285 + $0x108] sm:$0x8]
        %v1828 = vld [vmem:[%s285 + $0x10c] sm:$0xf]
        %v1829 = vld [vmem:[%s285 + $0x110] sm:$0xf]
        %v1830 = vld [vmem:[%s285 + $0x11c] sm:$0x8]
        %v1831 = vld [vmem:[%s285 + $0x120] sm:$0xf]
        %v1832 = vld [vmem:[%s285 + $0x124] sm:$0xf]
        %v1833 = vld [vmem:[%s285 + $0x130] sm:$0x8]
        %v1834 = vld [vmem:[%s285 + $0x134] sm:$0xf]
        %v1835 = vld [vmem:[%s285 + $0x138] sm:$0xf]
        %v1837 = vshrl.u32 %v1788, 16
        %v1839 = vrot.slane %v1837, 7
        %v1840 = vrot.slane %v1839, 4
        %v1842 = vshrl.u32 %v1789, 16
        %v1844 = vrot.slane %v1842, 7
        %v1845 = vshll.u32 %v1789, 16
        %v1847 = vor.u32 %v1844, %v1845
        %v1848 = vsel %vm614, %v1840, %v1847
        %v1849 = vrot.slane %v1844, 4
        %v1851 = vshrl.u32 %v1790, 16
        %v1853 = vrot.slane %v1851, 7
        %v1854 = vshll.u32 %v1790, 16
        %v1856 = vor.u32 %v1853, %v1854
        %v1857 = vsel %vm614, %v1849, %v1856
        %v1859 = vshrl.u32 %v1791, 16
        %v1861 = vrot.slane %v1859, 7
        %v1862 = vrot.slane %v1861, 4
        %v1864 = vshrl.u32 %v1792, 16
        %v1866 = vrot.slane %v1864, 7
        %v1867 = vshll.u32 %v1792, 16
        %v1869 = vor.u32 %v1866, %v1867
        %v1870 = vsel %vm614, %v1862, %v1869
        %v1871 = vrot.slane %v1866, 4
        %v1873 = vshrl.u32 %v1793, 16
        %v1875 = vrot.slane %v1873, 7
        %v1876 = vshll.u32 %v1793, 16
        %v1878 = vor.u32 %v1875, %v1876
        %v1879 = vsel %vm614, %v1871, %v1878
        %v1881 = vshrl.u32 %v1794, 16
        %v1883 = vrot.slane %v1881, 7
        %v1884 = vrot.slane %v1883, 4
        %v1886 = vshrl.u32 %v1795, 16
        %v1888 = vrot.slane %v1886, 7
        %v1889 = vshll.u32 %v1795, 16
        %v1891 = vor.u32 %v1888, %v1889
        %v1892 = vsel %vm614, %v1884, %v1891
        %v1893 = vrot.slane %v1888, 4
        %v1895 = vshrl.u32 %v1796, 16
        %v1897 = vrot.slane %v1895, 7
        %v1898 = vshll.u32 %v1796, 16
        %v1900 = vor.u32 %v1897, %v1898
        %v1901 = vsel %vm614, %v1893, %v1900
        %v1903 = vshrl.u32 %v1797, 16
        %v1905 = vrot.slane %v1903, 7
        %v1906 = vrot.slane %v1905, 4
        %v1908 = vshrl.u32 %v1798, 16
        %v1910 = vrot.slane %v1908, 7
        %v1911 = vshll.u32 %v1798, 16
        %v1913 = vor.u32 %v1910, %v1911
        %v1914 = vsel %vm614, %v1906, %v1913
        %v1915 = vrot.slane %v1910, 4
        %v1917 = vshrl.u32 %v1799, 16
        %v1919 = vrot.slane %v1917, 7
        %v1920 = vshll.u32 %v1799, 16
        %v1922 = vor.u32 %v1919, %v1920
        %v1923 = vsel %vm614, %v1915, %v1922
        %v1925 = vshrl.u32 %v1800, 16
        %v1927 = vrot.slane %v1925, 7
        %v1928 = vrot.slane %v1927, 4
        %v1930 = vshrl.u32 %v1801, 16
        %v1932 = vrot.slane %v1930, 7
        %v1933 = vshll.u32 %v1801, 16
        %v1935 = vor.u32 %v1932, %v1933
        %v1936 = vsel %vm614, %v1928, %v1935
        %v1937 = vrot.slane %v1932, 4
        %v1939 = vshrl.u32 %v1802, 16
        %v1941 = vrot.slane %v1939, 7
        %v1942 = vshll.u32 %v1802, 16
        %v1944 = vor.u32 %v1941, %v1942
        %v1945 = vsel %vm614, %v1937, %v1944
        %v1947 = vshrl.u32 %v1803, 16
        %v1949 = vrot.slane %v1947, 7
        %v1950 = vrot.slane %v1949, 4
        %v1952 = vshrl.u32 %v1804, 16
        %v1954 = vrot.slane %v1952, 7
        %v1955 = vshll.u32 %v1804, 16
        %v1957 = vor.u32 %v1954, %v1955
        %v1958 = vsel %vm614, %v1950, %v1957
        %v1959 = vrot.slane %v1954, 4
        %v1961 = vshrl.u32 %v1805, 16
        %v1963 = vrot.slane %v1961, 7
        %v1964 = vshll.u32 %v1805, 16
        %v1966 = vor.u32 %v1963, %v1964
        %v1967 = vsel %vm614, %v1959, %v1966
        %v1969 = vshrl.u32 %v1806, 16
        %v1971 = vrot.slane %v1969, 7
        %v1972 = vrot.slane %v1971, 4
        %v1974 = vshrl.u32 %v1807, 16
        %v1976 = vrot.slane %v1974, 7
        %v1977 = vshll.u32 %v1807, 16
        %v1979 = vor.u32 %v1976, %v1977
        %v1980 = vsel %vm614, %v1972, %v1979
        %v1981 = vrot.slane %v1976, 4
        %v1983 = vshrl.u32 %v1808, 16
        %v1985 = vrot.slane %v1983, 7
        %v1986 = vshll.u32 %v1808, 16
        %v1988 = vor.u32 %v1985, %v1986
        %v1989 = vsel %vm614, %v1981, %v1988
        %v1991 = vshrl.u32 %v1809, 16
        %v1993 = vrot.slane %v1991, 7
        %v1994 = vrot.slane %v1993, 4
        %v1996 = vshrl.u32 %v1810, 16
        %v1998 = vrot.slane %v1996, 7
        %v1999 = vshll.u32 %v1810, 16
        %v2001 = vor.u32 %v1998, %v1999
        %v2002 = vsel %vm614, %v1994, %v2001
        %v2003 = vrot.slane %v1998, 4
        %v2005 = vshrl.u32 %v1811, 16
        %v2007 = vrot.slane %v2005, 7
        %v2008 = vshll.u32 %v1811, 16
        %v2010 = vor.u32 %v2007, %v2008
        %v2011 = vsel %vm614, %v2003, %v2010
        %v2013 = vshrl.u32 %v1812, 16
        %v2015 = vrot.slane %v2013, 7
        %v2016 = vrot.slane %v2015, 4
        %v2018 = vshrl.u32 %v1813, 16
        %v2020 = vrot.slane %v2018, 7
        %v2021 = vshll.u32 %v1813, 16
        %v2023 = vor.u32 %v2020, %v2021
        %v2024 = vsel %vm614, %v2016, %v2023
        %v2025 = vrot.slane %v2020, 4
        %v2027 = vshrl.u32 %v1814, 16
        %v2029 = vrot.slane %v2027, 7
        %v2030 = vshll.u32 %v1814, 16
        %v2032 = vor.u32 %v2029, %v2030
        %v2033 = vsel %vm614, %v2025, %v2032
        %v2035 = vshrl.u32 %v1815, 16
        %v2037 = vrot.slane %v2035, 7
        %v2038 = vrot.slane %v2037, 4
        %v2040 = vshrl.u32 %v1816, 16
        %v2042 = vrot.slane %v2040, 7
        %v2043 = vshll.u32 %v1816, 16
        %v2045 = vor.u32 %v2042, %v2043
        %v2046 = vsel %vm614, %v2038, %v2045
        %v2047 = vrot.slane %v2042, 4
        %v2049 = vshrl.u32 %v1817, 16
        %v2051 = vrot.slane %v2049, 7
        %v2052 = vshll.u32 %v1817, 16
        %v2054 = vor.u32 %v2051, %v2052
        %v2055 = vsel %vm614, %v2047, %v2054
        %v2057 = vshrl.u32 %v1818, 16
        %v2059 = vrot.slane %v2057, 7
        %v2060 = vrot.slane %v2059, 4
        %v2062 = vshrl.u32 %v1819, 16
        %v2064 = vrot.slane %v2062, 7
        %v2065 = vshll.u32 %v1819, 16
        %v2067 = vor.u32 %v2064, %v2065
        %v2068 = vsel %vm614, %v2060, %v2067
        %v2069 = vrot.slane %v2064, 4
        %v2071 = vshrl.u32 %v1820, 16
        %v2073 = vrot.slane %v2071, 7
        %v2074 = vshll.u32 %v1820, 16
        %v2076 = vor.u32 %v2073, %v2074
        %v2077 = vsel %vm614, %v2069, %v2076
        %v2079 = vshrl.u32 %v1821, 16
        %v2081 = vrot.slane %v2079, 7
        %v2082 = vrot.slane %v2081, 4
        %v2084 = vshrl.u32 %v1822, 16
        %v2086 = vrot.slane %v2084, 7
        %v2087 = vshll.u32 %v1822, 16
        %v2089 = vor.u32 %v2086, %v2087
        %v2090 = vsel %vm614, %v2082, %v2089
        %v2091 = vrot.slane %v2086, 4
        %v2093 = vshrl.u32 %v1823, 16
        %v2095 = vrot.slane %v2093, 7
        %v2096 = vshll.u32 %v1823, 16
        %v2098 = vor.u32 %v2095, %v2096
        %v2099 = vsel %vm614, %v2091, %v2098
        %v2101 = vshrl.u32 %v1824, 16
        %v2103 = vrot.slane %v2101, 7
        %v2104 = vrot.slane %v2103, 4
        %v2106 = vshrl.u32 %v1825, 16
        %v2108 = vrot.slane %v2106, 7
        %v2109 = vshll.u32 %v1825, 16
        %v2111 = vor.u32 %v2108, %v2109
        %v2112 = vsel %vm614, %v2104, %v2111
        %v2113 = vrot.slane %v2108, 4
        %v2115 = vshrl.u32 %v1826, 16
        %v2117 = vrot.slane %v2115, 7
        %v2118 = vshll.u32 %v1826, 16
        %v2120 = vor.u32 %v2117, %v2118
        %v2121 = vsel %vm614, %v2113, %v2120
        %v2123 = vshrl.u32 %v1827, 16
        %v2125 = vrot.slane %v2123, 7
        %v2126 = vrot.slane %v2125, 4
        %v2128 = vshrl.u32 %v1828, 16
        %v2130 = vrot.slane %v2128, 7
        %v2131 = vshll.u32 %v1828, 16
        %v2133 = vor.u32 %v2130, %v2131
        %v2134 = vsel %vm614, %v2126, %v2133
        %v2135 = vrot.slane %v2130, 4
        %v2137 = vshrl.u32 %v1829, 16
        %v2139 = vrot.slane %v2137, 7
        %v2140 = vshll.u32 %v1829, 16
        %v2142 = vor.u32 %v2139, %v2140
        %v2143 = vsel %vm614, %v2135, %v2142
        %v2145 = vshrl.u32 %v1830, 16
        %v2147 = vrot.slane %v2145, 7
        %v2148 = vrot.slane %v2147, 4
        %v2150 = vshrl.u32 %v1831, 16
        %v2152 = vrot.slane %v2150, 7
        %v2153 = vshll.u32 %v1831, 16
        %v2155 = vor.u32 %v2152, %v2153
        %v2156 = vsel %vm614, %v2148, %v2155
        %v2157 = vrot.slane %v2152, 4
        %v2159 = vshrl.u32 %v1832, 16
        %v2161 = vrot.slane %v2159, 7
        %v2162 = vshll.u32 %v1832, 16
        %v2164 = vor.u32 %v2161, %v2162
        %v2165 = vsel %vm614, %v2157, %v2164
        %v2167 = vshrl.u32 %v1833, 16
        %v2169 = vrot.slane %v2167, 7
        %v2170 = vrot.slane %v2169, 4
        %v2172 = vshrl.u32 %v1834, 16
        %v2174 = vrot.slane %v2172, 7
        %v2175 = vshll.u32 %v1834, 16
        %v2177 = vor.u32 %v2174, %v2175
        %v2178 = vsel %vm614, %v2170, %v2177
        %v2179 = vrot.slane %v2174, 4
        %v2181 = vshrl.u32 %v1835, 16
        %v2183 = vrot.slane %v2181, 7
        %v2184 = vshll.u32 %v1835, 16
        %v2186 = vor.u32 %v2183, %v2184
        %v2187 = vsel %vm614, %v2179, %v2186
        %2188 = vrot.lane.b32.xlu0 %v1848, 48
        %v2189 = vpop.permute.xlu0 %2188
        %2190 = vrot.lane.b32.xlu0 %v1857, 48
        %v2191 = vpop.permute.xlu0 %2190
        %2192 = vrot.lane.b32.xlu0 %v1870, 48
        %v2193 = vpop.permute.xlu0 %2192
        %2194 = vrot.lane.b32.xlu0 %v1879, 48
        %v2195 = vpop.permute.xlu0 %2194
        %2196 = vrot.lane.b32.xlu0 %v1892, 48
        %v2197 = vpop.permute.xlu0 %2196
        %2198 = vrot.lane.b32.xlu0 %v1901, 48
        %v2199 = vpop.permute.xlu0 %2198
        %2200 = vrot.lane.b32.xlu0 %v1914, 48
        %v2201 = vpop.permute.xlu0 %2200
        %2202 = vrot.lane.b32.xlu0 %v1923, 48
        %v2203 = vpop.permute.xlu0 %2202
        %2204 = vrot.lane.b32.xlu0 %v1936, 48
        %v2205 = vpop.permute.xlu0 %2204
        %2206 = vrot.lane.b32.xlu0 %v1945, 48
        %v2207 = vpop.permute.xlu0 %2206
        %2208 = vrot.lane.b32.xlu0 %v1958, 48
        %v2209 = vpop.permute.xlu0 %2208
        %2210 = vrot.lane.b32.xlu0 %v1967, 48
        %v2211 = vpop.permute.xlu0 %2210
        %2212 = vrot.lane.b32.xlu0 %v1980, 48
        %v2213 = vpop.permute.xlu0 %2212
        %2214 = vrot.lane.b32.xlu0 %v1989, 48
        %v2215 = vpop.permute.xlu0 %2214
        %2216 = vrot.lane.b32.xlu0 %v2002, 48
        %v2217 = vpop.permute.xlu0 %2216
        %2218 = vrot.lane.b32.xlu0 %v2011, 48
        %v2219 = vpop.permute.xlu0 %2218
        %2220 = vrot.lane.b32.xlu0 %v2024, 48
        %v2221 = vpop.permute.xlu0 %2220
        %2222 = vrot.lane.b32.xlu0 %v2033, 48
        %v2223 = vpop.permute.xlu0 %2222
        %2224 = vrot.lane.b32.xlu0 %v2046, 48
        %v2225 = vpop.permute.xlu0 %2224
        %2226 = vrot.lane.b32.xlu0 %v2055, 48
        %v2227 = vpop.permute.xlu0 %2226
        %2228 = vrot.lane.b32.xlu0 %v2068, 48
        %v2229 = vpop.permute.xlu0 %2228
        %2230 = vrot.lane.b32.xlu0 %v2077, 48
        %v2231 = vpop.permute.xlu0 %2230
        %2232 = vrot.lane.b32.xlu0 %v2090, 48
        %v2233 = vpop.permute.xlu0 %2232
        %2234 = vrot.lane.b32.xlu0 %v2099, 48
        %v2235 = vpop.permute.xlu0 %2234
        %2236 = vrot.lane.b32.xlu0 %v2112, 48
        %v2237 = vpop.permute.xlu0 %2236
        %2238 = vrot.lane.b32.xlu0 %v2121, 48
        %v2239 = vpop.permute.xlu0 %2238
        %2240 = vrot.lane.b32.xlu0 %v2134, 48
        %v2241 = vpop.permute.xlu0 %2240
        %2242 = vrot.lane.b32.xlu0 %v2143, 48
        %v2243 = vpop.permute.xlu0 %2242
        %2244 = vrot.lane.b32.xlu0 %v2156, 48
        %v2245 = vpop.permute.xlu0 %2244
        %2246 = vrot.lane.b32.xlu0 %v2165, 48
        %v2247 = vpop.permute.xlu0 %2246
        %2248 = vrot.lane.b32.xlu0 %v2178, 48
        %v2249 = vpop.permute.xlu0 %2248
        %2250 = vrot.lane.b32.xlu0 %v2187, 48
        %v2251 = vpop.permute.xlu0 %2250
        %vm2284 = vcmask 519552
        %2285 = vst.msk [vmem:[#allocation4] sm:$0xf] %vm2284, %v2189
        %2286 = vst.msk [vmem:[#allocation4 + $0x8] sm:$0xf] %vm2284, %v2191
        %2287 = vst.msk [vmem:[#allocation4 + $0x10] sm:$0xf] %vm2284, %v2193
        %2288 = vst.msk [vmem:[#allocation4 + $0x18] sm:$0xf] %vm2284, %v2195
        %2289 = vst.msk [vmem:[#allocation4 + $0x20] sm:$0xf] %vm2284, %v2197
        %2290 = vst.msk [vmem:[#allocation4 + $0x28] sm:$0xf] %vm2284, %v2199
        %2291 = vst.msk [vmem:[#allocation4 + $0x30] sm:$0xf] %vm2284, %v2201
        %2292 = vst.msk [vmem:[#allocation4 + $0x38] sm:$0xf] %vm2284, %v2203
        %2293 = vst.msk [vmem:[#allocation4 + $0x40] sm:$0xf] %vm2284, %v2205
        %2294 = vst.msk [vmem:[#allocation4 + $0x48] sm:$0xf] %vm2284, %v2207
        %2295 = vst.msk [vmem:[#allocation4 + $0x50] sm:$0xf] %vm2284, %v2209
        %2296 = vst.msk [vmem:[#allocation4 + $0x58] sm:$0xf] %vm2284, %v2211
        %2297 = vst.msk [vmem:[#allocation4 + $0x60] sm:$0xf] %vm2284, %v2213
        %2298 = vst.msk [vmem:[#allocation4 + $0x68] sm:$0xf] %vm2284, %v2215
        %2299 = vst.msk [vmem:[#allocation4 + $0x70] sm:$0xf] %vm2284, %v2217
        %2300 = vst.msk [vmem:[#allocation4 + $0x78] sm:$0xf] %vm2284, %v2219
        %2301 = vst.msk [vmem:[#allocation4 + $0x80] sm:$0xf] %vm2284, %v2221
        %2302 = vst.msk [vmem:[#allocation4 + $0x88] sm:$0xf] %vm2284, %v2223
        %2303 = vst.msk [vmem:[#allocation4 + $0x90] sm:$0xf] %vm2284, %v2225
        %2304 = vst.msk [vmem:[#allocation4 + $0x98] sm:$0xf] %vm2284, %v2227
        %2305 = vst.msk [vmem:[#allocation4 + $0xa0] sm:$0xf] %vm2284, %v2229
        %2306 = vst.msk [vmem:[#allocation4 + $0xa8] sm:$0xf] %vm2284, %v2231
        %2307 = vst.msk [vmem:[#allocation4 + $0xb0] sm:$0xf] %vm2284, %v2233
        %2308 = vst.msk [vmem:[#allocation4 + $0xb8] sm:$0xf] %vm2284, %v2235
        %2309 = vst.msk [vmem:[#allocation4 + $0xc0] sm:$0xf] %vm2284, %v2237
        %2310 = vst.msk [vmem:[#allocation4 + $0xc8] sm:$0xf] %vm2284, %v2239
        %2311 = vst.msk [vmem:[#allocation4 + $0xd0] sm:$0xf] %vm2284, %v2241
        %2312 = vst.msk [vmem:[#allocation4 + $0xd8] sm:$0xf] %vm2284, %v2243
        %2313 = vst.msk [vmem:[#allocation4 + $0xe0] sm:$0xf] %vm2284, %v2245
        %2314 = vst.msk [vmem:[#allocation4 + $0xe8] sm:$0xf] %vm2284, %v2247
        %2315 = vst.msk [vmem:[#allocation4 + $0xf0] sm:$0xf] %vm2284, %v2249
        %2316 = vst.msk [vmem:[#allocation4 + $0xf8] sm:$0xf] %vm2284, %v2251
        %v2317 = vld [vmem:[%s285 + $0x8] sm:$0xf]
        %v2318 = vld [vmem:[%s285 + $0xc] sm:$0xf]
        %v2319 = vld [vmem:[%s285 + $0x1c] sm:$0xf]
        %v2320 = vld [vmem:[%s285 + $0x20] sm:$0xf]
        %v2321 = vld [vmem:[%s285 + $0x30] sm:$0xf]
        %v2322 = vld [vmem:[%s285 + $0x34] sm:$0xf]
        %v2323 = vld [vmem:[%s285 + $0x44] sm:$0xf]
        %v2324 = vld [vmem:[%s285 + $0x48] sm:$0xf]
        %v2325 = vld [vmem:[%s285 + $0x58] sm:$0xf]
        %v2326 = vld [vmem:[%s285 + $0x5c] sm:$0xf]
        %v2327 = vld [vmem:[%s285 + $0x6c] sm:$0xf]
        %v2328 = vld [vmem:[%s285 + $0x70] sm:$0xf]
        %v2329 = vld [vmem:[%s285 + $0x80] sm:$0xf]
        %v2330 = vld [vmem:[%s285 + $0x84] sm:$0xf]
        %v2331 = vld [vmem:[%s285 + $0x94] sm:$0xf]
        %v2332 = vld [vmem:[%s285 + $0x98] sm:$0xf]
        %v2333 = vld [vmem:[%s285 + $0xa8] sm:$0xf]
        %v2334 = vld [vmem:[%s285 + $0xac] sm:$0xf]
        %v2335 = vld [vmem:[%s285 + $0xbc] sm:$0xf]
        %v2336 = vld [vmem:[%s285 + $0xc0] sm:$0xf]
        %v2337 = vld [vmem:[%s285 + $0xd0] sm:$0xf]
        %v2338 = vld [vmem:[%s285 + $0xd4] sm:$0xf]
        %v2339 = vld [vmem:[%s285 + $0xe4] sm:$0xf]
        %v2340 = vld [vmem:[%s285 + $0xe8] sm:$0xf]
        %v2341 = vld [vmem:[%s285 + $0xf8] sm:$0xf]
        %v2342 = vld [vmem:[%s285 + $0xfc] sm:$0xf]
        %v2343 = vld [vmem:[%s285 + $0x10c] sm:$0xf]
        %v2344 = vld [vmem:[%s285 + $0x110] sm:$0xf]
        %v2345 = vld [vmem:[%s285 + $0x120] sm:$0xf]
        %v2346 = vld [vmem:[%s285 + $0x124] sm:$0xf]
        %v2347 = vld [vmem:[%s285 + $0x134] sm:$0xf]
        %v2348 = vld [vmem:[%s285 + $0x138] sm:$0xf]
        %2381 = vrot.lane.b32.xlu0 %v2317, 64
        %v2382 = vpop.permute.xlu0 %2381
        %2383 = vrot.lane.b32.xlu0 %v2318, 64
        %v2384 = vpop.permute.xlu0 %2383
        %2385 = vrot.lane.b32.xlu0 %v2319, 64
        %v2386 = vpop.permute.xlu0 %2385
        %2387 = vrot.lane.b32.xlu0 %v2320, 64
        %v2388 = vpop.permute.xlu0 %2387
        %2389 = vrot.lane.b32.xlu0 %v2321, 64
        %v2390 = vpop.permute.xlu0 %2389
        %2391 = vrot.lane.b32.xlu0 %v2322, 64
        %v2392 = vpop.permute.xlu0 %2391
        %2393 = vrot.lane.b32.xlu0 %v2323, 64
        %v2394 = vpop.permute.xlu0 %2393
        %2395 = vrot.lane.b32.xlu0 %v2324, 64
        %v2396 = vpop.permute.xlu0 %2395
        %2397 = vrot.lane.b32.xlu0 %v2325, 64
        %v2398 = vpop.permute.xlu0 %2397
        %2399 = vrot.lane.b32.xlu0 %v2326, 64
        %v2400 = vpop.permute.xlu0 %2399
        %2401 = vrot.lane.b32.xlu0 %v2327, 64
        %v2402 = vpop.permute.xlu0 %2401
        %2403 = vrot.lane.b32.xlu0 %v2328, 64
        %v2404 = vpop.permute.xlu0 %2403
        %2405 = vrot.lane.b32.xlu0 %v2329, 64
        %v2406 = vpop.permute.xlu0 %2405
        %2407 = vrot.lane.b32.xlu0 %v2330, 64
        %v2408 = vpop.permute.xlu0 %2407
        %2409 = vrot.lane.b32.xlu0 %v2331, 64
        %v2410 = vpop.permute.xlu0 %2409
        %2411 = vrot.lane.b32.xlu0 %v2332, 64
        %v2412 = vpop.permute.xlu0 %2411
        %2413 = vrot.lane.b32.xlu0 %v2333, 64
        %v2414 = vpop.permute.xlu0 %2413
        %2415 = vrot.lane.b32.xlu0 %v2334, 64
        %v2416 = vpop.permute.xlu0 %2415
        %2417 = vrot.lane.b32.xlu0 %v2335, 64
        %v2418 = vpop.permute.xlu0 %2417
        %2419 = vrot.lane.b32.xlu0 %v2336, 64
        %v2420 = vpop.permute.xlu0 %2419
        %2421 = vrot.lane.b32.xlu0 %v2337, 64
        %v2422 = vpop.permute.xlu0 %2421
        %2423 = vrot.lane.b32.xlu0 %v2338, 64
        %v2424 = vpop.permute.xlu0 %2423
        %2425 = vrot.lane.b32.xlu0 %v2339, 64
        %v2426 = vpop.permute.xlu0 %2425
        %2427 = vrot.lane.b32.xlu0 %v2340, 64
        %v2428 = vpop.permute.xlu0 %2427
        %2429 = vrot.lane.b32.xlu0 %v2341, 64
        %v2430 = vpop.permute.xlu0 %2429
        %2431 = vrot.lane.b32.xlu0 %v2342, 64
        %v2432 = vpop.permute.xlu0 %2431
        %2433 = vrot.lane.b32.xlu0 %v2343, 64
        %v2434 = vpop.permute.xlu0 %2433
        %2435 = vrot.lane.b32.xlu0 %v2344, 64
        %v2436 = vpop.permute.xlu0 %2435
        %2437 = vrot.lane.b32.xlu0 %v2345, 64
        %v2438 = vpop.permute.xlu0 %2437
        %2439 = vrot.lane.b32.xlu0 %v2346, 64
        %v2440 = vpop.permute.xlu0 %2439
        %2441 = vrot.lane.b32.xlu0 %v2347, 64
        %v2442 = vpop.permute.xlu0 %2441
        %2443 = vrot.lane.b32.xlu0 %v2348, 64
        %v2444 = vpop.permute.xlu0 %2443
        %vm2477 = vcmask 650752
        %2478 = vst.msk [vmem:[#allocation4] sm:$0xf] %vm2477, %v2382
        %2479 = vst.msk [vmem:[#allocation4 + $0x8] sm:$0xf] %vm2477, %v2384
        %2480 = vst.msk [vmem:[#allocation4 + $0x10] sm:$0xf] %vm2477, %v2386
        %2481 = vst.msk [vmem:[#allocation4 + $0x18] sm:$0xf] %vm2477, %v2388
        %2482 = vst.msk [vmem:[#allocation4 + $0x20] sm:$0xf] %vm2477, %v2390
        %2483 = vst.msk [vmem:[#allocation4 + $0x28] sm:$0xf] %vm2477, %v2392
        %2484 = vst.msk [vmem:[#allocation4 + $0x30] sm:$0xf] %vm2477, %v2394
        %2485 = vst.msk [vmem:[#allocation4 + $0x38] sm:$0xf] %vm2477, %v2396
        %2486 = vst.msk [vmem:[#allocation4 + $0x40] sm:$0xf] %vm2477, %v2398
        %2487 = vst.msk [vmem:[#allocation4 + $0x48] sm:$0xf] %vm2477, %v2400
        %2488 = vst.msk [vmem:[#allocation4 + $0x50] sm:$0xf] %vm2477, %v2402
        %2489 = vst.msk [vmem:[#allocation4 + $0x58] sm:$0xf] %vm2477, %v2404
        %2490 = vst.msk [vmem:[#allocation4 + $0x60] sm:$0xf] %vm2477, %v2406
        %2491 = vst.msk [vmem:[#allocation4 + $0x68] sm:$0xf] %vm2477, %v2408
        %2492 = vst.msk [vmem:[#allocation4 + $0x70] sm:$0xf] %vm2477, %v2410
        %2493 = vst.msk [vmem:[#allocation4 + $0x78] sm:$0xf] %vm2477, %v2412
        %2494 = vst.msk [vmem:[#allocation4 + $0x80] sm:$0xf] %vm2477, %v2414
        %2495 = vst.msk [vmem:[#allocation4 + $0x88] sm:$0xf] %vm2477, %v2416
        %2496 = vst.msk [vmem:[#allocation4 + $0x90] sm:$0xf] %vm2477, %v2418
        %2497 = vst.msk [vmem:[#allocation4 + $0x98] sm:$0xf] %vm2477, %v2420
        %2498 = vst.msk [vmem:[#allocation4 + $0xa0] sm:$0xf] %vm2477, %v2422
        %2499 = vst.msk [vmem:[#allocation4 + $0xa8] sm:$0xf] %vm2477, %v2424
        %2500 = vst.msk [vmem:[#allocation4 + $0xb0] sm:$0xf] %vm2477, %v2426
        %2501 = vst.msk [vmem:[#allocation4 + $0xb8] sm:$0xf] %vm2477, %v2428
        %2502 = vst.msk [vmem:[#allocation4 + $0xc0] sm:$0xf] %vm2477, %v2430
        %2503 = vst.msk [vmem:[#allocation4 + $0xc8] sm:$0xf] %vm2477, %v2432
        %2504 = vst.msk [vmem:[#allocation4 + $0xd0] sm:$0xf] %vm2477, %v2434
        %2505 = vst.msk [vmem:[#allocation4 + $0xd8] sm:$0xf] %vm2477, %v2436
        %2506 = vst.msk [vmem:[#allocation4 + $0xe0] sm:$0xf] %vm2477, %v2438
        %2507 = vst.msk [vmem:[#allocation4 + $0xe8] sm:$0xf] %vm2477, %v2440
        %2508 = vst.msk [vmem:[#allocation4 + $0xf0] sm:$0xf] %vm2477, %v2442
        %2509 = vst.msk [vmem:[#allocation4 + $0xf8] sm:$0xf] %vm2477, %v2444
        %v2510 = vld [vmem:[%s285 + $0x8] sm:$0xf]
        %v2511 = vld [vmem:[%s285 + $0xc] sm:$0xf]
        %v2512 = vld [vmem:[%s285 + $0x10] sm:$0x1]
        %v2513 = vld [vmem:[%s285 + $0x1c] sm:$0xf]
        %v2514 = vld [vmem:[%s285 + $0x20] sm:$0xf]
        %v2515 = vld [vmem:[%s285 + $0x24] sm:$0x1]
        %v2516 = vld [vmem:[%s285 + $0x30] sm:$0xf]
        %v2517 = vld [vmem:[%s285 + $0x34] sm:$0xf]
        %v2518 = vld [vmem:[%s285 + $0x38] sm:$0x1]
        %v2519 = vld [vmem:[%s285 + $0x44] sm:$0xf]
        %v2520 = vld [vmem:[%s285 + $0x48] sm:$0xf]
        %v2521 = vld [vmem:[%s285 + $0x4c] sm:$0x1]
        %v2522 = vld [vmem:[%s285 + $0x58] sm:$0xf]
        %v2523 = vld [vmem:[%s285 + $0x5c] sm:$0xf]
        %v2524 = vld [vmem:[%s285 + $0x60] sm:$0x1]
        %v2525 = vld [vmem:[%s285 + $0x6c] sm:$0xf]
        %v2526 = vld [vmem:[%s285 + $0x70] sm:$0xf]
        %v2527 = vld [vmem:[%s285 + $0x74] sm:$0x1]
        %v2528 = vld [vmem:[%s285 + $0x80] sm:$0xf]
        %v2529 = vld [vmem:[%s285 + $0x84] sm:$0xf]
        %v2530 = vld [vmem:[%s285 + $0x88] sm:$0x1]
        %v2531 = vld [vmem:[%s285 + $0x94] sm:$0xf]
        %v2532 = vld [vmem:[%s285 + $0x98] sm:$0xf]
        %v2533 = vld [vmem:[%s285 + $0x9c] sm:$0x1]
        %v2534 = vld [vmem:[%s285 + $0xa8] sm:$0xf]
        %v2535 = vld [vmem:[%s285 + $0xac] sm:$0xf]
        %v2536 = vld [vmem:[%s285 + $0xb0] sm:$0x1]
        %v2537 = vld [vmem:[%s285 + $0xbc] sm:$0xf]
        %v2538 = vld [vmem:[%s285 + $0xc0] sm:$0xf]
        %v2539 = vld [vmem:[%s285 + $0xc4] sm:$0x1]
        %v2540 = vld [vmem:[%s285 + $0xd0] sm:$0xf]
        %v2541 = vld [vmem:[%s285 + $0xd4] sm:$0xf]
        %v2542 = vld [vmem:[%s285 + $0xd8] sm:$0x1]
        %v2543 = vld [vmem:[%s285 + $0xe4] sm:$0xf]
        %v2544 = vld [vmem:[%s285 + $0xe8] sm:$0xf]
        %v2545 = vld [vmem:[%s285 + $0xec] sm:$0x1]
        %v2546 = vld [vmem:[%s285 + $0xf8] sm:$0xf]
        %v2547 = vld [vmem:[%s285 + $0xfc] sm:$0xf]
        %v2548 = vld [vmem:[%s285 + $0x100] sm:$0x1]
        %v2549 = vld [vmem:[%s285 + $0x10c] sm:$0xf]
        %v2550 = vld [vmem:[%s285 + $0x110] sm:$0xf]
        %v2551 = vld [vmem:[%s285 + $0x114] sm:$0x1]
        %v2552 = vld [vmem:[%s285 + $0x120] sm:$0xf]
        %v2553 = vld [vmem:[%s285 + $0x124] sm:$0xf]
        %v2554 = vld [vmem:[%s285 + $0x128] sm:$0x1]
        %v2555 = vld [vmem:[%s285 + $0x134] sm:$0xf]
        %v2556 = vld [vmem:[%s285 + $0x138] sm:$0xf]
        %v2557 = vld [vmem:[%s285 + $0x13c] sm:$0x1]
        %v2559 = vshrl.u32 %v2510, 16
        %v2561 = vrot.slane %v2559, 4
        %v2562 = vshll.u32 %v2510, 16
        %v2564 = vrot.slane %v2562, 5
        %v2565 = vor.u32 %v2561, %v2564
        %v2566 = vrot.slane %v2565, 4
        %v2568 = vshll.u32 %v2511, 16
        %v2570 = vrot.slane %v2568, 5
        %v2571 = vsel %vm1274, %v2566, %v2570
        %v2572 = vshrl.u32 %v2511, 16
        %v2574 = vrot.slane %v2572, 4
        %v2575 = vor.u32 %v2574, %v2570
        %v2576 = vrot.slane %v2575, 4
        %v2578 = vshll.u32 %v2512, 16
        %v2580 = vrot.slane %v2578, 5
        %v2581 = vsel %vm1274, %v2576, %v2580
        %v2583 = vshrl.u32 %v2513, 16
        %v2585 = vrot.slane %v2583, 4
        %v2586 = vshll.u32 %v2513, 16
        %v2588 = vrot.slane %v2586, 5
        %v2589 = vor.u32 %v2585, %v2588
        %v2590 = vrot.slane %v2589, 4
        %v2592 = vshll.u32 %v2514, 16
        %v2594 = vrot.slane %v2592, 5
        %v2595 = vsel %vm1274, %v2590, %v2594
        %v2596 = vshrl.u32 %v2514, 16
        %v2598 = vrot.slane %v2596, 4
        %v2599 = vor.u32 %v2598, %v2594
        %v2600 = vrot.slane %v2599, 4
        %v2602 = vshll.u32 %v2515, 16
        %v2604 = vrot.slane %v2602, 5
        %v2605 = vsel %vm1274, %v2600, %v2604
        %v2607 = vshrl.u32 %v2516, 16
        %v2609 = vrot.slane %v2607, 4
        %v2610 = vshll.u32 %v2516, 16
        %v2612 = vrot.slane %v2610, 5
        %v2613 = vor.u32 %v2609, %v2612
        %v2614 = vrot.slane %v2613, 4
        %v2616 = vshll.u32 %v2517, 16
        %v2618 = vrot.slane %v2616, 5
        %v2619 = vsel %vm1274, %v2614, %v2618
        %v2620 = vshrl.u32 %v2517, 16
        %v2622 = vrot.slane %v2620, 4
        %v2623 = vor.u32 %v2622, %v2618
        %v2624 = vrot.slane %v2623, 4
        %v2626 = vshll.u32 %v2518, 16
        %v2628 = vrot.slane %v2626, 5
        %v2629 = vsel %vm1274, %v2624, %v2628
        %v2631 = vshrl.u32 %v2519, 16
        %v2633 = vrot.slane %v2631, 4
        %v2634 = vshll.u32 %v2519, 16
        %v2636 = vrot.slane %v2634, 5
        %v2637 = vor.u32 %v2633, %v2636
        %v2638 = vrot.slane %v2637, 4
        %v2640 = vshll.u32 %v2520, 16
        %v2642 = vrot.slane %v2640, 5
        %v2643 = vsel %vm1274, %v2638, %v2642
        %v2644 = vshrl.u32 %v2520, 16
        %v2646 = vrot.slane %v2644, 4
        %v2647 = vor.u32 %v2646, %v2642
        %v2648 = vrot.slane %v2647, 4
        %v2650 = vshll.u32 %v2521, 16
        %v2652 = vrot.slane %v2650, 5
        %v2653 = vsel %vm1274, %v2648, %v2652
        %v2655 = vshrl.u32 %v2522, 16
        %v2657 = vrot.slane %v2655, 4
        %v2658 = vshll.u32 %v2522, 16
        %v2660 = vrot.slane %v2658, 5
        %v2661 = vor.u32 %v2657, %v2660
        %v2662 = vrot.slane %v2661, 4
        %v2664 = vshll.u32 %v2523, 16
        %v2666 = vrot.slane %v2664, 5
        %v2667 = vsel %vm1274, %v2662, %v2666
        %v2668 = vshrl.u32 %v2523, 16
        %v2670 = vrot.slane %v2668, 4
        %v2671 = vor.u32 %v2670, %v2666
        %v2672 = vrot.slane %v2671, 4
        %v2674 = vshll.u32 %v2524, 16
        %v2676 = vrot.slane %v2674, 5
        %v2677 = vsel %vm1274, %v2672, %v2676
        %v2679 = vshrl.u32 %v2525, 16
        %v2681 = vrot.slane %v2679, 4
        %v2682 = vshll.u32 %v2525, 16
        %v2684 = vrot.slane %v2682, 5
        %v2685 = vor.u32 %v2681, %v2684
        %v2686 = vrot.slane %v2685, 4
        %v2688 = vshll.u32 %v2526, 16
        %v2690 = vrot.slane %v2688, 5
        %v2691 = vsel %vm1274, %v2686, %v2690
        %v2692 = vshrl.u32 %v2526, 16
        %v2694 = vrot.slane %v2692, 4
        %v2695 = vor.u32 %v2694, %v2690
        %v2696 = vrot.slane %v2695, 4
        %v2698 = vshll.u32 %v2527, 16
        %v2700 = vrot.slane %v2698, 5
        %v2701 = vsel %vm1274, %v2696, %v2700
        %v2703 = vshrl.u32 %v2528, 16
        %v2705 = vrot.slane %v2703, 4
        %v2706 = vshll.u32 %v2528, 16
        %v2708 = vrot.slane %v2706, 5
        %v2709 = vor.u32 %v2705, %v2708
        %v2710 = vrot.slane %v2709, 4
        %v2712 = vshll.u32 %v2529, 16
        %v2714 = vrot.slane %v2712, 5
        %v2715 = vsel %vm1274, %v2710, %v2714
        %v2716 = vshrl.u32 %v2529, 16
        %v2718 = vrot.slane %v2716, 4
        %v2719 = vor.u32 %v2718, %v2714
        %v2720 = vrot.slane %v2719, 4
        %v2722 = vshll.u32 %v2530, 16
        %v2724 = vrot.slane %v2722, 5
        %v2725 = vsel %vm1274, %v2720, %v2724
        %v2727 = vshrl.u32 %v2531, 16
        %v2729 = vrot.slane %v2727, 4
        %v2730 = vshll.u32 %v2531, 16
        %v2732 = vrot.slane %v2730, 5
        %v2733 = vor.u32 %v2729, %v2732
        %v2734 = vrot.slane %v2733, 4
        %v2736 = vshll.u32 %v2532, 16
        %v2738 = vrot.slane %v2736, 5
        %v2739 = vsel %vm1274, %v2734, %v2738
        %v2740 = vshrl.u32 %v2532, 16
        %v2742 = vrot.slane %v2740, 4
        %v2743 = vor.u32 %v2742, %v2738
        %v2744 = vrot.slane %v2743, 4
        %v2746 = vshll.u32 %v2533, 16
        %v2748 = vrot.slane %v2746, 5
        %v2749 = vsel %vm1274, %v2744, %v2748
        %v2751 = vshrl.u32 %v2534, 16
        %v2753 = vrot.slane %v2751, 4
        %v2754 = vshll.u32 %v2534, 16
        %v2756 = vrot.slane %v2754, 5
        %v2757 = vor.u32 %v2753, %v2756
        %v2758 = vrot.slane %v2757, 4
        %v2760 = vshll.u32 %v2535, 16
        %v2762 = vrot.slane %v2760, 5
        %v2763 = vsel %vm1274, %v2758, %v2762
        %v2764 = vshrl.u32 %v2535, 16
        %v2766 = vrot.slane %v2764, 4
        %v2767 = vor.u32 %v2766, %v2762
        %v2768 = vrot.slane %v2767, 4
        %v2770 = vshll.u32 %v2536, 16
        %v2772 = vrot.slane %v2770, 5
        %v2773 = vsel %vm1274, %v2768, %v2772
        %v2775 = vshrl.u32 %v2537, 16
        %v2777 = vrot.slane %v2775, 4
        %v2778 = vshll.u32 %v2537, 16
        %v2780 = vrot.slane %v2778, 5
        %v2781 = vor.u32 %v2777, %v2780
        %v2782 = vrot.slane %v2781, 4
        %v2784 = vshll.u32 %v2538, 16
        %v2786 = vrot.slane %v2784, 5
        %v2787 = vsel %vm1274, %v2782, %v2786
        %v2788 = vshrl.u32 %v2538, 16
        %v2790 = vrot.slane %v2788, 4
        %v2791 = vor.u32 %v2790, %v2786
        %v2792 = vrot.slane %v2791, 4
        %v2794 = vshll.u32 %v2539, 16
        %v2796 = vrot.slane %v2794, 5
        %v2797 = vsel %vm1274, %v2792, %v2796
        %v2799 = vshrl.u32 %v2540, 16
        %v2801 = vrot.slane %v2799, 4
        %v2802 = vshll.u32 %v2540, 16
        %v2804 = vrot.slane %v2802, 5
        %v2805 = vor.u32 %v2801, %v2804
        %v2806 = vrot.slane %v2805, 4
        %v2808 = vshll.u32 %v2541, 16
        %v2810 = vrot.slane %v2808, 5
        %v2811 = vsel %vm1274, %v2806, %v2810
        %v2812 = vshrl.u32 %v2541, 16
        %v2814 = vrot.slane %v2812, 4
        %v2815 = vor.u32 %v2814, %v2810
        %v2816 = vrot.slane %v2815, 4
        %v2818 = vshll.u32 %v2542, 16
        %v2820 = vrot.slane %v2818, 5
        %v2821 = vsel %vm1274, %v2816, %v2820
        %v2823 = vshrl.u32 %v2543, 16
        %v2825 = vrot.slane %v2823, 4
        %v2826 = vshll.u32 %v2543, 16
        %v2828 = vrot.slane %v2826, 5
        %v2829 = vor.u32 %v2825, %v2828
        %v2830 = vrot.slane %v2829, 4
        %v2832 = vshll.u32 %v2544, 16
        %v2834 = vrot.slane %v2832, 5
        %v2835 = vsel %vm1274, %v2830, %v2834
        %v2836 = vshrl.u32 %v2544, 16
        %v2838 = vrot.slane %v2836, 4
        %v2839 = vor.u32 %v2838, %v2834
        %v2840 = vrot.slane %v2839, 4
        %v2842 = vshll.u32 %v2545, 16
        %v2844 = vrot.slane %v2842, 5
        %v2845 = vsel %vm1274, %v2840, %v2844
        %v2847 = vshrl.u32 %v2546, 16
        %v2849 = vrot.slane %v2847, 4
        %v2850 = vshll.u32 %v2546, 16
        %v2852 = vrot.slane %v2850, 5
        %v2853 = vor.u32 %v2849, %v2852
        %v2854 = vrot.slane %v2853, 4
        %v2856 = vshll.u32 %v2547, 16
        %v2858 = vrot.slane %v2856, 5
        %v2859 = vsel %vm1274, %v2854, %v2858
        %v2860 = vshrl.u32 %v2547, 16
        %v2862 = vrot.slane %v2860, 4
        %v2863 = vor.u32 %v2862, %v2858
        %v2864 = vrot.slane %v2863, 4
        %v2866 = vshll.u32 %v2548, 16
        %v2868 = vrot.slane %v2866, 5
        %v2869 = vsel %vm1274, %v2864, %v2868
        %v2871 = vshrl.u32 %v2549, 16
        %v2873 = vrot.slane %v2871, 4
        %v2874 = vshll.u32 %v2549, 16
        %v2876 = vrot.slane %v2874, 5
        %v2877 = vor.u32 %v2873, %v2876
        %v2878 = vrot.slane %v2877, 4
        %v2880 = vshll.u32 %v2550, 16
        %v2882 = vrot.slane %v2880, 5
        %v2883 = vsel %vm1274, %v2878, %v2882
        %v2884 = vshrl.u32 %v2550, 16
        %v2886 = vrot.slane %v2884, 4
        %v2887 = vor.u32 %v2886, %v2882
        %v2888 = vrot.slane %v2887, 4
        %v2890 = vshll.u32 %v2551, 16
        %v2892 = vrot.slane %v2890, 5
        %v2893 = vsel %vm1274, %v2888, %v2892
        %v2895 = vshrl.u32 %v2552, 16
        %v2897 = vrot.slane %v2895, 4
        %v2898 = vshll.u32 %v2552, 16
        %v2900 = vrot.slane %v2898, 5
        %v2901 = vor.u32 %v2897, %v2900
        %v2902 = vrot.slane %v2901, 4
        %v2904 = vshll.u32 %v2553, 16
        %v2906 = vrot.slane %v2904, 5
        %v2907 = vsel %vm1274, %v2902, %v2906
        %v2908 = vshrl.u32 %v2553, 16
        %v2910 = vrot.slane %v2908, 4
        %v2911 = vor.u32 %v2910, %v2906
        %v2912 = vrot.slane %v2911, 4
        %v2914 = vshll.u32 %v2554, 16
        %v2916 = vrot.slane %v2914, 5
        %v2917 = vsel %vm1274, %v2912, %v2916
        %v2919 = vshrl.u32 %v2555, 16
        %v2921 = vrot.slane %v2919, 4
        %v2922 = vshll.u32 %v2555, 16
        %v2924 = vrot.slane %v2922, 5
        %v2925 = vor.u32 %v2921, %v2924
        %v2926 = vrot.slane %v2925, 4
        %v2928 = vshll.u32 %v2556, 16
        %v2930 = vrot.slane %v2928, 5
        %v2931 = vsel %vm1274, %v2926, %v2930
        %v2932 = vshrl.u32 %v2556, 16
        %v2934 = vrot.slane %v2932, 4
        %v2935 = vor.u32 %v2934, %v2930
        %v2936 = vrot.slane %v2935, 4
        %v2938 = vshll.u32 %v2557, 16
        %v2940 = vrot.slane %v2938, 5
        %v2941 = vsel %vm1274, %v2936, %v2940
        %2942 = vrot.lane.b32.xlu0 %v2571, 80
        %v2943 = vpop.permute.xlu0 %2942
        %2944 = vrot.lane.b32.xlu0 %v2581, 80
        %v2945 = vpop.permute.xlu0 %2944
        %2946 = vrot.lane.b32.xlu0 %v2595, 80
        %v2947 = vpop.permute.xlu0 %2946
        %2948 = vrot.lane.b32.xlu0 %v2605, 80
        %v2949 = vpop.permute.xlu0 %2948
        %2950 = vrot.lane.b32.xlu0 %v2619, 80
        %v2951 = vpop.permute.xlu0 %2950
        %2952 = vrot.lane.b32.xlu0 %v2629, 80
        %v2953 = vpop.permute.xlu0 %2952
        %2954 = vrot.lane.b32.xlu0 %v2643, 80
        %v2955 = vpop.permute.xlu0 %2954
        %2956 = vrot.lane.b32.xlu0 %v2653, 80
        %v2957 = vpop.permute.xlu0 %2956
        %2958 = vrot.lane.b32.xlu0 %v2667, 80
        %v2959 = vpop.permute.xlu0 %2958
        %2960 = vrot.lane.b32.xlu0 %v2677, 80
        %v2961 = vpop.permute.xlu0 %2960
        %2962 = vrot.lane.b32.xlu0 %v2691, 80
        %v2963 = vpop.permute.xlu0 %2962
        %2964 = vrot.lane.b32.xlu0 %v2701, 80
        %v2965 = vpop.permute.xlu0 %2964
        %2966 = vrot.lane.b32.xlu0 %v2715, 80
        %v2967 = vpop.permute.xlu0 %2966
        %2968 = vrot.lane.b32.xlu0 %v2725, 80
        %v2969 = vpop.permute.xlu0 %2968
        %2970 = vrot.lane.b32.xlu0 %v2739, 80
        %v2971 = vpop.permute.xlu0 %2970
        %2972 = vrot.lane.b32.xlu0 %v2749, 80
        %v2973 = vpop.permute.xlu0 %2972
        %2974 = vrot.lane.b32.xlu0 %v2763, 80
        %v2975 = vpop.permute.xlu0 %2974
        %2976 = vrot.lane.b32.xlu0 %v2773, 80
        %v2977 = vpop.permute.xlu0 %2976
        %2978 = vrot.lane.b32.xlu0 %v2787, 80
        %v2979 = vpop.permute.xlu0 %2978
        %2980 = vrot.lane.b32.xlu0 %v2797, 80
        %v2981 = vpop.permute.xlu0 %2980
        %2982 = vrot.lane.b32.xlu0 %v2811, 80
        %v2983 = vpop.permute.xlu0 %2982
        %2984 = vrot.lane.b32.xlu0 %v2821, 80
        %v2985 = vpop.permute.xlu0 %2984
        %2986 = vrot.lane.b32.xlu0 %v2835, 80
        %v2987 = vpop.permute.xlu0 %2986
        %2988 = vrot.lane.b32.xlu0 %v2845, 80
        %v2989 = vpop.permute.xlu0 %2988
        %2990 = vrot.lane.b32.xlu0 %v2859, 80
        %v2991 = vpop.permute.xlu0 %2990
        %2992 = vrot.lane.b32.xlu0 %v2869, 80
        %v2993 = vpop.permute.xlu0 %2992
        %2994 = vrot.lane.b32.xlu0 %v2883, 80
        %v2995 = vpop.permute.xlu0 %2994
        %2996 = vrot.lane.b32.xlu0 %v2893, 80
        %v2997 = vpop.permute.xlu0 %2996
        %2998 = vrot.lane.b32.xlu0 %v2907, 80
        %v2999 = vpop.permute.xlu0 %2998
        %3000 = vrot.lane.b32.xlu0 %v2917, 80
        %v3001 = vpop.permute.xlu0 %3000
        %3002 = vrot.lane.b32.xlu0 %v2931, 80
        %v3003 = vpop.permute.xlu0 %3002
        %3004 = vrot.lane.b32.xlu0 %v2941, 80
        %v3005 = vpop.permute.xlu0 %3004
        %vm3038 = vcmask 781952
        %3039 = vst.msk [vmem:[#allocation4] sm:$0xf] %vm3038, %v2943
        %3040 = vst.msk [vmem:[#allocation4 + $0x8] sm:$0xf] %vm3038, %v2945
        %3041 = vst.msk [vmem:[#allocation4 + $0x10] sm:$0xf] %vm3038, %v2947
        %3042 = vst.msk [vmem:[#allocation4 + $0x18] sm:$0xf] %vm3038, %v2949
        %3043 = vst.msk [vmem:[#allocation4 + $0x20] sm:$0xf] %vm3038, %v2951
        %3044 = vst.msk [vmem:[#allocation4 + $0x28] sm:$0xf] %vm3038, %v2953
        %3045 = vst.msk [vmem:[#allocation4 + $0x30] sm:$0xf] %vm3038, %v2955
        %3046 = vst.msk [vmem:[#allocation4 + $0x38] sm:$0xf] %vm3038, %v2957
        %3047 = vst.msk [vmem:[#allocation4 + $0x40] sm:$0xf] %vm3038, %v2959
        %3048 = vst.msk [vmem:[#allocation4 + $0x48] sm:$0xf] %vm3038, %v2961
        %3049 = vst.msk [vmem:[#allocation4 + $0x50] sm:$0xf] %vm3038, %v2963
        %3050 = vst.msk [vmem:[#allocation4 + $0x58] sm:$0xf] %vm3038, %v2965
        %3051 = vst.msk [vmem:[#allocation4 + $0x60] sm:$0xf] %vm3038, %v2967
        %3052 = vst.msk [vmem:[#allocation4 + $0x68] sm:$0xf] %vm3038, %v2969
        %3053 = vst.msk [vmem:[#allocation4 + $0x70] sm:$0xf] %vm3038, %v2971
        %3054 = vst.msk [vmem:[#allocation4 + $0x78] sm:$0xf] %vm3038, %v2973
        %3055 = vst.msk [vmem:[#allocation4 + $0x80] sm:$0xf] %vm3038, %v2975
        %3056 = vst.msk [vmem:[#allocation4 + $0x88] sm:$0xf] %vm3038, %v2977
        %3057 = vst.msk [vmem:[#allocation4 + $0x90] sm:$0xf] %vm3038, %v2979
        %3058 = vst.msk [vmem:[#allocation4 + $0x98] sm:$0xf] %vm3038, %v2981
        %3059 = vst.msk [vmem:[#allocation4 + $0xa0] sm:$0xf] %vm3038, %v2983
        %3060 = vst.msk [vmem:[#allocation4 + $0xa8] sm:$0xf] %vm3038, %v2985
        %3061 = vst.msk [vmem:[#allocation4 + $0xb0] sm:$0xf] %vm3038, %v2987
        %3062 = vst.msk [vmem:[#allocation4 + $0xb8] sm:$0xf] %vm3038, %v2989
        %3063 = vst.msk [vmem:[#allocation4 + $0xc0] sm:$0xf] %vm3038, %v2991
        %3064 = vst.msk [vmem:[#allocation4 + $0xc8] sm:$0xf] %vm3038, %v2993
        %3065 = vst.msk [vmem:[#allocation4 + $0xd0] sm:$0xf] %vm3038, %v2995
        %3066 = vst.msk [vmem:[#allocation4 + $0xd8] sm:$0xf] %vm3038, %v2997
        %3067 = vst.msk [vmem:[#allocation4 + $0xe0] sm:$0xf] %vm3038, %v2999
        %3068 = vst.msk [vmem:[#allocation4 + $0xe8] sm:$0xf] %vm3038, %v3001
        %3069 = vst.msk [vmem:[#allocation4 + $0xf0] sm:$0xf] %vm3038, %v3003
        %3070 = vst.msk [vmem:[#allocation4 + $0xf8] sm:$0xf] %vm3038, %v3005
        %s3071 = scalar_lea.vmem [#allocation2], 40
        %v3072 = vld [vmem:[%s3071 + $0x4] sm:$0x8]
        %v3073 = vld [vmem:[%s3071 + $0x8] sm:$0xf]
        %v3074 = vld [vmem:[%s3071 + $0xc] sm:$0xf]
        %v3075 = vld [vmem:[%s3071 + $0x18] sm:$0x8]
        %v3076 = vld [vmem:[%s3071 + $0x1c] sm:$0xf]
        %v3077 = vld [vmem:[%s3071 + $0x20] sm:$0xf]
        %v3078 = vld [vmem:[%s3071 + $0x2c] sm:$0x8]
        %v3079 = vld [vmem:[%s3071 + $0x30] sm:$0xf]
        %v3080 = vld [vmem:[%s3071 + $0x34] sm:$0xf]
        %v3081 = vld [vmem:[%s3071 + $0x40] sm:$0x8]
        %v3082 = vld [vmem:[%s3071 + $0x44] sm:$0xf]
        %v3083 = vld [vmem:[%s3071 + $0x48] sm:$0xf]
        %v3084 = vld [vmem:[%s3071 + $0x54] sm:$0x8]
        %v3085 = vld [vmem:[%s3071 + $0x58] sm:$0xf]
        %v3086 = vld [vmem:[%s3071 + $0x5c] sm:$0xf]
        %v3087 = vld [vmem:[%s3071 + $0x68] sm:$0x8]
        %v3088 = vld [vmem:[%s3071 + $0x6c] sm:$0xf]
        %v3089 = vld [vmem:[%s3071 + $0x70] sm:$0xf]
        %v3090 = vld [vmem:[%s3071 + $0x7c] sm:$0x8]
        %v3091 = vld [vmem:[%s3071 + $0x80] sm:$0xf]
        %v3092 = vld [vmem:[%s3071 + $0x84] sm:$0xf]
        %v3093 = vld [vmem:[%s3071 + $0x90] sm:$0x8]
        %v3094 = vld [vmem:[%s3071 + $0x94] sm:$0xf]
        %v3095 = vld [vmem:[%s3071 + $0x98] sm:$0xf]
        %v3096 = vld [vmem:[%s3071 + $0xa4] sm:$0x8]
        %v3097 = vld [vmem:[%s3071 + $0xa8] sm:$0xf]
        %v3098 = vld [vmem:[%s3071 + $0xac] sm:$0xf]
        %v3099 = vld [vmem:[%s3071 + $0xb8] sm:$0x8]
        %v3100 = vld [vmem:[%s3071 + $0xbc] sm:$0xf]
        %v3101 = vld [vmem:[%s3071 + $0xc0] sm:$0xf]
        %v3102 = vld [vmem:[%s3071 + $0xcc] sm:$0x8]
        %v3103 = vld [vmem:[%s3071 + $0xd0] sm:$0xf]
        %v3104 = vld [vmem:[%s3071 + $0xd4] sm:$0xf]
        %v3105 = vld [vmem:[%s3071 + $0xe0] sm:$0x8]
        %v3106 = vld [vmem:[%s3071 + $0xe4] sm:$0xf]
        %v3107 = vld [vmem:[%s3071 + $0xe8] sm:$0xf]
        %v3108 = vld [vmem:[%s3071 + $0xf4] sm:$0x8]
        %v3109 = vld [vmem:[%s3071 + $0xf8] sm:$0xf]
        %v3110 = vld [vmem:[%s3071 + $0xfc] sm:$0xf]
        %v3111 = vld [vmem:[%s3071 + $0x108] sm:$0x8]
        %v3112 = vld [vmem:[%s3071 + $0x10c] sm:$0xf]
        %v3113 = vld [vmem:[%s3071 + $0x110] sm:$0xf]
        %v3114 = vld [vmem:[%s3071 + $0x11c] sm:$0x8]
        %v3115 = vld [vmem:[%s3071 + $0x120] sm:$0xf]
        %v3116 = vld [vmem:[%s3071 + $0x124] sm:$0xf]
        %v3117 = vld [vmem:[%s3071 + $0x130] sm:$0x8]
        %v3118 = vld [vmem:[%s3071 + $0x134] sm:$0xf]
        %v3119 = vld [vmem:[%s3071 + $0x138] sm:$0xf]
        %v3121 = vshrl.u32 %v3072, 16
        %v3123 = vrot.slane %v3121, 7
        %v3124 = vrot.slane %v3123, 4
        %v3126 = vshrl.u32 %v3073, 16
        %v3128 = vrot.slane %v3126, 7
        %v3129 = vshll.u32 %v3073, 16
        %v3131 = vor.u32 %v3128, %v3129
        %v3132 = vsel %vm614, %v3124, %v3131
        %v3133 = vrot.slane %v3128, 4
        %v3135 = vshrl.u32 %v3074, 16
        %v3137 = vrot.slane %v3135, 7
        %v3138 = vshll.u32 %v3074, 16
        %v3140 = vor.u32 %v3137, %v3138
        %v3141 = vsel %vm614, %v3133, %v3140
        %v3143 = vshrl.u32 %v3075, 16
        %v3145 = vrot.slane %v3143, 7
        %v3146 = vrot.slane %v3145, 4
        %v3148 = vshrl.u32 %v3076, 16
        %v3150 = vrot.slane %v3148, 7
        %v3151 = vshll.u32 %v3076, 16
        %v3153 = vor.u32 %v3150, %v3151
        %v3154 = vsel %vm614, %v3146, %v3153
        %v3155 = vrot.slane %v3150, 4
        %v3157 = vshrl.u32 %v3077, 16
        %v3159 = vrot.slane %v3157, 7
        %v3160 = vshll.u32 %v3077, 16
        %v3162 = vor.u32 %v3159, %v3160
        %v3163 = vsel %vm614, %v3155, %v3162
        %v3165 = vshrl.u32 %v3078, 16
        %v3167 = vrot.slane %v3165, 7
        %v3168 = vrot.slane %v3167, 4
        %v3170 = vshrl.u32 %v3079, 16
        %v3172 = vrot.slane %v3170, 7
        %v3173 = vshll.u32 %v3079, 16
        %v3175 = vor.u32 %v3172, %v3173
        %v3176 = vsel %vm614, %v3168, %v3175
        %v3177 = vrot.slane %v3172, 4
        %v3179 = vshrl.u32 %v3080, 16
        %v3181 = vrot.slane %v3179, 7
        %v3182 = vshll.u32 %v3080, 16
        %v3184 = vor.u32 %v3181, %v3182
        %v3185 = vsel %vm614, %v3177, %v3184
        %v3187 = vshrl.u32 %v3081, 16
        %v3189 = vrot.slane %v3187, 7
        %v3190 = vrot.slane %v3189, 4
        %v3192 = vshrl.u32 %v3082, 16
        %v3194 = vrot.slane %v3192, 7
        %v3195 = vshll.u32 %v3082, 16
        %v3197 = vor.u32 %v3194, %v3195
        %v3198 = vsel %vm614, %v3190, %v3197
        %v3199 = vrot.slane %v3194, 4
        %v3201 = vshrl.u32 %v3083, 16
        %v3203 = vrot.slane %v3201, 7
        %v3204 = vshll.u32 %v3083, 16
        %v3206 = vor.u32 %v3203, %v3204
        %v3207 = vsel %vm614, %v3199, %v3206
        %v3209 = vshrl.u32 %v3084, 16
        %v3211 = vrot.slane %v3209, 7
        %v3212 = vrot.slane %v3211, 4
        %v3214 = vshrl.u32 %v3085, 16
        %v3216 = vrot.slane %v3214, 7
        %v3217 = vshll.u32 %v3085, 16
        %v3219 = vor.u32 %v3216, %v3217
        %v3220 = vsel %vm614, %v3212, %v3219
        %v3221 = vrot.slane %v3216, 4
        %v3223 = vshrl.u32 %v3086, 16
        %v3225 = vrot.slane %v3223, 7
        %v3226 = vshll.u32 %v3086, 16
        %v3228 = vor.u32 %v3225, %v3226
        %v3229 = vsel %vm614, %v3221, %v3228
        %v3231 = vshrl.u32 %v3087, 16
        %v3233 = vrot.slane %v3231, 7
        %v3234 = vrot.slane %v3233, 4
        %v3236 = vshrl.u32 %v3088, 16
        %v3238 = vrot.slane %v3236, 7
        %v3239 = vshll.u32 %v3088, 16
        %v3241 = vor.u32 %v3238, %v3239
        %v3242 = vsel %vm614, %v3234, %v3241
        %v3243 = vrot.slane %v3238, 4
        %v3245 = vshrl.u32 %v3089, 16
        %v3247 = vrot.slane %v3245, 7
        %v3248 = vshll.u32 %v3089, 16
        %v3250 = vor.u32 %v3247, %v3248
        %v3251 = vsel %vm614, %v3243, %v3250
        %v3253 = vshrl.u32 %v3090, 16
        %v3255 = vrot.slane %v3253, 7
        %v3256 = vrot.slane %v3255, 4
        %v3258 = vshrl.u32 %v3091, 16
        %v3260 = vrot.slane %v3258, 7
        %v3261 = vshll.u32 %v3091, 16
        %v3263 = vor.u32 %v3260, %v3261
        %v3264 = vsel %vm614, %v3256, %v3263
        %v3265 = vrot.slane %v3260, 4
        %v3267 = vshrl.u32 %v3092, 16
        %v3269 = vrot.slane %v3267, 7
        %v3270 = vshll.u32 %v3092, 16
        %v3272 = vor.u32 %v3269, %v3270
        %v3273 = vsel %vm614, %v3265, %v3272
        %v3275 = vshrl.u32 %v3093, 16
        %v3277 = vrot.slane %v3275, 7
        %v3278 = vrot.slane %v3277, 4
        %v3280 = vshrl.u32 %v3094, 16
        %v3282 = vrot.slane %v3280, 7
        %v3283 = vshll.u32 %v3094, 16
        %v3285 = vor.u32 %v3282, %v3283
        %v3286 = vsel %vm614, %v3278, %v3285
        %v3287 = vrot.slane %v3282, 4
        %v3289 = vshrl.u32 %v3095, 16
        %v3291 = vrot.slane %v3289, 7
        %v3292 = vshll.u32 %v3095, 16
        %v3294 = vor.u32 %v3291, %v3292
        %v3295 = vsel %vm614, %v3287, %v3294
        %v3297 = vshrl.u32 %v3096, 16
        %v3299 = vrot.slane %v3297, 7
        %v3300 = vrot.slane %v3299, 4
        %v3302 = vshrl.u32 %v3097, 16
        %v3304 = vrot.slane %v3302, 7
        %v3305 = vshll.u32 %v3097, 16
        %v3307 = vor.u32 %v3304, %v3305
        %v3308 = vsel %vm614, %v3300, %v3307
        %v3309 = vrot.slane %v3304, 4
        %v3311 = vshrl.u32 %v3098, 16
        %v3313 = vrot.slane %v3311, 7
        %v3314 = vshll.u32 %v3098, 16
        %v3316 = vor.u32 %v3313, %v3314
        %v3317 = vsel %vm614, %v3309, %v3316
        %v3319 = vshrl.u32 %v3099, 16
        %v3321 = vrot.slane %v3319, 7
        %v3322 = vrot.slane %v3321, 4
        %v3324 = vshrl.u32 %v3100, 16
        %v3326 = vrot.slane %v3324, 7
        %v3327 = vshll.u32 %v3100, 16
        %v3329 = vor.u32 %v3326, %v3327
        %v3330 = vsel %vm614, %v3322, %v3329
        %v3331 = vrot.slane %v3326, 4
        %v3333 = vshrl.u32 %v3101, 16
        %v3335 = vrot.slane %v3333, 7
        %v3336 = vshll.u32 %v3101, 16
        %v3338 = vor.u32 %v3335, %v3336
        %v3339 = vsel %vm614, %v3331, %v3338
        %v3341 = vshrl.u32 %v3102, 16
        %v3343 = vrot.slane %v3341, 7
        %v3344 = vrot.slane %v3343, 4
        %v3346 = vshrl.u32 %v3103, 16
        %v3348 = vrot.slane %v3346, 7
        %v3349 = vshll.u32 %v3103, 16
        %v3351 = vor.u32 %v3348, %v3349
        %v3352 = vsel %vm614, %v3344, %v3351
        %v3353 = vrot.slane %v3348, 4
        %v3355 = vshrl.u32 %v3104, 16
        %v3357 = vrot.slane %v3355, 7
        %v3358 = vshll.u32 %v3104, 16
        %v3360 = vor.u32 %v3357, %v3358
        %v3361 = vsel %vm614, %v3353, %v3360
        %v3363 = vshrl.u32 %v3105, 16
        %v3365 = vrot.slane %v3363, 7
        %v3366 = vrot.slane %v3365, 4
        %v3368 = vshrl.u32 %v3106, 16
        %v3370 = vrot.slane %v3368, 7
        %v3371 = vshll.u32 %v3106, 16
        %v3373 = vor.u32 %v3370, %v3371
        %v3374 = vsel %vm614, %v3366, %v3373
        %v3375 = vrot.slane %v3370, 4
        %v3377 = vshrl.u32 %v3107, 16
        %v3379 = vrot.slane %v3377, 7
        %v3380 = vshll.u32 %v3107, 16
        %v3382 = vor.u32 %v3379, %v3380
        %v3383 = vsel %vm614, %v3375, %v3382
        %v3385 = vshrl.u32 %v3108, 16
        %v3387 = vrot.slane %v3385, 7
        %v3388 = vrot.slane %v3387, 4
        %v3390 = vshrl.u32 %v3109, 16
        %v3392 = vrot.slane %v3390, 7
        %v3393 = vshll.u32 %v3109, 16
        %v3395 = vor.u32 %v3392, %v3393
        %v3396 = vsel %vm614, %v3388, %v3395
        %v3397 = vrot.slane %v3392, 4
        %v3399 = vshrl.u32 %v3110, 16
        %v3401 = vrot.slane %v3399, 7
        %v3402 = vshll.u32 %v3110, 16
        %v3404 = vor.u32 %v3401, %v3402
        %v3405 = vsel %vm614, %v3397, %v3404
        %v3407 = vshrl.u32 %v3111, 16
        %v3409 = vrot.slane %v3407, 7
        %v3410 = vrot.slane %v3409, 4
        %v3412 = vshrl.u32 %v3112, 16
        %v3414 = vrot.slane %v3412, 7
        %v3415 = vshll.u32 %v3112, 16
        %v3417 = vor.u32 %v3414, %v3415
        %v3418 = vsel %vm614, %v3410, %v3417
        %v3419 = vrot.slane %v3414, 4
        %v3421 = vshrl.u32 %v3113, 16
        %v3423 = vrot.slane %v3421, 7
        %v3424 = vshll.u32 %v3113, 16
        %v3426 = vor.u32 %v3423, %v3424
        %v3427 = vsel %vm614, %v3419, %v3426
        %v3429 = vshrl.u32 %v3114, 16
        %v3431 = vrot.slane %v3429, 7
        %v3432 = vrot.slane %v3431, 4
        %v3434 = vshrl.u32 %v3115, 16
        %v3436 = vrot.slane %v3434, 7
        %v3437 = vshll.u32 %v3115, 16
        %v3439 = vor.u32 %v3436, %v3437
        %v3440 = vsel %vm614, %v3432, %v3439
        %v3441 = vrot.slane %v3436, 4
        %v3443 = vshrl.u32 %v3116, 16
        %v3445 = vrot.slane %v3443, 7
        %v3446 = vshll.u32 %v3116, 16
        %v3448 = vor.u32 %v3445, %v3446
        %v3449 = vsel %vm614, %v3441, %v3448
        %v3451 = vshrl.u32 %v3117, 16
        %v3453 = vrot.slane %v3451, 7
        %v3454 = vrot.slane %v3453, 4
        %v3456 = vshrl.u32 %v3118, 16
        %v3458 = vrot.slane %v3456, 7
        %v3459 = vshll.u32 %v3118, 16
        %v3461 = vor.u32 %v3458, %v3459
        %v3462 = vsel %vm614, %v3454, %v3461
        %v3463 = vrot.slane %v3458, 4
        %v3465 = vshrl.u32 %v3119, 16
        %v3467 = vrot.slane %v3465, 7
        %v3468 = vshll.u32 %v3119, 16
        %v3470 = vor.u32 %v3467, %v3468
        %v3471 = vsel %vm614, %v3463, %v3470
        %3472 = vrot.lane.b32.xlu0 %v3132, 96
        %v3473 = vpop.permute.xlu0 %3472
        %3474 = vrot.lane.b32.xlu0 %v3141, 96
        %v3475 = vpop.permute.xlu0 %3474
        %3476 = vrot.lane.b32.xlu0 %v3154, 96
        %v3477 = vpop.permute.xlu0 %3476
        %3478 = vrot.lane.b32.xlu0 %v3163, 96
        %v3479 = vpop.permute.xlu0 %3478
        %3480 = vrot.lane.b32.xlu0 %v3176, 96
        %v3481 = vpop.permute.xlu0 %3480
        %3482 = vrot.lane.b32.xlu0 %v3185, 96
        %v3483 = vpop.permute.xlu0 %3482
        %3484 = vrot.lane.b32.xlu0 %v3198, 96
        %v3485 = vpop.permute.xlu0 %3484
        %3486 = vrot.lane.b32.xlu0 %v3207, 96
        %v3487 = vpop.permute.xlu0 %3486
        %3488 = vrot.lane.b32.xlu0 %v3220, 96
        %v3489 = vpop.permute.xlu0 %3488
        %3490 = vrot.lane.b32.xlu0 %v3229, 96
        %v3491 = vpop.permute.xlu0 %3490
        %3492 = vrot.lane.b32.xlu0 %v3242, 96
        %v3493 = vpop.permute.xlu0 %3492
        %3494 = vrot.lane.b32.xlu0 %v3251, 96
        %v3495 = vpop.permute.xlu0 %3494
        %3496 = vrot.lane.b32.xlu0 %v3264, 96
        %v3497 = vpop.permute.xlu0 %3496
        %3498 = vrot.lane.b32.xlu0 %v3273, 96
        %v3499 = vpop.permute.xlu0 %3498
        %3500 = vrot.lane.b32.xlu0 %v3286, 96
        %v3501 = vpop.permute.xlu0 %3500
        %3502 = vrot.lane.b32.xlu0 %v3295, 96
        %v3503 = vpop.permute.xlu0 %3502
        %3504 = vrot.lane.b32.xlu0 %v3308, 96
        %v3505 = vpop.permute.xlu0 %3504
        %3506 = vrot.lane.b32.xlu0 %v3317, 96
        %v3507 = vpop.permute.xlu0 %3506
        %3508 = vrot.lane.b32.xlu0 %v3330, 96
        %v3509 = vpop.permute.xlu0 %3508
        %3510 = vrot.lane.b32.xlu0 %v3339, 96
        %v3511 = vpop.permute.xlu0 %3510
        %3512 = vrot.lane.b32.xlu0 %v3352, 96
        %v3513 = vpop.permute.xlu0 %3512
        %3514 = vrot.lane.b32.xlu0 %v3361, 96
        %v3515 = vpop.permute.xlu0 %3514
        %3516 = vrot.lane.b32.xlu0 %v3374, 96
        %v3517 = vpop.permute.xlu0 %3516
        %3518 = vrot.lane.b32.xlu0 %v3383, 96
        %v3519 = vpop.permute.xlu0 %3518
        %3520 = vrot.lane.b32.xlu0 %v3396, 96
        %v3521 = vpop.permute.xlu0 %3520
        %3522 = vrot.lane.b32.xlu0 %v3405, 96
        %v3523 = vpop.permute.xlu0 %3522
        %3524 = vrot.lane.b32.xlu0 %v3418, 96
        %v3525 = vpop.permute.xlu0 %3524
        %3526 = vrot.lane.b32.xlu0 %v3427, 96
        %v3527 = vpop.permute.xlu0 %3526
        %3528 = vrot.lane.b32.xlu0 %v3440, 96
        %v3529 = vpop.permute.xlu0 %3528
        %3530 = vrot.lane.b32.xlu0 %v3449, 96
        %v3531 = vpop.permute.xlu0 %3530
        %3532 = vrot.lane.b32.xlu0 %v3462, 96
        %v3533 = vpop.permute.xlu0 %3532
        %3534 = vrot.lane.b32.xlu0 %v3471, 96
        %v3535 = vpop.permute.xlu0 %3534
        %vm3568 = vcmask 913152
        %3569 = vst.msk [vmem:[#allocation4] sm:$0xf] %vm3568, %v3473
        %3570 = vst.msk [vmem:[#allocation4 + $0x8] sm:$0xf] %vm3568, %v3475
        %3571 = vst.msk [vmem:[#allocation4 + $0x10] sm:$0xf] %vm3568, %v3477
        %3572 = vst.msk [vmem:[#allocation4 + $0x18] sm:$0xf] %vm3568, %v3479
        %3573 = vst.msk [vmem:[#allocation4 + $0x20] sm:$0xf] %vm3568, %v3481
        %3574 = vst.msk [vmem:[#allocation4 + $0x28] sm:$0xf] %vm3568, %v3483
        %3575 = vst.msk [vmem:[#allocation4 + $0x30] sm:$0xf] %vm3568, %v3485
        %3576 = vst.msk [vmem:[#allocation4 + $0x38] sm:$0xf] %vm3568, %v3487
        %3577 = vst.msk [vmem:[#allocation4 + $0x40] sm:$0xf] %vm3568, %v3489
        %3578 = vst.msk [vmem:[#allocation4 + $0x48] sm:$0xf] %vm3568, %v3491
        %3579 = vst.msk [vmem:[#allocation4 + $0x50] sm:$0xf] %vm3568, %v3493
        %3580 = vst.msk [vmem:[#allocation4 + $0x58] sm:$0xf] %vm3568, %v3495
        %3581 = vst.msk [vmem:[#allocation4 + $0x60] sm:$0xf] %vm3568, %v3497
        %3582 = vst.msk [vmem:[#allocation4 + $0x68] sm:$0xf] %vm3568, %v3499
        %3583 = vst.msk [vmem:[#allocation4 + $0x70] sm:$0xf] %vm3568, %v3501
        %3584 = vst.msk [vmem:[#allocation4 + $0x78] sm:$0xf] %vm3568, %v3503
        %3585 = vst.msk [vmem:[#allocation4 + $0x80] sm:$0xf] %vm3568, %v3505
        %3586 = vst.msk [vmem:[#allocation4 + $0x88] sm:$0xf] %vm3568, %v3507
        %3587 = vst.msk [vmem:[#allocation4 + $0x90] sm:$0xf] %vm3568, %v3509
        %3588 = vst.msk [vmem:[#allocation4 + $0x98] sm:$0xf] %vm3568, %v3511
        %3589 = vst.msk [vmem:[#allocation4 + $0xa0] sm:$0xf] %vm3568, %v3513
        %3590 = vst.msk [vmem:[#allocation4 + $0xa8] sm:$0xf] %vm3568, %v3515
        %3591 = vst.msk [vmem:[#allocation4 + $0xb0] sm:$0xf] %vm3568, %v3517
        %3592 = vst.msk [vmem:[#allocation4 + $0xb8] sm:$0xf] %vm3568, %v3519
        %3593 = vst.msk [vmem:[#allocation4 + $0xc0] sm:$0xf] %vm3568, %v3521
        %3594 = vst.msk [vmem:[#allocation4 + $0xc8] sm:$0xf] %vm3568, %v3523
        %3595 = vst.msk [vmem:[#allocation4 + $0xd0] sm:$0xf] %vm3568, %v3525
        %3596 = vst.msk [vmem:[#allocation4 + $0xd8] sm:$0xf] %vm3568, %v3527
        %3597 = vst.msk [vmem:[#allocation4 + $0xe0] sm:$0xf] %vm3568, %v3529
        %3598 = vst.msk [vmem:[#allocation4 + $0xe8] sm:$0xf] %vm3568, %v3531
        %3599 = vst.msk [vmem:[#allocation4 + $0xf0] sm:$0xf] %vm3568, %v3533
        %3600 = vst.msk [vmem:[#allocation4 + $0xf8] sm:$0xf] %vm3568, %v3535
        %v3601 = vld [vmem:[%s3071 + $0x8] sm:$0xf]
        %v3602 = vld [vmem:[%s3071 + $0xc] sm:$0xf]
        %v3603 = vld [vmem:[%s3071 + $0x1c] sm:$0xf]
        %v3604 = vld [vmem:[%s3071 + $0x20] sm:$0xf]
        %v3605 = vld [vmem:[%s3071 + $0x30] sm:$0xf]
        %v3606 = vld [vmem:[%s3071 + $0x34] sm:$0xf]
        %v3607 = vld [vmem:[%s3071 + $0x44] sm:$0xf]
        %v3608 = vld [vmem:[%s3071 + $0x48] sm:$0xf]
        %v3609 = vld [vmem:[%s3071 + $0x58] sm:$0xf]
        %v3610 = vld [vmem:[%s3071 + $0x5c] sm:$0xf]
        %v3611 = vld [vmem:[%s3071 + $0x6c] sm:$0xf]
        %v3612 = vld [vmem:[%s3071 + $0x70] sm:$0xf]
        %v3613 = vld [vmem:[%s3071 + $0x80] sm:$0xf]
        %v3614 = vld [vmem:[%s3071 + $0x84] sm:$0xf]
        %v3615 = vld [vmem:[%s3071 + $0x94] sm:$0xf]
        %v3616 = vld [vmem:[%s3071 + $0x98] sm:$0xf]
        %v3617 = vld [vmem:[%s3071 + $0xa8] sm:$0xf]
        %v3618 = vld [vmem:[%s3071 + $0xac] sm:$0xf]
        %v3619 = vld [vmem:[%s3071 + $0xbc] sm:$0xf]
        %v3620 = vld [vmem:[%s3071 + $0xc0] sm:$0xf]
        %v3621 = vld [vmem:[%s3071 + $0xd0] sm:$0xf]
        %v3622 = vld [vmem:[%s3071 + $0xd4] sm:$0xf]
        %v3623 = vld [vmem:[%s3071 + $0xe4] sm:$0xf]
        %v3624 = vld [vmem:[%s3071 + $0xe8] sm:$0xf]
        %v3625 = vld [vmem:[%s3071 + $0xf8] sm:$0xf]
        %v3626 = vld [vmem:[%s3071 + $0xfc] sm:$0xf]
        %v3627 = vld [vmem:[%s3071 + $0x10c] sm:$0xf]
        %v3628 = vld [vmem:[%s3071 + $0x110] sm:$0xf]
        %v3629 = vld [vmem:[%s3071 + $0x120] sm:$0xf]
        %v3630 = vld [vmem:[%s3071 + $0x124] sm:$0xf]
        %v3631 = vld [vmem:[%s3071 + $0x134] sm:$0xf]
        %v3632 = vld [vmem:[%s3071 + $0x138] sm:$0xf]
        %3665 = vrot.lane.b32.xlu0 %v3601, 112
        %v3666 = vpop.permute.xlu0 %3665
        %3667 = vrot.lane.b32.xlu0 %v3602, 112
        %v3668 = vpop.permute.xlu0 %3667
        %3669 = vrot.lane.b32.xlu0 %v3603, 112
        %v3670 = vpop.permute.xlu0 %3669
        %3671 = vrot.lane.b32.xlu0 %v3604, 112
        %v3672 = vpop.permute.xlu0 %3671
        %3673 = vrot.lane.b32.xlu0 %v3605, 112
        %v3674 = vpop.permute.xlu0 %3673
        %3675 = vrot.lane.b32.xlu0 %v3606, 112
        %v3676 = vpop.permute.xlu0 %3675
        %3677 = vrot.lane.b32.xlu0 %v3607, 112
        %v3678 = vpop.permute.xlu0 %3677
        %3679 = vrot.lane.b32.xlu0 %v3608, 112
        %v3680 = vpop.permute.xlu0 %3679
        %3681 = vrot.lane.b32.xlu0 %v3609, 112
        %v3682 = vpop.permute.xlu0 %3681
        %3683 = vrot.lane.b32.xlu0 %v3610, 112
        %v3684 = vpop.permute.xlu0 %3683
        %3685 = vrot.lane.b32.xlu0 %v3611, 112
        %v3686 = vpop.permute.xlu0 %3685
        %3687 = vrot.lane.b32.xlu0 %v3612, 112
        %v3688 = vpop.permute.xlu0 %3687
        %3689 = vrot.lane.b32.xlu0 %v3613, 112
        %v3690 = vpop.permute.xlu0 %3689
        %3691 = vrot.lane.b32.xlu0 %v3614, 112
        %v3692 = vpop.permute.xlu0 %3691
        %3693 = vrot.lane.b32.xlu0 %v3615, 112
        %v3694 = vpop.permute.xlu0 %3693
        %3695 = vrot.lane.b32.xlu0 %v3616, 112
        %v3696 = vpop.permute.xlu0 %3695
        %3697 = vrot.lane.b32.xlu0 %v3617, 112
        %v3698 = vpop.permute.xlu0 %3697
        %3699 = vrot.lane.b32.xlu0 %v3618, 112
        %v3700 = vpop.permute.xlu0 %3699
        %3701 = vrot.lane.b32.xlu0 %v3619, 112
        %v3702 = vpop.permute.xlu0 %3701
        %3703 = vrot.lane.b32.xlu0 %v3620, 112
        %v3704 = vpop.permute.xlu0 %3703
        %3705 = vrot.lane.b32.xlu0 %v3621, 112
        %v3706 = vpop.permute.xlu0 %3705
        %3707 = vrot.lane.b32.xlu0 %v3622, 112
        %v3708 = vpop.permute.xlu0 %3707
        %3709 = vrot.lane.b32.xlu0 %v3623, 112
        %v3710 = vpop.permute.xlu0 %3709
        %3711 = vrot.lane.b32.xlu0 %v3624, 112
        %v3712 = vpop.permute.xlu0 %3711
        %3713 = vrot.lane.b32.xlu0 %v3625, 112
        %v3714 = vpop.permute.xlu0 %3713
        %3715 = vrot.lane.b32.xlu0 %v3626, 112
        %v3716 = vpop.permute.xlu0 %3715
        %3717 = vrot.lane.b32.xlu0 %v3627, 112
        %v3718 = vpop.permute.xlu0 %3717
        %3719 = vrot.lane.b32.xlu0 %v3628, 112
        %v3720 = vpop.permute.xlu0 %3719
        %3721 = vrot.lane.b32.xlu0 %v3629, 112
        %v3722 = vpop.permute.xlu0 %3721
        %3723 = vrot.lane.b32.xlu0 %v3630, 112
        %v3724 = vpop.permute.xlu0 %3723
        %3725 = vrot.lane.b32.xlu0 %v3631, 112
        %v3726 = vpop.permute.xlu0 %3725
        %3727 = vrot.lane.b32.xlu0 %v3632, 112
        %v3728 = vpop.permute.xlu0 %3727
        %vm3761 = vcmask 1044352
        %3762 = vst.msk [vmem:[#allocation4] sm:$0xf] %vm3761, %v3666
        %3763 = vst.msk [vmem:[#allocation4 + $0x8] sm:$0xf] %vm3761, %v3668
        %3764 = vst.msk [vmem:[#allocation4 + $0x10] sm:$0xf] %vm3761, %v3670
        %3765 = vst.msk [vmem:[#allocation4 + $0x18] sm:$0xf] %vm3761, %v3672
        %3766 = vst.msk [vmem:[#allocation4 + $0x20] sm:$0xf] %vm3761, %v3674
        %3767 = vst.msk [vmem:[#allocation4 + $0x28] sm:$0xf] %vm3761, %v3676
        %3768 = vst.msk [vmem:[#allocation4 + $0x30] sm:$0xf] %vm3761, %v3678
        %3769 = vst.msk [vmem:[#allocation4 + $0x38] sm:$0xf] %vm3761, %v3680
        %3770 = vst.msk [vmem:[#allocation4 + $0x40] sm:$0xf] %vm3761, %v3682
        %3771 = vst.msk [vmem:[#allocation4 + $0x48] sm:$0xf] %vm3761, %v3684
        %3772 = vst.msk [vmem:[#allocation4 + $0x50] sm:$0xf] %vm3761, %v3686
        %3773 = vst.msk [vmem:[#allocation4 + $0x58] sm:$0xf] %vm3761, %v3688
        %3774 = vst.msk [vmem:[#allocation4 + $0x60] sm:$0xf] %vm3761, %v3690
        %3775 = vst.msk [vmem:[#allocation4 + $0x68] sm:$0xf] %vm3761, %v3692
        %3776 = vst.msk [vmem:[#allocation4 + $0x70] sm:$0xf] %vm3761, %v3694
        %3777 = vst.msk [vmem:[#allocation4 + $0x78] sm:$0xf] %vm3761, %v3696
        %3778 = vst.msk [vmem:[#allocation4 + $0x80] sm:$0xf] %vm3761, %v3698
        %3779 = vst.msk [vmem:[#allocation4 + $0x88] sm:$0xf] %vm3761, %v3700
        %3780 = vst.msk [vmem:[#allocation4 + $0x90] sm:$0xf] %vm3761, %v3702
        %3781 = vst.msk [vmem:[#allocation4 + $0x98] sm:$0xf] %vm3761, %v3704
        %3782 = vst.msk [vmem:[#allocation4 + $0xa0] sm:$0xf] %vm3761, %v3706
        %3783 = vst.msk [vmem:[#allocation4 + $0xa8] sm:$0xf] %vm3761, %v3708
        %3784 = vst.msk [vmem:[#allocation4 + $0xb0] sm:$0xf] %vm3761, %v3710
        %3785 = vst.msk [vmem:[#allocation4 + $0xb8] sm:$0xf] %vm3761, %v3712
        %3786 = vst.msk [vmem:[#allocation4 + $0xc0] sm:$0xf] %vm3761, %v3714
        %3787 = vst.msk [vmem:[#allocation4 + $0xc8] sm:$0xf] %vm3761, %v3716
        %3788 = vst.msk [vmem:[#allocation4 + $0xd0] sm:$0xf] %vm3761, %v3718
        %3789 = vst.msk [vmem:[#allocation4 + $0xd8] sm:$0xf] %vm3761, %v3720
        %3790 = vst.msk [vmem:[#allocation4 + $0xe0] sm:$0xf] %vm3761, %v3722
        %3791 = vst.msk [vmem:[#allocation4 + $0xe8] sm:$0xf] %vm3761, %v3724
        %3792 = vst.msk [vmem:[#allocation4 + $0xf0] sm:$0xf] %vm3761, %v3726
        %3793 = vst.msk [vmem:[#allocation4 + $0xf8] sm:$0xf] %vm3761, %v3728
        %v3794 = vld [vmem:[%s3071 + $0x8] sm:$0xf]
        %v3795 = vld [vmem:[%s3071 + $0xc] sm:$0xf]
        %v3796 = vld [vmem:[%s3071 + $0x10] sm:$0x1]
        %v3797 = vld [vmem:[%s3071 + $0x1c] sm:$0xf]
        %v3798 = vld [vmem:[%s3071 + $0x20] sm:$0xf]
        %v3799 = vld [vmem:[%s3071 + $0x24] sm:$0x1]
        %v3800 = vld [vmem:[%s3071 + $0x30] sm:$0xf]
        %v3801 = vld [vmem:[%s3071 + $0x34] sm:$0xf]
        %v3802 = vld [vmem:[%s3071 + $0x38] sm:$0x1]
        %v3803 = vld [vmem:[%s3071 + $0x44] sm:$0xf]
        %v3804 = vld [vmem:[%s3071 + $0x48] sm:$0xf]
        %v3805 = vld [vmem:[%s3071 + $0x4c] sm:$0x1]
        %v3806 = vld [vmem:[%s3071 + $0x58] sm:$0xf]
        %v3807 = vld [vmem:[%s3071 + $0x5c] sm:$0xf]
        %v3808 = vld [vmem:[%s3071 + $0x60] sm:$0x1]
        %v3809 = vld [vmem:[%s3071 + $0x6c] sm:$0xf]
        %v3810 = vld [vmem:[%s3071 + $0x70] sm:$0xf]
        %v3811 = vld [vmem:[%s3071 + $0x74] sm:$0x1]
        %v3812 = vld [vmem:[%s3071 + $0x80] sm:$0xf]
        %v3813 = vld [vmem:[%s3071 + $0x84] sm:$0xf]
        %v3814 = vld [vmem:[%s3071 + $0x88] sm:$0x1]
        %v3815 = vld [vmem:[%s3071 + $0x94] sm:$0xf]
        %v3816 = vld [vmem:[%s3071 + $0x98] sm:$0xf]
        %v3817 = vld [vmem:[%s3071 + $0x9c] sm:$0x1]
        %v3818 = vld [vmem:[%s3071 + $0xa8] sm:$0xf]
        %v3819 = vld [vmem:[%s3071 + $0xac] sm:$0xf]
        %v3820 = vld [vmem:[%s3071 + $0xb0] sm:$0x1]
        %v3821 = vld [vmem:[%s3071 + $0xbc] sm:$0xf]
        %v3822 = vld [vmem:[%s3071 + $0xc0] sm:$0xf]
        %v3823 = vld [vmem:[%s3071 + $0xc4] sm:$0x1]
        %v3824 = vld [vmem:[%s3071 + $0xd0] sm:$0xf]
        %v3825 = vld [vmem:[%s3071 + $0xd4] sm:$0xf]
        %v3826 = vld [vmem:[%s3071 + $0xd8] sm:$0x1]
        %v3827 = vld [vmem:[%s3071 + $0xe4] sm:$0xf]
        %v3828 = vld [vmem:[%s3071 + $0xe8] sm:$0xf]
        %v3829 = vld [vmem:[%s3071 + $0xec] sm:$0x1]
        %v3830 = vld [vmem:[%s3071 + $0xf8] sm:$0xf]
        %v3831 = vld [vmem:[%s3071 + $0xfc] sm:$0xf]
        %v3832 = vld [vmem:[%s3071 + $0x100] sm:$0x1]
        %v3833 = vld [vmem:[%s3071 + $0x10c] sm:$0xf]
        %v3834 = vld [vmem:[%s3071 + $0x110] sm:$0xf]
        %v3835 = vld [vmem:[%s3071 + $0x114] sm:$0x1]
        %v3836 = vld [vmem:[%s3071 + $0x120] sm:$0xf]
        %v3837 = vld [vmem:[%s3071 + $0x124] sm:$0xf]
        %v3838 = vld [vmem:[%s3071 + $0x128] sm:$0x1]
        %v3839 = vld [vmem:[%s3071 + $0x134] sm:$0xf]
        %v3840 = vld [vmem:[%s3071 + $0x138] sm:$0xf]
        %v3841 = vld [vmem:[%s3071 + $0x13c] sm:$0x1]
        %v3843 = vshrl.u32 %v3794, 16
        %v3845 = vrot.slane %v3843, 4
        %v3846 = vshll.u32 %v3794, 16
        %v3848 = vrot.slane %v3846, 5
        %v3849 = vor.u32 %v3845, %v3848
        %v3850 = vrot.slane %v3849, 4
        %v3852 = vshll.u32 %v3795, 16
        %v3854 = vrot.slane %v3852, 5
        %v3855 = vsel %vm1274, %v3850, %v3854
        %v3856 = vshrl.u32 %v3795, 16
        %v3858 = vrot.slane %v3856, 4
        %v3859 = vor.u32 %v3858, %v3854
        %v3860 = vrot.slane %v3859, 4
        %v3862 = vshll.u32 %v3796, 16
        %v3864 = vrot.slane %v3862, 5
        %v3865 = vsel %vm1274, %v3860, %v3864
        %v3867 = vshrl.u32 %v3797, 16
        %v3869 = vrot.slane %v3867, 4
        %v3870 = vshll.u32 %v3797, 16
        %v3872 = vrot.slane %v3870, 5
        %v3873 = vor.u32 %v3869, %v3872
        %v3874 = vrot.slane %v3873, 4
        %v3876 = vshll.u32 %v3798, 16
        %v3878 = vrot.slane %v3876, 5
        %v3879 = vsel %vm1274, %v3874, %v3878
        %v3880 = vshrl.u32 %v3798, 16
        %v3882 = vrot.slane %v3880, 4
        %v3883 = vor.u32 %v3882, %v3878
        %v3884 = vrot.slane %v3883, 4
        %v3886 = vshll.u32 %v3799, 16
        %v3888 = vrot.slane %v3886, 5
        %v3889 = vsel %vm1274, %v3884, %v3888
        %v3891 = vshrl.u32 %v3800, 16
        %v3893 = vrot.slane %v3891, 4
        %v3894 = vshll.u32 %v3800, 16
        %v3896 = vrot.slane %v3894, 5
        %v3897 = vor.u32 %v3893, %v3896
        %v3898 = vrot.slane %v3897, 4
        %v3900 = vshll.u32 %v3801, 16
        %v3902 = vrot.slane %v3900, 5
        %v3903 = vsel %vm1274, %v3898, %v3902
        %v3904 = vshrl.u32 %v3801, 16
        %v3906 = vrot.slane %v3904, 4
        %v3907 = vor.u32 %v3906, %v3902
        %v3908 = vrot.slane %v3907, 4
        %v3910 = vshll.u32 %v3802, 16
        %v3912 = vrot.slane %v3910, 5
        %v3913 = vsel %vm1274, %v3908, %v3912
        %v3915 = vshrl.u32 %v3803, 16
        %v3917 = vrot.slane %v3915, 4
        %v3918 = vshll.u32 %v3803, 16
        %v3920 = vrot.slane %v3918, 5
        %v3921 = vor.u32 %v3917, %v3920
        %v3922 = vrot.slane %v3921, 4
        %v3924 = vshll.u32 %v3804, 16
        %v3926 = vrot.slane %v3924, 5
        %v3927 = vsel %vm1274, %v3922, %v3926
        %v3928 = vshrl.u32 %v3804, 16
        %v3930 = vrot.slane %v3928, 4
        %v3931 = vor.u32 %v3930, %v3926
        %v3932 = vrot.slane %v3931, 4
        %v3934 = vshll.u32 %v3805, 16
        %v3936 = vrot.slane %v3934, 5
        %v3937 = vsel %vm1274, %v3932, %v3936
        %v3939 = vshrl.u32 %v3806, 16
        %v3941 = vrot.slane %v3939, 4
        %v3942 = vshll.u32 %v3806, 16
        %v3944 = vrot.slane %v3942, 5
        %v3945 = vor.u32 %v3941, %v3944
        %v3946 = vrot.slane %v3945, 4
        %v3948 = vshll.u32 %v3807, 16
        %v3950 = vrot.slane %v3948, 5
        %v3951 = vsel %vm1274, %v3946, %v3950
        %v3952 = vshrl.u32 %v3807, 16
        %v3954 = vrot.slane %v3952, 4
        %v3955 = vor.u32 %v3954, %v3950
        %v3956 = vrot.slane %v3955, 4
        %v3958 = vshll.u32 %v3808, 16
        %v3960 = vrot.slane %v3958, 5
        %v3961 = vsel %vm1274, %v3956, %v3960
        %v3963 = vshrl.u32 %v3809, 16
        %v3965 = vrot.slane %v3963, 4
        %v3966 = vshll.u32 %v3809, 16
        %v3968 = vrot.slane %v3966, 5
        %v3969 = vor.u32 %v3965, %v3968
        %v3970 = vrot.slane %v3969, 4
        %v3972 = vshll.u32 %v3810, 16
        %v3974 = vrot.slane %v3972, 5
        %v3975 = vsel %vm1274, %v3970, %v3974
        %v3976 = vshrl.u32 %v3810, 16
        %v3978 = vrot.slane %v3976, 4
        %v3979 = vor.u32 %v3978, %v3974
        %v3980 = vrot.slane %v3979, 4
        %v3982 = vshll.u32 %v3811, 16
        %v3984 = vrot.slane %v3982, 5
        %v3985 = vsel %vm1274, %v3980, %v3984
        %v3987 = vshrl.u32 %v3812, 16
        %v3989 = vrot.slane %v3987, 4
        %v3990 = vshll.u32 %v3812, 16
        %v3992 = vrot.slane %v3990, 5
        %v3993 = vor.u32 %v3989, %v3992
        %v3994 = vrot.slane %v3993, 4
        %v3996 = vshll.u32 %v3813, 16
        %v3998 = vrot.slane %v3996, 5
        %v3999 = vsel %vm1274, %v3994, %v3998
        %v4000 = vshrl.u32 %v3813, 16
        %v4002 = vrot.slane %v4000, 4
        %v4003 = vor.u32 %v4002, %v3998
        %v4004 = vrot.slane %v4003, 4
        %v4006 = vshll.u32 %v3814, 16
        %v4008 = vrot.slane %v4006, 5
        %v4009 = vsel %vm1274, %v4004, %v4008
        %v4011 = vshrl.u32 %v3815, 16
        %v4013 = vrot.slane %v4011, 4
        %v4014 = vshll.u32 %v3815, 16
        %v4016 = vrot.slane %v4014, 5
        %v4017 = vor.u32 %v4013, %v4016
        %v4018 = vrot.slane %v4017, 4
        %v4020 = vshll.u32 %v3816, 16
        %v4022 = vrot.slane %v4020, 5
        %v4023 = vsel %vm1274, %v4018, %v4022
        %v4024 = vshrl.u32 %v3816, 16
        %v4026 = vrot.slane %v4024, 4
        %v4027 = vor.u32 %v4026, %v4022
        %v4028 = vrot.slane %v4027, 4
        %v4030 = vshll.u32 %v3817, 16
        %v4032 = vrot.slane %v4030, 5
        %v4033 = vsel %vm1274, %v4028, %v4032
        %v4035 = vshrl.u32 %v3818, 16
        %v4037 = vrot.slane %v4035, 4
        %v4038 = vshll.u32 %v3818, 16
        %v4040 = vrot.slane %v4038, 5
        %v4041 = vor.u32 %v4037, %v4040
        %v4042 = vrot.slane %v4041, 4
        %v4044 = vshll.u32 %v3819, 16
        %v4046 = vrot.slane %v4044, 5
        %v4047 = vsel %vm1274, %v4042, %v4046
        %v4048 = vshrl.u32 %v3819, 16
        %v4050 = vrot.slane %v4048, 4
        %v4051 = vor.u32 %v4050, %v4046
        %v4052 = vrot.slane %v4051, 4
        %v4054 = vshll.u32 %v3820, 16
        %v4056 = vrot.slane %v4054, 5
        %v4057 = vsel %vm1274, %v4052, %v4056
        %v4059 = vshrl.u32 %v3821, 16
        %v4061 = vrot.slane %v4059, 4
        %v4062 = vshll.u32 %v3821, 16
        %v4064 = vrot.slane %v4062, 5
        %v4065 = vor.u32 %v4061, %v4064
        %v4066 = vrot.slane %v4065, 4
        %v4068 = vshll.u32 %v3822, 16
        %v4070 = vrot.slane %v4068, 5
        %v4071 = vsel %vm1274, %v4066, %v4070
        %v4072 = vshrl.u32 %v3822, 16
        %v4074 = vrot.slane %v4072, 4
        %v4075 = vor.u32 %v4074, %v4070
        %v4076 = vrot.slane %v4075, 4
        %v4078 = vshll.u32 %v3823, 16
        %v4080 = vrot.slane %v4078, 5
        %v4081 = vsel %vm1274, %v4076, %v4080
        %v4083 = vshrl.u32 %v3824, 16
        %v4085 = vrot.slane %v4083, 4
        %v4086 = vshll.u32 %v3824, 16
        %v4088 = vrot.slane %v4086, 5
        %v4089 = vor.u32 %v4085, %v4088
        %v4090 = vrot.slane %v4089, 4
        %v4092 = vshll.u32 %v3825, 16
        %v4094 = vrot.slane %v4092, 5
        %v4095 = vsel %vm1274, %v4090, %v4094
        %v4096 = vshrl.u32 %v3825, 16
        %v4098 = vrot.slane %v4096, 4
        %v4099 = vor.u32 %v4098, %v4094
        %v4100 = vrot.slane %v4099, 4
        %v4102 = vshll.u32 %v3826, 16
        %v4104 = vrot.slane %v4102, 5
        %v4105 = vsel %vm1274, %v4100, %v4104
        %v4107 = vshrl.u32 %v3827, 16
        %v4109 = vrot.slane %v4107, 4
        %v4110 = vshll.u32 %v3827, 16
        %v4112 = vrot.slane %v4110, 5
        %v4113 = vor.u32 %v4109, %v4112
        %v4114 = vrot.slane %v4113, 4
        %v4116 = vshll.u32 %v3828, 16
        %v4118 = vrot.slane %v4116, 5
        %v4119 = vsel %vm1274, %v4114, %v4118
        %v4120 = vshrl.u32 %v3828, 16
        %v4122 = vrot.slane %v4120, 4
        %v4123 = vor.u32 %v4122, %v4118
        %v4124 = vrot.slane %v4123, 4
        %v4126 = vshll.u32 %v3829, 16
        %v4128 = vrot.slane %v4126, 5
        %v4129 = vsel %vm1274, %v4124, %v4128
        %v4131 = vshrl.u32 %v3830, 16
        %v4133 = vrot.slane %v4131, 4
        %v4134 = vshll.u32 %v3830, 16
        %v4136 = vrot.slane %v4134, 5
        %v4137 = vor.u32 %v4133, %v4136
        %v4138 = vrot.slane %v4137, 4
        %v4140 = vshll.u32 %v3831, 16
        %v4142 = vrot.slane %v4140, 5
        %v4143 = vsel %vm1274, %v4138, %v4142
        %v4144 = vshrl.u32 %v3831, 16
        %v4146 = vrot.slane %v4144, 4
        %v4147 = vor.u32 %v4146, %v4142
        %v4148 = vrot.slane %v4147, 4
        %v4150 = vshll.u32 %v3832, 16
        %v4152 = vrot.slane %v4150, 5
        %v4153 = vsel %vm1274, %v4148, %v4152
        %v4155 = vshrl.u32 %v3833, 16
        %v4157 = vrot.slane %v4155, 4
        %v4158 = vshll.u32 %v3833, 16
        %v4160 = vrot.slane %v4158, 5
        %v4161 = vor.u32 %v4157, %v4160
        %v4162 = vrot.slane %v4161, 4
        %v4164 = vshll.u32 %v3834, 16
        %v4166 = vrot.slane %v4164, 5
        %v4167 = vsel %vm1274, %v4162, %v4166
        %v4168 = vshrl.u32 %v3834, 16
        %v4170 = vrot.slane %v4168, 4
        %v4171 = vor.u32 %v4170, %v4166
        %v4172 = vrot.slane %v4171, 4
        %v4174 = vshll.u32 %v3835, 16
        %v4176 = vrot.slane %v4174, 5
        %v4177 = vsel %vm1274, %v4172, %v4176
        %v4179 = vshrl.u32 %v3836, 16
        %v4181 = vrot.slane %v4179, 4
        %v4182 = vshll.u32 %v3836, 16
        %v4184 = vrot.slane %v4182, 5
        %v4185 = vor.u32 %v4181, %v4184
        %v4186 = vrot.slane %v4185, 4
        %v4188 = vshll.u32 %v3837, 16
        %v4190 = vrot.slane %v4188, 5
        %v4191 = vsel %vm1274, %v4186, %v4190
        %v4192 = vshrl.u32 %v3837, 16
        %v4194 = vrot.slane %v4192, 4
        %v4195 = vor.u32 %v4194, %v4190
        %v4196 = vrot.slane %v4195, 4
        %v4198 = vshll.u32 %v3838, 16
        %v4200 = vrot.slane %v4198, 5
        %v4201 = vsel %vm1274, %v4196, %v4200
        %v4203 = vshrl.u32 %v3839, 16
        %v4205 = vrot.slane %v4203, 4
        %v4206 = vshll.u32 %v3839, 16
        %v4208 = vrot.slane %v4206, 5
        %v4209 = vor.u32 %v4205, %v4208
        %v4210 = vrot.slane %v4209, 4
        %v4212 = vshll.u32 %v3840, 16
        %v4214 = vrot.slane %v4212, 5
        %v4215 = vsel %vm1274, %v4210, %v4214
        %v4216 = vshrl.u32 %v3840, 16
        %v4218 = vrot.slane %v4216, 4
        %v4219 = vor.u32 %v4218, %v4214
        %v4220 = vrot.slane %v4219, 4
        %v4222 = vshll.u32 %v3841, 16
        %v4224 = vrot.slane %v4222, 5
        %v4225 = vsel %vm1274, %v4220, %v4224
        %4258 = vst.msk [vmem:[#allocation4 + $0x4] sm:$0xf] %vm267, %v3855
        %4259 = vst.msk [vmem:[#allocation4 + $0xc] sm:$0xf] %vm267, %v3865
        %4260 = vst.msk [vmem:[#allocation4 + $0x14] sm:$0xf] %vm267, %v3879
        %4261 = vst.msk [vmem:[#allocation4 + $0x1c] sm:$0xf] %vm267, %v3889
        %4262 = vst.msk [vmem:[#allocation4 + $0x24] sm:$0xf] %vm267, %v3903
        %4263 = vst.msk [vmem:[#allocation4 + $0x2c] sm:$0xf] %vm267, %v3913
        %4264 = vst.msk [vmem:[#allocation4 + $0x34] sm:$0xf] %vm267, %v3927
        %4265 = vst.msk [vmem:[#allocation4 + $0x3c] sm:$0xf] %vm267, %v3937
        %4266 = vst.msk [vmem:[#allocation4 + $0x44] sm:$0xf] %vm267, %v3951
        %4267 = vst.msk [vmem:[#allocation4 + $0x4c] sm:$0xf] %vm267, %v3961
        %4268 = vst.msk [vmem:[#allocation4 + $0x54] sm:$0xf] %vm267, %v3975
        %4269 = vst.msk [vmem:[#allocation4 + $0x5c] sm:$0xf] %vm267, %v3985
        %4270 = vst.msk [vmem:[#allocation4 + $0x64] sm:$0xf] %vm267, %v3999
        %4271 = vst.msk [vmem:[#allocation4 + $0x6c] sm:$0xf] %vm267, %v4009
        %4272 = vst.msk [vmem:[#allocation4 + $0x74] sm:$0xf] %vm267, %v4023
        %4273 = vst.msk [vmem:[#allocation4 + $0x7c] sm:$0xf] %vm267, %v4033
        %4274 = vst.msk [vmem:[#allocation4 + $0x84] sm:$0xf] %vm267, %v4047
        %4275 = vst.msk [vmem:[#allocation4 + $0x8c] sm:$0xf] %vm267, %v4057
        %4276 = vst.msk [vmem:[#allocation4 + $0x94] sm:$0xf] %vm267, %v4071
        %4277 = vst.msk [vmem:[#allocation4 + $0x9c] sm:$0xf] %vm267, %v4081
        %4278 = vst.msk [vmem:[#allocation4 + $0xa4] sm:$0xf] %vm267, %v4095
        %4279 = vst.msk [vmem:[#allocation4 + $0xac] sm:$0xf] %vm267, %v4105
        %4280 = vst.msk [vmem:[#allocation4 + $0xb4] sm:$0xf] %vm267, %v4119
        %4281 = vst.msk [vmem:[#allocation4 + $0xbc] sm:$0xf] %vm267, %v4129
        %4282 = vst.msk [vmem:[#allocation4 + $0xc4] sm:$0xf] %vm267, %v4143
        %4283 = vst.msk [vmem:[#allocation4 + $0xcc] sm:$0xf] %vm267, %v4153
        %4284 = vst.msk [vmem:[#allocation4 + $0xd4] sm:$0xf] %vm267, %v4167
        %4285 = vst.msk [vmem:[#allocation4 + $0xdc] sm:$0xf] %vm267, %v4177
        %4286 = vst.msk [vmem:[#allocation4 + $0xe4] sm:$0xf] %vm267, %v4191
        %4287 = vst.msk [vmem:[#allocation4 + $0xec] sm:$0xf] %vm267, %v4201
        %4288 = vst.msk [vmem:[#allocation4 + $0xf4] sm:$0xf] %vm267, %v4215
        %4289 = vst.msk [vmem:[#allocation4 + $0xfc] sm:$0xf] %vm267, %v4225
        %v4290 = vld [vmem:[#allocation4] sm:$0xff]
        %v4291 = vld [vmem:[#allocation4 + $0x8] sm:$0xff]
        %v4292 = vld [vmem:[#allocation4 + $0x10] sm:$0xff]
        %v4293 = vld [vmem:[#allocation4 + $0x18] sm:$0xff]
        %v4294 = vld [vmem:[#allocation4 + $0x20] sm:$0xff]
        %v4295 = vld [vmem:[#allocation4 + $0x28] sm:$0xff]
        %v4296 = vld [vmem:[#allocation4 + $0x30] sm:$0xff]
        %v4297 = vld [vmem:[#allocation4 + $0x38] sm:$0xff]
        %v4298 = vld [vmem:[#allocation4 + $0x40] sm:$0xff]
        %v4299 = vld [vmem:[#allocation4 + $0x48] sm:$0xff]
        %v4300 = vld [vmem:[#allocation4 + $0x50] sm:$0xff]
        %v4301 = vld [vmem:[#allocation4 + $0x58] sm:$0xff]
        %v4302 = vld [vmem:[#allocation4 + $0x60] sm:$0xff]
        %v4303 = vld [vmem:[#allocation4 + $0x68] sm:$0xff]
        %v4304 = vld [vmem:[#allocation4 + $0x70] sm:$0xff]
        %v4305 = vld [vmem:[#allocation4 + $0x78] sm:$0xff]
        %v4306 = vld [vmem:[#allocation4 + $0x80] sm:$0xff]
        %v4307 = vld [vmem:[#allocation4 + $0x88] sm:$0xff]
        %v4308 = vld [vmem:[#allocation4 + $0x90] sm:$0xff]
        %v4309 = vld [vmem:[#allocation4 + $0x98] sm:$0xff]
        %v4310 = vld [vmem:[#allocation4 + $0xa0] sm:$0xff]
        %v4311 = vld [vmem:[#allocation4 + $0xa8] sm:$0xff]
        %v4312 = vld [vmem:[#allocation4 + $0xb0] sm:$0xff]
        %v4313 = vld [vmem:[#allocation4 + $0xb8] sm:$0xff]
        %v4314 = vld [vmem:[#allocation4 + $0xc0] sm:$0xff]
        %v4315 = vld [vmem:[#allocation4 + $0xc8] sm:$0xff]
        %v4316 = vld [vmem:[#allocation4 + $0xd0] sm:$0xff]
        %v4317 = vld [vmem:[#allocation4 + $0xd8] sm:$0xff]
        %v4318 = vld [vmem:[#allocation4 + $0xe0] sm:$0xff]
        %v4319 = vld [vmem:[#allocation4 + $0xe8] sm:$0xff]
        %v4320 = vld [vmem:[#allocation4 + $0xf0] sm:$0xff]
        %v4321 = vld [vmem:[#allocation4 + $0xf8] sm:$0xff]
        %v4322 = vld [vmem:[%s1] sm:$0xf]
        %v4323 = vld [vmem:[%s1 + $0x4] sm:$0xf]
        %v4324 = vld [vmem:[%s1 + $0x8] sm:$0xf]
        %v4325 = vld [vmem:[%s1 + $0xc] sm:$0xf]
        %v4326 = vld [vmem:[%s1 + $0x10] sm:$0xf]
        %v4327 = vld [vmem:[%s1 + $0x14] sm:$0xf]
        %v4328 = vld [vmem:[%s1 + $0x18] sm:$0xf]
        %v4329 = vld [vmem:[%s1 + $0x1c] sm:$0xf]
        %v4330 = vld [vmem:[%s1 + $0x20] sm:$0xf]
        %v4331 = vld [vmem:[%s1 + $0x24] sm:$0xf]
        %v4332 = vld [vmem:[%s1 + $0x28] sm:$0xf]
        %v4333 = vld [vmem:[%s1 + $0x2c] sm:$0xf]
        %v4334 = vld [vmem:[%s1 + $0x30] sm:$0xf]
        %v4335 = vld [vmem:[%s1 + $0x34] sm:$0xf]
        %v4336 = vld [vmem:[%s1 + $0x38] sm:$0xf]
        %v4337 = vld [vmem:[%s1 + $0x3c] sm:$0xf]
        %v4338 = vld [vmem:[%s1 + $0x40] sm:$0xf]
        %v4339 = vld [vmem:[%s1 + $0x44] sm:$0xf]
        %v4340 = vld [vmem:[%s2] sm:$0x1]
        %v4342 = vlaneseq
        %v4343 = vshrl.u32 %v4342, 7
        %v4344 = vsub.s32 0, %v4343
        %v4345 = vrot.slane %v4340, %v4344
        %v4379 = vunpack.c.l.b16 %v4290
        %v4380 = vunpack.c.h.b16 %v4290
        %v4381 = vunpack.c.l.b16 %v4291
        %v4382 = vunpack.c.h.b16 %v4291
        %v4383 = vunpack.c.l.b16 %v4292
        %v4384 = vunpack.c.h.b16 %v4292
        %v4385 = vunpack.c.l.b16 %v4293
        %v4386 = vunpack.c.h.b16 %v4293
        %v4387 = vunpack.c.l.b16 %v4294
        %v4388 = vunpack.c.h.b16 %v4294
        %v4389 = vunpack.c.l.b16 %v4295
        %v4390 = vunpack.c.h.b16 %v4295
        %v4391 = vunpack.c.l.b16 %v4296
        %v4392 = vunpack.c.h.b16 %v4296
        %v4393 = vunpack.c.l.b16 %v4297
        %v4394 = vunpack.c.h.b16 %v4297
        %v4395 = vunpack.c.l.b16 %v4298
        %v4396 = vunpack.c.h.b16 %v4298
        %v4397 = vunpack.c.l.b16 %v4299
        %v4398 = vunpack.c.h.b16 %v4299
        %v4399 = vunpack.c.l.b16 %v4300
        %v4400 = vunpack.c.h.b16 %v4300
        %v4401 = vunpack.c.l.b16 %v4301
        %v4402 = vunpack.c.h.b16 %v4301
        %v4403 = vunpack.c.l.b16 %v4302
        %v4404 = vunpack.c.h.b16 %v4302
        %v4405 = vunpack.c.l.b16 %v4303
        %v4406 = vunpack.c.h.b16 %v4303
        %v4407 = vunpack.c.l.b16 %v4304
        %v4408 = vunpack.c.h.b16 %v4304
        %v4409 = vunpack.c.l.b16 %v4305
        %v4410 = vunpack.c.h.b16 %v4305
        %v4411 = vunpack.c.l.b16 %v4306
        %v4412 = vunpack.c.h.b16 %v4306
        %v4413 = vunpack.c.l.b16 %v4307
        %v4414 = vunpack.c.h.b16 %v4307
        %v4415 = vunpack.c.l.b16 %v4308
        %v4416 = vunpack.c.h.b16 %v4308
        %v4417 = vunpack.c.l.b16 %v4309
        %v4418 = vunpack.c.h.b16 %v4309
        %v4419 = vunpack.c.l.b16 %v4310
        %v4420 = vunpack.c.h.b16 %v4310
        %v4421 = vunpack.c.l.b16 %v4311
        %v4422 = vunpack.c.h.b16 %v4311
        %v4423 = vunpack.c.l.b16 %v4312
        %v4424 = vunpack.c.h.b16 %v4312
        %v4425 = vunpack.c.l.b16 %v4313
        %v4426 = vunpack.c.h.b16 %v4313
        %v4427 = vunpack.c.l.b16 %v4314
        %v4428 = vunpack.c.h.b16 %v4314
        %v4429 = vunpack.c.l.b16 %v4315
        %v4430 = vunpack.c.h.b16 %v4315
        %v4431 = vunpack.c.l.b16 %v4316
        %v4432 = vunpack.c.h.b16 %v4316
        %v4433 = vunpack.c.l.b16 %v4317
        %v4434 = vunpack.c.h.b16 %v4317
        %v4435 = vunpack.c.l.b16 %v4318
        %v4436 = vunpack.c.h.b16 %v4318
        %v4437 = vunpack.c.l.b16 %v4319
        %v4438 = vunpack.c.h.b16 %v4319
        %v4439 = vunpack.c.l.b16 %v4320
        %v4440 = vunpack.c.h.b16 %v4320
        %v4441 = vunpack.c.l.b16 %v4321
        %v4442 = vunpack.c.h.b16 %v4321
        %v4443 = vpack.c.b16 %v4381, %v4379
        %v4444 = vpack.c.b16 %v4382, %v4380
        %v4445 = vpack.c.b16 %v4385, %v4383
        %v4446 = vpack.c.b16 %v4386, %v4384
        %v4447 = vpack.c.b16 %v4389, %v4387
        %v4448 = vpack.c.b16 %v4390, %v4388
        %v4449 = vpack.c.b16 %v4393, %v4391
        %v4450 = vpack.c.b16 %v4394, %v4392
        %v4451 = vpack.c.b16 %v4397, %v4395
        %v4452 = vpack.c.b16 %v4398, %v4396
        %v4453 = vpack.c.b16 %v4401, %v4399
        %v4454 = vpack.c.b16 %v4402, %v4400
        %v4455 = vpack.c.b16 %v4405, %v4403
        %v4456 = vpack.c.b16 %v4406, %v4404
        %v4457 = vpack.c.b16 %v4409, %v4407
        %v4458 = vpack.c.b16 %v4410, %v4408
        %v4459 = vpack.c.b16 %v4413, %v4411
        %v4460 = vpack.c.b16 %v4414, %v4412
        %v4461 = vpack.c.b16 %v4417, %v4415
        %v4462 = vpack.c.b16 %v4418, %v4416
        %v4463 = vpack.c.b16 %v4421, %v4419
        %v4464 = vpack.c.b16 %v4422, %v4420
        %v4465 = vpack.c.b16 %v4425, %v4423
        %v4466 = vpack.c.b16 %v4426, %v4424
        %v4467 = vpack.c.b16 %v4429, %v4427
        %v4468 = vpack.c.b16 %v4430, %v4428
        %v4469 = vpack.c.b16 %v4433, %v4431
        %v4470 = vpack.c.b16 %v4434, %v4432
        %v4471 = vpack.c.b16 %v4437, %v4435
        %v4472 = vpack.c.b16 %v4438, %v4436
        %v4473 = vpack.c.b16 %v4441, %v4439
        %v4474 = vpack.c.b16 %v4442, %v4440
        %v4509 = vunpack.c.l.b16 %v4322
        %v4510 = vunpack.c.l.b16 %v4323
        %v4511 = vunpack.c.l.b16 %v4324
        %v4512 = vunpack.c.l.b16 %v4325
        %v4513 = vunpack.c.l.b16 %v4326
        %v4514 = vunpack.c.l.b16 %v4327
        %v4515 = vunpack.c.l.b16 %v4328
        %v4516 = vunpack.c.l.b16 %v4329
        %v4517 = vunpack.c.l.b16 %v4330
        %v4518 = vunpack.c.l.b16 %v4331
        %v4519 = vunpack.c.l.b16 %v4332
        %v4520 = vunpack.c.l.b16 %v4333
        %v4521 = vunpack.c.l.b16 %v4334
        %v4522 = vunpack.c.l.b16 %v4335
        %v4523 = vunpack.c.l.b16 %v4336
        %v4524 = vunpack.c.l.b16 %v4337
        %v4525 = vunpack.c.l.b16 %v4338
        %v4526 = vunpack.c.l.b16 %v4339
        %v4527 = vpack.c.b16 %v4510, %v4509
        %v4528 = vpack.c.b16 %v4512, %v4511
        %v4529 = vpack.c.b16 %v4514, %v4513
        %v4530 = vpack.c.b16 %v4516, %v4515
        %v4531 = vpack.c.b16 %v4518, %v4517
        %v4532 = vpack.c.b16 %v4520, %v4519
        %v4533 = vpack.c.b16 %v4522, %v4521
        %v4534 = vpack.c.b16 %v4524, %v4523
        %v4535 = vpack.c.b16 %v4526, %v4525
        %vm4545 = vcmask 130048
        %v4547 = vsel %vm4545, %v4444, 0
        %v4550 = vsel %vm4545, %v4446, 0
        %v4553 = vsel %vm4545, %v4448, 0
        %v4556 = vsel %vm4545, %v4450, 0
        %v4559 = vsel %vm4545, %v4452, 0
        %v4562 = vsel %vm4545, %v4454, 0
        %v4565 = vsel %vm4545, %v4456, 0
        %v4568 = vsel %vm4545, %v4458, 0
        %v4571 = vsel %vm4545, %v4460, 0
        %v4574 = vsel %vm4545, %v4462, 0
        %v4577 = vsel %vm4545, %v4464, 0
        %v4580 = vsel %vm4545, %v4466, 0
        %v4583 = vsel %vm4545, %v4468, 0
        %v4586 = vsel %vm4545, %v4470, 0
        %v4589 = vsel %vm4545, %v4472, 0
        %v4592 = vsel %vm4545, %v4474, 0
        %4594 = vmatprep.subr.bf16.mxu0 0
        %4595 = vmatpush1.bf16.msra.mxu0 %v4534
        %4596 = vmatprep.subr.bf16.mxu0 0
        %4597 = vmatpush1.bf16.msra.mxu0 %v4533
        %4598 = vmatprep.subr.bf16.mxu0 0
        %4599 = vmatpush1.bf16.msra.mxu0 %v4532
        %4600 = vmatprep.subr.bf16.mxu0 0
        %4601 = vmatpush1.bf16.msra.mxu0 %v4531
        %4602 = vmatprep.subr.bf16.mxu0 0
        %4603 = vmatpush1.bf16.msra.mxu0 %v4530
        %4604 = vmatprep.subr.bf16.mxu0 0
        %4605 = vmatpush1.bf16.msra.mxu0 %v4529
        %4606 = vmatprep.subr.bf16.mxu0 0
        %4607 = vmatpush1.bf16.msra.mxu0 %v4528
        %4608 = vmatprep.subr.bf16.mxu0 0
        %4609 = vmatpush1.bf16.msra.mxu0 %v4527
        %4610 = vmatprep.subr.bf16.mxu0 0
        %4611 = vmatpush2.bf16.msra.mxu0 0
        %4612 = vmatprep.subr.bf16.mxu0 0
        %4613 = vmatpush2.bf16.msra.mxu0 0
        %4614 = vmatprep.subr.bf16.mxu0 0
        %4615 = vmatpush2.bf16.msra.mxu0 0
        %4616 = vmatprep.subr.bf16.mxu0 0
        %4617 = vmatpush2.bf16.msra.mxu0 0
        %4618 = vmatprep.subr.bf16.mxu0 0
        %4619 = vmatpush2.bf16.msra.mxu0 0
        %4620 = vmatprep.subr.bf16.mxu0 0
        %4621 = vmatpush2.bf16.msra.mxu0 0
        %4622 = vmatprep.subr.bf16.mxu0 0
        %4623 = vmatpush2.bf16.msra.mxu0 0
        %4624 = vmatprep.subr.bf16.mxu0 0
        %4625 = vmatpush2.bf16.msra.mxu0 %v4535
        %4626 = vmatprep.mubr.bf16.mxu0 %v4547
        %4627 = vmatmul.mubr.bf16.gmra.mxu0 %v4443
        %v4628 = vpop.f32.mrf.mxu0
        %v4629 = vadd.f32 %v4345, %v4628
        %v4630 = vpop.f32.mrf.mxu0
        %v4631 = vpop.f32.mrf.mxu0
        %v4632 = vadd.f32 %v4345, %v4631
        %v4633 = vpop.f32.mrf.mxu0
        %4634 = vmatprep.mubr.bf16.mxu0 %v4550
        %4635 = vmatmul.mubr.bf16.gmra.mxu0 %v4445
        %v4636 = vpop.f32.mrf.mxu0
        %v4637 = vadd.f32 %v4345, %v4636
        %v4638 = vpop.f32.mrf.mxu0
        %v4639 = vpop.f32.mrf.mxu0
        %v4640 = vadd.f32 %v4345, %v4639
        %v4641 = vpop.f32.mrf.mxu0
        %4642 = vmatprep.mubr.bf16.mxu0 %v4553
        %4643 = vmatmul.mubr.bf16.gmra.mxu0 %v4447
        %v4644 = vpop.f32.mrf.mxu0
        %v4645 = vadd.f32 %v4345, %v4644
        %v4646 = vpop.f32.mrf.mxu0
        %v4647 = vpop.f32.mrf.mxu0
        %v4648 = vadd.f32 %v4345, %v4647
        %v4649 = vpop.f32.mrf.mxu0
        %4650 = vmatprep.mubr.bf16.mxu0 %v4556
        %4651 = vmatmul.mubr.bf16.gmra.mxu0 %v4449
        %v4652 = vpop.f32.mrf.mxu0
        %v4653 = vadd.f32 %v4345, %v4652
        %v4654 = vpop.f32.mrf.mxu0
        %v4655 = vpop.f32.mrf.mxu0
        %v4656 = vadd.f32 %v4345, %v4655
        %v4657 = vpop.f32.mrf.mxu0
        %4658 = vmatprep.mubr.bf16.mxu0 %v4559
        %4659 = vmatmul.mubr.bf16.gmra.mxu0 %v4451
        %v4660 = vpop.f32.mrf.mxu0
        %v4661 = vadd.f32 %v4345, %v4660
        %v4662 = vpop.f32.mrf.mxu0
        %v4663 = vpop.f32.mrf.mxu0
        %v4664 = vadd.f32 %v4345, %v4663
        %v4665 = vpop.f32.mrf.mxu0
        %4666 = vmatprep.mubr.bf16.mxu0 %v4562
        %4667 = vmatmul.mubr.bf16.gmra.mxu0 %v4453
        %v4668 = vpop.f32.mrf.mxu0
        %v4669 = vadd.f32 %v4345, %v4668
        %v4670 = vpop.f32.mrf.mxu0
        %v4671 = vpop.f32.mrf.mxu0
        %v4672 = vadd.f32 %v4345, %v4671
        %v4673 = vpop.f32.mrf.mxu0
        %4674 = vmatprep.mubr.bf16.mxu0 %v4565
        %4675 = vmatmul.mubr.bf16.gmra.mxu0 %v4455
        %v4676 = vpop.f32.mrf.mxu0
        %v4677 = vadd.f32 %v4345, %v4676
        %v4678 = vpop.f32.mrf.mxu0
        %v4679 = vpop.f32.mrf.mxu0
        %v4680 = vadd.f32 %v4345, %v4679
        %v4681 = vpop.f32.mrf.mxu0
        %4682 = vmatprep.mubr.bf16.mxu0 %v4568
        %4683 = vmatmul.mubr.bf16.gmra.mxu0 %v4457
        %v4684 = vpop.f32.mrf.mxu0
        %v4685 = vadd.f32 %v4345, %v4684
        %v4686 = vpop.f32.mrf.mxu0
        %v4687 = vpop.f32.mrf.mxu0
        %v4688 = vadd.f32 %v4345, %v4687
        %v4689 = vpop.f32.mrf.mxu0
        %4690 = vmatprep.mubr.bf16.mxu0 %v4571
        %4691 = vmatmul.mubr.bf16.gmra.mxu0 %v4459
        %v4692 = vpop.f32.mrf.mxu0
        %v4693 = vadd.f32 %v4345, %v4692
        %v4694 = vpop.f32.mrf.mxu0
        %v4695 = vpop.f32.mrf.mxu0
        %v4696 = vadd.f32 %v4345, %v4695
        %v4697 = vpop.f32.mrf.mxu0
        %4698 = vmatprep.mubr.bf16.mxu0 %v4574
        %4699 = vmatmul.mubr.bf16.gmra.mxu0 %v4461
        %v4700 = vpop.f32.mrf.mxu0
        %v4701 = vadd.f32 %v4345, %v4700
        %v4702 = vpop.f32.mrf.mxu0
        %v4703 = vpop.f32.mrf.mxu0
        %v4704 = vadd.f32 %v4345, %v4703
        %v4705 = vpop.f32.mrf.mxu0
        %4706 = vmatprep.mubr.bf16.mxu0 %v4577
        %4707 = vmatmul.mubr.bf16.gmra.mxu0 %v4463
        %v4708 = vpop.f32.mrf.mxu0
        %v4709 = vadd.f32 %v4345, %v4708
        %v4710 = vpop.f32.mrf.mxu0
        %v4711 = vpop.f32.mrf.mxu0
        %v4712 = vadd.f32 %v4345, %v4711
        %v4713 = vpop.f32.mrf.mxu0
        %4714 = vmatprep.mubr.bf16.mxu0 %v4580
        %4715 = vmatmul.mubr.bf16.gmra.mxu0 %v4465
        %v4716 = vpop.f32.mrf.mxu0
        %v4717 = vadd.f32 %v4345, %v4716
        %v4718 = vpop.f32.mrf.mxu0
        %v4719 = vpop.f32.mrf.mxu0
        %v4720 = vadd.f32 %v4345, %v4719
        %v4721 = vpop.f32.mrf.mxu0
        %4722 = vmatprep.mubr.bf16.mxu0 %v4583
        %4723 = vmatmul.mubr.bf16.gmra.mxu0 %v4467
        %v4724 = vpop.f32.mrf.mxu0
        %v4725 = vadd.f32 %v4345, %v4724
        %v4726 = vpop.f32.mrf.mxu0
        %v4727 = vpop.f32.mrf.mxu0
        %v4728 = vadd.f32 %v4345, %v4727
        %v4729 = vpop.f32.mrf.mxu0
        %4730 = vmatprep.mubr.bf16.mxu0 %v4586
        %4731 = vmatmul.mubr.bf16.gmra.mxu0 %v4469
        %v4732 = vpop.f32.mrf.mxu0
        %v4733 = vadd.f32 %v4345, %v4732
        %v4734 = vpop.f32.mrf.mxu0
        %v4735 = vpop.f32.mrf.mxu0
        %v4736 = vadd.f32 %v4345, %v4735
        %v4737 = vpop.f32.mrf.mxu0
        %4738 = vmatprep.mubr.bf16.mxu0 %v4589
        %4739 = vmatmul.mubr.bf16.gmra.mxu0 %v4471
        %v4740 = vpop.f32.mrf.mxu0
        %v4741 = vadd.f32 %v4345, %v4740
        %v4742 = vpop.f32.mrf.mxu0
        %v4743 = vpop.f32.mrf.mxu0
        %v4744 = vadd.f32 %v4345, %v4743
        %v4745 = vpop.f32.mrf.mxu0
        %4746 = vmatprep.mubr.bf16.mxu0 %v4592
        %4747 = vmatmul.mubr.bf16.gmra.mxu0 %v4473
        %v4748 = vpop.f32.mrf.mxu0
        %v4749 = vadd.f32 %v4345, %v4748
        %v4750 = vpop.f32.mrf.mxu0
        %v4751 = vpop.f32.mrf.mxu0
        %v4752 = vadd.f32 %v4345, %v4751
        %v4753 = vpop.f32.mrf.mxu0
        %4754 = vdwg.mxu0
        %vm4755 = vcmp.gt.f32.partialorder %v4629, 0.0
        %vm4756 = vcmp.gt.f32.partialorder %v4632, 0.0
        %vm4757 = vcmp.gt.f32.partialorder %v4637, 0.0
        %vm4758 = vcmp.gt.f32.partialorder %v4640, 0.0
        %vm4759 = vcmp.gt.f32.partialorder %v4645, 0.0
        %vm4760 = vcmp.gt.f32.partialorder %v4648, 0.0
        %vm4761 = vcmp.gt.f32.partialorder %v4653, 0.0
        %vm4762 = vcmp.gt.f32.partialorder %v4656, 0.0
        %vm4763 = vcmp.gt.f32.partialorder %v4661, 0.0
        %vm4764 = vcmp.gt.f32.partialorder %v4664, 0.0
        %vm4765 = vcmp.gt.f32.partialorder %v4669, 0.0
        %vm4766 = vcmp.gt.f32.partialorder %v4672, 0.0
        %vm4767 = vcmp.gt.f32.partialorder %v4677, 0.0
        %vm4768 = vcmp.gt.f32.partialorder %v4680, 0.0
        %vm4769 = vcmp.gt.f32.partialorder %v4685, 0.0
        %vm4770 = vcmp.gt.f32.partialorder %v4688, 0.0
        %vm4771 = vcmp.gt.f32.partialorder %v4693, 0.0
        %vm4772 = vcmp.gt.f32.partialorder %v4696, 0.0
        %vm4773 = vcmp.gt.f32.partialorder %v4701, 0.0
        %vm4774 = vcmp.gt.f32.partialorder %v4704, 0.0
        %vm4775 = vcmp.gt.f32.partialorder %v4709, 0.0
        %vm4776 = vcmp.gt.f32.partialorder %v4712, 0.0
        %vm4777 = vcmp.gt.f32.partialorder %v4717, 0.0
        %vm4778 = vcmp.gt.f32.partialorder %v4720, 0.0
        %vm4779 = vcmp.gt.f32.partialorder %v4725, 0.0
        %vm4780 = vcmp.gt.f32.partialorder %v4728, 0.0
        %vm4781 = vcmp.gt.f32.partialorder %v4733, 0.0
        %vm4782 = vcmp.gt.f32.partialorder %v4736, 0.0
        %vm4783 = vcmp.gt.f32.partialorder %v4741, 0.0
        %vm4784 = vcmp.gt.f32.partialorder %v4744, 0.0
        %vm4785 = vcmp.gt.f32.partialorder %v4749, 0.0
        %vm4786 = vcmp.gt.f32.partialorder %v4752, 0.0
        %v4787 = vmul.f32 %v4629, 0.1
        %v4788 = vmul.f32 %v4632, 0.1
        %v4789 = vmul.f32 %v4637, 0.1
        %v4790 = vmul.f32 %v4640, 0.1
        %v4791 = vmul.f32 %v4645, 0.1
        %v4792 = vmul.f32 %v4648, 0.1
        %v4793 = vmul.f32 %v4653, 0.1
        %v4794 = vmul.f32 %v4656, 0.1
        %v4795 = vmul.f32 %v4661, 0.1
        %v4796 = vmul.f32 %v4664, 0.1
        %v4797 = vmul.f32 %v4669, 0.1
        %v4798 = vmul.f32 %v4672, 0.1
        %v4799 = vmul.f32 %v4677, 0.1
        %v4800 = vmul.f32 %v4680, 0.1
        %v4801 = vmul.f32 %v4685, 0.1
        %v4802 = vmul.f32 %v4688, 0.1
        %v4803 = vmul.f32 %v4693, 0.1
        %v4804 = vmul.f32 %v4696, 0.1
        %v4805 = vmul.f32 %v4701, 0.1
        %v4806 = vmul.f32 %v4704, 0.1
        %v4807 = vmul.f32 %v4709, 0.1
        %v4808 = vmul.f32 %v4712, 0.1
        %v4809 = vmul.f32 %v4717, 0.1
        %v4810 = vmul.f32 %v4720, 0.1
        %v4811 = vmul.f32 %v4725, 0.1
        %v4812 = vmul.f32 %v4728, 0.1
        %v4813 = vmul.f32 %v4733, 0.1
        %v4814 = vmul.f32 %v4736, 0.1
        %v4815 = vmul.f32 %v4741, 0.1
        %v4816 = vmul.f32 %v4744, 0.1
        %v4817 = vmul.f32 %v4749, 0.1
        %v4818 = vmul.f32 %v4752, 0.1
        %v4819 = vsel %vm4755, %v4629, %v4787
        %v4820 = vsel %vm4756, %v4632, %v4788
        %v4821 = vsel %vm4757, %v4637, %v4789
        %v4822 = vsel %vm4758, %v4640, %v4790
        %v4823 = vsel %vm4759, %v4645, %v4791
        %v4824 = vsel %vm4760, %v4648, %v4792
        %v4825 = vsel %vm4761, %v4653, %v4793
        %v4826 = vsel %vm4762, %v4656, %v4794
        %v4827 = vsel %vm4763, %v4661, %v4795
        %v4828 = vsel %vm4764, %v4664, %v4796
        %v4829 = vsel %vm4765, %v4669, %v4797
        %v4830 = vsel %vm4766, %v4672, %v4798
        %v4831 = vsel %vm4767, %v4677, %v4799
        %v4832 = vsel %vm4768, %v4680, %v4800
        %v4833 = vsel %vm4769, %v4685, %v4801
        %v4834 = vsel %vm4770, %v4688, %v4802
        %v4835 = vsel %vm4771, %v4693, %v4803
        %v4836 = vsel %vm4772, %v4696, %v4804
        %v4837 = vsel %vm4773, %v4701, %v4805
        %v4838 = vsel %vm4774, %v4704, %v4806
        %v4839 = vsel %vm4775, %v4709, %v4807
        %v4840 = vsel %vm4776, %v4712, %v4808
        %v4841 = vsel %vm4777, %v4717, %v4809
        %v4842 = vsel %vm4778, %v4720, %v4810
        %v4843 = vsel %vm4779, %v4725, %v4811
        %v4844 = vsel %vm4780, %v4728, %v4812
        %v4845 = vsel %vm4781, %v4733, %v4813
        %v4846 = vsel %vm4782, %v4736, %v4814
        %v4847 = vsel %vm4783, %v4741, %v4815
        %v4848 = vsel %vm4784, %v4744, %v4816
        %v4849 = vsel %vm4785, %v4749, %v4817
        %v4850 = vsel %vm4786, %v4752, %v4818
        %v4851 = vpack.c.bf16 %v4820, %v4819
        %v4852 = vpack.c.bf16 %v4822, %v4821
        %v4853 = vpack.c.bf16 %v4824, %v4823
        %v4854 = vpack.c.bf16 %v4826, %v4825
        %v4855 = vpack.c.bf16 %v4828, %v4827
        %v4856 = vpack.c.bf16 %v4830, %v4829
        %v4857 = vpack.c.bf16 %v4832, %v4831
        %v4858 = vpack.c.bf16 %v4834, %v4833
        %v4859 = vpack.c.bf16 %v4836, %v4835
        %v4860 = vpack.c.bf16 %v4838, %v4837
        %v4861 = vpack.c.bf16 %v4840, %v4839
        %v4862 = vpack.c.bf16 %v4842, %v4841
        %v4863 = vpack.c.bf16 %v4844, %v4843
        %v4864 = vpack.c.bf16 %v4846, %v4845
        %v4865 = vpack.c.bf16 %v4848, %v4847
        %v4866 = vpack.c.bf16 %v4850, %v4849
        %v4883 = vunpack.c.l.b16 %v4851
        %v4884 = vunpack.c.h.b16 %v4851
        %v4885 = vunpack.c.l.b16 %v4852
        %v4886 = vunpack.c.h.b16 %v4852
        %v4887 = vunpack.c.l.b16 %v4853
        %v4888 = vunpack.c.h.b16 %v4853
        %v4889 = vunpack.c.l.b16 %v4854
        %v4890 = vunpack.c.h.b16 %v4854
        %v4891 = vunpack.c.l.b16 %v4855
        %v4892 = vunpack.c.h.b16 %v4855
        %v4893 = vunpack.c.l.b16 %v4856
        %v4894 = vunpack.c.h.b16 %v4856
        %v4895 = vunpack.c.l.b16 %v4857
        %v4896 = vunpack.c.h.b16 %v4857
        %v4897 = vunpack.c.l.b16 %v4858
        %v4898 = vunpack.c.h.b16 %v4858
        %v4899 = vunpack.c.l.b16 %v4859
        %v4900 = vunpack.c.h.b16 %v4859
        %v4901 = vunpack.c.l.b16 %v4860
        %v4902 = vunpack.c.h.b16 %v4860
        %v4903 = vunpack.c.l.b16 %v4861
        %v4904 = vunpack.c.h.b16 %v4861
        %v4905 = vunpack.c.l.b16 %v4862
        %v4906 = vunpack.c.h.b16 %v4862
        %v4907 = vunpack.c.l.b16 %v4863
        %v4908 = vunpack.c.h.b16 %v4863
        %v4909 = vunpack.c.l.b16 %v4864
        %v4910 = vunpack.c.h.b16 %v4864
        %v4911 = vunpack.c.l.b16 %v4865
        %v4912 = vunpack.c.h.b16 %v4865
        %v4913 = vunpack.c.l.b16 %v4866
        %v4914 = vunpack.c.h.b16 %v4866
        %v4915 = vpack.c.b16 %v4883, %v4883
        %v4916 = vpack.c.b16 %v4884, %v4884
        %v4917 = vpack.c.b16 %v4885, %v4885
        %v4918 = vpack.c.b16 %v4886, %v4886
        %v4919 = vpack.c.b16 %v4887, %v4887
        %v4920 = vpack.c.b16 %v4888, %v4888
        %v4921 = vpack.c.b16 %v4889, %v4889
        %v4922 = vpack.c.b16 %v4890, %v4890
        %v4923 = vpack.c.b16 %v4891, %v4891
        %v4924 = vpack.c.b16 %v4892, %v4892
        %v4925 = vpack.c.b16 %v4893, %v4893
        %v4926 = vpack.c.b16 %v4894, %v4894
        %v4927 = vpack.c.b16 %v4895, %v4895
        %v4928 = vpack.c.b16 %v4896, %v4896
        %v4929 = vpack.c.b16 %v4897, %v4897
        %v4930 = vpack.c.b16 %v4898, %v4898
        %v4931 = vpack.c.b16 %v4899, %v4899
        %v4932 = vpack.c.b16 %v4900, %v4900
        %v4933 = vpack.c.b16 %v4901, %v4901
        %v4934 = vpack.c.b16 %v4902, %v4902
        %v4935 = vpack.c.b16 %v4903, %v4903
        %v4936 = vpack.c.b16 %v4904, %v4904
        %v4937 = vpack.c.b16 %v4905, %v4905
        %v4938 = vpack.c.b16 %v4906, %v4906
        %v4939 = vpack.c.b16 %v4907, %v4907
        %v4940 = vpack.c.b16 %v4908, %v4908
        %v4941 = vpack.c.b16 %v4909, %v4909
        %v4942 = vpack.c.b16 %v4910, %v4910
        %v4943 = vpack.c.b16 %v4911, %v4911
        %v4944 = vpack.c.b16 %v4912, %v4912
        %v4945 = vpack.c.b16 %v4913, %v4913
        %v4946 = vpack.c.b16 %v4914, %v4914
        %4979 = vst.msk [vmem:[%s404 + $0x8] sm:$0xf] %vm387, %v4915
        %4980 = vst.msk [vmem:[%s404 + $0xc] sm:$0xf] %vm387, %v4916
        %4981 = vst.msk [vmem:[%s404 + $0x1c] sm:$0xf] %vm387, %v4917
        %4982 = vst.msk [vmem:[%s404 + $0x20] sm:$0xf] %vm387, %v4918
        %4983 = vst.msk [vmem:[%s404 + $0x30] sm:$0xf] %vm387, %v4919
        %4984 = vst.msk [vmem:[%s404 + $0x34] sm:$0xf] %vm387, %v4920
        %4985 = vst.msk [vmem:[%s404 + $0x44] sm:$0xf] %vm387, %v4921
        %4986 = vst.msk [vmem:[%s404 + $0x48] sm:$0xf] %vm387, %v4922
        %4987 = vst.msk [vmem:[%s404 + $0x58] sm:$0xf] %vm387, %v4923
        %4988 = vst.msk [vmem:[%s404 + $0x5c] sm:$0xf] %vm387, %v4924
        %4989 = vst.msk [vmem:[%s404 + $0x6c] sm:$0xf] %vm387, %v4925
        %4990 = vst.msk [vmem:[%s404 + $0x70] sm:$0xf] %vm387, %v4926
        %4991 = vst.msk [vmem:[%s404 + $0x80] sm:$0xf] %vm387, %v4927
        %4992 = vst.msk [vmem:[%s404 + $0x84] sm:$0xf] %vm387, %v4928
        %4993 = vst.msk [vmem:[%s404 + $0x94] sm:$0xf] %vm387, %v4929
        %4994 = vst.msk [vmem:[%s404 + $0x98] sm:$0xf] %vm387, %v4930
        %4995 = vst.msk [vmem:[%s404 + $0xa8] sm:$0xf] %vm387, %v4931
        %4996 = vst.msk [vmem:[%s404 + $0xac] sm:$0xf] %vm387, %v4932
        %4997 = vst.msk [vmem:[%s404 + $0xbc] sm:$0xf] %vm387, %v4933
        %4998 = vst.msk [vmem:[%s404 + $0xc0] sm:$0xf] %vm387, %v4934
        %4999 = vst.msk [vmem:[%s404 + $0xd0] sm:$0xf] %vm387, %v4935
        %5000 = vst.msk [vmem:[%s404 + $0xd4] sm:$0xf] %vm387, %v4936
        %5001 = vst.msk [vmem:[%s404 + $0xe4] sm:$0xf] %vm387, %v4937
        %5002 = vst.msk [vmem:[%s404 + $0xe8] sm:$0xf] %vm387, %v4938
        %5003 = vst.msk [vmem:[%s404 + $0xf8] sm:$0xf] %vm387, %v4939
        %5004 = vst.msk [vmem:[%s404 + $0xfc] sm:$0xf] %vm387, %v4940
        %5005 = vst.msk [vmem:[%s404 + $0x10c] sm:$0xf] %vm387, %v4941
        %5006 = vst.msk [vmem:[%s404 + $0x110] sm:$0xf] %vm387, %v4942
        %5007 = vst.msk [vmem:[%s404 + $0x120] sm:$0xf] %vm387, %v4943
        %5008 = vst.msk [vmem:[%s404 + $0x124] sm:$0xf] %vm387, %v4944
        %5009 = vst.msk [vmem:[%s404 + $0x134] sm:$0xf] %vm387, %v4945
        %5010 = vst.msk [vmem:[%s404 + $0x138] sm:$0xf] %vm387, %v4946
        %v5011 = vld [vmem:[#allocation3 + $0x4] sm:$0x8]
        %v5012 = vld [vmem:[#allocation3 + $0x8] sm:$0xf]
        %v5013 = vld [vmem:[#allocation3 + $0xc] sm:$0xf]
        %v5014 = vld [vmem:[#allocation3 + $0x18] sm:$0x8]
        %v5015 = vld [vmem:[#allocation3 + $0x1c] sm:$0xf]
        %v5016 = vld [vmem:[#allocation3 + $0x20] sm:$0xf]
        %v5017 = vld [vmem:[#allocation3 + $0x2c] sm:$0x8]
        %v5018 = vld [vmem:[#allocation3 + $0x30] sm:$0xf]
        %v5019 = vld [vmem:[#allocation3 + $0x34] sm:$0xf]
        %v5020 = vld [vmem:[#allocation3 + $0x40] sm:$0x8]
        %v5021 = vld [vmem:[#allocation3 + $0x44] sm:$0xf]
        %v5022 = vld [vmem:[#allocation3 + $0x48] sm:$0xf]
        %v5023 = vld [vmem:[#allocation3 + $0x54] sm:$0x8]
        %v5024 = vld [vmem:[#allocation3 + $0x58] sm:$0xf]
        %v5025 = vld [vmem:[#allocation3 + $0x5c] sm:$0xf]
        %v5026 = vld [vmem:[#allocation3 + $0x68] sm:$0x8]
        %v5027 = vld [vmem:[#allocation3 + $0x6c] sm:$0xf]
        %v5028 = vld [vmem:[#allocation3 + $0x70] sm:$0xf]
        %v5029 = vld [vmem:[#allocation3 + $0x7c] sm:$0x8]
        %v5030 = vld [vmem:[#allocation3 + $0x80] sm:$0xf]
        %v5031 = vld [vmem:[#allocation3 + $0x84] sm:$0xf]
        %v5032 = vld [vmem:[#allocation3 + $0x90] sm:$0x8]
        %v5033 = vld [vmem:[#allocation3 + $0x94] sm:$0xf]
        %v5034 = vld [vmem:[#allocation3 + $0x98] sm:$0xf]
        %v5035 = vld [vmem:[#allocation3 + $0xa4] sm:$0x8]
        %v5036 = vld [vmem:[#allocation3 + $0xa8] sm:$0xf]
        %v5037 = vld [vmem:[#allocation3 + $0xac] sm:$0xf]
        %v5038 = vld [vmem:[#allocation3 + $0xb8] sm:$0x8]
        %v5039 = vld [vmem:[#allocation3 + $0xbc] sm:$0xf]
        %v5040 = vld [vmem:[#allocation3 + $0xc0] sm:$0xf]
        %v5041 = vld [vmem:[#allocation3 + $0xcc] sm:$0x8]
        %v5042 = vld [vmem:[#allocation3 + $0xd0] sm:$0xf]
        %v5043 = vld [vmem:[#allocation3 + $0xd4] sm:$0xf]
        %v5044 = vld [vmem:[#allocation3 + $0xe0] sm:$0x8]
        %v5045 = vld [vmem:[#allocation3 + $0xe4] sm:$0xf]
        %v5046 = vld [vmem:[#allocation3 + $0xe8] sm:$0xf]
        %v5047 = vld [vmem:[#allocation3 + $0xf4] sm:$0x8]
        %v5048 = vld [vmem:[#allocation3 + $0xf8] sm:$0xf]
        %v5049 = vld [vmem:[#allocation3 + $0xfc] sm:$0xf]
        %v5050 = vld [vmem:[#allocation3 + $0x108] sm:$0x8]
        %v5051 = vld [vmem:[#allocation3 + $0x10c] sm:$0xf]
        %v5052 = vld [vmem:[#allocation3 + $0x110] sm:$0xf]
        %v5053 = vld [vmem:[#allocation3 + $0x11c] sm:$0x8]
        %v5054 = vld [vmem:[#allocation3 + $0x120] sm:$0xf]
        %v5055 = vld [vmem:[#allocation3 + $0x124] sm:$0xf]
        %v5056 = vld [vmem:[#allocation3 + $0x130] sm:$0x8]
        %v5057 = vld [vmem:[#allocation3 + $0x134] sm:$0xf]
        %v5058 = vld [vmem:[#allocation3 + $0x138] sm:$0xf]
        %v5060 = vshrl.u32 %v5011, 16
        %v5062 = vrot.slane %v5060, 7
        %v5063 = vrot.slane %v5062, 4
        %v5065 = vshrl.u32 %v5012, 16
        %v5067 = vrot.slane %v5065, 7
        %v5068 = vshll.u32 %v5012, 16
        %v5070 = vor.u32 %v5067, %v5068
        %v5071 = vsel %vm614, %v5063, %v5070
        %v5072 = vrot.slane %v5067, 4
        %v5074 = vshrl.u32 %v5013, 16
        %v5076 = vrot.slane %v5074, 7
        %v5077 = vshll.u32 %v5013, 16
        %v5079 = vor.u32 %v5076, %v5077
        %v5080 = vsel %vm614, %v5072, %v5079
        %v5082 = vshrl.u32 %v5014, 16
        %v5084 = vrot.slane %v5082, 7
        %v5085 = vrot.slane %v5084, 4
        %v5087 = vshrl.u32 %v5015, 16
        %v5089 = vrot.slane %v5087, 7
        %v5090 = vshll.u32 %v5015, 16
        %v5092 = vor.u32 %v5089, %v5090
        %v5093 = vsel %vm614, %v5085, %v5092
        %v5094 = vrot.slane %v5089, 4
        %v5096 = vshrl.u32 %v5016, 16
        %v5098 = vrot.slane %v5096, 7
        %v5099 = vshll.u32 %v5016, 16
        %v5101 = vor.u32 %v5098, %v5099
        %v5102 = vsel %vm614, %v5094, %v5101
        %v5104 = vshrl.u32 %v5017, 16
        %v5106 = vrot.slane %v5104, 7
        %v5107 = vrot.slane %v5106, 4
        %v5109 = vshrl.u32 %v5018, 16
        %v5111 = vrot.slane %v5109, 7
        %v5112 = vshll.u32 %v5018, 16
        %v5114 = vor.u32 %v5111, %v5112
        %v5115 = vsel %vm614, %v5107, %v5114
        %v5116 = vrot.slane %v5111, 4
        %v5118 = vshrl.u32 %v5019, 16
        %v5120 = vrot.slane %v5118, 7
        %v5121 = vshll.u32 %v5019, 16
        %v5123 = vor.u32 %v5120, %v5121
        %v5124 = vsel %vm614, %v5116, %v5123
        %v5126 = vshrl.u32 %v5020, 16
        %v5128 = vrot.slane %v5126, 7
        %v5129 = vrot.slane %v5128, 4
        %v5131 = vshrl.u32 %v5021, 16
        %v5133 = vrot.slane %v5131, 7
        %v5134 = vshll.u32 %v5021, 16
        %v5136 = vor.u32 %v5133, %v5134
        %v5137 = vsel %vm614, %v5129, %v5136
        %v5138 = vrot.slane %v5133, 4
        %v5140 = vshrl.u32 %v5022, 16
        %v5142 = vrot.slane %v5140, 7
        %v5143 = vshll.u32 %v5022, 16
        %v5145 = vor.u32 %v5142, %v5143
        %v5146 = vsel %vm614, %v5138, %v5145
        %v5148 = vshrl.u32 %v5023, 16
        %v5150 = vrot.slane %v5148, 7
        %v5151 = vrot.slane %v5150, 4
        %v5153 = vshrl.u32 %v5024, 16
        %v5155 = vrot.slane %v5153, 7
        %v5156 = vshll.u32 %v5024, 16
        %v5158 = vor.u32 %v5155, %v5156
        %v5159 = vsel %vm614, %v5151, %v5158
        %v5160 = vrot.slane %v5155, 4
        %v5162 = vshrl.u32 %v5025, 16
        %v5164 = vrot.slane %v5162, 7
        %v5165 = vshll.u32 %v5025, 16
        %v5167 = vor.u32 %v5164, %v5165
        %v5168 = vsel %vm614, %v5160, %v5167
        %v5170 = vshrl.u32 %v5026, 16
        %v5172 = vrot.slane %v5170, 7
        %v5173 = vrot.slane %v5172, 4
        %v5175 = vshrl.u32 %v5027, 16
        %v5177 = vrot.slane %v5175, 7
        %v5178 = vshll.u32 %v5027, 16
        %v5180 = vor.u32 %v5177, %v5178
        %v5181 = vsel %vm614, %v5173, %v5180
        %v5182 = vrot.slane %v5177, 4
        %v5184 = vshrl.u32 %v5028, 16
        %v5186 = vrot.slane %v5184, 7
        %v5187 = vshll.u32 %v5028, 16
        %v5189 = vor.u32 %v5186, %v5187
        %v5190 = vsel %vm614, %v5182, %v5189
        %v5192 = vshrl.u32 %v5029, 16
        %v5194 = vrot.slane %v5192, 7
        %v5195 = vrot.slane %v5194, 4
        %v5197 = vshrl.u32 %v5030, 16
        %v5199 = vrot.slane %v5197, 7
        %v5200 = vshll.u32 %v5030, 16
        %v5202 = vor.u32 %v5199, %v5200
        %v5203 = vsel %vm614, %v5195, %v5202
        %v5204 = vrot.slane %v5199, 4
        %v5206 = vshrl.u32 %v5031, 16
        %v5208 = vrot.slane %v5206, 7
        %v5209 = vshll.u32 %v5031, 16
        %v5211 = vor.u32 %v5208, %v5209
        %v5212 = vsel %vm614, %v5204, %v5211
        %v5214 = vshrl.u32 %v5032, 16
        %v5216 = vrot.slane %v5214, 7
        %v5217 = vrot.slane %v5216, 4
        %v5219 = vshrl.u32 %v5033, 16
        %v5221 = vrot.slane %v5219, 7
        %v5222 = vshll.u32 %v5033, 16
        %v5224 = vor.u32 %v5221, %v5222
        %v5225 = vsel %vm614, %v5217, %v5224
        %v5226 = vrot.slane %v5221, 4
        %v5228 = vshrl.u32 %v5034, 16
        %v5230 = vrot.slane %v5228, 7
        %v5231 = vshll.u32 %v5034, 16
        %v5233 = vor.u32 %v5230, %v5231
        %v5234 = vsel %vm614, %v5226, %v5233
        %v5236 = vshrl.u32 %v5035, 16
        %v5238 = vrot.slane %v5236, 7
        %v5239 = vrot.slane %v5238, 4
        %v5241 = vshrl.u32 %v5036, 16
        %v5243 = vrot.slane %v5241, 7
        %v5244 = vshll.u32 %v5036, 16
        %v5246 = vor.u32 %v5243, %v5244
        %v5247 = vsel %vm614, %v5239, %v5246
        %v5248 = vrot.slane %v5243, 4
        %v5250 = vshrl.u32 %v5037, 16
        %v5252 = vrot.slane %v5250, 7
        %v5253 = vshll.u32 %v5037, 16
        %v5255 = vor.u32 %v5252, %v5253
        %v5256 = vsel %vm614, %v5248, %v5255
        %v5258 = vshrl.u32 %v5038, 16
        %v5260 = vrot.slane %v5258, 7
        %v5261 = vrot.slane %v5260, 4
        %v5263 = vshrl.u32 %v5039, 16
        %v5265 = vrot.slane %v5263, 7
        %v5266 = vshll.u32 %v5039, 16
        %v5268 = vor.u32 %v5265, %v5266
        %v5269 = vsel %vm614, %v5261, %v5268
        %v5270 = vrot.slane %v5265, 4
        %v5272 = vshrl.u32 %v5040, 16
        %v5274 = vrot.slane %v5272, 7
        %v5275 = vshll.u32 %v5040, 16
        %v5277 = vor.u32 %v5274, %v5275
        %v5278 = vsel %vm614, %v5270, %v5277
        %v5280 = vshrl.u32 %v5041, 16
        %v5282 = vrot.slane %v5280, 7
        %v5283 = vrot.slane %v5282, 4
        %v5285 = vshrl.u32 %v5042, 16
        %v5287 = vrot.slane %v5285, 7
        %v5288 = vshll.u32 %v5042, 16
        %v5290 = vor.u32 %v5287, %v5288
        %v5291 = vsel %vm614, %v5283, %v5290
        %v5292 = vrot.slane %v5287, 4
        %v5294 = vshrl.u32 %v5043, 16
        %v5296 = vrot.slane %v5294, 7
        %v5297 = vshll.u32 %v5043, 16
        %v5299 = vor.u32 %v5296, %v5297
        %v5300 = vsel %vm614, %v5292, %v5299
        %v5302 = vshrl.u32 %v5044, 16
        %v5304 = vrot.slane %v5302, 7
        %v5305 = vrot.slane %v5304, 4
        %v5307 = vshrl.u32 %v5045, 16
        %v5309 = vrot.slane %v5307, 7
        %v5310 = vshll.u32 %v5045, 16
        %v5312 = vor.u32 %v5309, %v5310
        %v5313 = vsel %vm614, %v5305, %v5312
        %v5314 = vrot.slane %v5309, 4
        %v5316 = vshrl.u32 %v5046, 16
        %v5318 = vrot.slane %v5316, 7
        %v5319 = vshll.u32 %v5046, 16
        %v5321 = vor.u32 %v5318, %v5319
        %v5322 = vsel %vm614, %v5314, %v5321
        %v5324 = vshrl.u32 %v5047, 16
        %v5326 = vrot.slane %v5324, 7
        %v5327 = vrot.slane %v5326, 4
        %v5329 = vshrl.u32 %v5048, 16
        %v5331 = vrot.slane %v5329, 7
        %v5332 = vshll.u32 %v5048, 16
        %v5334 = vor.u32 %v5331, %v5332
        %v5335 = vsel %vm614, %v5327, %v5334
        %v5336 = vrot.slane %v5331, 4
        %v5338 = vshrl.u32 %v5049, 16
        %v5340 = vrot.slane %v5338, 7
        %v5341 = vshll.u32 %v5049, 16
        %v5343 = vor.u32 %v5340, %v5341
        %v5344 = vsel %vm614, %v5336, %v5343
        %v5346 = vshrl.u32 %v5050, 16
        %v5348 = vrot.slane %v5346, 7
        %v5349 = vrot.slane %v5348, 4
        %v5351 = vshrl.u32 %v5051, 16
        %v5353 = vrot.slane %v5351, 7
        %v5354 = vshll.u32 %v5051, 16
        %v5356 = vor.u32 %v5353, %v5354
        %v5357 = vsel %vm614, %v5349, %v5356
        %v5358 = vrot.slane %v5353, 4
        %v5360 = vshrl.u32 %v5052, 16
        %v5362 = vrot.slane %v5360, 7
        %v5363 = vshll.u32 %v5052, 16
        %v5365 = vor.u32 %v5362, %v5363
        %v5366 = vsel %vm614, %v5358, %v5365
        %v5368 = vshrl.u32 %v5053, 16
        %v5370 = vrot.slane %v5368, 7
        %v5371 = vrot.slane %v5370, 4
        %v5373 = vshrl.u32 %v5054, 16
        %v5375 = vrot.slane %v5373, 7
        %v5376 = vshll.u32 %v5054, 16
        %v5378 = vor.u32 %v5375, %v5376
        %v5379 = vsel %vm614, %v5371, %v5378
        %v5380 = vrot.slane %v5375, 4
        %v5382 = vshrl.u32 %v5055, 16
        %v5384 = vrot.slane %v5382, 7
        %v5385 = vshll.u32 %v5055, 16
        %v5387 = vor.u32 %v5384, %v5385
        %v5388 = vsel %vm614, %v5380, %v5387
        %v5390 = vshrl.u32 %v5056, 16
        %v5392 = vrot.slane %v5390, 7
        %v5393 = vrot.slane %v5392, 4
        %v5395 = vshrl.u32 %v5057, 16
        %v5397 = vrot.slane %v5395, 7
        %v5398 = vshll.u32 %v5057, 16
        %v5400 = vor.u32 %v5397, %v5398
        %v5401 = vsel %vm614, %v5393, %v5400
        %v5402 = vrot.slane %v5397, 4
        %v5404 = vshrl.u32 %v5058, 16
        %v5406 = vrot.slane %v5404, 7
        %v5407 = vshll.u32 %v5058, 16
        %v5409 = vor.u32 %v5406, %v5407
        %v5410 = vsel %vm614, %v5402, %v5409
        %5443 = vst.msk [vmem:[#allocation5] sm:$0xf] %vm387, %v5071
        %5444 = vst.msk [vmem:[#allocation5 + $0xc] sm:$0xf] %vm387, %v5080
        %5445 = vst.msk [vmem:[#allocation5 + $0x18] sm:$0xf] %vm387, %v5093
        %5446 = vst.msk [vmem:[#allocation5 + $0x24] sm:$0xf] %vm387, %v5102
        %5447 = vst.msk [vmem:[#allocation5 + $0x30] sm:$0xf] %vm387, %v5115
        %5448 = vst.msk [vmem:[#allocation5 + $0x3c] sm:$0xf] %vm387, %v5124
        %5449 = vst.msk [vmem:[#allocation5 + $0x48] sm:$0xf] %vm387, %v5137
        %5450 = vst.msk [vmem:[#allocation5 + $0x54] sm:$0xf] %vm387, %v5146
        %5451 = vst.msk [vmem:[#allocation5 + $0x60] sm:$0xf] %vm387, %v5159
        %5452 = vst.msk [vmem:[#allocation5 + $0x6c] sm:$0xf] %vm387, %v5168
        %5453 = vst.msk [vmem:[#allocation5 + $0x78] sm:$0xf] %vm387, %v5181
        %5454 = vst.msk [vmem:[#allocation5 + $0x84] sm:$0xf] %vm387, %v5190
        %5455 = vst.msk [vmem:[#allocation5 + $0x90] sm:$0xf] %vm387, %v5203
        %5456 = vst.msk [vmem:[#allocation5 + $0x9c] sm:$0xf] %vm387, %v5212
        %5457 = vst.msk [vmem:[#allocation5 + $0xa8] sm:$0xf] %vm387, %v5225
        %5458 = vst.msk [vmem:[#allocation5 + $0xb4] sm:$0xf] %vm387, %v5234
        %5459 = vst.msk [vmem:[#allocation5 + $0xc0] sm:$0xf] %vm387, %v5247
        %5460 = vst.msk [vmem:[#allocation5 + $0xcc] sm:$0xf] %vm387, %v5256
        %5461 = vst.msk [vmem:[#allocation5 + $0xd8] sm:$0xf] %vm387, %v5269
        %5462 = vst.msk [vmem:[#allocation5 + $0xe4] sm:$0xf] %vm387, %v5278
        %5463 = vst.msk [vmem:[#allocation5 + $0xf0] sm:$0xf] %vm387, %v5291
        %5464 = vst.msk [vmem:[#allocation5 + $0xfc] sm:$0xf] %vm387, %v5300
        %5465 = vst.msk [vmem:[#allocation5 + $0x108] sm:$0xf] %vm387, %v5313
        %5466 = vst.msk [vmem:[#allocation5 + $0x114] sm:$0xf] %vm387, %v5322
        %5467 = vst.msk [vmem:[#allocation5 + $0x120] sm:$0xf] %vm387, %v5335
        %5468 = vst.msk [vmem:[#allocation5 + $0x12c] sm:$0xf] %vm387, %v5344
        %5469 = vst.msk [vmem:[#allocation5 + $0x138] sm:$0xf] %vm387, %v5357
        %5470 = vst.msk [vmem:[#allocation5 + $0x144] sm:$0xf] %vm387, %v5366
        %5471 = vst.msk [vmem:[#allocation5 + $0x150] sm:$0xf] %vm387, %v5379
        %5472 = vst.msk [vmem:[#allocation5 + $0x15c] sm:$0xf] %vm387, %v5388
        %5473 = vst.msk [vmem:[#allocation5 + $0x168] sm:$0xf] %vm387, %v5401
        %5474 = vst.msk [vmem:[#allocation5 + $0x174] sm:$0xf] %vm387, %v5410
        %v5475 = vld [vmem:[#allocation3 + $0x8] sm:$0xf]
        %v5476 = vld [vmem:[#allocation3 + $0xc] sm:$0xf]
        %v5477 = vld [vmem:[#allocation3 + $0x1c] sm:$0xf]
        %v5478 = vld [vmem:[#allocation3 + $0x20] sm:$0xf]
        %v5479 = vld [vmem:[#allocation3 + $0x30] sm:$0xf]
        %v5480 = vld [vmem:[#allocation3 + $0x34] sm:$0xf]
        %v5481 = vld [vmem:[#allocation3 + $0x44] sm:$0xf]
        %v5482 = vld [vmem:[#allocation3 + $0x48] sm:$0xf]
        %v5483 = vld [vmem:[#allocation3 + $0x58] sm:$0xf]
        %v5484 = vld [vmem:[#allocation3 + $0x5c] sm:$0xf]
        %v5485 = vld [vmem:[#allocation3 + $0x6c] sm:$0xf]
        %v5486 = vld [vmem:[#allocation3 + $0x70] sm:$0xf]
        %v5487 = vld [vmem:[#allocation3 + $0x80] sm:$0xf]
        %v5488 = vld [vmem:[#allocation3 + $0x84] sm:$0xf]
        %v5489 = vld [vmem:[#allocation3 + $0x94] sm:$0xf]
        %v5490 = vld [vmem:[#allocation3 + $0x98] sm:$0xf]
        %v5491 = vld [vmem:[#allocation3 + $0xa8] sm:$0xf]
        %v5492 = vld [vmem:[#allocation3 + $0xac] sm:$0xf]
        %v5493 = vld [vmem:[#allocation3 + $0xbc] sm:$0xf]
        %v5494 = vld [vmem:[#allocation3 + $0xc0] sm:$0xf]
        %v5495 = vld [vmem:[#allocation3 + $0xd0] sm:$0xf]
        %v5496 = vld [vmem:[#allocation3 + $0xd4] sm:$0xf]
        %v5497 = vld [vmem:[#allocation3 + $0xe4] sm:$0xf]
        %v5498 = vld [vmem:[#allocation3 + $0xe8] sm:$0xf]
        %v5499 = vld [vmem:[#allocation3 + $0xf8] sm:$0xf]
        %v5500 = vld [vmem:[#allocation3 + $0xfc] sm:$0xf]
        %v5501 = vld [vmem:[#allocation3 + $0x10c] sm:$0xf]
        %v5502 = vld [vmem:[#allocation3 + $0x110] sm:$0xf]
        %v5503 = vld [vmem:[#allocation3 + $0x120] sm:$0xf]
        %v5504 = vld [vmem:[#allocation3 + $0x124] sm:$0xf]
        %v5505 = vld [vmem:[#allocation3 + $0x134] sm:$0xf]
        %v5506 = vld [vmem:[#allocation3 + $0x138] sm:$0xf]
        %5539 = vrot.lane.b32.xlu0 %v5475, 32
        %v5540 = vpop.permute.xlu0 %5539
        %5541 = vrot.lane.b32.xlu0 %v5476, 32
        %v5542 = vpop.permute.xlu0 %5541
        %5543 = vrot.lane.b32.xlu0 %v5477, 32
        %v5544 = vpop.permute.xlu0 %5543
        %5545 = vrot.lane.b32.xlu0 %v5478, 32
        %v5546 = vpop.permute.xlu0 %5545
        %5547 = vrot.lane.b32.xlu0 %v5479, 32
        %v5548 = vpop.permute.xlu0 %5547
        %5549 = vrot.lane.b32.xlu0 %v5480, 32
        %v5550 = vpop.permute.xlu0 %5549
        %5551 = vrot.lane.b32.xlu0 %v5481, 32
        %v5552 = vpop.permute.xlu0 %5551
        %5553 = vrot.lane.b32.xlu0 %v5482, 32
        %v5554 = vpop.permute.xlu0 %5553
        %5555 = vrot.lane.b32.xlu0 %v5483, 32
        %v5556 = vpop.permute.xlu0 %5555
        %5557 = vrot.lane.b32.xlu0 %v5484, 32
        %v5558 = vpop.permute.xlu0 %5557
        %5559 = vrot.lane.b32.xlu0 %v5485, 32
        %v5560 = vpop.permute.xlu0 %5559
        %5561 = vrot.lane.b32.xlu0 %v5486, 32
        %v5562 = vpop.permute.xlu0 %5561
        %5563 = vrot.lane.b32.xlu0 %v5487, 32
        %v5564 = vpop.permute.xlu0 %5563
        %5565 = vrot.lane.b32.xlu0 %v5488, 32
        %v5566 = vpop.permute.xlu0 %5565
        %5567 = vrot.lane.b32.xlu0 %v5489, 32
        %v5568 = vpop.permute.xlu0 %5567
        %5569 = vrot.lane.b32.xlu0 %v5490, 32
        %v5570 = vpop.permute.xlu0 %5569
        %5571 = vrot.lane.b32.xlu0 %v5491, 32
        %v5572 = vpop.permute.xlu0 %5571
        %5573 = vrot.lane.b32.xlu0 %v5492, 32
        %v5574 = vpop.permute.xlu0 %5573
        %5575 = vrot.lane.b32.xlu0 %v5493, 32
        %v5576 = vpop.permute.xlu0 %5575
        %5577 = vrot.lane.b32.xlu0 %v5494, 32
        %v5578 = vpop.permute.xlu0 %5577
        %5579 = vrot.lane.b32.xlu0 %v5495, 32
        %v5580 = vpop.permute.xlu0 %5579
        %5581 = vrot.lane.b32.xlu0 %v5496, 32
        %v5582 = vpop.permute.xlu0 %5581
        %5583 = vrot.lane.b32.xlu0 %v5497, 32
        %v5584 = vpop.permute.xlu0 %5583
        %5585 = vrot.lane.b32.xlu0 %v5498, 32
        %v5586 = vpop.permute.xlu0 %5585
        %5587 = vrot.lane.b32.xlu0 %v5499, 32
        %v5588 = vpop.permute.xlu0 %5587
        %5589 = vrot.lane.b32.xlu0 %v5500, 32
        %v5590 = vpop.permute.xlu0 %5589
        %5591 = vrot.lane.b32.xlu0 %v5501, 32
        %v5592 = vpop.permute.xlu0 %5591
        %5593 = vrot.lane.b32.xlu0 %v5502, 32
        %v5594 = vpop.permute.xlu0 %5593
        %5595 = vrot.lane.b32.xlu0 %v5503, 32
        %v5596 = vpop.permute.xlu0 %5595
        %5597 = vrot.lane.b32.xlu0 %v5504, 32
        %v5598 = vpop.permute.xlu0 %5597
        %5599 = vrot.lane.b32.xlu0 %v5505, 32
        %v5600 = vpop.permute.xlu0 %5599
        %5601 = vrot.lane.b32.xlu0 %v5506, 32
        %v5602 = vpop.permute.xlu0 %5601
        %vm5635 = vcmask 519424
        %5636 = vst.msk [vmem:[#allocation5] sm:$0xf] %vm5635, %v5540
        %5637 = vst.msk [vmem:[#allocation5 + $0xc] sm:$0xf] %vm5635, %v5542
        %5638 = vst.msk [vmem:[#allocation5 + $0x18] sm:$0xf] %vm5635, %v5544
        %5639 = vst.msk [vmem:[#allocation5 + $0x24] sm:$0xf] %vm5635, %v5546
        %5640 = vst.msk [vmem:[#allocation5 + $0x30] sm:$0xf] %vm5635, %v5548
        %5641 = vst.msk [vmem:[#allocation5 + $0x3c] sm:$0xf] %vm5635, %v5550
        %5642 = vst.msk [vmem:[#allocation5 + $0x48] sm:$0xf] %vm5635, %v5552
        %5643 = vst.msk [vmem:[#allocation5 + $0x54] sm:$0xf] %vm5635, %v5554
        %5644 = vst.msk [vmem:[#allocation5 + $0x60] sm:$0xf] %vm5635, %v5556
        %5645 = vst.msk [vmem:[#allocation5 + $0x6c] sm:$0xf] %vm5635, %v5558
        %5646 = vst.msk [vmem:[#allocation5 + $0x78] sm:$0xf] %vm5635, %v5560
        %5647 = vst.msk [vmem:[#allocation5 + $0x84] sm:$0xf] %vm5635, %v5562
        %5648 = vst.msk [vmem:[#allocation5 + $0x90] sm:$0xf] %vm5635, %v5564
        %5649 = vst.msk [vmem:[#allocation5 + $0x9c] sm:$0xf] %vm5635, %v5566
        %5650 = vst.msk [vmem:[#allocation5 + $0xa8] sm:$0xf] %vm5635, %v5568
        %5651 = vst.msk [vmem:[#allocation5 + $0xb4] sm:$0xf] %vm5635, %v5570
        %5652 = vst.msk [vmem:[#allocation5 + $0xc0] sm:$0xf] %vm5635, %v5572
        %5653 = vst.msk [vmem:[#allocation5 + $0xcc] sm:$0xf] %vm5635, %v5574
        %5654 = vst.msk [vmem:[#allocation5 + $0xd8] sm:$0xf] %vm5635, %v5576
        %5655 = vst.msk [vmem:[#allocation5 + $0xe4] sm:$0xf] %vm5635, %v5578
        %5656 = vst.msk [vmem:[#allocation5 + $0xf0] sm:$0xf] %vm5635, %v5580
        %5657 = vst.msk [vmem:[#allocation5 + $0xfc] sm:$0xf] %vm5635, %v5582
        %5658 = vst.msk [vmem:[#allocation5 + $0x108] sm:$0xf] %vm5635, %v5584
        %5659 = vst.msk [vmem:[#allocation5 + $0x114] sm:$0xf] %vm5635, %v5586
        %5660 = vst.msk [vmem:[#allocation5 + $0x120] sm:$0xf] %vm5635, %v5588
        %5661 = vst.msk [vmem:[#allocation5 + $0x12c] sm:$0xf] %vm5635, %v5590
        %5662 = vst.msk [vmem:[#allocation5 + $0x138] sm:$0xf] %vm5635, %v5592
        %5663 = vst.msk [vmem:[#allocation5 + $0x144] sm:$0xf] %vm5635, %v5594
        %5664 = vst.msk [vmem:[#allocation5 + $0x150] sm:$0xf] %vm5635, %v5596
        %5665 = vst.msk [vmem:[#allocation5 + $0x15c] sm:$0xf] %vm5635, %v5598
        %5666 = vst.msk [vmem:[#allocation5 + $0x168] sm:$0xf] %vm5635, %v5600
        %5667 = vst.msk [vmem:[#allocation5 + $0x174] sm:$0xf] %vm5635, %v5602
        %v5668 = vld [vmem:[#allocation3 + $0x8] sm:$0xf]
        %v5669 = vld [vmem:[#allocation3 + $0xc] sm:$0xf]
        %v5670 = vld [vmem:[#allocation3 + $0x10] sm:$0x1]
        %v5671 = vld [vmem:[#allocation3 + $0x1c] sm:$0xf]
        %v5672 = vld [vmem:[#allocation3 + $0x20] sm:$0xf]
        %v5673 = vld [vmem:[#allocation3 + $0x24] sm:$0x1]
        %v5674 = vld [vmem:[#allocation3 + $0x30] sm:$0xf]
        %v5675 = vld [vmem:[#allocation3 + $0x34] sm:$0xf]
        %v5676 = vld [vmem:[#allocation3 + $0x38] sm:$0x1]
        %v5677 = vld [vmem:[#allocation3 + $0x44] sm:$0xf]
        %v5678 = vld [vmem:[#allocation3 + $0x48] sm:$0xf]
        %v5679 = vld [vmem:[#allocation3 + $0x4c] sm:$0x1]
        %v5680 = vld [vmem:[#allocation3 + $0x58] sm:$0xf]
        %v5681 = vld [vmem:[#allocation3 + $0x5c] sm:$0xf]
        %v5682 = vld [vmem:[#allocation3 + $0x60] sm:$0x1]
        %v5683 = vld [vmem:[#allocation3 + $0x6c] sm:$0xf]
        %v5684 = vld [vmem:[#allocation3 + $0x70] sm:$0xf]
        %v5685 = vld [vmem:[#allocation3 + $0x74] sm:$0x1]
        %v5686 = vld [vmem:[#allocation3 + $0x80] sm:$0xf]
        %v5687 = vld [vmem:[#allocation3 + $0x84] sm:$0xf]
        %v5688 = vld [vmem:[#allocation3 + $0x88] sm:$0x1]
        %v5689 = vld [vmem:[#allocation3 + $0x94] sm:$0xf]
        %v5690 = vld [vmem:[#allocation3 + $0x98] sm:$0xf]
        %v5691 = vld [vmem:[#allocation3 + $0x9c] sm:$0x1]
        %v5692 = vld [vmem:[#allocation3 + $0xa8] sm:$0xf]
        %v5693 = vld [vmem:[#allocation3 + $0xac] sm:$0xf]
        %v5694 = vld [vmem:[#allocation3 + $0xb0] sm:$0x1]
        %v5695 = vld [vmem:[#allocation3 + $0xbc] sm:$0xf]
        %v5696 = vld [vmem:[#allocation3 + $0xc0] sm:$0xf]
        %v5697 = vld [vmem:[#allocation3 + $0xc4] sm:$0x1]
        %v5698 = vld [vmem:[#allocation3 + $0xd0] sm:$0xf]
        %v5699 = vld [vmem:[#allocation3 + $0xd4] sm:$0xf]
        %v5700 = vld [vmem:[#allocation3 + $0xd8] sm:$0x1]
        %v5701 = vld [vmem:[#allocation3 + $0xe4] sm:$0xf]
        %v5702 = vld [vmem:[#allocation3 + $0xe8] sm:$0xf]
        %v5703 = vld [vmem:[#allocation3 + $0xec] sm:$0x1]
        %v5704 = vld [vmem:[#allocation3 + $0xf8] sm:$0xf]
        %v5705 = vld [vmem:[#allocation3 + $0xfc] sm:$0xf]
        %v5706 = vld [vmem:[#allocation3 + $0x100] sm:$0x1]
        %v5707 = vld [vmem:[#allocation3 + $0x10c] sm:$0xf]
        %v5708 = vld [vmem:[#allocation3 + $0x110] sm:$0xf]
        %v5709 = vld [vmem:[#allocation3 + $0x114] sm:$0x1]
        %v5710 = vld [vmem:[#allocation3 + $0x120] sm:$0xf]
        %v5711 = vld [vmem:[#allocation3 + $0x124] sm:$0xf]
        %v5712 = vld [vmem:[#allocation3 + $0x128] sm:$0x1]
        %v5713 = vld [vmem:[#allocation3 + $0x134] sm:$0xf]
        %v5714 = vld [vmem:[#allocation3 + $0x138] sm:$0xf]
        %v5715 = vld [vmem:[#allocation3 + $0x13c] sm:$0x1]
        %v5717 = vshrl.u32 %v5668, 16
        %v5719 = vrot.slane %v5717, 4
        %v5720 = vshll.u32 %v5668, 16
        %v5722 = vrot.slane %v5720, 5
        %v5723 = vor.u32 %v5719, %v5722
        %v5724 = vrot.slane %v5723, 4
        %v5726 = vshll.u32 %v5669, 16
        %v5728 = vrot.slane %v5726, 5
        %v5729 = vsel %vm1274, %v5724, %v5728
        %v5730 = vshrl.u32 %v5669, 16
        %v5732 = vrot.slane %v5730, 4
        %v5733 = vor.u32 %v5732, %v5728
        %v5734 = vrot.slane %v5733, 4
        %v5736 = vshll.u32 %v5670, 16
        %v5738 = vrot.slane %v5736, 5
        %v5739 = vsel %vm1274, %v5734, %v5738
        %v5741 = vshrl.u32 %v5671, 16
        %v5743 = vrot.slane %v5741, 4
        %v5744 = vshll.u32 %v5671, 16
        %v5746 = vrot.slane %v5744, 5
        %v5747 = vor.u32 %v5743, %v5746
        %v5748 = vrot.slane %v5747, 4
        %v5750 = vshll.u32 %v5672, 16
        %v5752 = vrot.slane %v5750, 5
        %v5753 = vsel %vm1274, %v5748, %v5752
        %v5754 = vshrl.u32 %v5672, 16
        %v5756 = vrot.slane %v5754, 4
        %v5757 = vor.u32 %v5756, %v5752
        %v5758 = vrot.slane %v5757, 4
        %v5760 = vshll.u32 %v5673, 16
        %v5762 = vrot.slane %v5760, 5
        %v5763 = vsel %vm1274, %v5758, %v5762
        %v5765 = vshrl.u32 %v5674, 16
        %v5767 = vrot.slane %v5765, 4
        %v5768 = vshll.u32 %v5674, 16
        %v5770 = vrot.slane %v5768, 5
        %v5771 = vor.u32 %v5767, %v5770
        %v5772 = vrot.slane %v5771, 4
        %v5774 = vshll.u32 %v5675, 16
        %v5776 = vrot.slane %v5774, 5
        %v5777 = vsel %vm1274, %v5772, %v5776
        %v5778 = vshrl.u32 %v5675, 16
        %v5780 = vrot.slane %v5778, 4
        %v5781 = vor.u32 %v5780, %v5776
        %v5782 = vrot.slane %v5781, 4
        %v5784 = vshll.u32 %v5676, 16
        %v5786 = vrot.slane %v5784, 5
        %v5787 = vsel %vm1274, %v5782, %v5786
        %v5789 = vshrl.u32 %v5677, 16
        %v5791 = vrot.slane %v5789, 4
        %v5792 = vshll.u32 %v5677, 16
        %v5794 = vrot.slane %v5792, 5
        %v5795 = vor.u32 %v5791, %v5794
        %v5796 = vrot.slane %v5795, 4
        %v5798 = vshll.u32 %v5678, 16
        %v5800 = vrot.slane %v5798, 5
        %v5801 = vsel %vm1274, %v5796, %v5800
        %v5802 = vshrl.u32 %v5678, 16
        %v5804 = vrot.slane %v5802, 4
        %v5805 = vor.u32 %v5804, %v5800
        %v5806 = vrot.slane %v5805, 4
        %v5808 = vshll.u32 %v5679, 16
        %v5810 = vrot.slane %v5808, 5
        %v5811 = vsel %vm1274, %v5806, %v5810
        %v5813 = vshrl.u32 %v5680, 16
        %v5815 = vrot.slane %v5813, 4
        %v5816 = vshll.u32 %v5680, 16
        %v5818 = vrot.slane %v5816, 5
        %v5819 = vor.u32 %v5815, %v5818
        %v5820 = vrot.slane %v5819, 4
        %v5822 = vshll.u32 %v5681, 16
        %v5824 = vrot.slane %v5822, 5
        %v5825 = vsel %vm1274, %v5820, %v5824
        %v5826 = vshrl.u32 %v5681, 16
        %v5828 = vrot.slane %v5826, 4
        %v5829 = vor.u32 %v5828, %v5824
        %v5830 = vrot.slane %v5829, 4
        %v5832 = vshll.u32 %v5682, 16
        %v5834 = vrot.slane %v5832, 5
        %v5835 = vsel %vm1274, %v5830, %v5834
        %v5837 = vshrl.u32 %v5683, 16
        %v5839 = vrot.slane %v5837, 4
        %v5840 = vshll.u32 %v5683, 16
        %v5842 = vrot.slane %v5840, 5
        %v5843 = vor.u32 %v5839, %v5842
        %v5844 = vrot.slane %v5843, 4
        %v5846 = vshll.u32 %v5684, 16
        %v5848 = vrot.slane %v5846, 5
        %v5849 = vsel %vm1274, %v5844, %v5848
        %v5850 = vshrl.u32 %v5684, 16
        %v5852 = vrot.slane %v5850, 4
        %v5853 = vor.u32 %v5852, %v5848
        %v5854 = vrot.slane %v5853, 4
        %v5856 = vshll.u32 %v5685, 16
        %v5858 = vrot.slane %v5856, 5
        %v5859 = vsel %vm1274, %v5854, %v5858
        %v5861 = vshrl.u32 %v5686, 16
        %v5863 = vrot.slane %v5861, 4
        %v5864 = vshll.u32 %v5686, 16
        %v5866 = vrot.slane %v5864, 5
        %v5867 = vor.u32 %v5863, %v5866
        %v5868 = vrot.slane %v5867, 4
        %v5870 = vshll.u32 %v5687, 16
        %v5872 = vrot.slane %v5870, 5
        %v5873 = vsel %vm1274, %v5868, %v5872
        %v5874 = vshrl.u32 %v5687, 16
        %v5876 = vrot.slane %v5874, 4
        %v5877 = vor.u32 %v5876, %v5872
        %v5878 = vrot.slane %v5877, 4
        %v5880 = vshll.u32 %v5688, 16
        %v5882 = vrot.slane %v5880, 5
        %v5883 = vsel %vm1274, %v5878, %v5882
        %v5885 = vshrl.u32 %v5689, 16
        %v5887 = vrot.slane %v5885, 4
        %v5888 = vshll.u32 %v5689, 16
        %v5890 = vrot.slane %v5888, 5
        %v5891 = vor.u32 %v5887, %v5890
        %v5892 = vrot.slane %v5891, 4
        %v5894 = vshll.u32 %v5690, 16
        %v5896 = vrot.slane %v5894, 5
        %v5897 = vsel %vm1274, %v5892, %v5896
        %v5898 = vshrl.u32 %v5690, 16
        %v5900 = vrot.slane %v5898, 4
        %v5901 = vor.u32 %v5900, %v5896
        %v5902 = vrot.slane %v5901, 4
        %v5904 = vshll.u32 %v5691, 16
        %v5906 = vrot.slane %v5904, 5
        %v5907 = vsel %vm1274, %v5902, %v5906
        %v5909 = vshrl.u32 %v5692, 16
        %v5911 = vrot.slane %v5909, 4
        %v5912 = vshll.u32 %v5692, 16
        %v5914 = vrot.slane %v5912, 5
        %v5915 = vor.u32 %v5911, %v5914
        %v5916 = vrot.slane %v5915, 4
        %v5918 = vshll.u32 %v5693, 16
        %v5920 = vrot.slane %v5918, 5
        %v5921 = vsel %vm1274, %v5916, %v5920
        %v5922 = vshrl.u32 %v5693, 16
        %v5924 = vrot.slane %v5922, 4
        %v5925 = vor.u32 %v5924, %v5920
        %v5926 = vrot.slane %v5925, 4
        %v5928 = vshll.u32 %v5694, 16
        %v5930 = vrot.slane %v5928, 5
        %v5931 = vsel %vm1274, %v5926, %v5930
        %v5933 = vshrl.u32 %v5695, 16
        %v5935 = vrot.slane %v5933, 4
        %v5936 = vshll.u32 %v5695, 16
        %v5938 = vrot.slane %v5936, 5
        %v5939 = vor.u32 %v5935, %v5938
        %v5940 = vrot.slane %v5939, 4
        %v5942 = vshll.u32 %v5696, 16
        %v5944 = vrot.slane %v5942, 5
        %v5945 = vsel %vm1274, %v5940, %v5944
        %v5946 = vshrl.u32 %v5696, 16
        %v5948 = vrot.slane %v5946, 4
        %v5949 = vor.u32 %v5948, %v5944
        %v5950 = vrot.slane %v5949, 4
        %v5952 = vshll.u32 %v5697, 16
        %v5954 = vrot.slane %v5952, 5
        %v5955 = vsel %vm1274, %v5950, %v5954
        %v5957 = vshrl.u32 %v5698, 16
        %v5959 = vrot.slane %v5957, 4
        %v5960 = vshll.u32 %v5698, 16
        %v5962 = vrot.slane %v5960, 5
        %v5963 = vor.u32 %v5959, %v5962
        %v5964 = vrot.slane %v5963, 4
        %v5966 = vshll.u32 %v5699, 16
        %v5968 = vrot.slane %v5966, 5
        %v5969 = vsel %vm1274, %v5964, %v5968
        %v5970 = vshrl.u32 %v5699, 16
        %v5972 = vrot.slane %v5970, 4
        %v5973 = vor.u32 %v5972, %v5968
        %v5974 = vrot.slane %v5973, 4
        %v5976 = vshll.u32 %v5700, 16
        %v5978 = vrot.slane %v5976, 5
        %v5979 = vsel %vm1274, %v5974, %v5978
        %v5981 = vshrl.u32 %v5701, 16
        %v5983 = vrot.slane %v5981, 4
        %v5984 = vshll.u32 %v5701, 16
        %v5986 = vrot.slane %v5984, 5
        %v5987 = vor.u32 %v5983, %v5986
        %v5988 = vrot.slane %v5987, 4
        %v5990 = vshll.u32 %v5702, 16
        %v5992 = vrot.slane %v5990, 5
        %v5993 = vsel %vm1274, %v5988, %v5992
        %v5994 = vshrl.u32 %v5702, 16
        %v5996 = vrot.slane %v5994, 4
        %v5997 = vor.u32 %v5996, %v5992
        %v5998 = vrot.slane %v5997, 4
        %v6000 = vshll.u32 %v5703, 16
        %v6002 = vrot.slane %v6000, 5
        %v6003 = vsel %vm1274, %v5998, %v6002
        %v6005 = vshrl.u32 %v5704, 16
        %v6007 = vrot.slane %v6005, 4
        %v6008 = vshll.u32 %v5704, 16
        %v6010 = vrot.slane %v6008, 5
        %v6011 = vor.u32 %v6007, %v6010
        %v6012 = vrot.slane %v6011, 4
        %v6014 = vshll.u32 %v5705, 16
        %v6016 = vrot.slane %v6014, 5
        %v6017 = vsel %vm1274, %v6012, %v6016
        %v6018 = vshrl.u32 %v5705, 16
        %v6020 = vrot.slane %v6018, 4
        %v6021 = vor.u32 %v6020, %v6016
        %v6022 = vrot.slane %v6021, 4
        %v6024 = vshll.u32 %v5706, 16
        %v6026 = vrot.slane %v6024, 5
        %v6027 = vsel %vm1274, %v6022, %v6026
        %v6029 = vshrl.u32 %v5707, 16
        %v6031 = vrot.slane %v6029, 4
        %v6032 = vshll.u32 %v5707, 16
        %v6034 = vrot.slane %v6032, 5
        %v6035 = vor.u32 %v6031, %v6034
        %v6036 = vrot.slane %v6035, 4
        %v6038 = vshll.u32 %v5708, 16
        %v6040 = vrot.slane %v6038, 5
        %v6041 = vsel %vm1274, %v6036, %v6040
        %v6042 = vshrl.u32 %v5708, 16
        %v6044 = vrot.slane %v6042, 4
        %v6045 = vor.u32 %v6044, %v6040
        %v6046 = vrot.slane %v6045, 4
        %v6048 = vshll.u32 %v5709, 16
        %v6050 = vrot.slane %v6048, 5
        %v6051 = vsel %vm1274, %v6046, %v6050
        %v6053 = vshrl.u32 %v5710, 16
        %v6055 = vrot.slane %v6053, 4
        %v6056 = vshll.u32 %v5710, 16
        %v6058 = vrot.slane %v6056, 5
        %v6059 = vor.u32 %v6055, %v6058
        %v6060 = vrot.slane %v6059, 4
        %v6062 = vshll.u32 %v5711, 16
        %v6064 = vrot.slane %v6062, 5
        %v6065 = vsel %vm1274, %v6060, %v6064
        %v6066 = vshrl.u32 %v5711, 16
        %v6068 = vrot.slane %v6066, 4
        %v6069 = vor.u32 %v6068, %v6064
        %v6070 = vrot.slane %v6069, 4
        %v6072 = vshll.u32 %v5712, 16
        %v6074 = vrot.slane %v6072, 5
        %v6075 = vsel %vm1274, %v6070, %v6074
        %v6077 = vshrl.u32 %v5713, 16
        %v6079 = vrot.slane %v6077, 4
        %v6080 = vshll.u32 %v5713, 16
        %v6082 = vrot.slane %v6080, 5
        %v6083 = vor.u32 %v6079, %v6082
        %v6084 = vrot.slane %v6083, 4
        %v6086 = vshll.u32 %v5714, 16
        %v6088 = vrot.slane %v6086, 5
        %v6089 = vsel %vm1274, %v6084, %v6088
        %v6090 = vshrl.u32 %v5714, 16
        %v6092 = vrot.slane %v6090, 4
        %v6093 = vor.u32 %v6092, %v6088
        %v6094 = vrot.slane %v6093, 4
        %v6096 = vshll.u32 %v5715, 16
        %v6098 = vrot.slane %v6096, 5
        %v6099 = vsel %vm1274, %v6094, %v6098
        %6100 = vrot.lane.b32.xlu0 %v5729, 64
        %v6101 = vpop.permute.xlu0 %6100
        %6102 = vrot.lane.b32.xlu0 %v5739, 64
        %v6103 = vpop.permute.xlu0 %6102
        %6104 = vrot.lane.b32.xlu0 %v5753, 64
        %v6105 = vpop.permute.xlu0 %6104
        %6106 = vrot.lane.b32.xlu0 %v5763, 64
        %v6107 = vpop.permute.xlu0 %6106
        %6108 = vrot.lane.b32.xlu0 %v5777, 64
        %v6109 = vpop.permute.xlu0 %6108
        %6110 = vrot.lane.b32.xlu0 %v5787, 64
        %v6111 = vpop.permute.xlu0 %6110
        %6112 = vrot.lane.b32.xlu0 %v5801, 64
        %v6113 = vpop.permute.xlu0 %6112
        %6114 = vrot.lane.b32.xlu0 %v5811, 64
        %v6115 = vpop.permute.xlu0 %6114
        %6116 = vrot.lane.b32.xlu0 %v5825, 64
        %v6117 = vpop.permute.xlu0 %6116
        %6118 = vrot.lane.b32.xlu0 %v5835, 64
        %v6119 = vpop.permute.xlu0 %6118
        %6120 = vrot.lane.b32.xlu0 %v5849, 64
        %v6121 = vpop.permute.xlu0 %6120
        %6122 = vrot.lane.b32.xlu0 %v5859, 64
        %v6123 = vpop.permute.xlu0 %6122
        %6124 = vrot.lane.b32.xlu0 %v5873, 64
        %v6125 = vpop.permute.xlu0 %6124
        %6126 = vrot.lane.b32.xlu0 %v5883, 64
        %v6127 = vpop.permute.xlu0 %6126
        %6128 = vrot.lane.b32.xlu0 %v5897, 64
        %v6129 = vpop.permute.xlu0 %6128
        %6130 = vrot.lane.b32.xlu0 %v5907, 64
        %v6131 = vpop.permute.xlu0 %6130
        %6132 = vrot.lane.b32.xlu0 %v5921, 64
        %v6133 = vpop.permute.xlu0 %6132
        %6134 = vrot.lane.b32.xlu0 %v5931, 64
        %v6135 = vpop.permute.xlu0 %6134
        %6136 = vrot.lane.b32.xlu0 %v5945, 64
        %v6137 = vpop.permute.xlu0 %6136
        %6138 = vrot.lane.b32.xlu0 %v5955, 64
        %v6139 = vpop.permute.xlu0 %6138
        %6140 = vrot.lane.b32.xlu0 %v5969, 64
        %v6141 = vpop.permute.xlu0 %6140
        %6142 = vrot.lane.b32.xlu0 %v5979, 64
        %v6143 = vpop.permute.xlu0 %6142
        %6144 = vrot.lane.b32.xlu0 %v5993, 64
        %v6145 = vpop.permute.xlu0 %6144
        %6146 = vrot.lane.b32.xlu0 %v6003, 64
        %v6147 = vpop.permute.xlu0 %6146
        %6148 = vrot.lane.b32.xlu0 %v6017, 64
        %v6149 = vpop.permute.xlu0 %6148
        %6150 = vrot.lane.b32.xlu0 %v6027, 64
        %v6151 = vpop.permute.xlu0 %6150
        %6152 = vrot.lane.b32.xlu0 %v6041, 64
        %v6153 = vpop.permute.xlu0 %6152
        %6154 = vrot.lane.b32.xlu0 %v6051, 64
        %v6155 = vpop.permute.xlu0 %6154
        %6156 = vrot.lane.b32.xlu0 %v6065, 64
        %v6157 = vpop.permute.xlu0 %6156
        %6158 = vrot.lane.b32.xlu0 %v6075, 64
        %v6159 = vpop.permute.xlu0 %6158
        %6160 = vrot.lane.b32.xlu0 %v6089, 64
        %v6161 = vpop.permute.xlu0 %6160
        %6162 = vrot.lane.b32.xlu0 %v6099, 64
        %v6163 = vpop.permute.xlu0 %6162
        %vm6196 = vcmask 781824
        %6197 = vst.msk [vmem:[#allocation5] sm:$0xf] %vm6196, %v6101
        %6198 = vst.msk [vmem:[#allocation5 + $0xc] sm:$0xf] %vm6196, %v6103
        %6199 = vst.msk [vmem:[#allocation5 + $0x18] sm:$0xf] %vm6196, %v6105
        %6200 = vst.msk [vmem:[#allocation5 + $0x24] sm:$0xf] %vm6196, %v6107
        %6201 = vst.msk [vmem:[#allocation5 + $0x30] sm:$0xf] %vm6196, %v6109
        %6202 = vst.msk [vmem:[#allocation5 + $0x3c] sm:$0xf] %vm6196, %v6111
        %6203 = vst.msk [vmem:[#allocation5 + $0x48] sm:$0xf] %vm6196, %v6113
        %6204 = vst.msk [vmem:[#allocation5 + $0x54] sm:$0xf] %vm6196, %v6115
        %6205 = vst.msk [vmem:[#allocation5 + $0x60] sm:$0xf] %vm6196, %v6117
        %6206 = vst.msk [vmem:[#allocation5 + $0x6c] sm:$0xf] %vm6196, %v6119
        %6207 = vst.msk [vmem:[#allocation5 + $0x78] sm:$0xf] %vm6196, %v6121
        %6208 = vst.msk [vmem:[#allocation5 + $0x84] sm:$0xf] %vm6196, %v6123
        %6209 = vst.msk [vmem:[#allocation5 + $0x90] sm:$0xf] %vm6196, %v6125
        %6210 = vst.msk [vmem:[#allocation5 + $0x9c] sm:$0xf] %vm6196, %v6127
        %6211 = vst.msk [vmem:[#allocation5 + $0xa8] sm:$0xf] %vm6196, %v6129
        %6212 = vst.msk [vmem:[#allocation5 + $0xb4] sm:$0xf] %vm6196, %v6131
        %6213 = vst.msk [vmem:[#allocation5 + $0xc0] sm:$0xf] %vm6196, %v6133
        %6214 = vst.msk [vmem:[#allocation5 + $0xcc] sm:$0xf] %vm6196, %v6135
        %6215 = vst.msk [vmem:[#allocation5 + $0xd8] sm:$0xf] %vm6196, %v6137
        %6216 = vst.msk [vmem:[#allocation5 + $0xe4] sm:$0xf] %vm6196, %v6139
        %6217 = vst.msk [vmem:[#allocation5 + $0xf0] sm:$0xf] %vm6196, %v6141
        %6218 = vst.msk [vmem:[#allocation5 + $0xfc] sm:$0xf] %vm6196, %v6143
        %6219 = vst.msk [vmem:[#allocation5 + $0x108] sm:$0xf] %vm6196, %v6145
        %6220 = vst.msk [vmem:[#allocation5 + $0x114] sm:$0xf] %vm6196, %v6147
        %6221 = vst.msk [vmem:[#allocation5 + $0x120] sm:$0xf] %vm6196, %v6149
        %6222 = vst.msk [vmem:[#allocation5 + $0x12c] sm:$0xf] %vm6196, %v6151
        %6223 = vst.msk [vmem:[#allocation5 + $0x138] sm:$0xf] %vm6196, %v6153
        %6224 = vst.msk [vmem:[#allocation5 + $0x144] sm:$0xf] %vm6196, %v6155
        %6225 = vst.msk [vmem:[#allocation5 + $0x150] sm:$0xf] %vm6196, %v6157
        %6226 = vst.msk [vmem:[#allocation5 + $0x15c] sm:$0xf] %vm6196, %v6159
        %6227 = vst.msk [vmem:[#allocation5 + $0x168] sm:$0xf] %vm6196, %v6161
        %6228 = vst.msk [vmem:[#allocation5 + $0x174] sm:$0xf] %vm6196, %v6163
        %v6229 = vld [vmem:[%s404 + $0x4] sm:$0x8]
        %v6230 = vld [vmem:[%s404 + $0x8] sm:$0xf]
        %v6231 = vld [vmem:[%s404 + $0xc] sm:$0xf]
        %v6232 = vld [vmem:[%s404 + $0x18] sm:$0x8]
        %v6233 = vld [vmem:[%s404 + $0x1c] sm:$0xf]
        %v6234 = vld [vmem:[%s404 + $0x20] sm:$0xf]
        %v6235 = vld [vmem:[%s404 + $0x2c] sm:$0x8]
        %v6236 = vld [vmem:[%s404 + $0x30] sm:$0xf]
        %v6237 = vld [vmem:[%s404 + $0x34] sm:$0xf]
        %v6238 = vld [vmem:[%s404 + $0x40] sm:$0x8]
        %v6239 = vld [vmem:[%s404 + $0x44] sm:$0xf]
        %v6240 = vld [vmem:[%s404 + $0x48] sm:$0xf]
        %v6241 = vld [vmem:[%s404 + $0x54] sm:$0x8]
        %v6242 = vld [vmem:[%s404 + $0x58] sm:$0xf]
        %v6243 = vld [vmem:[%s404 + $0x5c] sm:$0xf]
        %v6244 = vld [vmem:[%s404 + $0x68] sm:$0x8]
        %v6245 = vld [vmem:[%s404 + $0x6c] sm:$0xf]
        %v6246 = vld [vmem:[%s404 + $0x70] sm:$0xf]
        %v6247 = vld [vmem:[%s404 + $0x7c] sm:$0x8]
        %v6248 = vld [vmem:[%s404 + $0x80] sm:$0xf]
        %v6249 = vld [vmem:[%s404 + $0x84] sm:$0xf]
        %v6250 = vld [vmem:[%s404 + $0x90] sm:$0x8]
        %v6251 = vld [vmem:[%s404 + $0x94] sm:$0xf]
        %v6252 = vld [vmem:[%s404 + $0x98] sm:$0xf]
        %v6253 = vld [vmem:[%s404 + $0xa4] sm:$0x8]
        %v6254 = vld [vmem:[%s404 + $0xa8] sm:$0xf]
        %v6255 = vld [vmem:[%s404 + $0xac] sm:$0xf]
        %v6256 = vld [vmem:[%s404 + $0xb8] sm:$0x8]
        %v6257 = vld [vmem:[%s404 + $0xbc] sm:$0xf]
        %v6258 = vld [vmem:[%s404 + $0xc0] sm:$0xf]
        %v6259 = vld [vmem:[%s404 + $0xcc] sm:$0x8]
        %v6260 = vld [vmem:[%s404 + $0xd0] sm:$0xf]
        %v6261 = vld [vmem:[%s404 + $0xd4] sm:$0xf]
        %v6262 = vld [vmem:[%s404 + $0xe0] sm:$0x8]
        %v6263 = vld [vmem:[%s404 + $0xe4] sm:$0xf]
        %v6264 = vld [vmem:[%s404 + $0xe8] sm:$0xf]
        %v6265 = vld [vmem:[%s404 + $0xf4] sm:$0x8]
        %v6266 = vld [vmem:[%s404 + $0xf8] sm:$0xf]
        %v6267 = vld [vmem:[%s404 + $0xfc] sm:$0xf]
        %v6268 = vld [vmem:[%s404 + $0x108] sm:$0x8]
        %v6269 = vld [vmem:[%s404 + $0x10c] sm:$0xf]
        %v6270 = vld [vmem:[%s404 + $0x110] sm:$0xf]
        %v6271 = vld [vmem:[%s404 + $0x11c] sm:$0x8]
        %v6272 = vld [vmem:[%s404 + $0x120] sm:$0xf]
        %v6273 = vld [vmem:[%s404 + $0x124] sm:$0xf]
        %v6274 = vld [vmem:[%s404 + $0x130] sm:$0x8]
        %v6275 = vld [vmem:[%s404 + $0x134] sm:$0xf]
        %v6276 = vld [vmem:[%s404 + $0x138] sm:$0xf]
        %v6278 = vshrl.u32 %v6229, 16
        %v6280 = vrot.slane %v6278, 7
        %v6281 = vrot.slane %v6280, 4
        %v6283 = vshrl.u32 %v6230, 16
        %v6285 = vrot.slane %v6283, 7
        %v6286 = vshll.u32 %v6230, 16
        %v6288 = vor.u32 %v6285, %v6286
        %v6289 = vsel %vm614, %v6281, %v6288
        %v6290 = vrot.slane %v6285, 4
        %v6292 = vshrl.u32 %v6231, 16
        %v6294 = vrot.slane %v6292, 7
        %v6295 = vshll.u32 %v6231, 16
        %v6297 = vor.u32 %v6294, %v6295
        %v6298 = vsel %vm614, %v6290, %v6297
        %v6300 = vshrl.u32 %v6232, 16
        %v6302 = vrot.slane %v6300, 7
        %v6303 = vrot.slane %v6302, 4
        %v6305 = vshrl.u32 %v6233, 16
        %v6307 = vrot.slane %v6305, 7
        %v6308 = vshll.u32 %v6233, 16
        %v6310 = vor.u32 %v6307, %v6308
        %v6311 = vsel %vm614, %v6303, %v6310
        %v6312 = vrot.slane %v6307, 4
        %v6314 = vshrl.u32 %v6234, 16
        %v6316 = vrot.slane %v6314, 7
        %v6317 = vshll.u32 %v6234, 16
        %v6319 = vor.u32 %v6316, %v6317
        %v6320 = vsel %vm614, %v6312, %v6319
        %v6322 = vshrl.u32 %v6235, 16
        %v6324 = vrot.slane %v6322, 7
        %v6325 = vrot.slane %v6324, 4
        %v6327 = vshrl.u32 %v6236, 16
        %v6329 = vrot.slane %v6327, 7
        %v6330 = vshll.u32 %v6236, 16
        %v6332 = vor.u32 %v6329, %v6330
        %v6333 = vsel %vm614, %v6325, %v6332
        %v6334 = vrot.slane %v6329, 4
        %v6336 = vshrl.u32 %v6237, 16
        %v6338 = vrot.slane %v6336, 7
        %v6339 = vshll.u32 %v6237, 16
        %v6341 = vor.u32 %v6338, %v6339
        %v6342 = vsel %vm614, %v6334, %v6341
        %v6344 = vshrl.u32 %v6238, 16
        %v6346 = vrot.slane %v6344, 7
        %v6347 = vrot.slane %v6346, 4
        %v6349 = vshrl.u32 %v6239, 16
        %v6351 = vrot.slane %v6349, 7
        %v6352 = vshll.u32 %v6239, 16
        %v6354 = vor.u32 %v6351, %v6352
        %v6355 = vsel %vm614, %v6347, %v6354
        %v6356 = vrot.slane %v6351, 4
        %v6358 = vshrl.u32 %v6240, 16
        %v6360 = vrot.slane %v6358, 7
        %v6361 = vshll.u32 %v6240, 16
        %v6363 = vor.u32 %v6360, %v6361
        %v6364 = vsel %vm614, %v6356, %v6363
        %v6366 = vshrl.u32 %v6241, 16
        %v6368 = vrot.slane %v6366, 7
        %v6369 = vrot.slane %v6368, 4
        %v6371 = vshrl.u32 %v6242, 16
        %v6373 = vrot.slane %v6371, 7
        %v6374 = vshll.u32 %v6242, 16
        %v6376 = vor.u32 %v6373, %v6374
        %v6377 = vsel %vm614, %v6369, %v6376
        %v6378 = vrot.slane %v6373, 4
        %v6380 = vshrl.u32 %v6243, 16
        %v6382 = vrot.slane %v6380, 7
        %v6383 = vshll.u32 %v6243, 16
        %v6385 = vor.u32 %v6382, %v6383
        %v6386 = vsel %vm614, %v6378, %v6385
        %v6388 = vshrl.u32 %v6244, 16
        %v6390 = vrot.slane %v6388, 7
        %v6391 = vrot.slane %v6390, 4
        %v6393 = vshrl.u32 %v6245, 16
        %v6395 = vrot.slane %v6393, 7
        %v6396 = vshll.u32 %v6245, 16
        %v6398 = vor.u32 %v6395, %v6396
        %v6399 = vsel %vm614, %v6391, %v6398
        %v6400 = vrot.slane %v6395, 4
        %v6402 = vshrl.u32 %v6246, 16
        %v6404 = vrot.slane %v6402, 7
        %v6405 = vshll.u32 %v6246, 16
        %v6407 = vor.u32 %v6404, %v6405
        %v6408 = vsel %vm614, %v6400, %v6407
        %v6410 = vshrl.u32 %v6247, 16
        %v6412 = vrot.slane %v6410, 7
        %v6413 = vrot.slane %v6412, 4
        %v6415 = vshrl.u32 %v6248, 16
        %v6417 = vrot.slane %v6415, 7
        %v6418 = vshll.u32 %v6248, 16
        %v6420 = vor.u32 %v6417, %v6418
        %v6421 = vsel %vm614, %v6413, %v6420
        %v6422 = vrot.slane %v6417, 4
        %v6424 = vshrl.u32 %v6249, 16
        %v6426 = vrot.slane %v6424, 7
        %v6427 = vshll.u32 %v6249, 16
        %v6429 = vor.u32 %v6426, %v6427
        %v6430 = vsel %vm614, %v6422, %v6429
        %v6432 = vshrl.u32 %v6250, 16
        %v6434 = vrot.slane %v6432, 7
        %v6435 = vrot.slane %v6434, 4
        %v6437 = vshrl.u32 %v6251, 16
        %v6439 = vrot.slane %v6437, 7
        %v6440 = vshll.u32 %v6251, 16
        %v6442 = vor.u32 %v6439, %v6440
        %v6443 = vsel %vm614, %v6435, %v6442
        %v6444 = vrot.slane %v6439, 4
        %v6446 = vshrl.u32 %v6252, 16
        %v6448 = vrot.slane %v6446, 7
        %v6449 = vshll.u32 %v6252, 16
        %v6451 = vor.u32 %v6448, %v6449
        %v6452 = vsel %vm614, %v6444, %v6451
        %v6454 = vshrl.u32 %v6253, 16
        %v6456 = vrot.slane %v6454, 7
        %v6457 = vrot.slane %v6456, 4
        %v6459 = vshrl.u32 %v6254, 16
        %v6461 = vrot.slane %v6459, 7
        %v6462 = vshll.u32 %v6254, 16
        %v6464 = vor.u32 %v6461, %v6462
        %v6465 = vsel %vm614, %v6457, %v6464
        %v6466 = vrot.slane %v6461, 4
        %v6468 = vshrl.u32 %v6255, 16
        %v6470 = vrot.slane %v6468, 7
        %v6471 = vshll.u32 %v6255, 16
        %v6473 = vor.u32 %v6470, %v6471
        %v6474 = vsel %vm614, %v6466, %v6473
        %v6476 = vshrl.u32 %v6256, 16
        %v6478 = vrot.slane %v6476, 7
        %v6479 = vrot.slane %v6478, 4
        %v6481 = vshrl.u32 %v6257, 16
        %v6483 = vrot.slane %v6481, 7
        %v6484 = vshll.u32 %v6257, 16
        %v6486 = vor.u32 %v6483, %v6484
        %v6487 = vsel %vm614, %v6479, %v6486
        %v6488 = vrot.slane %v6483, 4
        %v6490 = vshrl.u32 %v6258, 16
        %v6492 = vrot.slane %v6490, 7
        %v6493 = vshll.u32 %v6258, 16
        %v6495 = vor.u32 %v6492, %v6493
        %v6496 = vsel %vm614, %v6488, %v6495
        %v6498 = vshrl.u32 %v6259, 16
        %v6500 = vrot.slane %v6498, 7
        %v6501 = vrot.slane %v6500, 4
        %v6503 = vshrl.u32 %v6260, 16
        %v6505 = vrot.slane %v6503, 7
        %v6506 = vshll.u32 %v6260, 16
        %v6508 = vor.u32 %v6505, %v6506
        %v6509 = vsel %vm614, %v6501, %v6508
        %v6510 = vrot.slane %v6505, 4
        %v6512 = vshrl.u32 %v6261, 16
        %v6514 = vrot.slane %v6512, 7
        %v6515 = vshll.u32 %v6261, 16
        %v6517 = vor.u32 %v6514, %v6515
        %v6518 = vsel %vm614, %v6510, %v6517
        %v6520 = vshrl.u32 %v6262, 16
        %v6522 = vrot.slane %v6520, 7
        %v6523 = vrot.slane %v6522, 4
        %v6525 = vshrl.u32 %v6263, 16
        %v6527 = vrot.slane %v6525, 7
        %v6528 = vshll.u32 %v6263, 16
        %v6530 = vor.u32 %v6527, %v6528
        %v6531 = vsel %vm614, %v6523, %v6530
        %v6532 = vrot.slane %v6527, 4
        %v6534 = vshrl.u32 %v6264, 16
        %v6536 = vrot.slane %v6534, 7
        %v6537 = vshll.u32 %v6264, 16
        %v6539 = vor.u32 %v6536, %v6537
        %v6540 = vsel %vm614, %v6532, %v6539
        %v6542 = vshrl.u32 %v6265, 16
        %v6544 = vrot.slane %v6542, 7
        %v6545 = vrot.slane %v6544, 4
        %v6547 = vshrl.u32 %v6266, 16
        %v6549 = vrot.slane %v6547, 7
        %v6550 = vshll.u32 %v6266, 16
        %v6552 = vor.u32 %v6549, %v6550
        %v6553 = vsel %vm614, %v6545, %v6552
        %v6554 = vrot.slane %v6549, 4
        %v6556 = vshrl.u32 %v6267, 16
        %v6558 = vrot.slane %v6556, 7
        %v6559 = vshll.u32 %v6267, 16
        %v6561 = vor.u32 %v6558, %v6559
        %v6562 = vsel %vm614, %v6554, %v6561
        %v6564 = vshrl.u32 %v6268, 16
        %v6566 = vrot.slane %v6564, 7
        %v6567 = vrot.slane %v6566, 4
        %v6569 = vshrl.u32 %v6269, 16
        %v6571 = vrot.slane %v6569, 7
        %v6572 = vshll.u32 %v6269, 16
        %v6574 = vor.u32 %v6571, %v6572
        %v6575 = vsel %vm614, %v6567, %v6574
        %v6576 = vrot.slane %v6571, 4
        %v6578 = vshrl.u32 %v6270, 16
        %v6580 = vrot.slane %v6578, 7
        %v6581 = vshll.u32 %v6270, 16
        %v6583 = vor.u32 %v6580, %v6581
        %v6584 = vsel %vm614, %v6576, %v6583
        %v6586 = vshrl.u32 %v6271, 16
        %v6588 = vrot.slane %v6586, 7
        %v6589 = vrot.slane %v6588, 4
        %v6591 = vshrl.u32 %v6272, 16
        %v6593 = vrot.slane %v6591, 7
        %v6594 = vshll.u32 %v6272, 16
        %v6596 = vor.u32 %v6593, %v6594
        %v6597 = vsel %vm614, %v6589, %v6596
        %v6598 = vrot.slane %v6593, 4
        %v6600 = vshrl.u32 %v6273, 16
        %v6602 = vrot.slane %v6600, 7
        %v6603 = vshll.u32 %v6273, 16
        %v6605 = vor.u32 %v6602, %v6603
        %v6606 = vsel %vm614, %v6598, %v6605
        %v6608 = vshrl.u32 %v6274, 16
        %v6610 = vrot.slane %v6608, 7
        %v6611 = vrot.slane %v6610, 4
        %v6613 = vshrl.u32 %v6275, 16
        %v6615 = vrot.slane %v6613, 7
        %v6616 = vshll.u32 %v6275, 16
        %v6618 = vor.u32 %v6615, %v6616
        %v6619 = vsel %vm614, %v6611, %v6618
        %v6620 = vrot.slane %v6615, 4
        %v6622 = vshrl.u32 %v6276, 16
        %v6624 = vrot.slane %v6622, 7
        %v6625 = vshll.u32 %v6276, 16
        %v6627 = vor.u32 %v6624, %v6625
        %v6628 = vsel %vm614, %v6620, %v6627
        %6629 = vrot.lane.b32.xlu0 %v6289, 96
        %v6630 = vpop.permute.xlu0 %6629
        %6631 = vrot.lane.b32.xlu0 %v6298, 96
        %v6632 = vpop.permute.xlu0 %6631
        %6633 = vrot.lane.b32.xlu0 %v6311, 96
        %v6634 = vpop.permute.xlu0 %6633
        %6635 = vrot.lane.b32.xlu0 %v6320, 96
        %v6636 = vpop.permute.xlu0 %6635
        %6637 = vrot.lane.b32.xlu0 %v6333, 96
        %v6638 = vpop.permute.xlu0 %6637
        %6639 = vrot.lane.b32.xlu0 %v6342, 96
        %v6640 = vpop.permute.xlu0 %6639
        %6641 = vrot.lane.b32.xlu0 %v6355, 96
        %v6642 = vpop.permute.xlu0 %6641
        %6643 = vrot.lane.b32.xlu0 %v6364, 96
        %v6644 = vpop.permute.xlu0 %6643
        %6645 = vrot.lane.b32.xlu0 %v6377, 96
        %v6646 = vpop.permute.xlu0 %6645
        %6647 = vrot.lane.b32.xlu0 %v6386, 96
        %v6648 = vpop.permute.xlu0 %6647
        %6649 = vrot.lane.b32.xlu0 %v6399, 96
        %v6650 = vpop.permute.xlu0 %6649
        %6651 = vrot.lane.b32.xlu0 %v6408, 96
        %v6652 = vpop.permute.xlu0 %6651
        %6653 = vrot.lane.b32.xlu0 %v6421, 96
        %v6654 = vpop.permute.xlu0 %6653
        %6655 = vrot.lane.b32.xlu0 %v6430, 96
        %v6656 = vpop.permute.xlu0 %6655
        %6657 = vrot.lane.b32.xlu0 %v6443, 96
        %v6658 = vpop.permute.xlu0 %6657
        %6659 = vrot.lane.b32.xlu0 %v6452, 96
        %v6660 = vpop.permute.xlu0 %6659
        %6661 = vrot.lane.b32.xlu0 %v6465, 96
        %v6662 = vpop.permute.xlu0 %6661
        %6663 = vrot.lane.b32.xlu0 %v6474, 96
        %v6664 = vpop.permute.xlu0 %6663
        %6665 = vrot.lane.b32.xlu0 %v6487, 96
        %v6666 = vpop.permute.xlu0 %6665
        %6667 = vrot.lane.b32.xlu0 %v6496, 96
        %v6668 = vpop.permute.xlu0 %6667
        %6669 = vrot.lane.b32.xlu0 %v6509, 96
        %v6670 = vpop.permute.xlu0 %6669
        %6671 = vrot.lane.b32.xlu0 %v6518, 96
        %v6672 = vpop.permute.xlu0 %6671
        %6673 = vrot.lane.b32.xlu0 %v6531, 96
        %v6674 = vpop.permute.xlu0 %6673
        %6675 = vrot.lane.b32.xlu0 %v6540, 96
        %v6676 = vpop.permute.xlu0 %6675
        %6677 = vrot.lane.b32.xlu0 %v6553, 96
        %v6678 = vpop.permute.xlu0 %6677
        %6679 = vrot.lane.b32.xlu0 %v6562, 96
        %v6680 = vpop.permute.xlu0 %6679
        %6681 = vrot.lane.b32.xlu0 %v6575, 96
        %v6682 = vpop.permute.xlu0 %6681
        %6683 = vrot.lane.b32.xlu0 %v6584, 96
        %v6684 = vpop.permute.xlu0 %6683
        %6685 = vrot.lane.b32.xlu0 %v6597, 96
        %v6686 = vpop.permute.xlu0 %6685
        %6687 = vrot.lane.b32.xlu0 %v6606, 96
        %v6688 = vpop.permute.xlu0 %6687
        %6689 = vrot.lane.b32.xlu0 %v6619, 96
        %v6690 = vpop.permute.xlu0 %6689
        %6691 = vrot.lane.b32.xlu0 %v6628, 96
        %v6692 = vpop.permute.xlu0 %6691
        %vm6725 = vcmask 1044224
        %6726 = vst.msk [vmem:[#allocation5] sm:$0xf] %vm6725, %v6630
        %6727 = vst.msk [vmem:[#allocation5 + $0xc] sm:$0xf] %vm6725, %v6632
        %6728 = vst.msk [vmem:[#allocation5 + $0x18] sm:$0xf] %vm6725, %v6634
        %6729 = vst.msk [vmem:[#allocation5 + $0x24] sm:$0xf] %vm6725, %v6636
        %6730 = vst.msk [vmem:[#allocation5 + $0x30] sm:$0xf] %vm6725, %v6638
        %6731 = vst.msk [vmem:[#allocation5 + $0x3c] sm:$0xf] %vm6725, %v6640
        %6732 = vst.msk [vmem:[#allocation5 + $0x48] sm:$0xf] %vm6725, %v6642
        %6733 = vst.msk [vmem:[#allocation5 + $0x54] sm:$0xf] %vm6725, %v6644
        %6734 = vst.msk [vmem:[#allocation5 + $0x60] sm:$0xf] %vm6725, %v6646
        %6735 = vst.msk [vmem:[#allocation5 + $0x6c] sm:$0xf] %vm6725, %v6648
        %6736 = vst.msk [vmem:[#allocation5 + $0x78] sm:$0xf] %vm6725, %v6650
        %6737 = vst.msk [vmem:[#allocation5 + $0x84] sm:$0xf] %vm6725, %v6652
        %6738 = vst.msk [vmem:[#allocation5 + $0x90] sm:$0xf] %vm6725, %v6654
        %6739 = vst.msk [vmem:[#allocation5 + $0x9c] sm:$0xf] %vm6725, %v6656
        %6740 = vst.msk [vmem:[#allocation5 + $0xa8] sm:$0xf] %vm6725, %v6658
        %6741 = vst.msk [vmem:[#allocation5 + $0xb4] sm:$0xf] %vm6725, %v6660
        %6742 = vst.msk [vmem:[#allocation5 + $0xc0] sm:$0xf] %vm6725, %v6662
        %6743 = vst.msk [vmem:[#allocation5 + $0xcc] sm:$0xf] %vm6725, %v6664
        %6744 = vst.msk [vmem:[#allocation5 + $0xd8] sm:$0xf] %vm6725, %v6666
        %6745 = vst.msk [vmem:[#allocation5 + $0xe4] sm:$0xf] %vm6725, %v6668
        %6746 = vst.msk [vmem:[#allocation5 + $0xf0] sm:$0xf] %vm6725, %v6670
        %6747 = vst.msk [vmem:[#allocation5 + $0xfc] sm:$0xf] %vm6725, %v6672
        %6748 = vst.msk [vmem:[#allocation5 + $0x108] sm:$0xf] %vm6725, %v6674
        %6749 = vst.msk [vmem:[#allocation5 + $0x114] sm:$0xf] %vm6725, %v6676
        %6750 = vst.msk [vmem:[#allocation5 + $0x120] sm:$0xf] %vm6725, %v6678
        %6751 = vst.msk [vmem:[#allocation5 + $0x12c] sm:$0xf] %vm6725, %v6680
        %6752 = vst.msk [vmem:[#allocation5 + $0x138] sm:$0xf] %vm6725, %v6682
        %6753 = vst.msk [vmem:[#allocation5 + $0x144] sm:$0xf] %vm6725, %v6684
        %6754 = vst.msk [vmem:[#allocation5 + $0x150] sm:$0xf] %vm6725, %v6686
        %6755 = vst.msk [vmem:[#allocation5 + $0x15c] sm:$0xf] %vm6725, %v6688
        %6756 = vst.msk [vmem:[#allocation5 + $0x168] sm:$0xf] %vm6725, %v6690
        %6757 = vst.msk [vmem:[#allocation5 + $0x174] sm:$0xf] %vm6725, %v6692
        %v6758 = vld [vmem:[%s404 + $0x8] sm:$0xf]
        %v6759 = vld [vmem:[%s404 + $0xc] sm:$0xf]
        %v6760 = vld [vmem:[%s404 + $0x1c] sm:$0xf]
        %v6761 = vld [vmem:[%s404 + $0x20] sm:$0xf]
        %v6762 = vld [vmem:[%s404 + $0x30] sm:$0xf]
        %v6763 = vld [vmem:[%s404 + $0x34] sm:$0xf]
        %v6764 = vld [vmem:[%s404 + $0x44] sm:$0xf]
        %v6765 = vld [vmem:[%s404 + $0x48] sm:$0xf]
        %v6766 = vld [vmem:[%s404 + $0x58] sm:$0xf]
        %v6767 = vld [vmem:[%s404 + $0x5c] sm:$0xf]
        %v6768 = vld [vmem:[%s404 + $0x6c] sm:$0xf]
        %v6769 = vld [vmem:[%s404 + $0x70] sm:$0xf]
        %v6770 = vld [vmem:[%s404 + $0x80] sm:$0xf]
        %v6771 = vld [vmem:[%s404 + $0x84] sm:$0xf]
        %v6772 = vld [vmem:[%s404 + $0x94] sm:$0xf]
        %v6773 = vld [vmem:[%s404 + $0x98] sm:$0xf]
        %v6774 = vld [vmem:[%s404 + $0xa8] sm:$0xf]
        %v6775 = vld [vmem:[%s404 + $0xac] sm:$0xf]
        %v6776 = vld [vmem:[%s404 + $0xbc] sm:$0xf]
        %v6777 = vld [vmem:[%s404 + $0xc0] sm:$0xf]
        %v6778 = vld [vmem:[%s404 + $0xd0] sm:$0xf]
        %v6779 = vld [vmem:[%s404 + $0xd4] sm:$0xf]
        %v6780 = vld [vmem:[%s404 + $0xe4] sm:$0xf]
        %v6781 = vld [vmem:[%s404 + $0xe8] sm:$0xf]
        %v6782 = vld [vmem:[%s404 + $0xf8] sm:$0xf]
        %v6783 = vld [vmem:[%s404 + $0xfc] sm:$0xf]
        %v6784 = vld [vmem:[%s404 + $0x10c] sm:$0xf]
        %v6785 = vld [vmem:[%s404 + $0x110] sm:$0xf]
        %v6786 = vld [vmem:[%s404 + $0x120] sm:$0xf]
        %v6787 = vld [vmem:[%s404 + $0x124] sm:$0xf]
        %v6788 = vld [vmem:[%s404 + $0x134] sm:$0xf]
        %v6789 = vld [vmem:[%s404 + $0x138] sm:$0xf]
        %6790 = vst.msk [vmem:[#allocation5 + $0x4] sm:$0xf] %vm387, %v6758
        %6791 = vst.msk [vmem:[#allocation5 + $0x10] sm:$0xf] %vm387, %v6759
        %6792 = vst.msk [vmem:[#allocation5 + $0x1c] sm:$0xf] %vm387, %v6760
        %6793 = vst.msk [vmem:[#allocation5 + $0x28] sm:$0xf] %vm387, %v6761
        %6794 = vst.msk [vmem:[#allocation5 + $0x34] sm:$0xf] %vm387, %v6762
        %6795 = vst.msk [vmem:[#allocation5 + $0x40] sm:$0xf] %vm387, %v6763
        %6796 = vst.msk [vmem:[#allocation5 + $0x4c] sm:$0xf] %vm387, %v6764
        %6797 = vst.msk [vmem:[#allocation5 + $0x58] sm:$0xf] %vm387, %v6765
        %6798 = vst.msk [vmem:[#allocation5 + $0x64] sm:$0xf] %vm387, %v6766
        %6799 = vst.msk [vmem:[#allocation5 + $0x70] sm:$0xf] %vm387, %v6767
        %6800 = vst.msk [vmem:[#allocation5 + $0x7c] sm:$0xf] %vm387, %v6768
        %6801 = vst.msk [vmem:[#allocation5 + $0x88] sm:$0xf] %vm387, %v6769
        %6802 = vst.msk [vmem:[#allocation5 + $0x94] sm:$0xf] %vm387, %v6770
        %6803 = vst.msk [vmem:[#allocation5 + $0xa0] sm:$0xf] %vm387, %v6771
        %6804 = vst.msk [vmem:[#allocation5 + $0xac] sm:$0xf] %vm387, %v6772
        %6805 = vst.msk [vmem:[#allocation5 + $0xb8] sm:$0xf] %vm387, %v6773
        %6806 = vst.msk [vmem:[#allocation5 + $0xc4] sm:$0xf] %vm387, %v6774
        %6807 = vst.msk [vmem:[#allocation5 + $0xd0] sm:$0xf] %vm387, %v6775
        %6808 = vst.msk [vmem:[#allocation5 + $0xdc] sm:$0xf] %vm387, %v6776
        %6809 = vst.msk [vmem:[#allocation5 + $0xe8] sm:$0xf] %vm387, %v6777
        %6810 = vst.msk [vmem:[#allocation5 + $0xf4] sm:$0xf] %vm387, %v6778
        %6811 = vst.msk [vmem:[#allocation5 + $0x100] sm:$0xf] %vm387, %v6779
        %6812 = vst.msk [vmem:[#allocation5 + $0x10c] sm:$0xf] %vm387, %v6780
        %6813 = vst.msk [vmem:[#allocation5 + $0x118] sm:$0xf] %vm387, %v6781
        %6814 = vst.msk [vmem:[#allocation5 + $0x124] sm:$0xf] %vm387, %v6782
        %6815 = vst.msk [vmem:[#allocation5 + $0x130] sm:$0xf] %vm387, %v6783
        %6816 = vst.msk [vmem:[#allocation5 + $0x13c] sm:$0xf] %vm387, %v6784
        %6817 = vst.msk [vmem:[#allocation5 + $0x148] sm:$0xf] %vm387, %v6785
        %6818 = vst.msk [vmem:[#allocation5 + $0x154] sm:$0xf] %vm387, %v6786
        %6819 = vst.msk [vmem:[#allocation5 + $0x160] sm:$0xf] %vm387, %v6787
        %6820 = vst.msk [vmem:[#allocation5 + $0x16c] sm:$0xf] %vm387, %v6788
        %6821 = vst.msk [vmem:[#allocation5 + $0x178] sm:$0xf] %vm387, %v6789
        %v6822 = vld [vmem:[%s404 + $0x8] sm:$0xf]
        %v6823 = vld [vmem:[%s404 + $0xc] sm:$0xf]
        %v6824 = vld [vmem:[%s404 + $0x10] sm:$0x1]
        %v6825 = vld [vmem:[%s404 + $0x1c] sm:$0xf]
        %v6826 = vld [vmem:[%s404 + $0x20] sm:$0xf]
        %v6827 = vld [vmem:[%s404 + $0x24] sm:$0x1]
        %v6828 = vld [vmem:[%s404 + $0x30] sm:$0xf]
        %v6829 = vld [vmem:[%s404 + $0x34] sm:$0xf]
        %v6830 = vld [vmem:[%s404 + $0x38] sm:$0x1]
        %v6831 = vld [vmem:[%s404 + $0x44] sm:$0xf]
        %v6832 = vld [vmem:[%s404 + $0x48] sm:$0xf]
        %v6833 = vld [vmem:[%s404 + $0x4c] sm:$0x1]
        %v6834 = vld [vmem:[%s404 + $0x58] sm:$0xf]
        %v6835 = vld [vmem:[%s404 + $0x5c] sm:$0xf]
        %v6836 = vld [vmem:[%s404 + $0x60] sm:$0x1]
        %v6837 = vld [vmem:[%s404 + $0x6c] sm:$0xf]
        %v6838 = vld [vmem:[%s404 + $0x70] sm:$0xf]
        %v6839 = vld [vmem:[%s404 + $0x74] sm:$0x1]
        %v6840 = vld [vmem:[%s404 + $0x80] sm:$0xf]
        %v6841 = vld [vmem:[%s404 + $0x84] sm:$0xf]
        %v6842 = vld [vmem:[%s404 + $0x88] sm:$0x1]
        %v6843 = vld [vmem:[%s404 + $0x94] sm:$0xf]
        %v6844 = vld [vmem:[%s404 + $0x98] sm:$0xf]
        %v6845 = vld [vmem:[%s404 + $0x9c] sm:$0x1]
        %v6846 = vld [vmem:[%s404 + $0xa8] sm:$0xf]
        %v6847 = vld [vmem:[%s404 + $0xac] sm:$0xf]
        %v6848 = vld [vmem:[%s404 + $0xb0] sm:$0x1]
        %v6849 = vld [vmem:[%s404 + $0xbc] sm:$0xf]
        %v6850 = vld [vmem:[%s404 + $0xc0] sm:$0xf]
        %v6851 = vld [vmem:[%s404 + $0xc4] sm:$0x1]
        %v6852 = vld [vmem:[%s404 + $0xd0] sm:$0xf]
        %v6853 = vld [vmem:[%s404 + $0xd4] sm:$0xf]
        %v6854 = vld [vmem:[%s404 + $0xd8] sm:$0x1]
        %v6855 = vld [vmem:[%s404 + $0xe4] sm:$0xf]
        %v6856 = vld [vmem:[%s404 + $0xe8] sm:$0xf]
        %v6857 = vld [vmem:[%s404 + $0xec] sm:$0x1]
        %v6858 = vld [vmem:[%s404 + $0xf8] sm:$0xf]
        %v6859 = vld [vmem:[%s404 + $0xfc] sm:$0xf]
        %v6860 = vld [vmem:[%s404 + $0x100] sm:$0x1]
        %v6861 = vld [vmem:[%s404 + $0x10c] sm:$0xf]
        %v6862 = vld [vmem:[%s404 + $0x110] sm:$0xf]
        %v6863 = vld [vmem:[%s404 + $0x114] sm:$0x1]
        %v6864 = vld [vmem:[%s404 + $0x120] sm:$0xf]
        %v6865 = vld [vmem:[%s404 + $0x124] sm:$0xf]
        %v6866 = vld [vmem:[%s404 + $0x128] sm:$0x1]
        %v6867 = vld [vmem:[%s404 + $0x134] sm:$0xf]
        %v6868 = vld [vmem:[%s404 + $0x138] sm:$0xf]
        %v6869 = vld [vmem:[%s404 + $0x13c] sm:$0x1]
        %v6871 = vshrl.u32 %v6822, 16
        %v6873 = vrot.slane %v6871, 4
        %v6874 = vshll.u32 %v6822, 16
        %v6876 = vrot.slane %v6874, 5
        %v6877 = vor.u32 %v6873, %v6876
        %v6878 = vrot.slane %v6877, 4
        %v6880 = vshll.u32 %v6823, 16
        %v6882 = vrot.slane %v6880, 5
        %v6883 = vsel %vm1274, %v6878, %v6882
        %v6884 = vshrl.u32 %v6823, 16
        %v6886 = vrot.slane %v6884, 4
        %v6887 = vor.u32 %v6886, %v6882
        %v6888 = vrot.slane %v6887, 4
        %v6890 = vshll.u32 %v6824, 16
        %v6892 = vrot.slane %v6890, 5
        %v6893 = vsel %vm1274, %v6888, %v6892
        %v6895 = vshrl.u32 %v6825, 16
        %v6897 = vrot.slane %v6895, 4
        %v6898 = vshll.u32 %v6825, 16
        %v6900 = vrot.slane %v6898, 5
        %v6901 = vor.u32 %v6897, %v6900
        %v6902 = vrot.slane %v6901, 4
        %v6904 = vshll.u32 %v6826, 16
        %v6906 = vrot.slane %v6904, 5
        %v6907 = vsel %vm1274, %v6902, %v6906
        %v6908 = vshrl.u32 %v6826, 16
        %v6910 = vrot.slane %v6908, 4
        %v6911 = vor.u32 %v6910, %v6906
        %v6912 = vrot.slane %v6911, 4
        %v6914 = vshll.u32 %v6827, 16
        %v6916 = vrot.slane %v6914, 5
        %v6917 = vsel %vm1274, %v6912, %v6916
        %v6919 = vshrl.u32 %v6828, 16
        %v6921 = vrot.slane %v6919, 4
        %v6922 = vshll.u32 %v6828, 16
        %v6924 = vrot.slane %v6922, 5
        %v6925 = vor.u32 %v6921, %v6924
        %v6926 = vrot.slane %v6925, 4
        %v6928 = vshll.u32 %v6829, 16
        %v6930 = vrot.slane %v6928, 5
        %v6931 = vsel %vm1274, %v6926, %v6930
        %v6932 = vshrl.u32 %v6829, 16
        %v6934 = vrot.slane %v6932, 4
        %v6935 = vor.u32 %v6934, %v6930
        %v6936 = vrot.slane %v6935, 4
        %v6938 = vshll.u32 %v6830, 16
        %v6940 = vrot.slane %v6938, 5
        %v6941 = vsel %vm1274, %v6936, %v6940
        %v6943 = vshrl.u32 %v6831, 16
        %v6945 = vrot.slane %v6943, 4
        %v6946 = vshll.u32 %v6831, 16
        %v6948 = vrot.slane %v6946, 5
        %v6949 = vor.u32 %v6945, %v6948
        %v6950 = vrot.slane %v6949, 4
        %v6952 = vshll.u32 %v6832, 16
        %v6954 = vrot.slane %v6952, 5
        %v6955 = vsel %vm1274, %v6950, %v6954
        %v6956 = vshrl.u32 %v6832, 16
        %v6958 = vrot.slane %v6956, 4
        %v6959 = vor.u32 %v6958, %v6954
        %v6960 = vrot.slane %v6959, 4
        %v6962 = vshll.u32 %v6833, 16
        %v6964 = vrot.slane %v6962, 5
        %v6965 = vsel %vm1274, %v6960, %v6964
        %v6967 = vshrl.u32 %v6834, 16
        %v6969 = vrot.slane %v6967, 4
        %v6970 = vshll.u32 %v6834, 16
        %v6972 = vrot.slane %v6970, 5
        %v6973 = vor.u32 %v6969, %v6972
        %v6974 = vrot.slane %v6973, 4
        %v6976 = vshll.u32 %v6835, 16
        %v6978 = vrot.slane %v6976, 5
        %v6979 = vsel %vm1274, %v6974, %v6978
        %v6980 = vshrl.u32 %v6835, 16
        %v6982 = vrot.slane %v6980, 4
        %v6983 = vor.u32 %v6982, %v6978
        %v6984 = vrot.slane %v6983, 4
        %v6986 = vshll.u32 %v6836, 16
        %v6988 = vrot.slane %v6986, 5
        %v6989 = vsel %vm1274, %v6984, %v6988
        %v6991 = vshrl.u32 %v6837, 16
        %v6993 = vrot.slane %v6991, 4
        %v6994 = vshll.u32 %v6837, 16
        %v6996 = vrot.slane %v6994, 5
        %v6997 = vor.u32 %v6993, %v6996
        %v6998 = vrot.slane %v6997, 4
        %v7000 = vshll.u32 %v6838, 16
        %v7002 = vrot.slane %v7000, 5
        %v7003 = vsel %vm1274, %v6998, %v7002
        %v7004 = vshrl.u32 %v6838, 16
        %v7006 = vrot.slane %v7004, 4
        %v7007 = vor.u32 %v7006, %v7002
        %v7008 = vrot.slane %v7007, 4
        %v7010 = vshll.u32 %v6839, 16
        %v7012 = vrot.slane %v7010, 5
        %v7013 = vsel %vm1274, %v7008, %v7012
        %v7015 = vshrl.u32 %v6840, 16
        %v7017 = vrot.slane %v7015, 4
        %v7018 = vshll.u32 %v6840, 16
        %v7020 = vrot.slane %v7018, 5
        %v7021 = vor.u32 %v7017, %v7020
        %v7022 = vrot.slane %v7021, 4
        %v7024 = vshll.u32 %v6841, 16
        %v7026 = vrot.slane %v7024, 5
        %v7027 = vsel %vm1274, %v7022, %v7026
        %v7028 = vshrl.u32 %v6841, 16
        %v7030 = vrot.slane %v7028, 4
        %v7031 = vor.u32 %v7030, %v7026
        %v7032 = vrot.slane %v7031, 4
        %v7034 = vshll.u32 %v6842, 16
        %v7036 = vrot.slane %v7034, 5
        %v7037 = vsel %vm1274, %v7032, %v7036
        %v7039 = vshrl.u32 %v6843, 16
        %v7041 = vrot.slane %v7039, 4
        %v7042 = vshll.u32 %v6843, 16
        %v7044 = vrot.slane %v7042, 5
        %v7045 = vor.u32 %v7041, %v7044
        %v7046 = vrot.slane %v7045, 4
        %v7048 = vshll.u32 %v6844, 16
        %v7050 = vrot.slane %v7048, 5
        %v7051 = vsel %vm1274, %v7046, %v7050
        %v7052 = vshrl.u32 %v6844, 16
        %v7054 = vrot.slane %v7052, 4
        %v7055 = vor.u32 %v7054, %v7050
        %v7056 = vrot.slane %v7055, 4
        %v7058 = vshll.u32 %v6845, 16
        %v7060 = vrot.slane %v7058, 5
        %v7061 = vsel %vm1274, %v7056, %v7060
        %v7063 = vshrl.u32 %v6846, 16
        %v7065 = vrot.slane %v7063, 4
        %v7066 = vshll.u32 %v6846, 16
        %v7068 = vrot.slane %v7066, 5
        %v7069 = vor.u32 %v7065, %v7068
        %v7070 = vrot.slane %v7069, 4
        %v7072 = vshll.u32 %v6847, 16
        %v7074 = vrot.slane %v7072, 5
        %v7075 = vsel %vm1274, %v7070, %v7074
        %v7076 = vshrl.u32 %v6847, 16
        %v7078 = vrot.slane %v7076, 4
        %v7079 = vor.u32 %v7078, %v7074
        %v7080 = vrot.slane %v7079, 4
        %v7082 = vshll.u32 %v6848, 16
        %v7084 = vrot.slane %v7082, 5
        %v7085 = vsel %vm1274, %v7080, %v7084
        %v7087 = vshrl.u32 %v6849, 16
        %v7089 = vrot.slane %v7087, 4
        %v7090 = vshll.u32 %v6849, 16
        %v7092 = vrot.slane %v7090, 5
        %v7093 = vor.u32 %v7089, %v7092
        %v7094 = vrot.slane %v7093, 4
        %v7096 = vshll.u32 %v6850, 16
        %v7098 = vrot.slane %v7096, 5
        %v7099 = vsel %vm1274, %v7094, %v7098
        %v7100 = vshrl.u32 %v6850, 16
        %v7102 = vrot.slane %v7100, 4
        %v7103 = vor.u32 %v7102, %v7098
        %v7104 = vrot.slane %v7103, 4
        %v7106 = vshll.u32 %v6851, 16
        %v7108 = vrot.slane %v7106, 5
        %v7109 = vsel %vm1274, %v7104, %v7108
        %v7111 = vshrl.u32 %v6852, 16
        %v7113 = vrot.slane %v7111, 4
        %v7114 = vshll.u32 %v6852, 16
        %v7116 = vrot.slane %v7114, 5
        %v7117 = vor.u32 %v7113, %v7116
        %v7118 = vrot.slane %v7117, 4
        %v7120 = vshll.u32 %v6853, 16
        %v7122 = vrot.slane %v7120, 5
        %v7123 = vsel %vm1274, %v7118, %v7122
        %v7124 = vshrl.u32 %v6853, 16
        %v7126 = vrot.slane %v7124, 4
        %v7127 = vor.u32 %v7126, %v7122
        %v7128 = vrot.slane %v7127, 4
        %v7130 = vshll.u32 %v6854, 16
        %v7132 = vrot.slane %v7130, 5
        %v7133 = vsel %vm1274, %v7128, %v7132
        %v7135 = vshrl.u32 %v6855, 16
        %v7137 = vrot.slane %v7135, 4
        %v7138 = vshll.u32 %v6855, 16
        %v7140 = vrot.slane %v7138, 5
        %v7141 = vor.u32 %v7137, %v7140
        %v7142 = vrot.slane %v7141, 4
        %v7144 = vshll.u32 %v6856, 16
        %v7146 = vrot.slane %v7144, 5
        %v7147 = vsel %vm1274, %v7142, %v7146
        %v7148 = vshrl.u32 %v6856, 16
        %v7150 = vrot.slane %v7148, 4
        %v7151 = vor.u32 %v7150, %v7146
        %v7152 = vrot.slane %v7151, 4
        %v7154 = vshll.u32 %v6857, 16
        %v7156 = vrot.slane %v7154, 5
        %v7157 = vsel %vm1274, %v7152, %v7156
        %v7159 = vshrl.u32 %v6858, 16
        %v7161 = vrot.slane %v7159, 4
        %v7162 = vshll.u32 %v6858, 16
        %v7164 = vrot.slane %v7162, 5
        %v7165 = vor.u32 %v7161, %v7164
        %v7166 = vrot.slane %v7165, 4
        %v7168 = vshll.u32 %v6859, 16
        %v7170 = vrot.slane %v7168, 5
        %v7171 = vsel %vm1274, %v7166, %v7170
        %v7172 = vshrl.u32 %v6859, 16
        %v7174 = vrot.slane %v7172, 4
        %v7175 = vor.u32 %v7174, %v7170
        %v7176 = vrot.slane %v7175, 4
        %v7178 = vshll.u32 %v6860, 16
        %v7180 = vrot.slane %v7178, 5
        %v7181 = vsel %vm1274, %v7176, %v7180
        %v7183 = vshrl.u32 %v6861, 16
        %v7185 = vrot.slane %v7183, 4
        %v7186 = vshll.u32 %v6861, 16
        %v7188 = vrot.slane %v7186, 5
        %v7189 = vor.u32 %v7185, %v7188
        %v7190 = vrot.slane %v7189, 4
        %v7192 = vshll.u32 %v6862, 16
        %v7194 = vrot.slane %v7192, 5
        %v7195 = vsel %vm1274, %v7190, %v7194
        %v7196 = vshrl.u32 %v6862, 16
        %v7198 = vrot.slane %v7196, 4
        %v7199 = vor.u32 %v7198, %v7194
        %v7200 = vrot.slane %v7199, 4
        %v7202 = vshll.u32 %v6863, 16
        %v7204 = vrot.slane %v7202, 5
        %v7205 = vsel %vm1274, %v7200, %v7204
        %v7207 = vshrl.u32 %v6864, 16
        %v7209 = vrot.slane %v7207, 4
        %v7210 = vshll.u32 %v6864, 16
        %v7212 = vrot.slane %v7210, 5
        %v7213 = vor.u32 %v7209, %v7212
        %v7214 = vrot.slane %v7213, 4
        %v7216 = vshll.u32 %v6865, 16
        %v7218 = vrot.slane %v7216, 5
        %v7219 = vsel %vm1274, %v7214, %v7218
        %v7220 = vshrl.u32 %v6865, 16
        %v7222 = vrot.slane %v7220, 4
        %v7223 = vor.u32 %v7222, %v7218
        %v7224 = vrot.slane %v7223, 4
        %v7226 = vshll.u32 %v6866, 16
        %v7228 = vrot.slane %v7226, 5
        %v7229 = vsel %vm1274, %v7224, %v7228
        %v7231 = vshrl.u32 %v6867, 16
        %v7233 = vrot.slane %v7231, 4
        %v7234 = vshll.u32 %v6867, 16
        %v7236 = vrot.slane %v7234, 5
        %v7237 = vor.u32 %v7233, %v7236
        %v7238 = vrot.slane %v7237, 4
        %v7240 = vshll.u32 %v6868, 16
        %v7242 = vrot.slane %v7240, 5
        %v7243 = vsel %vm1274, %v7238, %v7242
        %v7244 = vshrl.u32 %v6868, 16
        %v7246 = vrot.slane %v7244, 4
        %v7247 = vor.u32 %v7246, %v7242
        %v7248 = vrot.slane %v7247, 4
        %v7250 = vshll.u32 %v6869, 16
        %v7252 = vrot.slane %v7250, 5
        %v7253 = vsel %vm1274, %v7248, %v7252
        %7254 = vrot.lane.b32.xlu0 %v6883, 32
        %v7255 = vpop.permute.xlu0 %7254
        %7256 = vrot.lane.b32.xlu0 %v6893, 32
        %v7257 = vpop.permute.xlu0 %7256
        %7258 = vrot.lane.b32.xlu0 %v6907, 32
        %v7259 = vpop.permute.xlu0 %7258
        %7260 = vrot.lane.b32.xlu0 %v6917, 32
        %v7261 = vpop.permute.xlu0 %7260
        %7262 = vrot.lane.b32.xlu0 %v6931, 32
        %v7263 = vpop.permute.xlu0 %7262
        %7264 = vrot.lane.b32.xlu0 %v6941, 32
        %v7265 = vpop.permute.xlu0 %7264
        %7266 = vrot.lane.b32.xlu0 %v6955, 32
        %v7267 = vpop.permute.xlu0 %7266
        %7268 = vrot.lane.b32.xlu0 %v6965, 32
        %v7269 = vpop.permute.xlu0 %7268
        %7270 = vrot.lane.b32.xlu0 %v6979, 32
        %v7271 = vpop.permute.xlu0 %7270
        %7272 = vrot.lane.b32.xlu0 %v6989, 32
        %v7273 = vpop.permute.xlu0 %7272
        %7274 = vrot.lane.b32.xlu0 %v7003, 32
        %v7275 = vpop.permute.xlu0 %7274
        %7276 = vrot.lane.b32.xlu0 %v7013, 32
        %v7277 = vpop.permute.xlu0 %7276
        %7278 = vrot.lane.b32.xlu0 %v7027, 32
        %v7279 = vpop.permute.xlu0 %7278
        %7280 = vrot.lane.b32.xlu0 %v7037, 32
        %v7281 = vpop.permute.xlu0 %7280
        %7282 = vrot.lane.b32.xlu0 %v7051, 32
        %v7283 = vpop.permute.xlu0 %7282
        %7284 = vrot.lane.b32.xlu0 %v7061, 32
        %v7285 = vpop.permute.xlu0 %7284
        %7286 = vrot.lane.b32.xlu0 %v7075, 32
        %v7287 = vpop.permute.xlu0 %7286
        %7288 = vrot.lane.b32.xlu0 %v7085, 32
        %v7289 = vpop.permute.xlu0 %7288
        %7290 = vrot.lane.b32.xlu0 %v7099, 32
        %v7291 = vpop.permute.xlu0 %7290
        %7292 = vrot.lane.b32.xlu0 %v7109, 32
        %v7293 = vpop.permute.xlu0 %7292
        %7294 = vrot.lane.b32.xlu0 %v7123, 32
        %v7295 = vpop.permute.xlu0 %7294
        %7296 = vrot.lane.b32.xlu0 %v7133, 32
        %v7297 = vpop.permute.xlu0 %7296
        %7298 = vrot.lane.b32.xlu0 %v7147, 32
        %v7299 = vpop.permute.xlu0 %7298
        %7300 = vrot.lane.b32.xlu0 %v7157, 32
        %v7301 = vpop.permute.xlu0 %7300
        %7302 = vrot.lane.b32.xlu0 %v7171, 32
        %v7303 = vpop.permute.xlu0 %7302
        %7304 = vrot.lane.b32.xlu0 %v7181, 32
        %v7305 = vpop.permute.xlu0 %7304
        %7306 = vrot.lane.b32.xlu0 %v7195, 32
        %v7307 = vpop.permute.xlu0 %7306
        %7308 = vrot.lane.b32.xlu0 %v7205, 32
        %v7309 = vpop.permute.xlu0 %7308
        %7310 = vrot.lane.b32.xlu0 %v7219, 32
        %v7311 = vpop.permute.xlu0 %7310
        %7312 = vrot.lane.b32.xlu0 %v7229, 32
        %v7313 = vpop.permute.xlu0 %7312
        %7314 = vrot.lane.b32.xlu0 %v7243, 32
        %v7315 = vpop.permute.xlu0 %7314
        %7316 = vrot.lane.b32.xlu0 %v7253, 32
        %v7317 = vpop.permute.xlu0 %7316
        %7350 = vst.msk [vmem:[#allocation5 + $0x4] sm:$0xf] %vm5635, %v7255
        %7351 = vst.msk [vmem:[#allocation5 + $0x10] sm:$0xf] %vm5635, %v7257
        %7352 = vst.msk [vmem:[#allocation5 + $0x1c] sm:$0xf] %vm5635, %v7259
        %7353 = vst.msk [vmem:[#allocation5 + $0x28] sm:$0xf] %vm5635, %v7261
        %7354 = vst.msk [vmem:[#allocation5 + $0x34] sm:$0xf] %vm5635, %v7263
        %7355 = vst.msk [vmem:[#allocation5 + $0x40] sm:$0xf] %vm5635, %v7265
        %7356 = vst.msk [vmem:[#allocation5 + $0x4c] sm:$0xf] %vm5635, %v7267
        %7357 = vst.msk [vmem:[#allocation5 + $0x58] sm:$0xf] %vm5635, %v7269
        %7358 = vst.msk [vmem:[#allocation5 + $0x64] sm:$0xf] %vm5635, %v7271
        %7359 = vst.msk [vmem:[#allocation5 + $0x70] sm:$0xf] %vm5635, %v7273
        %7360 = vst.msk [vmem:[#allocation5 + $0x7c] sm:$0xf] %vm5635, %v7275
        %7361 = vst.msk [vmem:[#allocation5 + $0x88] sm:$0xf] %vm5635, %v7277
        %7362 = vst.msk [vmem:[#allocation5 + $0x94] sm:$0xf] %vm5635, %v7279
        %7363 = vst.msk [vmem:[#allocation5 + $0xa0] sm:$0xf] %vm5635, %v7281
        %7364 = vst.msk [vmem:[#allocation5 + $0xac] sm:$0xf] %vm5635, %v7283
        %7365 = vst.msk [vmem:[#allocation5 + $0xb8] sm:$0xf] %vm5635, %v7285
        %7366 = vst.msk [vmem:[#allocation5 + $0xc4] sm:$0xf] %vm5635, %v7287
        %7367 = vst.msk [vmem:[#allocation5 + $0xd0] sm:$0xf] %vm5635, %v7289
        %7368 = vst.msk [vmem:[#allocation5 + $0xdc] sm:$0xf] %vm5635, %v7291
        %7369 = vst.msk [vmem:[#allocation5 + $0xe8] sm:$0xf] %vm5635, %v7293
        %7370 = vst.msk [vmem:[#allocation5 + $0xf4] sm:$0xf] %vm5635, %v7295
        %7371 = vst.msk [vmem:[#allocation5 + $0x100] sm:$0xf] %vm5635, %v7297
        %7372 = vst.msk [vmem:[#allocation5 + $0x10c] sm:$0xf] %vm5635, %v7299
        %7373 = vst.msk [vmem:[#allocation5 + $0x118] sm:$0xf] %vm5635, %v7301
        %7374 = vst.msk [vmem:[#allocation5 + $0x124] sm:$0xf] %vm5635, %v7303
        %7375 = vst.msk [vmem:[#allocation5 + $0x130] sm:$0xf] %vm5635, %v7305
        %7376 = vst.msk [vmem:[#allocation5 + $0x13c] sm:$0xf] %vm5635, %v7307
        %7377 = vst.msk [vmem:[#allocation5 + $0x148] sm:$0xf] %vm5635, %v7309
        %7378 = vst.msk [vmem:[#allocation5 + $0x154] sm:$0xf] %vm5635, %v7311
        %7379 = vst.msk [vmem:[#allocation5 + $0x160] sm:$0xf] %vm5635, %v7313
        %7380 = vst.msk [vmem:[#allocation5 + $0x16c] sm:$0xf] %vm5635, %v7315
        %7381 = vst.msk [vmem:[#allocation5 + $0x178] sm:$0xf] %vm5635, %v7317
        %s7382 = scalar_lea.vmem [#allocation3], 40
        %v7383 = vld [vmem:[%s7382 + $0x4] sm:$0x8]
        %v7384 = vld [vmem:[%s7382 + $0x8] sm:$0xf]
        %v7385 = vld [vmem:[%s7382 + $0xc] sm:$0xf]
        %v7386 = vld [vmem:[%s7382 + $0x18] sm:$0x8]
        %v7387 = vld [vmem:[%s7382 + $0x1c] sm:$0xf]
        %v7388 = vld [vmem:[%s7382 + $0x20] sm:$0xf]
        %v7389 = vld [vmem:[%s7382 + $0x2c] sm:$0x8]
        %v7390 = vld [vmem:[%s7382 + $0x30] sm:$0xf]
        %v7391 = vld [vmem:[%s7382 + $0x34] sm:$0xf]
        %v7392 = vld [vmem:[%s7382 + $0x40] sm:$0x8]
        %v7393 = vld [vmem:[%s7382 + $0x44] sm:$0xf]
        %v7394 = vld [vmem:[%s7382 + $0x48] sm:$0xf]
        %v7395 = vld [vmem:[%s7382 + $0x54] sm:$0x8]
        %v7396 = vld [vmem:[%s7382 + $0x58] sm:$0xf]
        %v7397 = vld [vmem:[%s7382 + $0x5c] sm:$0xf]
        %v7398 = vld [vmem:[%s7382 + $0x68] sm:$0x8]
        %v7399 = vld [vmem:[%s7382 + $0x6c] sm:$0xf]
        %v7400 = vld [vmem:[%s7382 + $0x70] sm:$0xf]
        %v7401 = vld [vmem:[%s7382 + $0x7c] sm:$0x8]
        %v7402 = vld [vmem:[%s7382 + $0x80] sm:$0xf]
        %v7403 = vld [vmem:[%s7382 + $0x84] sm:$0xf]
        %v7404 = vld [vmem:[%s7382 + $0x90] sm:$0x8]
        %v7405 = vld [vmem:[%s7382 + $0x94] sm:$0xf]
        %v7406 = vld [vmem:[%s7382 + $0x98] sm:$0xf]
        %v7407 = vld [vmem:[%s7382 + $0xa4] sm:$0x8]
        %v7408 = vld [vmem:[%s7382 + $0xa8] sm:$0xf]
        %v7409 = vld [vmem:[%s7382 + $0xac] sm:$0xf]
        %v7410 = vld [vmem:[%s7382 + $0xb8] sm:$0x8]
        %v7411 = vld [vmem:[%s7382 + $0xbc] sm:$0xf]
        %v7412 = vld [vmem:[%s7382 + $0xc0] sm:$0xf]
        %v7413 = vld [vmem:[%s7382 + $0xcc] sm:$0x8]
        %v7414 = vld [vmem:[%s7382 + $0xd0] sm:$0xf]
        %v7415 = vld [vmem:[%s7382 + $0xd4] sm:$0xf]
        %v7416 = vld [vmem:[%s7382 + $0xe0] sm:$0x8]
        %v7417 = vld [vmem:[%s7382 + $0xe4] sm:$0xf]
        %v7418 = vld [vmem:[%s7382 + $0xe8] sm:$0xf]
        %v7419 = vld [vmem:[%s7382 + $0xf4] sm:$0x8]
        %v7420 = vld [vmem:[%s7382 + $0xf8] sm:$0xf]
        %v7421 = vld [vmem:[%s7382 + $0xfc] sm:$0xf]
        %v7422 = vld [vmem:[%s7382 + $0x108] sm:$0x8]
        %v7423 = vld [vmem:[%s7382 + $0x10c] sm:$0xf]
        %v7424 = vld [vmem:[%s7382 + $0x110] sm:$0xf]
        %v7425 = vld [vmem:[%s7382 + $0x11c] sm:$0x8]
        %v7426 = vld [vmem:[%s7382 + $0x120] sm:$0xf]
        %v7427 = vld [vmem:[%s7382 + $0x124] sm:$0xf]
        %v7428 = vld [vmem:[%s7382 + $0x130] sm:$0x8]
        %v7429 = vld [vmem:[%s7382 + $0x134] sm:$0xf]
        %v7430 = vld [vmem:[%s7382 + $0x138] sm:$0xf]
        %v7432 = vshrl.u32 %v7383, 16
        %v7434 = vrot.slane %v7432, 7
        %v7435 = vrot.slane %v7434, 4
        %v7437 = vshrl.u32 %v7384, 16
        %v7439 = vrot.slane %v7437, 7
        %v7440 = vshll.u32 %v7384, 16
        %v7442 = vor.u32 %v7439, %v7440
        %v7443 = vsel %vm614, %v7435, %v7442
        %v7444 = vrot.slane %v7439, 4
        %v7446 = vshrl.u32 %v7385, 16
        %v7448 = vrot.slane %v7446, 7
        %v7449 = vshll.u32 %v7385, 16
        %v7451 = vor.u32 %v7448, %v7449
        %v7452 = vsel %vm614, %v7444, %v7451
        %v7454 = vshrl.u32 %v7386, 16
        %v7456 = vrot.slane %v7454, 7
        %v7457 = vrot.slane %v7456, 4
        %v7459 = vshrl.u32 %v7387, 16
        %v7461 = vrot.slane %v7459, 7
        %v7462 = vshll.u32 %v7387, 16
        %v7464 = vor.u32 %v7461, %v7462
        %v7465 = vsel %vm614, %v7457, %v7464
        %v7466 = vrot.slane %v7461, 4
        %v7468 = vshrl.u32 %v7388, 16
        %v7470 = vrot.slane %v7468, 7
        %v7471 = vshll.u32 %v7388, 16
        %v7473 = vor.u32 %v7470, %v7471
        %v7474 = vsel %vm614, %v7466, %v7473
        %v7476 = vshrl.u32 %v7389, 16
        %v7478 = vrot.slane %v7476, 7
        %v7479 = vrot.slane %v7478, 4
        %v7481 = vshrl.u32 %v7390, 16
        %v7483 = vrot.slane %v7481, 7
        %v7484 = vshll.u32 %v7390, 16
        %v7486 = vor.u32 %v7483, %v7484
        %v7487 = vsel %vm614, %v7479, %v7486
        %v7488 = vrot.slane %v7483, 4
        %v7490 = vshrl.u32 %v7391, 16
        %v7492 = vrot.slane %v7490, 7
        %v7493 = vshll.u32 %v7391, 16
        %v7495 = vor.u32 %v7492, %v7493
        %v7496 = vsel %vm614, %v7488, %v7495
        %v7498 = vshrl.u32 %v7392, 16
        %v7500 = vrot.slane %v7498, 7
        %v7501 = vrot.slane %v7500, 4
        %v7503 = vshrl.u32 %v7393, 16
        %v7505 = vrot.slane %v7503, 7
        %v7506 = vshll.u32 %v7393, 16
        %v7508 = vor.u32 %v7505, %v7506
        %v7509 = vsel %vm614, %v7501, %v7508
        %v7510 = vrot.slane %v7505, 4
        %v7512 = vshrl.u32 %v7394, 16
        %v7514 = vrot.slane %v7512, 7
        %v7515 = vshll.u32 %v7394, 16
        %v7517 = vor.u32 %v7514, %v7515
        %v7518 = vsel %vm614, %v7510, %v7517
        %v7520 = vshrl.u32 %v7395, 16
        %v7522 = vrot.slane %v7520, 7
        %v7523 = vrot.slane %v7522, 4
        %v7525 = vshrl.u32 %v7396, 16
        %v7527 = vrot.slane %v7525, 7
        %v7528 = vshll.u32 %v7396, 16
        %v7530 = vor.u32 %v7527, %v7528
        %v7531 = vsel %vm614, %v7523, %v7530
        %v7532 = vrot.slane %v7527, 4
        %v7534 = vshrl.u32 %v7397, 16
        %v7536 = vrot.slane %v7534, 7
        %v7537 = vshll.u32 %v7397, 16
        %v7539 = vor.u32 %v7536, %v7537
        %v7540 = vsel %vm614, %v7532, %v7539
        %v7542 = vshrl.u32 %v7398, 16
        %v7544 = vrot.slane %v7542, 7
        %v7545 = vrot.slane %v7544, 4
        %v7547 = vshrl.u32 %v7399, 16
        %v7549 = vrot.slane %v7547, 7
        %v7550 = vshll.u32 %v7399, 16
        %v7552 = vor.u32 %v7549, %v7550
        %v7553 = vsel %vm614, %v7545, %v7552
        %v7554 = vrot.slane %v7549, 4
        %v7556 = vshrl.u32 %v7400, 16
        %v7558 = vrot.slane %v7556, 7
        %v7559 = vshll.u32 %v7400, 16
        %v7561 = vor.u32 %v7558, %v7559
        %v7562 = vsel %vm614, %v7554, %v7561
        %v7564 = vshrl.u32 %v7401, 16
        %v7566 = vrot.slane %v7564, 7
        %v7567 = vrot.slane %v7566, 4
        %v7569 = vshrl.u32 %v7402, 16
        %v7571 = vrot.slane %v7569, 7
        %v7572 = vshll.u32 %v7402, 16
        %v7574 = vor.u32 %v7571, %v7572
        %v7575 = vsel %vm614, %v7567, %v7574
        %v7576 = vrot.slane %v7571, 4
        %v7578 = vshrl.u32 %v7403, 16
        %v7580 = vrot.slane %v7578, 7
        %v7581 = vshll.u32 %v7403, 16
        %v7583 = vor.u32 %v7580, %v7581
        %v7584 = vsel %vm614, %v7576, %v7583
        %v7586 = vshrl.u32 %v7404, 16
        %v7588 = vrot.slane %v7586, 7
        %v7589 = vrot.slane %v7588, 4
        %v7591 = vshrl.u32 %v7405, 16
        %v7593 = vrot.slane %v7591, 7
        %v7594 = vshll.u32 %v7405, 16
        %v7596 = vor.u32 %v7593, %v7594
        %v7597 = vsel %vm614, %v7589, %v7596
        %v7598 = vrot.slane %v7593, 4
        %v7600 = vshrl.u32 %v7406, 16
        %v7602 = vrot.slane %v7600, 7
        %v7603 = vshll.u32 %v7406, 16
        %v7605 = vor.u32 %v7602, %v7603
        %v7606 = vsel %vm614, %v7598, %v7605
        %v7608 = vshrl.u32 %v7407, 16
        %v7610 = vrot.slane %v7608, 7
        %v7611 = vrot.slane %v7610, 4
        %v7613 = vshrl.u32 %v7408, 16
        %v7615 = vrot.slane %v7613, 7
        %v7616 = vshll.u32 %v7408, 16
        %v7618 = vor.u32 %v7615, %v7616
        %v7619 = vsel %vm614, %v7611, %v7618
        %v7620 = vrot.slane %v7615, 4
        %v7622 = vshrl.u32 %v7409, 16
        %v7624 = vrot.slane %v7622, 7
        %v7625 = vshll.u32 %v7409, 16
        %v7627 = vor.u32 %v7624, %v7625
        %v7628 = vsel %vm614, %v7620, %v7627
        %v7630 = vshrl.u32 %v7410, 16
        %v7632 = vrot.slane %v7630, 7
        %v7633 = vrot.slane %v7632, 4
        %v7635 = vshrl.u32 %v7411, 16
        %v7637 = vrot.slane %v7635, 7
        %v7638 = vshll.u32 %v7411, 16
        %v7640 = vor.u32 %v7637, %v7638
        %v7641 = vsel %vm614, %v7633, %v7640
        %v7642 = vrot.slane %v7637, 4
        %v7644 = vshrl.u32 %v7412, 16
        %v7646 = vrot.slane %v7644, 7
        %v7647 = vshll.u32 %v7412, 16
        %v7649 = vor.u32 %v7646, %v7647
        %v7650 = vsel %vm614, %v7642, %v7649
        %v7652 = vshrl.u32 %v7413, 16
        %v7654 = vrot.slane %v7652, 7
        %v7655 = vrot.slane %v7654, 4
        %v7657 = vshrl.u32 %v7414, 16
        %v7659 = vrot.slane %v7657, 7
        %v7660 = vshll.u32 %v7414, 16
        %v7662 = vor.u32 %v7659, %v7660
        %v7663 = vsel %vm614, %v7655, %v7662
        %v7664 = vrot.slane %v7659, 4
        %v7666 = vshrl.u32 %v7415, 16
        %v7668 = vrot.slane %v7666, 7
        %v7669 = vshll.u32 %v7415, 16
        %v7671 = vor.u32 %v7668, %v7669
        %v7672 = vsel %vm614, %v7664, %v7671
        %v7674 = vshrl.u32 %v7416, 16
        %v7676 = vrot.slane %v7674, 7
        %v7677 = vrot.slane %v7676, 4
        %v7679 = vshrl.u32 %v7417, 16
        %v7681 = vrot.slane %v7679, 7
        %v7682 = vshll.u32 %v7417, 16
        %v7684 = vor.u32 %v7681, %v7682
        %v7685 = vsel %vm614, %v7677, %v7684
        %v7686 = vrot.slane %v7681, 4
        %v7688 = vshrl.u32 %v7418, 16
        %v7690 = vrot.slane %v7688, 7
        %v7691 = vshll.u32 %v7418, 16
        %v7693 = vor.u32 %v7690, %v7691
        %v7694 = vsel %vm614, %v7686, %v7693
        %v7696 = vshrl.u32 %v7419, 16
        %v7698 = vrot.slane %v7696, 7
        %v7699 = vrot.slane %v7698, 4
        %v7701 = vshrl.u32 %v7420, 16
        %v7703 = vrot.slane %v7701, 7
        %v7704 = vshll.u32 %v7420, 16
        %v7706 = vor.u32 %v7703, %v7704
        %v7707 = vsel %vm614, %v7699, %v7706
        %v7708 = vrot.slane %v7703, 4
        %v7710 = vshrl.u32 %v7421, 16
        %v7712 = vrot.slane %v7710, 7
        %v7713 = vshll.u32 %v7421, 16
        %v7715 = vor.u32 %v7712, %v7713
        %v7716 = vsel %vm614, %v7708, %v7715
        %v7718 = vshrl.u32 %v7422, 16
        %v7720 = vrot.slane %v7718, 7
        %v7721 = vrot.slane %v7720, 4
        %v7723 = vshrl.u32 %v7423, 16
        %v7725 = vrot.slane %v7723, 7
        %v7726 = vshll.u32 %v7423, 16
        %v7728 = vor.u32 %v7725, %v7726
        %v7729 = vsel %vm614, %v7721, %v7728
        %v7730 = vrot.slane %v7725, 4
        %v7732 = vshrl.u32 %v7424, 16
        %v7734 = vrot.slane %v7732, 7
        %v7735 = vshll.u32 %v7424, 16
        %v7737 = vor.u32 %v7734, %v7735
        %v7738 = vsel %vm614, %v7730, %v7737
        %v7740 = vshrl.u32 %v7425, 16
        %v7742 = vrot.slane %v7740, 7
        %v7743 = vrot.slane %v7742, 4
        %v7745 = vshrl.u32 %v7426, 16
        %v7747 = vrot.slane %v7745, 7
        %v7748 = vshll.u32 %v7426, 16
        %v7750 = vor.u32 %v7747, %v7748
        %v7751 = vsel %vm614, %v7743, %v7750
        %v7752 = vrot.slane %v7747, 4
        %v7754 = vshrl.u32 %v7427, 16
        %v7756 = vrot.slane %v7754, 7
        %v7757 = vshll.u32 %v7427, 16
        %v7759 = vor.u32 %v7756, %v7757
        %v7760 = vsel %vm614, %v7752, %v7759
        %v7762 = vshrl.u32 %v7428, 16
        %v7764 = vrot.slane %v7762, 7
        %v7765 = vrot.slane %v7764, 4
        %v7767 = vshrl.u32 %v7429, 16
        %v7769 = vrot.slane %v7767, 7
        %v7770 = vshll.u32 %v7429, 16
        %v7772 = vor.u32 %v7769, %v7770
        %v7773 = vsel %vm614, %v7765, %v7772
        %v7774 = vrot.slane %v7769, 4
        %v7776 = vshrl.u32 %v7430, 16
        %v7778 = vrot.slane %v7776, 7
        %v7779 = vshll.u32 %v7430, 16
        %v7781 = vor.u32 %v7778, %v7779
        %v7782 = vsel %vm614, %v7774, %v7781
        %7783 = vrot.lane.b32.xlu0 %v7443, 64
        %v7784 = vpop.permute.xlu0 %7783
        %7785 = vrot.lane.b32.xlu0 %v7452, 64
        %v7786 = vpop.permute.xlu0 %7785
        %7787 = vrot.lane.b32.xlu0 %v7465, 64
        %v7788 = vpop.permute.xlu0 %7787
        %7789 = vrot.lane.b32.xlu0 %v7474, 64
        %v7790 = vpop.permute.xlu0 %7789
        %7791 = vrot.lane.b32.xlu0 %v7487, 64
        %v7792 = vpop.permute.xlu0 %7791
        %7793 = vrot.lane.b32.xlu0 %v7496, 64
        %v7794 = vpop.permute.xlu0 %7793
        %7795 = vrot.lane.b32.xlu0 %v7509, 64
        %v7796 = vpop.permute.xlu0 %7795
        %7797 = vrot.lane.b32.xlu0 %v7518, 64
        %v7798 = vpop.permute.xlu0 %7797
        %7799 = vrot.lane.b32.xlu0 %v7531, 64
        %v7800 = vpop.permute.xlu0 %7799
        %7801 = vrot.lane.b32.xlu0 %v7540, 64
        %v7802 = vpop.permute.xlu0 %7801
        %7803 = vrot.lane.b32.xlu0 %v7553, 64
        %v7804 = vpop.permute.xlu0 %7803
        %7805 = vrot.lane.b32.xlu0 %v7562, 64
        %v7806 = vpop.permute.xlu0 %7805
        %7807 = vrot.lane.b32.xlu0 %v7575, 64
        %v7808 = vpop.permute.xlu0 %7807
        %7809 = vrot.lane.b32.xlu0 %v7584, 64
        %v7810 = vpop.permute.xlu0 %7809
        %7811 = vrot.lane.b32.xlu0 %v7597, 64
        %v7812 = vpop.permute.xlu0 %7811
        %7813 = vrot.lane.b32.xlu0 %v7606, 64
        %v7814 = vpop.permute.xlu0 %7813
        %7815 = vrot.lane.b32.xlu0 %v7619, 64
        %v7816 = vpop.permute.xlu0 %7815
        %7817 = vrot.lane.b32.xlu0 %v7628, 64
        %v7818 = vpop.permute.xlu0 %7817
        %7819 = vrot.lane.b32.xlu0 %v7641, 64
        %v7820 = vpop.permute.xlu0 %7819
        %7821 = vrot.lane.b32.xlu0 %v7650, 64
        %v7822 = vpop.permute.xlu0 %7821
        %7823 = vrot.lane.b32.xlu0 %v7663, 64
        %v7824 = vpop.permute.xlu0 %7823
        %7825 = vrot.lane.b32.xlu0 %v7672, 64
        %v7826 = vpop.permute.xlu0 %7825
        %7827 = vrot.lane.b32.xlu0 %v7685, 64
        %v7828 = vpop.permute.xlu0 %7827
        %7829 = vrot.lane.b32.xlu0 %v7694, 64
        %v7830 = vpop.permute.xlu0 %7829
        %7831 = vrot.lane.b32.xlu0 %v7707, 64
        %v7832 = vpop.permute.xlu0 %7831
        %7833 = vrot.lane.b32.xlu0 %v7716, 64
        %v7834 = vpop.permute.xlu0 %7833
        %7835 = vrot.lane.b32.xlu0 %v7729, 64
        %v7836 = vpop.permute.xlu0 %7835
        %7837 = vrot.lane.b32.xlu0 %v7738, 64
        %v7838 = vpop.permute.xlu0 %7837
        %7839 = vrot.lane.b32.xlu0 %v7751, 64
        %v7840 = vpop.permute.xlu0 %7839
        %7841 = vrot.lane.b32.xlu0 %v7760, 64
        %v7842 = vpop.permute.xlu0 %7841
        %7843 = vrot.lane.b32.xlu0 %v7773, 64
        %v7844 = vpop.permute.xlu0 %7843
        %7845 = vrot.lane.b32.xlu0 %v7782, 64
        %v7846 = vpop.permute.xlu0 %7845
        %7879 = vst.msk [vmem:[#allocation5 + $0x4] sm:$0xf] %vm6196, %v7784
        %7880 = vst.msk [vmem:[#allocation5 + $0x10] sm:$0xf] %vm6196, %v7786
        %7881 = vst.msk [vmem:[#allocation5 + $0x1c] sm:$0xf] %vm6196, %v7788
        %7882 = vst.msk [vmem:[#allocation5 + $0x28] sm:$0xf] %vm6196, %v7790
        %7883 = vst.msk [vmem:[#allocation5 + $0x34] sm:$0xf] %vm6196, %v7792
        %7884 = vst.msk [vmem:[#allocation5 + $0x40] sm:$0xf] %vm6196, %v7794
        %7885 = vst.msk [vmem:[#allocation5 + $0x4c] sm:$0xf] %vm6196, %v7796
        %7886 = vst.msk [vmem:[#allocation5 + $0x58] sm:$0xf] %vm6196, %v7798
        %7887 = vst.msk [vmem:[#allocation5 + $0x64] sm:$0xf] %vm6196, %v7800
        %7888 = vst.msk [vmem:[#allocation5 + $0x70] sm:$0xf] %vm6196, %v7802
        %7889 = vst.msk [vmem:[#allocation5 + $0x7c] sm:$0xf] %vm6196, %v7804
        %7890 = vst.msk [vmem:[#allocation5 + $0x88] sm:$0xf] %vm6196, %v7806
        %7891 = vst.msk [vmem:[#allocation5 + $0x94] sm:$0xf] %vm6196, %v7808
        %7892 = vst.msk [vmem:[#allocation5 + $0xa0] sm:$0xf] %vm6196, %v7810
        %7893 = vst.msk [vmem:[#allocation5 + $0xac] sm:$0xf] %vm6196, %v7812
        %7894 = vst.msk [vmem:[#allocation5 + $0xb8] sm:$0xf] %vm6196, %v7814
        %7895 = vst.msk [vmem:[#allocation5 + $0xc4] sm:$0xf] %vm6196, %v7816
        %7896 = vst.msk [vmem:[#allocation5 + $0xd0] sm:$0xf] %vm6196, %v7818
        %7897 = vst.msk [vmem:[#allocation5 + $0xdc] sm:$0xf] %vm6196, %v7820
        %7898 = vst.msk [vmem:[#allocation5 + $0xe8] sm:$0xf] %vm6196, %v7822
        %7899 = vst.msk [vmem:[#allocation5 + $0xf4] sm:$0xf] %vm6196, %v7824
        %7900 = vst.msk [vmem:[#allocation5 + $0x100] sm:$0xf] %vm6196, %v7826
        %7901 = vst.msk [vmem:[#allocation5 + $0x10c] sm:$0xf] %vm6196, %v7828
        %7902 = vst.msk [vmem:[#allocation5 + $0x118] sm:$0xf] %vm6196, %v7830
        %7903 = vst.msk [vmem:[#allocation5 + $0x124] sm:$0xf] %vm6196, %v7832
        %7904 = vst.msk [vmem:[#allocation5 + $0x130] sm:$0xf] %vm6196, %v7834
        %7905 = vst.msk [vmem:[#allocation5 + $0x13c] sm:$0xf] %vm6196, %v7836
        %7906 = vst.msk [vmem:[#allocation5 + $0x148] sm:$0xf] %vm6196, %v7838
        %7907 = vst.msk [vmem:[#allocation5 + $0x154] sm:$0xf] %vm6196, %v7840
        %7908 = vst.msk [vmem:[#allocation5 + $0x160] sm:$0xf] %vm6196, %v7842
        %7909 = vst.msk [vmem:[#allocation5 + $0x16c] sm:$0xf] %vm6196, %v7844
        %7910 = vst.msk [vmem:[#allocation5 + $0x178] sm:$0xf] %vm6196, %v7846
        %v7911 = vld [vmem:[%s7382 + $0x8] sm:$0xf]
        %v7912 = vld [vmem:[%s7382 + $0xc] sm:$0xf]
        %v7913 = vld [vmem:[%s7382 + $0x1c] sm:$0xf]
        %v7914 = vld [vmem:[%s7382 + $0x20] sm:$0xf]
        %v7915 = vld [vmem:[%s7382 + $0x30] sm:$0xf]
        %v7916 = vld [vmem:[%s7382 + $0x34] sm:$0xf]
        %v7917 = vld [vmem:[%s7382 + $0x44] sm:$0xf]
        %v7918 = vld [vmem:[%s7382 + $0x48] sm:$0xf]
        %v7919 = vld [vmem:[%s7382 + $0x58] sm:$0xf]
        %v7920 = vld [vmem:[%s7382 + $0x5c] sm:$0xf]
        %v7921 = vld [vmem:[%s7382 + $0x6c] sm:$0xf]
        %v7922 = vld [vmem:[%s7382 + $0x70] sm:$0xf]
        %v7923 = vld [vmem:[%s7382 + $0x80] sm:$0xf]
        %v7924 = vld [vmem:[%s7382 + $0x84] sm:$0xf]
        %v7925 = vld [vmem:[%s7382 + $0x94] sm:$0xf]
        %v7926 = vld [vmem:[%s7382 + $0x98] sm:$0xf]
        %v7927 = vld [vmem:[%s7382 + $0xa8] sm:$0xf]
        %v7928 = vld [vmem:[%s7382 + $0xac] sm:$0xf]
        %v7929 = vld [vmem:[%s7382 + $0xbc] sm:$0xf]
        %v7930 = vld [vmem:[%s7382 + $0xc0] sm:$0xf]
        %v7931 = vld [vmem:[%s7382 + $0xd0] sm:$0xf]
        %v7932 = vld [vmem:[%s7382 + $0xd4] sm:$0xf]
        %v7933 = vld [vmem:[%s7382 + $0xe4] sm:$0xf]
        %v7934 = vld [vmem:[%s7382 + $0xe8] sm:$0xf]
        %v7935 = vld [vmem:[%s7382 + $0xf8] sm:$0xf]
        %v7936 = vld [vmem:[%s7382 + $0xfc] sm:$0xf]
        %v7937 = vld [vmem:[%s7382 + $0x10c] sm:$0xf]
        %v7938 = vld [vmem:[%s7382 + $0x110] sm:$0xf]
        %v7939 = vld [vmem:[%s7382 + $0x120] sm:$0xf]
        %v7940 = vld [vmem:[%s7382 + $0x124] sm:$0xf]
        %v7941 = vld [vmem:[%s7382 + $0x134] sm:$0xf]
        %v7942 = vld [vmem:[%s7382 + $0x138] sm:$0xf]
        %7975 = vrot.lane.b32.xlu0 %v7911, 96
        %v7976 = vpop.permute.xlu0 %7975
        %7977 = vrot.lane.b32.xlu0 %v7912, 96
        %v7978 = vpop.permute.xlu0 %7977
        %7979 = vrot.lane.b32.xlu0 %v7913, 96
        %v7980 = vpop.permute.xlu0 %7979
        %7981 = vrot.lane.b32.xlu0 %v7914, 96
        %v7982 = vpop.permute.xlu0 %7981
        %7983 = vrot.lane.b32.xlu0 %v7915, 96
        %v7984 = vpop.permute.xlu0 %7983
        %7985 = vrot.lane.b32.xlu0 %v7916, 96
        %v7986 = vpop.permute.xlu0 %7985
        %7987 = vrot.lane.b32.xlu0 %v7917, 96
        %v7988 = vpop.permute.xlu0 %7987
        %7989 = vrot.lane.b32.xlu0 %v7918, 96
        %v7990 = vpop.permute.xlu0 %7989
        %7991 = vrot.lane.b32.xlu0 %v7919, 96
        %v7992 = vpop.permute.xlu0 %7991
        %7993 = vrot.lane.b32.xlu0 %v7920, 96
        %v7994 = vpop.permute.xlu0 %7993
        %7995 = vrot.lane.b32.xlu0 %v7921, 96
        %v7996 = vpop.permute.xlu0 %7995
        %7997 = vrot.lane.b32.xlu0 %v7922, 96
        %v7998 = vpop.permute.xlu0 %7997
        %7999 = vrot.lane.b32.xlu0 %v7923, 96
        %v8000 = vpop.permute.xlu0 %7999
        %8001 = vrot.lane.b32.xlu0 %v7924, 96
        %v8002 = vpop.permute.xlu0 %8001
        %8003 = vrot.lane.b32.xlu0 %v7925, 96
        %v8004 = vpop.permute.xlu0 %8003
        %8005 = vrot.lane.b32.xlu0 %v7926, 96
        %v8006 = vpop.permute.xlu0 %8005
        %8007 = vrot.lane.b32.xlu0 %v7927, 96
        %v8008 = vpop.permute.xlu0 %8007
        %8009 = vrot.lane.b32.xlu0 %v7928, 96
        %v8010 = vpop.permute.xlu0 %8009
        %8011 = vrot.lane.b32.xlu0 %v7929, 96
        %v8012 = vpop.permute.xlu0 %8011
        %8013 = vrot.lane.b32.xlu0 %v7930, 96
        %v8014 = vpop.permute.xlu0 %8013
        %8015 = vrot.lane.b32.xlu0 %v7931, 96
        %v8016 = vpop.permute.xlu0 %8015
        %8017 = vrot.lane.b32.xlu0 %v7932, 96
        %v8018 = vpop.permute.xlu0 %8017
        %8019 = vrot.lane.b32.xlu0 %v7933, 96
        %v8020 = vpop.permute.xlu0 %8019
        %8021 = vrot.lane.b32.xlu0 %v7934, 96
        %v8022 = vpop.permute.xlu0 %8021
        %8023 = vrot.lane.b32.xlu0 %v7935, 96
        %v8024 = vpop.permute.xlu0 %8023
        %8025 = vrot.lane.b32.xlu0 %v7936, 96
        %v8026 = vpop.permute.xlu0 %8025
        %8027 = vrot.lane.b32.xlu0 %v7937, 96
        %v8028 = vpop.permute.xlu0 %8027
        %8029 = vrot.lane.b32.xlu0 %v7938, 96
        %v8030 = vpop.permute.xlu0 %8029
        %8031 = vrot.lane.b32.xlu0 %v7939, 96
        %v8032 = vpop.permute.xlu0 %8031
        %8033 = vrot.lane.b32.xlu0 %v7940, 96
        %v8034 = vpop.permute.xlu0 %8033
        %8035 = vrot.lane.b32.xlu0 %v7941, 96
        %v8036 = vpop.permute.xlu0 %8035
        %8037 = vrot.lane.b32.xlu0 %v7942, 96
        %v8038 = vpop.permute.xlu0 %8037
        %8071 = vst.msk [vmem:[#allocation5 + $0x4] sm:$0xf] %vm6725, %v7976
        %8072 = vst.msk [vmem:[#allocation5 + $0x10] sm:$0xf] %vm6725, %v7978
        %8073 = vst.msk [vmem:[#allocation5 + $0x1c] sm:$0xf] %vm6725, %v7980
        %8074 = vst.msk [vmem:[#allocation5 + $0x28] sm:$0xf] %vm6725, %v7982
        %8075 = vst.msk [vmem:[#allocation5 + $0x34] sm:$0xf] %vm6725, %v7984
        %8076 = vst.msk [vmem:[#allocation5 + $0x40] sm:$0xf] %vm6725, %v7986
        %8077 = vst.msk [vmem:[#allocation5 + $0x4c] sm:$0xf] %vm6725, %v7988
        %8078 = vst.msk [vmem:[#allocation5 + $0x58] sm:$0xf] %vm6725, %v7990
        %8079 = vst.msk [vmem:[#allocation5 + $0x64] sm:$0xf] %vm6725, %v7992
        %8080 = vst.msk [vmem:[#allocation5 + $0x70] sm:$0xf] %vm6725, %v7994
        %8081 = vst.msk [vmem:[#allocation5 + $0x7c] sm:$0xf] %vm6725, %v7996
        %8082 = vst.msk [vmem:[#allocation5 + $0x88] sm:$0xf] %vm6725, %v7998
        %8083 = vst.msk [vmem:[#allocation5 + $0x94] sm:$0xf] %vm6725, %v8000
        %8084 = vst.msk [vmem:[#allocation5 + $0xa0] sm:$0xf] %vm6725, %v8002
        %8085 = vst.msk [vmem:[#allocation5 + $0xac] sm:$0xf] %vm6725, %v8004
        %8086 = vst.msk [vmem:[#allocation5 + $0xb8] sm:$0xf] %vm6725, %v8006
        %8087 = vst.msk [vmem:[#allocation5 + $0xc4] sm:$0xf] %vm6725, %v8008
        %8088 = vst.msk [vmem:[#allocation5 + $0xd0] sm:$0xf] %vm6725, %v8010
        %8089 = vst.msk [vmem:[#allocation5 + $0xdc] sm:$0xf] %vm6725, %v8012
        %8090 = vst.msk [vmem:[#allocation5 + $0xe8] sm:$0xf] %vm6725, %v8014
        %8091 = vst.msk [vmem:[#allocation5 + $0xf4] sm:$0xf] %vm6725, %v8016
        %8092 = vst.msk [vmem:[#allocation5 + $0x100] sm:$0xf] %vm6725, %v8018
        %8093 = vst.msk [vmem:[#allocation5 + $0x10c] sm:$0xf] %vm6725, %v8020
        %8094 = vst.msk [vmem:[#allocation5 + $0x118] sm:$0xf] %vm6725, %v8022
        %8095 = vst.msk [vmem:[#allocation5 + $0x124] sm:$0xf] %vm6725, %v8024
        %8096 = vst.msk [vmem:[#allocation5 + $0x130] sm:$0xf] %vm6725, %v8026
        %8097 = vst.msk [vmem:[#allocation5 + $0x13c] sm:$0xf] %vm6725, %v8028
        %8098 = vst.msk [vmem:[#allocation5 + $0x148] sm:$0xf] %vm6725, %v8030
        %8099 = vst.msk [vmem:[#allocation5 + $0x154] sm:$0xf] %vm6725, %v8032
        %8100 = vst.msk [vmem:[#allocation5 + $0x160] sm:$0xf] %vm6725, %v8034
        %8101 = vst.msk [vmem:[#allocation5 + $0x16c] sm:$0xf] %vm6725, %v8036
        %8102 = vst.msk [vmem:[#allocation5 + $0x178] sm:$0xf] %vm6725, %v8038
        %v8103 = vld [vmem:[%s7382 + $0x8] sm:$0xf]
        %v8104 = vld [vmem:[%s7382 + $0xc] sm:$0xf]
        %v8105 = vld [vmem:[%s7382 + $0x10] sm:$0x1]
        %v8106 = vld [vmem:[%s7382 + $0x1c] sm:$0xf]
        %v8107 = vld [vmem:[%s7382 + $0x20] sm:$0xf]
        %v8108 = vld [vmem:[%s7382 + $0x24] sm:$0x1]
        %v8109 = vld [vmem:[%s7382 + $0x30] sm:$0xf]
        %v8110 = vld [vmem:[%s7382 + $0x34] sm:$0xf]
        %v8111 = vld [vmem:[%s7382 + $0x38] sm:$0x1]
        %v8112 = vld [vmem:[%s7382 + $0x44] sm:$0xf]
        %v8113 = vld [vmem:[%s7382 + $0x48] sm:$0xf]
        %v8114 = vld [vmem:[%s7382 + $0x4c] sm:$0x1]
        %v8115 = vld [vmem:[%s7382 + $0x58] sm:$0xf]
        %v8116 = vld [vmem:[%s7382 + $0x5c] sm:$0xf]
        %v8117 = vld [vmem:[%s7382 + $0x60] sm:$0x1]
        %v8118 = vld [vmem:[%s7382 + $0x6c] sm:$0xf]
        %v8119 = vld [vmem:[%s7382 + $0x70] sm:$0xf]
        %v8120 = vld [vmem:[%s7382 + $0x74] sm:$0x1]
        %v8121 = vld [vmem:[%s7382 + $0x80] sm:$0xf]
        %v8122 = vld [vmem:[%s7382 + $0x84] sm:$0xf]
        %v8123 = vld [vmem:[%s7382 + $0x88] sm:$0x1]
        %v8124 = vld [vmem:[%s7382 + $0x94] sm:$0xf]
        %v8125 = vld [vmem:[%s7382 + $0x98] sm:$0xf]
        %v8126 = vld [vmem:[%s7382 + $0x9c] sm:$0x1]
        %v8127 = vld [vmem:[%s7382 + $0xa8] sm:$0xf]
        %v8128 = vld [vmem:[%s7382 + $0xac] sm:$0xf]
        %v8129 = vld [vmem:[%s7382 + $0xb0] sm:$0x1]
        %v8130 = vld [vmem:[%s7382 + $0xbc] sm:$0xf]
        %v8131 = vld [vmem:[%s7382 + $0xc0] sm:$0xf]
        %v8132 = vld [vmem:[%s7382 + $0xc4] sm:$0x1]
        %v8133 = vld [vmem:[%s7382 + $0xd0] sm:$0xf]
        %v8134 = vld [vmem:[%s7382 + $0xd4] sm:$0xf]
        %v8135 = vld [vmem:[%s7382 + $0xd8] sm:$0x1]
        %v8136 = vld [vmem:[%s7382 + $0xe4] sm:$0xf]
        %v8137 = vld [vmem:[%s7382 + $0xe8] sm:$0xf]
        %v8138 = vld [vmem:[%s7382 + $0xec] sm:$0x1]
        %v8139 = vld [vmem:[%s7382 + $0xf8] sm:$0xf]
        %v8140 = vld [vmem:[%s7382 + $0xfc] sm:$0xf]
        %v8141 = vld [vmem:[%s7382 + $0x100] sm:$0x1]
        %v8142 = vld [vmem:[%s7382 + $0x10c] sm:$0xf]
        %v8143 = vld [vmem:[%s7382 + $0x110] sm:$0xf]
        %v8144 = vld [vmem:[%s7382 + $0x114] sm:$0x1]
        %v8145 = vld [vmem:[%s7382 + $0x120] sm:$0xf]
        %v8146 = vld [vmem:[%s7382 + $0x124] sm:$0xf]
        %v8147 = vld [vmem:[%s7382 + $0x128] sm:$0x1]
        %v8148 = vld [vmem:[%s7382 + $0x134] sm:$0xf]
        %v8149 = vld [vmem:[%s7382 + $0x138] sm:$0xf]
        %v8150 = vld [vmem:[%s7382 + $0x13c] sm:$0x1]
        %v8152 = vshrl.u32 %v8103, 16
        %v8154 = vrot.slane %v8152, 4
        %v8155 = vshll.u32 %v8103, 16
        %v8157 = vrot.slane %v8155, 5
        %v8158 = vor.u32 %v8154, %v8157
        %v8159 = vrot.slane %v8158, 4
        %v8161 = vshll.u32 %v8104, 16
        %v8163 = vrot.slane %v8161, 5
        %v8164 = vsel %vm1274, %v8159, %v8163
        %v8165 = vshrl.u32 %v8104, 16
        %v8167 = vrot.slane %v8165, 4
        %v8168 = vor.u32 %v8167, %v8163
        %v8169 = vrot.slane %v8168, 4
        %v8171 = vshll.u32 %v8105, 16
        %v8173 = vrot.slane %v8171, 5
        %v8174 = vsel %vm1274, %v8169, %v8173
        %v8176 = vshrl.u32 %v8106, 16
        %v8178 = vrot.slane %v8176, 4
        %v8179 = vshll.u32 %v8106, 16
        %v8181 = vrot.slane %v8179, 5
        %v8182 = vor.u32 %v8178, %v8181
        %v8183 = vrot.slane %v8182, 4
        %v8185 = vshll.u32 %v8107, 16
        %v8187 = vrot.slane %v8185, 5
        %v8188 = vsel %vm1274, %v8183, %v8187
        %v8189 = vshrl.u32 %v8107, 16
        %v8191 = vrot.slane %v8189, 4
        %v8192 = vor.u32 %v8191, %v8187
        %v8193 = vrot.slane %v8192, 4
        %v8195 = vshll.u32 %v8108, 16
        %v8197 = vrot.slane %v8195, 5
        %v8198 = vsel %vm1274, %v8193, %v8197
        %v8200 = vshrl.u32 %v8109, 16
        %v8202 = vrot.slane %v8200, 4
        %v8203 = vshll.u32 %v8109, 16
        %v8205 = vrot.slane %v8203, 5
        %v8206 = vor.u32 %v8202, %v8205
        %v8207 = vrot.slane %v8206, 4
        %v8209 = vshll.u32 %v8110, 16
        %v8211 = vrot.slane %v8209, 5
        %v8212 = vsel %vm1274, %v8207, %v8211
        %v8213 = vshrl.u32 %v8110, 16
        %v8215 = vrot.slane %v8213, 4
        %v8216 = vor.u32 %v8215, %v8211
        %v8217 = vrot.slane %v8216, 4
        %v8219 = vshll.u32 %v8111, 16
        %v8221 = vrot.slane %v8219, 5
        %v8222 = vsel %vm1274, %v8217, %v8221
        %v8224 = vshrl.u32 %v8112, 16
        %v8226 = vrot.slane %v8224, 4
        %v8227 = vshll.u32 %v8112, 16
        %v8229 = vrot.slane %v8227, 5
        %v8230 = vor.u32 %v8226, %v8229
        %v8231 = vrot.slane %v8230, 4
        %v8233 = vshll.u32 %v8113, 16
        %v8235 = vrot.slane %v8233, 5
        %v8236 = vsel %vm1274, %v8231, %v8235
        %v8237 = vshrl.u32 %v8113, 16
        %v8239 = vrot.slane %v8237, 4
        %v8240 = vor.u32 %v8239, %v8235
        %v8241 = vrot.slane %v8240, 4
        %v8243 = vshll.u32 %v8114, 16
        %v8245 = vrot.slane %v8243, 5
        %v8246 = vsel %vm1274, %v8241, %v8245
        %v8248 = vshrl.u32 %v8115, 16
        %v8250 = vrot.slane %v8248, 4
        %v8251 = vshll.u32 %v8115, 16
        %v8253 = vrot.slane %v8251, 5
        %v8254 = vor.u32 %v8250, %v8253
        %v8255 = vrot.slane %v8254, 4
        %v8257 = vshll.u32 %v8116, 16
        %v8259 = vrot.slane %v8257, 5
        %v8260 = vsel %vm1274, %v8255, %v8259
        %v8261 = vshrl.u32 %v8116, 16
        %v8263 = vrot.slane %v8261, 4
        %v8264 = vor.u32 %v8263, %v8259
        %v8265 = vrot.slane %v8264, 4
        %v8267 = vshll.u32 %v8117, 16
        %v8269 = vrot.slane %v8267, 5
        %v8270 = vsel %vm1274, %v8265, %v8269
        %v8272 = vshrl.u32 %v8118, 16
        %v8274 = vrot.slane %v8272, 4
        %v8275 = vshll.u32 %v8118, 16
        %v8277 = vrot.slane %v8275, 5
        %v8278 = vor.u32 %v8274, %v8277
        %v8279 = vrot.slane %v8278, 4
        %v8281 = vshll.u32 %v8119, 16
        %v8283 = vrot.slane %v8281, 5
        %v8284 = vsel %vm1274, %v8279, %v8283
        %v8285 = vshrl.u32 %v8119, 16
        %v8287 = vrot.slane %v8285, 4
        %v8288 = vor.u32 %v8287, %v8283
        %v8289 = vrot.slane %v8288, 4
        %v8291 = vshll.u32 %v8120, 16
        %v8293 = vrot.slane %v8291, 5
        %v8294 = vsel %vm1274, %v8289, %v8293
        %v8296 = vshrl.u32 %v8121, 16
        %v8298 = vrot.slane %v8296, 4
        %v8299 = vshll.u32 %v8121, 16
        %v8301 = vrot.slane %v8299, 5
        %v8302 = vor.u32 %v8298, %v8301
        %v8303 = vrot.slane %v8302, 4
        %v8305 = vshll.u32 %v8122, 16
        %v8307 = vrot.slane %v8305, 5
        %v8308 = vsel %vm1274, %v8303, %v8307
        %v8309 = vshrl.u32 %v8122, 16
        %v8311 = vrot.slane %v8309, 4
        %v8312 = vor.u32 %v8311, %v8307
        %v8313 = vrot.slane %v8312, 4
        %v8315 = vshll.u32 %v8123, 16
        %v8317 = vrot.slane %v8315, 5
        %v8318 = vsel %vm1274, %v8313, %v8317
        %v8320 = vshrl.u32 %v8124, 16
        %v8322 = vrot.slane %v8320, 4
        %v8323 = vshll.u32 %v8124, 16
        %v8325 = vrot.slane %v8323, 5
        %v8326 = vor.u32 %v8322, %v8325
        %v8327 = vrot.slane %v8326, 4
        %v8329 = vshll.u32 %v8125, 16
        %v8331 = vrot.slane %v8329, 5
        %v8332 = vsel %vm1274, %v8327, %v8331
        %v8333 = vshrl.u32 %v8125, 16
        %v8335 = vrot.slane %v8333, 4
        %v8336 = vor.u32 %v8335, %v8331
        %v8337 = vrot.slane %v8336, 4
        %v8339 = vshll.u32 %v8126, 16
        %v8341 = vrot.slane %v8339, 5
        %v8342 = vsel %vm1274, %v8337, %v8341
        %v8344 = vshrl.u32 %v8127, 16
        %v8346 = vrot.slane %v8344, 4
        %v8347 = vshll.u32 %v8127, 16
        %v8349 = vrot.slane %v8347, 5
        %v8350 = vor.u32 %v8346, %v8349
        %v8351 = vrot.slane %v8350, 4
        %v8353 = vshll.u32 %v8128, 16
        %v8355 = vrot.slane %v8353, 5
        %v8356 = vsel %vm1274, %v8351, %v8355
        %v8357 = vshrl.u32 %v8128, 16
        %v8359 = vrot.slane %v8357, 4
        %v8360 = vor.u32 %v8359, %v8355
        %v8361 = vrot.slane %v8360, 4
        %v8363 = vshll.u32 %v8129, 16
        %v8365 = vrot.slane %v8363, 5
        %v8366 = vsel %vm1274, %v8361, %v8365
        %v8368 = vshrl.u32 %v8130, 16
        %v8370 = vrot.slane %v8368, 4
        %v8371 = vshll.u32 %v8130, 16
        %v8373 = vrot.slane %v8371, 5
        %v8374 = vor.u32 %v8370, %v8373
        %v8375 = vrot.slane %v8374, 4
        %v8377 = vshll.u32 %v8131, 16
        %v8379 = vrot.slane %v8377, 5
        %v8380 = vsel %vm1274, %v8375, %v8379
        %v8381 = vshrl.u32 %v8131, 16
        %v8383 = vrot.slane %v8381, 4
        %v8384 = vor.u32 %v8383, %v8379
        %v8385 = vrot.slane %v8384, 4
        %v8387 = vshll.u32 %v8132, 16
        %v8389 = vrot.slane %v8387, 5
        %v8390 = vsel %vm1274, %v8385, %v8389
        %v8392 = vshrl.u32 %v8133, 16
        %v8394 = vrot.slane %v8392, 4
        %v8395 = vshll.u32 %v8133, 16
        %v8397 = vrot.slane %v8395, 5
        %v8398 = vor.u32 %v8394, %v8397
        %v8399 = vrot.slane %v8398, 4
        %v8401 = vshll.u32 %v8134, 16
        %v8403 = vrot.slane %v8401, 5
        %v8404 = vsel %vm1274, %v8399, %v8403
        %v8405 = vshrl.u32 %v8134, 16
        %v8407 = vrot.slane %v8405, 4
        %v8408 = vor.u32 %v8407, %v8403
        %v8409 = vrot.slane %v8408, 4
        %v8411 = vshll.u32 %v8135, 16
        %v8413 = vrot.slane %v8411, 5
        %v8414 = vsel %vm1274, %v8409, %v8413
        %v8416 = vshrl.u32 %v8136, 16
        %v8418 = vrot.slane %v8416, 4
        %v8419 = vshll.u32 %v8136, 16
        %v8421 = vrot.slane %v8419, 5
        %v8422 = vor.u32 %v8418, %v8421
        %v8423 = vrot.slane %v8422, 4
        %v8425 = vshll.u32 %v8137, 16
        %v8427 = vrot.slane %v8425, 5
        %v8428 = vsel %vm1274, %v8423, %v8427
        %v8429 = vshrl.u32 %v8137, 16
        %v8431 = vrot.slane %v8429, 4
        %v8432 = vor.u32 %v8431, %v8427
        %v8433 = vrot.slane %v8432, 4
        %v8435 = vshll.u32 %v8138, 16
        %v8437 = vrot.slane %v8435, 5
        %v8438 = vsel %vm1274, %v8433, %v8437
        %v8440 = vshrl.u32 %v8139, 16
        %v8442 = vrot.slane %v8440, 4
        %v8443 = vshll.u32 %v8139, 16
        %v8445 = vrot.slane %v8443, 5
        %v8446 = vor.u32 %v8442, %v8445
        %v8447 = vrot.slane %v8446, 4
        %v8449 = vshll.u32 %v8140, 16
        %v8451 = vrot.slane %v8449, 5
        %v8452 = vsel %vm1274, %v8447, %v8451
        %v8453 = vshrl.u32 %v8140, 16
        %v8455 = vrot.slane %v8453, 4
        %v8456 = vor.u32 %v8455, %v8451
        %v8457 = vrot.slane %v8456, 4
        %v8459 = vshll.u32 %v8141, 16
        %v8461 = vrot.slane %v8459, 5
        %v8462 = vsel %vm1274, %v8457, %v8461
        %v8464 = vshrl.u32 %v8142, 16
        %v8466 = vrot.slane %v8464, 4
        %v8467 = vshll.u32 %v8142, 16
        %v8469 = vrot.slane %v8467, 5
        %v8470 = vor.u32 %v8466, %v8469
        %v8471 = vrot.slane %v8470, 4
        %v8473 = vshll.u32 %v8143, 16
        %v8475 = vrot.slane %v8473, 5
        %v8476 = vsel %vm1274, %v8471, %v8475
        %v8477 = vshrl.u32 %v8143, 16
        %v8479 = vrot.slane %v8477, 4
        %v8480 = vor.u32 %v8479, %v8475
        %v8481 = vrot.slane %v8480, 4
        %v8483 = vshll.u32 %v8144, 16
        %v8485 = vrot.slane %v8483, 5
        %v8486 = vsel %vm1274, %v8481, %v8485
        %v8488 = vshrl.u32 %v8145, 16
        %v8490 = vrot.slane %v8488, 4
        %v8491 = vshll.u32 %v8145, 16
        %v8493 = vrot.slane %v8491, 5
        %v8494 = vor.u32 %v8490, %v8493
        %v8495 = vrot.slane %v8494, 4
        %v8497 = vshll.u32 %v8146, 16
        %v8499 = vrot.slane %v8497, 5
        %v8500 = vsel %vm1274, %v8495, %v8499
        %v8501 = vshrl.u32 %v8146, 16
        %v8503 = vrot.slane %v8501, 4
        %v8504 = vor.u32 %v8503, %v8499
        %v8505 = vrot.slane %v8504, 4
        %v8507 = vshll.u32 %v8147, 16
        %v8509 = vrot.slane %v8507, 5
        %v8510 = vsel %vm1274, %v8505, %v8509
        %v8512 = vshrl.u32 %v8148, 16
        %v8514 = vrot.slane %v8512, 4
        %v8515 = vshll.u32 %v8148, 16
        %v8517 = vrot.slane %v8515, 5
        %v8518 = vor.u32 %v8514, %v8517
        %v8519 = vrot.slane %v8518, 4
        %v8521 = vshll.u32 %v8149, 16
        %v8523 = vrot.slane %v8521, 5
        %v8524 = vsel %vm1274, %v8519, %v8523
        %v8525 = vshrl.u32 %v8149, 16
        %v8527 = vrot.slane %v8525, 4
        %v8528 = vor.u32 %v8527, %v8523
        %v8529 = vrot.slane %v8528, 4
        %v8531 = vshll.u32 %v8150, 16
        %v8533 = vrot.slane %v8531, 5
        %v8534 = vsel %vm1274, %v8529, %v8533
        %8567 = vst.msk [vmem:[#allocation5 + $0x8] sm:$0xf] %vm387, %v8164
        %8568 = vst.msk [vmem:[#allocation5 + $0x14] sm:$0xf] %vm387, %v8174
        %8569 = vst.msk [vmem:[#allocation5 + $0x20] sm:$0xf] %vm387, %v8188
        %8570 = vst.msk [vmem:[#allocation5 + $0x2c] sm:$0xf] %vm387, %v8198
        %8571 = vst.msk [vmem:[#allocation5 + $0x38] sm:$0xf] %vm387, %v8212
        %8572 = vst.msk [vmem:[#allocation5 + $0x44] sm:$0xf] %vm387, %v8222
        %8573 = vst.msk [vmem:[#allocation5 + $0x50] sm:$0xf] %vm387, %v8236
        %8574 = vst.msk [vmem:[#allocation5 + $0x5c] sm:$0xf] %vm387, %v8246
        %8575 = vst.msk [vmem:[#allocation5 + $0x68] sm:$0xf] %vm387, %v8260
        %8576 = vst.msk [vmem:[#allocation5 + $0x74] sm:$0xf] %vm387, %v8270
        %8577 = vst.msk [vmem:[#allocation5 + $0x80] sm:$0xf] %vm387, %v8284
        %8578 = vst.msk [vmem:[#allocation5 + $0x8c] sm:$0xf] %vm387, %v8294
        %8579 = vst.msk [vmem:[#allocation5 + $0x98] sm:$0xf] %vm387, %v8308
        %8580 = vst.msk [vmem:[#allocation5 + $0xa4] sm:$0xf] %vm387, %v8318
        %8581 = vst.msk [vmem:[#allocation5 + $0xb0] sm:$0xf] %vm387, %v8332
        %8582 = vst.msk [vmem:[#allocation5 + $0xbc] sm:$0xf] %vm387, %v8342
        %8583 = vst.msk [vmem:[#allocation5 + $0xc8] sm:$0xf] %vm387, %v8356
        %8584 = vst.msk [vmem:[#allocation5 + $0xd4] sm:$0xf] %vm387, %v8366
        %8585 = vst.msk [vmem:[#allocation5 + $0xe0] sm:$0xf] %vm387, %v8380
        %8586 = vst.msk [vmem:[#allocation5 + $0xec] sm:$0xf] %vm387, %v8390
        %8587 = vst.msk [vmem:[#allocation5 + $0xf8] sm:$0xf] %vm387, %v8404
        %8588 = vst.msk [vmem:[#allocation5 + $0x104] sm:$0xf] %vm387, %v8414
        %8589 = vst.msk [vmem:[#allocation5 + $0x110] sm:$0xf] %vm387, %v8428
        %8590 = vst.msk [vmem:[#allocation5 + $0x11c] sm:$0xf] %vm387, %v8438
        %8591 = vst.msk [vmem:[#allocation5 + $0x128] sm:$0xf] %vm387, %v8452
        %8592 = vst.msk [vmem:[#allocation5 + $0x134] sm:$0xf] %vm387, %v8462
        %8593 = vst.msk [vmem:[#allocation5 + $0x140] sm:$0xf] %vm387, %v8476
        %8594 = vst.msk [vmem:[#allocation5 + $0x14c] sm:$0xf] %vm387, %v8486
        %8595 = vst.msk [vmem:[#allocation5 + $0x158] sm:$0xf] %vm387, %v8500
        %8596 = vst.msk [vmem:[#allocation5 + $0x164] sm:$0xf] %vm387, %v8510
        %8597 = vst.msk [vmem:[#allocation5 + $0x170] sm:$0xf] %vm387, %v8524
        %8598 = vst.msk [vmem:[#allocation5 + $0x17c] sm:$0xf] %vm387, %v8534
        %v8599 = vld [vmem:[#allocation5] sm:$0xff]
        %v8600 = vld [vmem:[#allocation5 + $0x8] sm:$0xf]
        %v8601 = vld [vmem:[#allocation5 + $0xc] sm:$0xff]
        %v8602 = vld [vmem:[#allocation5 + $0x14] sm:$0xf]
        %v8603 = vld [vmem:[#allocation5 + $0x18] sm:$0xff]
        %v8604 = vld [vmem:[#allocation5 + $0x20] sm:$0xf]
        %v8605 = vld [vmem:[#allocation5 + $0x24] sm:$0xff]
        %v8606 = vld [vmem:[#allocation5 + $0x2c] sm:$0xf]
        %v8607 = vld [vmem:[#allocation5 + $0x30] sm:$0xff]
        %v8608 = vld [vmem:[#allocation5 + $0x38] sm:$0xf]
        %v8609 = vld [vmem:[#allocation5 + $0x3c] sm:$0xff]
        %v8610 = vld [vmem:[#allocation5 + $0x44] sm:$0xf]
        %v8611 = vld [vmem:[#allocation5 + $0x48] sm:$0xff]
        %v8612 = vld [vmem:[#allocation5 + $0x50] sm:$0xf]
        %v8613 = vld [vmem:[#allocation5 + $0x54] sm:$0xff]
        %v8614 = vld [vmem:[#allocation5 + $0x5c] sm:$0xf]
        %v8615 = vld [vmem:[#allocation5 + $0x60] sm:$0xff]
        %v8616 = vld [vmem:[#allocation5 + $0x68] sm:$0xf]
        %v8617 = vld [vmem:[#allocation5 + $0x6c] sm:$0xff]
        %v8618 = vld [vmem:[#allocation5 + $0x74] sm:$0xf]
        %v8619 = vld [vmem:[#allocation5 + $0x78] sm:$0xff]
        %v8620 = vld [vmem:[#allocation5 + $0x80] sm:$0xf]
        %v8621 = vld [vmem:[#allocation5 + $0x84] sm:$0xff]
        %v8622 = vld [vmem:[#allocation5 + $0x8c] sm:$0xf]
        %v8623 = vld [vmem:[#allocation5 + $0x90] sm:$0xff]
        %v8624 = vld [vmem:[#allocation5 + $0x98] sm:$0xf]
        %v8625 = vld [vmem:[#allocation5 + $0x9c] sm:$0xff]
        %v8626 = vld [vmem:[#allocation5 + $0xa4] sm:$0xf]
        %v8627 = vld [vmem:[#allocation5 + $0xa8] sm:$0xff]
        %v8628 = vld [vmem:[#allocation5 + $0xb0] sm:$0xf]
        %v8629 = vld [vmem:[#allocation5 + $0xb4] sm:$0xff]
        %v8630 = vld [vmem:[#allocation5 + $0xbc] sm:$0xf]
        %v8631 = vld [vmem:[#allocation5 + $0xc0] sm:$0xff]
        %v8632 = vld [vmem:[#allocation5 + $0xc8] sm:$0xf]
        %v8633 = vld [vmem:[#allocation5 + $0xcc] sm:$0xff]
        %v8634 = vld [vmem:[#allocation5 + $0xd4] sm:$0xf]
        %v8635 = vld [vmem:[#allocation5 + $0xd8] sm:$0xff]
        %v8636 = vld [vmem:[#allocation5 + $0xe0] sm:$0xf]
        %v8637 = vld [vmem:[#allocation5 + $0xe4] sm:$0xff]
        %v8638 = vld [vmem:[#allocation5 + $0xec] sm:$0xf]
        %v8639 = vld [vmem:[#allocation5 + $0xf0] sm:$0xff]
        %v8640 = vld [vmem:[#allocation5 + $0xf8] sm:$0xf]
        %v8641 = vld [vmem:[#allocation5 + $0xfc] sm:$0xff]
        %v8642 = vld [vmem:[#allocation5 + $0x104] sm:$0xf]
        %v8643 = vld [vmem:[#allocation5 + $0x108] sm:$0xff]
        %v8644 = vld [vmem:[#allocation5 + $0x110] sm:$0xf]
        %v8645 = vld [vmem:[#allocation5 + $0x114] sm:$0xff]
        %v8646 = vld [vmem:[#allocation5 + $0x11c] sm:$0xf]
        %v8647 = vld [vmem:[#allocation5 + $0x120] sm:$0xff]
        %v8648 = vld [vmem:[#allocation5 + $0x128] sm:$0xf]
        %v8649 = vld [vmem:[#allocation5 + $0x12c] sm:$0xff]
        %v8650 = vld [vmem:[#allocation5 + $0x134] sm:$0xf]
        %v8651 = vld [vmem:[#allocation5 + $0x138] sm:$0xff]
        %v8652 = vld [vmem:[#allocation5 + $0x140] sm:$0xf]
        %v8653 = vld [vmem:[#allocation5 + $0x144] sm:$0xff]
        %v8654 = vld [vmem:[#allocation5 + $0x14c] sm:$0xf]
        %v8655 = vld [vmem:[#allocation5 + $0x150] sm:$0xff]
        %v8656 = vld [vmem:[#allocation5 + $0x158] sm:$0xf]
        %v8657 = vld [vmem:[#allocation5 + $0x15c] sm:$0xff]
        %v8658 = vld [vmem:[#allocation5 + $0x164] sm:$0xf]
        %v8659 = vld [vmem:[#allocation5 + $0x168] sm:$0xff]
        %v8660 = vld [vmem:[#allocation5 + $0x170] sm:$0xf]
        %v8661 = vld [vmem:[#allocation5 + $0x174] sm:$0xff]
        %v8662 = vld [vmem:[#allocation5 + $0x17c] sm:$0xf]
        %v8663 = vld [vmem:[#allocation8] sm:$0xf]
        %v8664 = vld [vmem:[#allocation8 + $0x4] sm:$0xf]
        %v8665 = vld [vmem:[#allocation8 + $0x8] sm:$0xf]
        %v8666 = vld [vmem:[#allocation8 + $0xc] sm:$0xf]
        %v8667 = vld [vmem:[#allocation8 + $0x10] sm:$0xf]
        %v8668 = vld [vmem:[#allocation8 + $0x14] sm:$0xf]
        %v8669 = vld [vmem:[#allocation8 + $0x18] sm:$0xf]
        %v8670 = vld [vmem:[#allocation8 + $0x1c] sm:$0xf]
        %v8671 = vld [vmem:[#allocation8 + $0x20] sm:$0xf]
        %v8672 = vld [vmem:[#allocation8 + $0x24] sm:$0xf]
        %v8673 = vld [vmem:[#allocation8 + $0x28] sm:$0xf]
        %v8674 = vld [vmem:[#allocation8 + $0x2c] sm:$0xf]
        %v8675 = vld [vmem:[#allocation8 + $0x30] sm:$0xf]
        %v8676 = vld [vmem:[#allocation8 + $0x34] sm:$0xf]
        %v8677 = vld [vmem:[#allocation8 + $0x38] sm:$0xf]
        %v8678 = vld [vmem:[#allocation8 + $0x3c] sm:$0xf]
        %v8679 = vld [vmem:[#allocation8 + $0x40] sm:$0xf]
        %v8680 = vld [vmem:[#allocation8 + $0x44] sm:$0xf]
        %v8681 = vld [vmem:[#allocation8 + $0x48] sm:$0xf]
        %v8682 = vld [vmem:[#allocation8 + $0x4c] sm:$0xf]
        %v8683 = vld [vmem:[#allocation8 + $0x50] sm:$0xf]
        %v8684 = vld [vmem:[#allocation8 + $0x54] sm:$0xf]
        %v8685 = vld [vmem:[#allocation8 + $0x58] sm:$0xf]
        %v8686 = vld [vmem:[#allocation8 + $0x5c] sm:$0xf]
        %v8687 = vld [vmem:[#allocation8 + $0x60] sm:$0xf]
        %v8688 = vld [vmem:[#allocation8 + $0x64] sm:$0xf]
        %v8689 = vld [vmem:[#allocation8 + $0x68] sm:$0xf]
        %v8690 = vld [vmem:[#allocation8 + $0x6c] sm:$0xf]
        %v8691 = vld [vmem:[#allocation8 + $0x70] sm:$0xf]
        %v8692 = vld [vmem:[#allocation8 + $0x74] sm:$0xf]
        %v8693 = vld [vmem:[#allocation8 + $0x78] sm:$0xf]
        %v8694 = vld [vmem:[#allocation8 + $0x7c] sm:$0xf]
        %v8695 = vld [vmem:[#allocation8 + $0x80] sm:$0xf]
        %v8696 = vld [vmem:[#allocation8 + $0x84] sm:$0xf]
        %v8697 = vld [vmem:[#allocation8 + $0x88] sm:$0xf]
        %v8698 = vld [vmem:[#allocation8 + $0x8c] sm:$0xf]
        %v8763 = vunpack.c.l.b16 %v8599
        %v8764 = vunpack.c.h.b16 %v8599
        %v8765 = vunpack.c.l.b16 %v8600
        %v8766 = vunpack.c.l.b16 %v8601
        %v8767 = vunpack.c.h.b16 %v8601
        %v8768 = vunpack.c.l.b16 %v8602
        %v8769 = vunpack.c.l.b16 %v8603
        %v8770 = vunpack.c.h.b16 %v8603
        %v8771 = vunpack.c.l.b16 %v8604
        %v8772 = vunpack.c.l.b16 %v8605
        %v8773 = vunpack.c.h.b16 %v8605
        %v8774 = vunpack.c.l.b16 %v8606
        %v8775 = vunpack.c.l.b16 %v8607
        %v8776 = vunpack.c.h.b16 %v8607
        %v8777 = vunpack.c.l.b16 %v8608
        %v8778 = vunpack.c.l.b16 %v8609
        %v8779 = vunpack.c.h.b16 %v8609
        %v8780 = vunpack.c.l.b16 %v8610
        %v8781 = vunpack.c.l.b16 %v8611
        %v8782 = vunpack.c.h.b16 %v8611
        %v8783 = vunpack.c.l.b16 %v8612
        %v8784 = vunpack.c.l.b16 %v8613
        %v8785 = vunpack.c.h.b16 %v8613
        %v8786 = vunpack.c.l.b16 %v8614
        %v8787 = vunpack.c.l.b16 %v8615
        %v8788 = vunpack.c.h.b16 %v8615
        %v8789 = vunpack.c.l.b16 %v8616
        %v8790 = vunpack.c.l.b16 %v8617
        %v8791 = vunpack.c.h.b16 %v8617
        %v8792 = vunpack.c.l.b16 %v8618
        %v8793 = vunpack.c.l.b16 %v8619
        %v8794 = vunpack.c.h.b16 %v8619
        %v8795 = vunpack.c.l.b16 %v8620
        %v8796 = vunpack.c.l.b16 %v8621
        %v8797 = vunpack.c.h.b16 %v8621
        %v8798 = vunpack.c.l.b16 %v8622
        %v8799 = vunpack.c.l.b16 %v8623
        %v8800 = vunpack.c.h.b16 %v8623
        %v8801 = vunpack.c.l.b16 %v8624
        %v8802 = vunpack.c.l.b16 %v8625
        %v8803 = vunpack.c.h.b16 %v8625
        %v8804 = vunpack.c.l.b16 %v8626
        %v8805 = vunpack.c.l.b16 %v8627
        %v8806 = vunpack.c.h.b16 %v8627
        %v8807 = vunpack.c.l.b16 %v8628
        %v8808 = vunpack.c.l.b16 %v8629
        %v8809 = vunpack.c.h.b16 %v8629
        %v8810 = vunpack.c.l.b16 %v8630
        %v8811 = vunpack.c.l.b16 %v8631
        %v8812 = vunpack.c.h.b16 %v8631
        %v8813 = vunpack.c.l.b16 %v8632
        %v8814 = vunpack.c.l.b16 %v8633
        %v8815 = vunpack.c.h.b16 %v8633
        %v8816 = vunpack.c.l.b16 %v8634
        %v8817 = vunpack.c.l.b16 %v8635
        %v8818 = vunpack.c.h.b16 %v8635
        %v8819 = vunpack.c.l.b16 %v8636
        %v8820 = vunpack.c.l.b16 %v8637
        %v8821 = vunpack.c.h.b16 %v8637
        %v8822 = vunpack.c.l.b16 %v8638
        %v8823 = vunpack.c.l.b16 %v8639
        %v8824 = vunpack.c.h.b16 %v8639
        %v8825 = vunpack.c.l.b16 %v8640
        %v8826 = vunpack.c.l.b16 %v8641
        %v8827 = vunpack.c.h.b16 %v8641
        %v8828 = vunpack.c.l.b16 %v8642
        %v8829 = vunpack.c.l.b16 %v8643
        %v8830 = vunpack.c.h.b16 %v8643
        %v8831 = vunpack.c.l.b16 %v8644
        %v8832 = vunpack.c.l.b16 %v8645
        %v8833 = vunpack.c.h.b16 %v8645
        %v8834 = vunpack.c.l.b16 %v8646
        %v8835 = vunpack.c.l.b16 %v8647
        %v8836 = vunpack.c.h.b16 %v8647
        %v8837 = vunpack.c.l.b16 %v8648
        %v8838 = vunpack.c.l.b16 %v8649
        %v8839 = vunpack.c.h.b16 %v8649
        %v8840 = vunpack.c.l.b16 %v8650
        %v8841 = vunpack.c.l.b16 %v8651
        %v8842 = vunpack.c.h.b16 %v8651
        %v8843 = vunpack.c.l.b16 %v8652
        %v8844 = vunpack.c.l.b16 %v8653
        %v8845 = vunpack.c.h.b16 %v8653
        %v8846 = vunpack.c.l.b16 %v8654
        %v8847 = vunpack.c.l.b16 %v8655
        %v8848 = vunpack.c.h.b16 %v8655
        %v8849 = vunpack.c.l.b16 %v8656
        %v8850 = vunpack.c.l.b16 %v8657
        %v8851 = vunpack.c.h.b16 %v8657
        %v8852 = vunpack.c.l.b16 %v8658
        %v8853 = vunpack.c.l.b16 %v8659
        %v8854 = vunpack.c.h.b16 %v8659
        %v8855 = vunpack.c.l.b16 %v8660
        %v8856 = vunpack.c.l.b16 %v8661
        %v8857 = vunpack.c.h.b16 %v8661
        %v8858 = vunpack.c.l.b16 %v8662
        %v8859 = vpack.c.b16 %v8766, %v8763
        %v8860 = vpack.c.b16 %v8767, %v8764
        %v8861 = vpack.c.b16 %v8768, %v8765
        %v8862 = vpack.c.b16 %v8772, %v8769
        %v8863 = vpack.c.b16 %v8773, %v8770
        %v8864 = vpack.c.b16 %v8774, %v8771
        %v8865 = vpack.c.b16 %v8778, %v8775
        %v8866 = vpack.c.b16 %v8779, %v8776
        %v8867 = vpack.c.b16 %v8780, %v8777
        %v8868 = vpack.c.b16 %v8784, %v8781
        %v8869 = vpack.c.b16 %v8785, %v8782
        %v8870 = vpack.c.b16 %v8786, %v8783
        %v8871 = vpack.c.b16 %v8790, %v8787
        %v8872 = vpack.c.b16 %v8791, %v8788
        %v8873 = vpack.c.b16 %v8792, %v8789
        %v8874 = vpack.c.b16 %v8796, %v8793
        %v8875 = vpack.c.b16 %v8797, %v8794
        %v8876 = vpack.c.b16 %v8798, %v8795
        %v8877 = vpack.c.b16 %v8802, %v8799
        %v8878 = vpack.c.b16 %v8803, %v8800
        %v8879 = vpack.c.b16 %v8804, %v8801
        %v8880 = vpack.c.b16 %v8808, %v8805
        %v8881 = vpack.c.b16 %v8809, %v8806
        %v8882 = vpack.c.b16 %v8810, %v8807
        %v8883 = vpack.c.b16 %v8814, %v8811
        %v8884 = vpack.c.b16 %v8815, %v8812
        %v8885 = vpack.c.b16 %v8816, %v8813
        %v8886 = vpack.c.b16 %v8820, %v8817
        %v8887 = vpack.c.b16 %v8821, %v8818
        %v8888 = vpack.c.b16 %v8822, %v8819
        %v8889 = vpack.c.b16 %v8826, %v8823
        %v8890 = vpack.c.b16 %v8827, %v8824
        %v8891 = vpack.c.b16 %v8828, %v8825
        %v8892 = vpack.c.b16 %v8832, %v8829
        %v8893 = vpack.c.b16 %v8833, %v8830
        %v8894 = vpack.c.b16 %v8834, %v8831
        %v8895 = vpack.c.b16 %v8838, %v8835
        %v8896 = vpack.c.b16 %v8839, %v8836
        %v8897 = vpack.c.b16 %v8840, %v8837
        %v8898 = vpack.c.b16 %v8844, %v8841
        %v8899 = vpack.c.b16 %v8845, %v8842
        %v8900 = vpack.c.b16 %v8846, %v8843
        %v8901 = vpack.c.b16 %v8850, %v8847
        %v8902 = vpack.c.b16 %v8851, %v8848
        %v8903 = vpack.c.b16 %v8852, %v8849
        %v8904 = vpack.c.b16 %v8856, %v8853
        %v8905 = vpack.c.b16 %v8857, %v8854
        %v8906 = vpack.c.b16 %v8858, %v8855
        %v8975 = vunpack.c.l.b16 %v8663
        %v8976 = vunpack.c.l.b16 %v8664
        %v8977 = vunpack.c.l.b16 %v8665
        %v8978 = vunpack.c.l.b16 %v8666
        %v8979 = vunpack.c.l.b16 %v8667
        %v8980 = vunpack.c.l.b16 %v8668
        %v8981 = vunpack.c.l.b16 %v8669
        %v8982 = vunpack.c.l.b16 %v8670
        %v8983 = vunpack.c.l.b16 %v8671
        %v8984 = vunpack.c.l.b16 %v8672
        %v8985 = vunpack.c.l.b16 %v8673
        %v8986 = vunpack.c.l.b16 %v8674
        %v8987 = vunpack.c.l.b16 %v8675
        %v8988 = vunpack.c.l.b16 %v8676
        %v8989 = vunpack.c.l.b16 %v8677
        %v8990 = vunpack.c.l.b16 %v8678
        %v8991 = vunpack.c.l.b16 %v8679
        %v8992 = vunpack.c.l.b16 %v8680
        %v8993 = vunpack.c.l.b16 %v8681
        %v8994 = vunpack.c.l.b16 %v8682
        %v8995 = vunpack.c.l.b16 %v8683
        %v8996 = vunpack.c.l.b16 %v8684
        %v8997 = vunpack.c.l.b16 %v8685
        %v8998 = vunpack.c.l.b16 %v8686
        %v8999 = vunpack.c.l.b16 %v8687
        %v9000 = vunpack.c.l.b16 %v8688
        %v9001 = vunpack.c.l.b16 %v8689
        %v9002 = vunpack.c.l.b16 %v8690
        %v9003 = vunpack.c.l.b16 %v8691
        %v9004 = vunpack.c.l.b16 %v8692
        %v9005 = vunpack.c.l.b16 %v8693
        %v9006 = vunpack.c.l.b16 %v8694
        %v9007 = vunpack.c.l.b16 %v8695
        %v9008 = vunpack.c.l.b16 %v8696
        %v9009 = vunpack.c.l.b16 %v8697
        %v9010 = vunpack.c.l.b16 %v8698
        %v9011 = vpack.c.b16 %v8976, %v8975
        %v9012 = vpack.c.b16 %v8978, %v8977
        %v9013 = vpack.c.b16 %v8980, %v8979
        %v9014 = vpack.c.b16 %v8982, %v8981
        %v9015 = vpack.c.b16 %v8984, %v8983
        %v9016 = vpack.c.b16 %v8986, %v8985
        %v9017 = vpack.c.b16 %v8988, %v8987
        %v9018 = vpack.c.b16 %v8990, %v8989
        %v9019 = vpack.c.b16 %v8992, %v8991
        %v9020 = vpack.c.b16 %v8994, %v8993
        %v9021 = vpack.c.b16 %v8996, %v8995
        %v9022 = vpack.c.b16 %v8998, %v8997
        %v9023 = vpack.c.b16 %v9000, %v8999
        %v9024 = vpack.c.b16 %v9002, %v9001
        %v9025 = vpack.c.b16 %v9004, %v9003
        %v9026 = vpack.c.b16 %v9006, %v9005
        %v9027 = vpack.c.b16 %v9008, %v9007
        %v9028 = vpack.c.b16 %v9010, %v9009
        %vm9047 = vcmask 261120
        %v9049 = vsel %vm9047, %v8861, 0
        %v9052 = vsel %vm9047, %v8864, 0
        %v9055 = vsel %vm9047, %v8867, 0
        %v9058 = vsel %vm9047, %v8870, 0
        %v9061 = vsel %vm9047, %v8873, 0
        %v9064 = vsel %vm9047, %v8876, 0
        %v9067 = vsel %vm9047, %v8879, 0
        %v9070 = vsel %vm9047, %v8882, 0
        %v9073 = vsel %vm9047, %v8885, 0
        %v9076 = vsel %vm9047, %v8888, 0
        %v9079 = vsel %vm9047, %v8891, 0
        %v9082 = vsel %vm9047, %v8894, 0
        %v9085 = vsel %vm9047, %v8897, 0
        %v9088 = vsel %vm9047, %v8900, 0
        %v9091 = vsel %vm9047, %v8903, 0
        %v9094 = vsel %vm9047, %v8906, 0
        %9096 = vmatprep.subr.bf16.mxu0 0
        %9097 = vmatpush1.bf16.msra.mxu0 %v9018
        %9098 = vmatprep.subr.bf16.mxu0 0
        %9099 = vmatpush1.bf16.msra.mxu0 %v9017
        %9100 = vmatprep.subr.bf16.mxu0 0
        %9101 = vmatpush1.bf16.msra.mxu0 %v9016
        %9102 = vmatprep.subr.bf16.mxu0 0
        %9103 = vmatpush1.bf16.msra.mxu0 %v9015
        %9104 = vmatprep.subr.bf16.mxu0 0
        %9105 = vmatpush1.bf16.msra.mxu0 %v9014
        %9106 = vmatprep.subr.bf16.mxu0 0
        %9107 = vmatpush1.bf16.msra.mxu0 %v9013
        %9108 = vmatprep.subr.bf16.mxu0 0
        %9109 = vmatpush1.bf16.msra.mxu0 %v9012
        %9110 = vmatprep.subr.bf16.mxu0 0
        %9111 = vmatpush1.bf16.msra.mxu0 %v9011
        %9112 = vmatprep.subr.bf16.mxu0 0
        %9113 = vmatpush2.bf16.msra.mxu0 %v9026
        %9114 = vmatprep.subr.bf16.mxu0 0
        %9115 = vmatpush2.bf16.msra.mxu0 %v9025
        %9116 = vmatprep.subr.bf16.mxu0 0
        %9117 = vmatpush2.bf16.msra.mxu0 %v9024
        %9118 = vmatprep.subr.bf16.mxu0 0
        %9119 = vmatpush2.bf16.msra.mxu0 %v9023
        %9120 = vmatprep.subr.bf16.mxu0 0
        %9121 = vmatpush2.bf16.msra.mxu0 %v9022
        %9122 = vmatprep.subr.bf16.mxu0 0
        %9123 = vmatpush2.bf16.msra.mxu0 %v9021
        %9124 = vmatprep.subr.bf16.mxu0 0
        %9125 = vmatpush2.bf16.msra.mxu0 %v9020
        %9126 = vmatprep.subr.bf16.mxu0 0
        %9127 = vmatpush2.bf16.msra.mxu0 %v9019
        %9128 = vmatprep.mubr.bf16.mxu0 %v8860
        %9129 = vmatmul.mubr.bf16.gmra.mxu0 %v8859
        %v9130 = vpop.f32.mrf.mxu0
        %v9131 = vadd.f32 0.0, %v9130
        %v9132 = vpop.f32.mrf.mxu0
        %v9133 = vpop.f32.mrf.mxu0
        %v9134 = vadd.f32 0.0, %v9133
        %v9135 = vpop.f32.mrf.mxu0
        %9136 = vmatprep.mubr.bf16.mxu0 %v8863
        %9137 = vmatmul.mubr.bf16.gmra.mxu0 %v8862
        %v9138 = vpop.f32.mrf.mxu0
        %v9139 = vadd.f32 0.0, %v9138
        %v9140 = vpop.f32.mrf.mxu0
        %v9141 = vpop.f32.mrf.mxu0
        %v9142 = vadd.f32 0.0, %v9141
        %v9143 = vpop.f32.mrf.mxu0
        %9144 = vmatprep.mubr.bf16.mxu0 %v8866
        %9145 = vmatmul.mubr.bf16.gmra.mxu0 %v8865
        %v9146 = vpop.f32.mrf.mxu0
        %v9147 = vadd.f32 0.0, %v9146
        %v9148 = vpop.f32.mrf.mxu0
        %v9149 = vpop.f32.mrf.mxu0
        %v9150 = vadd.f32 0.0, %v9149
        %v9151 = vpop.f32.mrf.mxu0
        %9152 = vmatprep.mubr.bf16.mxu0 %v8869
        %9153 = vmatmul.mubr.bf16.gmra.mxu0 %v8868
        %v9154 = vpop.f32.mrf.mxu0
        %v9155 = vadd.f32 0.0, %v9154
        %v9156 = vpop.f32.mrf.mxu0
        %v9157 = vpop.f32.mrf.mxu0
        %v9158 = vadd.f32 0.0, %v9157
        %v9159 = vpop.f32.mrf.mxu0
        %9160 = vmatprep.mubr.bf16.mxu0 %v8872
        %9161 = vmatmul.mubr.bf16.gmra.mxu0 %v8871
        %v9162 = vpop.f32.mrf.mxu0
        %v9163 = vadd.f32 0.0, %v9162
        %v9164 = vpop.f32.mrf.mxu0
        %v9165 = vpop.f32.mrf.mxu0
        %v9166 = vadd.f32 0.0, %v9165
        %v9167 = vpop.f32.mrf.mxu0
        %9168 = vmatprep.mubr.bf16.mxu0 %v8875
        %9169 = vmatmul.mubr.bf16.gmra.mxu0 %v8874
        %v9170 = vpop.f32.mrf.mxu0
        %v9171 = vadd.f32 0.0, %v9170
        %v9172 = vpop.f32.mrf.mxu0
        %v9173 = vpop.f32.mrf.mxu0
        %v9174 = vadd.f32 0.0, %v9173
        %v9175 = vpop.f32.mrf.mxu0
        %9176 = vmatprep.mubr.bf16.mxu0 %v8878
        %9177 = vmatmul.mubr.bf16.gmra.mxu0 %v8877
        %v9178 = vpop.f32.mrf.mxu0
        %v9179 = vadd.f32 0.0, %v9178
        %v9180 = vpop.f32.mrf.mxu0
        %v9181 = vpop.f32.mrf.mxu0
        %v9182 = vadd.f32 0.0, %v9181
        %v9183 = vpop.f32.mrf.mxu0
        %9184 = vmatprep.mubr.bf16.mxu0 %v8881
        %9185 = vmatmul.mubr.bf16.gmra.mxu0 %v8880
        %v9186 = vpop.f32.mrf.mxu0
        %v9187 = vadd.f32 0.0, %v9186
        %v9188 = vpop.f32.mrf.mxu0
        %v9189 = vpop.f32.mrf.mxu0
        %v9190 = vadd.f32 0.0, %v9189
        %v9191 = vpop.f32.mrf.mxu0
        %9192 = vmatprep.mubr.bf16.mxu0 %v8884
        %9193 = vmatmul.mubr.bf16.gmra.mxu0 %v8883
        %v9194 = vpop.f32.mrf.mxu0
        %v9195 = vadd.f32 0.0, %v9194
        %v9196 = vpop.f32.mrf.mxu0
        %v9197 = vpop.f32.mrf.mxu0
        %v9198 = vadd.f32 0.0, %v9197
        %v9199 = vpop.f32.mrf.mxu0
        %9200 = vmatprep.mubr.bf16.mxu0 %v8887
        %9201 = vmatmul.mubr.bf16.gmra.mxu0 %v8886
        %v9202 = vpop.f32.mrf.mxu0
        %v9203 = vadd.f32 0.0, %v9202
        %v9204 = vpop.f32.mrf.mxu0
        %v9205 = vpop.f32.mrf.mxu0
        %v9206 = vadd.f32 0.0, %v9205
        %v9207 = vpop.f32.mrf.mxu0
        %9208 = vmatprep.mubr.bf16.mxu0 %v8890
        %9209 = vmatmul.mubr.bf16.gmra.mxu0 %v8889
        %v9210 = vpop.f32.mrf.mxu0
        %v9211 = vadd.f32 0.0, %v9210
        %v9212 = vpop.f32.mrf.mxu0
        %v9213 = vpop.f32.mrf.mxu0
        %v9214 = vadd.f32 0.0, %v9213
        %v9215 = vpop.f32.mrf.mxu0
        %9216 = vmatprep.mubr.bf16.mxu0 %v8893
        %9217 = vmatmul.mubr.bf16.gmra.mxu0 %v8892
        %v9218 = vpop.f32.mrf.mxu0
        %v9219 = vadd.f32 0.0, %v9218
        %v9220 = vpop.f32.mrf.mxu0
        %v9221 = vpop.f32.mrf.mxu0
        %v9222 = vadd.f32 0.0, %v9221
        %v9223 = vpop.f32.mrf.mxu0
        %9224 = vmatprep.mubr.bf16.mxu0 %v8896
        %9225 = vmatmul.mubr.bf16.gmra.mxu0 %v8895
        %v9226 = vpop.f32.mrf.mxu0
        %v9227 = vadd.f32 0.0, %v9226
        %v9228 = vpop.f32.mrf.mxu0
        %v9229 = vpop.f32.mrf.mxu0
        %v9230 = vadd.f32 0.0, %v9229
        %v9231 = vpop.f32.mrf.mxu0
        %9232 = vmatprep.mubr.bf16.mxu0 %v8899
        %9233 = vmatmul.mubr.bf16.gmra.mxu0 %v8898
        %v9234 = vpop.f32.mrf.mxu0
        %v9235 = vadd.f32 0.0, %v9234
        %v9236 = vpop.f32.mrf.mxu0
        %v9237 = vpop.f32.mrf.mxu0
        %v9238 = vadd.f32 0.0, %v9237
        %v9239 = vpop.f32.mrf.mxu0
        %9240 = vmatprep.mubr.bf16.mxu0 %v8902
        %9241 = vmatmul.mubr.bf16.gmra.mxu0 %v8901
        %v9242 = vpop.f32.mrf.mxu0
        %v9243 = vadd.f32 0.0, %v9242
        %v9244 = vpop.f32.mrf.mxu0
        %v9245 = vpop.f32.mrf.mxu0
        %v9246 = vadd.f32 0.0, %v9245
        %v9247 = vpop.f32.mrf.mxu0
        %9248 = vmatprep.mubr.bf16.mxu0 %v8905
        %9249 = vmatmul.mubr.bf16.gmra.mxu0 %v8904
        %v9250 = vpop.f32.mrf.mxu0
        %v9251 = vadd.f32 0.0, %v9250
        %v9252 = vpop.f32.mrf.mxu0
        %v9253 = vpop.f32.mrf.mxu0
        %v9254 = vadd.f32 0.0, %v9253
        %v9255 = vpop.f32.mrf.mxu0
        %9256 = vdwg.mxu0
        %9257 = vmatprep.subr.bf16.mxu0 0
        %9258 = vmatpush1.bf16.msra.mxu0 0
        %9259 = vmatprep.subr.bf16.mxu0 0
        %9260 = vmatpush1.bf16.msra.mxu0 0
        %9261 = vmatprep.subr.bf16.mxu0 0
        %9262 = vmatpush1.bf16.msra.mxu0 0
        %9263 = vmatprep.subr.bf16.mxu0 0
        %9264 = vmatpush1.bf16.msra.mxu0 0
        %9265 = vmatprep.subr.bf16.mxu0 0
        %9266 = vmatpush1.bf16.msra.mxu0 0
        %9267 = vmatprep.subr.bf16.mxu0 0
        %9268 = vmatpush1.bf16.msra.mxu0 0
        %9269 = vmatprep.subr.bf16.mxu0 0
        %9270 = vmatpush1.bf16.msra.mxu0 %v9028
        %9271 = vmatprep.subr.bf16.mxu0 0
        %9272 = vmatpush1.bf16.msra.mxu0 %v9027
        %9273 = vmatprep.subr.bf16.mxu0 0
        %9274 = vmatpush2.bf16.msra.mxu0 0
        %9275 = vmatprep.subr.bf16.mxu0 0
        %9276 = vmatpush2.bf16.msra.mxu0 0
        %9277 = vmatprep.subr.bf16.mxu0 0
        %9278 = vmatpush2.bf16.msra.mxu0 0
        %9279 = vmatprep.subr.bf16.mxu0 0
        %9280 = vmatpush2.bf16.msra.mxu0 0
        %9281 = vmatprep.subr.bf16.mxu0 0
        %9282 = vmatpush2.bf16.msra.mxu0 0
        %9283 = vmatprep.subr.bf16.mxu0 0
        %9284 = vmatpush2.bf16.msra.mxu0 0
        %9285 = vmatprep.subr.bf16.mxu0 0
        %9286 = vmatpush2.bf16.msra.mxu0 0
        %9287 = vmatprep.subr.bf16.mxu0 0
        %9288 = vmatpush2.bf16.msra.mxu0 0
        %9289 = vmatprep.mubr.bf16.mxu0 0
        %9290 = vmatmul.mubr.bf16.gmra.mxu0 %v9049
        %v9291 = vpop.f32.mrf.mxu0
        %v9292 = vadd.f32 %v9131, %v9291
        %v9293 = vpop.f32.mrf.mxu0
        %v9294 = vpop.f32.mrf.mxu0
        %v9295 = vadd.f32 %v9134, %v9294
        %v9296 = vpop.f32.mrf.mxu0
        %9297 = vmatprep.mubr.bf16.mxu0 0
        %9298 = vmatmul.mubr.bf16.gmra.mxu0 %v9052
        %v9299 = vpop.f32.mrf.mxu0
        %v9300 = vadd.f32 %v9139, %v9299
        %v9301 = vpop.f32.mrf.mxu0
        %v9302 = vpop.f32.mrf.mxu0
        %v9303 = vadd.f32 %v9142, %v9302
        %v9304 = vpop.f32.mrf.mxu0
        %9305 = vmatprep.mubr.bf16.mxu0 0
        %9306 = vmatmul.mubr.bf16.gmra.mxu0 %v9055
        %v9307 = vpop.f32.mrf.mxu0
        %v9308 = vadd.f32 %v9147, %v9307
        %v9309 = vpop.f32.mrf.mxu0
        %v9310 = vpop.f32.mrf.mxu0
        %v9311 = vadd.f32 %v9150, %v9310
        %v9312 = vpop.f32.mrf.mxu0
        %9313 = vmatprep.mubr.bf16.mxu0 0
        %9314 = vmatmul.mubr.bf16.gmra.mxu0 %v9058
        %v9315 = vpop.f32.mrf.mxu0
        %v9316 = vadd.f32 %v9155, %v9315
        %v9317 = vpop.f32.mrf.mxu0
        %v9318 = vpop.f32.mrf.mxu0
        %v9319 = vadd.f32 %v9158, %v9318
        %v9320 = vpop.f32.mrf.mxu0
        %9321 = vmatprep.mubr.bf16.mxu0 0
        %9322 = vmatmul.mubr.bf16.gmra.mxu0 %v9061
        %v9323 = vpop.f32.mrf.mxu0
        %v9324 = vadd.f32 %v9163, %v9323
        %v9325 = vpop.f32.mrf.mxu0
        %v9326 = vpop.f32.mrf.mxu0
        %v9327 = vadd.f32 %v9166, %v9326
        %v9328 = vpop.f32.mrf.mxu0
        %9329 = vmatprep.mubr.bf16.mxu0 0
        %9330 = vmatmul.mubr.bf16.gmra.mxu0 %v9064
        %v9331 = vpop.f32.mrf.mxu0
        %v9332 = vadd.f32 %v9171, %v9331
        %v9333 = vpop.f32.mrf.mxu0
        %v9334 = vpop.f32.mrf.mxu0
        %v9335 = vadd.f32 %v9174, %v9334
        %v9336 = vpop.f32.mrf.mxu0
        %9337 = vmatprep.mubr.bf16.mxu0 0
        %9338 = vmatmul.mubr.bf16.gmra.mxu0 %v9067
        %v9339 = vpop.f32.mrf.mxu0
        %v9340 = vadd.f32 %v9179, %v9339
        %v9341 = vpop.f32.mrf.mxu0
        %v9342 = vpop.f32.mrf.mxu0
        %v9343 = vadd.f32 %v9182, %v9342
        %v9344 = vpop.f32.mrf.mxu0
        %9345 = vmatprep.mubr.bf16.mxu0 0
        %9346 = vmatmul.mubr.bf16.gmra.mxu0 %v9070
        %v9347 = vpop.f32.mrf.mxu0
        %v9348 = vadd.f32 %v9187, %v9347
        %v9349 = vpop.f32.mrf.mxu0
        %v9350 = vpop.f32.mrf.mxu0
        %v9351 = vadd.f32 %v9190, %v9350
        %v9352 = vpop.f32.mrf.mxu0
        %9353 = vmatprep.mubr.bf16.mxu0 0
        %9354 = vmatmul.mubr.bf16.gmra.mxu0 %v9073
        %v9355 = vpop.f32.mrf.mxu0
        %v9356 = vadd.f32 %v9195, %v9355
        %v9357 = vpop.f32.mrf.mxu0
        %v9358 = vpop.f32.mrf.mxu0
        %v9359 = vadd.f32 %v9198, %v9358
        %v9360 = vpop.f32.mrf.mxu0
        %9361 = vmatprep.mubr.bf16.mxu0 0
        %9362 = vmatmul.mubr.bf16.gmra.mxu0 %v9076
        %v9363 = vpop.f32.mrf.mxu0
        %v9364 = vadd.f32 %v9203, %v9363
        %v9365 = vpop.f32.mrf.mxu0
        %v9366 = vpop.f32.mrf.mxu0
        %v9367 = vadd.f32 %v9206, %v9366
        %v9368 = vpop.f32.mrf.mxu0
        %9369 = vmatprep.mubr.bf16.mxu0 0
        %9370 = vmatmul.mubr.bf16.gmra.mxu0 %v9079
        %v9371 = vpop.f32.mrf.mxu0
        %v9372 = vadd.f32 %v9211, %v9371
        %v9373 = vpop.f32.mrf.mxu0
        %v9374 = vpop.f32.mrf.mxu0
        %v9375 = vadd.f32 %v9214, %v9374
        %v9376 = vpop.f32.mrf.mxu0
        %9377 = vmatprep.mubr.bf16.mxu0 0
        %9378 = vmatmul.mubr.bf16.gmra.mxu0 %v9082
        %v9379 = vpop.f32.mrf.mxu0
        %v9380 = vadd.f32 %v9219, %v9379
        %v9381 = vpop.f32.mrf.mxu0
        %v9382 = vpop.f32.mrf.mxu0
        %v9383 = vadd.f32 %v9222, %v9382
        %v9384 = vpop.f32.mrf.mxu0
        %9385 = vmatprep.mubr.bf16.mxu0 0
        %9386 = vmatmul.mubr.bf16.gmra.mxu0 %v9085
        %v9387 = vpop.f32.mrf.mxu0
        %v9388 = vadd.f32 %v9227, %v9387
        %v9389 = vpop.f32.mrf.mxu0
        %v9390 = vpop.f32.mrf.mxu0
        %v9391 = vadd.f32 %v9230, %v9390
        %v9392 = vpop.f32.mrf.mxu0
        %9393 = vmatprep.mubr.bf16.mxu0 0
        %9394 = vmatmul.mubr.bf16.gmra.mxu0 %v9088
        %v9395 = vpop.f32.mrf.mxu0
        %v9396 = vadd.f32 %v9235, %v9395
        %v9397 = vpop.f32.mrf.mxu0
        %v9398 = vpop.f32.mrf.mxu0
        %v9399 = vadd.f32 %v9238, %v9398
        %v9400 = vpop.f32.mrf.mxu0
        %9401 = vmatprep.mubr.bf16.mxu0 0
        %9402 = vmatmul.mubr.bf16.gmra.mxu0 %v9091
        %v9403 = vpop.f32.mrf.mxu0
        %v9404 = vadd.f32 %v9243, %v9403
        %v9405 = vpop.f32.mrf.mxu0
        %v9406 = vpop.f32.mrf.mxu0
        %v9407 = vadd.f32 %v9246, %v9406
        %v9408 = vpop.f32.mrf.mxu0
        %9409 = vmatprep.mubr.bf16.mxu0 0
        %9410 = vmatmul.mubr.bf16.gmra.mxu0 %v9094
        %v9411 = vpop.f32.mrf.mxu0
        %v9412 = vadd.f32 %v9251, %v9411
        %v9413 = vpop.f32.mrf.mxu0
        %v9414 = vpop.f32.mrf.mxu0
        %v9415 = vadd.f32 %v9254, %v9414
        %v9416 = vpop.f32.mrf.mxu0
        %9417 = vdwg.mxu0
        %v9418 = vld [vmem:[%s4] sm:$0x1]
        %v9420 = vlaneseq
        %v9421 = vshrl.u32 %v9420, 7
        %v9422 = vsub.s32 0, %v9421
        %v9423 = vrot.slane %v9418, %v9422
        %v9425 = vadd.f32 %v9292, %v9423
        %v9426 = vadd.f32 %v9295, %v9423
        %v9427 = vadd.f32 %v9300, %v9423
        %v9428 = vadd.f32 %v9303, %v9423
        %v9429 = vadd.f32 %v9308, %v9423
        %v9430 = vadd.f32 %v9311, %v9423
        %v9431 = vadd.f32 %v9316, %v9423
        %v9432 = vadd.f32 %v9319, %v9423
        %v9433 = vadd.f32 %v9324, %v9423
        %v9434 = vadd.f32 %v9327, %v9423
        %v9435 = vadd.f32 %v9332, %v9423
        %v9436 = vadd.f32 %v9335, %v9423
        %v9437 = vadd.f32 %v9340, %v9423
        %v9438 = vadd.f32 %v9343, %v9423
        %v9439 = vadd.f32 %v9348, %v9423
        %v9440 = vadd.f32 %v9351, %v9423
        %v9441 = vadd.f32 %v9356, %v9423
        %v9442 = vadd.f32 %v9359, %v9423
        %v9443 = vadd.f32 %v9364, %v9423
        %v9444 = vadd.f32 %v9367, %v9423
        %v9445 = vadd.f32 %v9372, %v9423
        %v9446 = vadd.f32 %v9375, %v9423
        %v9447 = vadd.f32 %v9380, %v9423
        %v9448 = vadd.f32 %v9383, %v9423
        %v9449 = vadd.f32 %v9388, %v9423
        %v9450 = vadd.f32 %v9391, %v9423
        %v9451 = vadd.f32 %v9396, %v9423
        %v9452 = vadd.f32 %v9399, %v9423
        %v9453 = vadd.f32 %v9404, %v9423
        %v9454 = vadd.f32 %v9407, %v9423
        %v9455 = vadd.f32 %v9412, %v9423
        %v9456 = vadd.f32 %v9415, %v9423
        %9457 = vxpose.xlu0.b32.start [1/16] %v9425, 128
        %9458 = vxpose.xlu0.b32.cont [2/16] %v9426, 128
        %9459 = vxpose.xlu0.b32.cont [3/16] %v9427, 128
        %9460 = vxpose.xlu0.b32.cont [4/16] %v9428, 128
        %9461 = vxpose.xlu0.b32.cont [5/16] %v9429, 128
        %9462 = vxpose.xlu0.b32.cont [6/16] %v9430, 128
        %9463 = vxpose.xlu0.b32.cont [7/16] %v9431, 128
        %9464 = vxpose.xlu0.b32.cont [8/16] %v9432, 128
        %9465 = vxpose.xlu0.b32.cont [9/16] %v9433, 128
        %9466 = vxpose.xlu0.b32.cont [10/16] %v9434, 128
        %9467 = vxpose.xlu0.b32.cont [11/16] %v9435, 128
        %9468 = vxpose.xlu0.b32.cont [12/16] %v9436, 128
        %9469 = vxpose.xlu0.b32.cont [13/16] %v9437, 128
        %9470 = vxpose.xlu0.b32.cont [14/16] %v9438, 128
        %9471 = vxpose.xlu0.b32.cont [15/16] %v9439, 128
        %9472 = vxpose.xlu0.b32.end [16/16] %v9440, 128
        %v9473 = vpop.trf.xlu0
        %v9474 = vpop.trf.xlu0
        %v9475 = vpop.trf.xlu0
        %v9476 = vpop.trf.xlu0
        %v9477 = vpop.trf.xlu0
        %v9478 = vpop.trf.xlu0
        %v9479 = vpop.trf.xlu0
        %v9480 = vpop.trf.xlu0
        %v9481 = vpop.trf.xlu0
        %v9482 = vpop.trf.xlu0
        %v9483 = vpop.trf.xlu0
        %v9484 = vpop.trf.xlu0
        %v9485 = vpop.trf.xlu0
        %v9486 = vpop.trf.xlu0
        %v9487 = vpop.trf.xlu0
        %v9488 = vpop.trf.xlu0
        %9489 = vxpose.xlu0.b32.start [1/16] %v9441, 128
        %9490 = vxpose.xlu0.b32.cont [2/16] %v9442, 128
        %9491 = vxpose.xlu0.b32.cont [3/16] %v9443, 128
        %9492 = vxpose.xlu0.b32.cont [4/16] %v9444, 128
        %9493 = vxpose.xlu0.b32.cont [5/16] %v9445, 128
        %9494 = vxpose.xlu0.b32.cont [6/16] %v9446, 128
        %9495 = vxpose.xlu0.b32.cont [7/16] %v9447, 128
        %9496 = vxpose.xlu0.b32.cont [8/16] %v9448, 128
        %9497 = vxpose.xlu0.b32.cont [9/16] %v9449, 128
        %9498 = vxpose.xlu0.b32.cont [10/16] %v9450, 128
        %9499 = vxpose.xlu0.b32.cont [11/16] %v9451, 128
        %9500 = vxpose.xlu0.b32.cont [12/16] %v9452, 128
        %9501 = vxpose.xlu0.b32.cont [13/16] %v9453, 128
        %9502 = vxpose.xlu0.b32.cont [14/16] %v9454, 128
        %9503 = vxpose.xlu0.b32.cont [15/16] %v9455, 128
        %9504 = vxpose.xlu0.b32.end [16/16] %v9456, 128
        %v9505 = vpop.trf.xlu0
        %v9506 = vpop.trf.xlu0
        %v9507 = vpop.trf.xlu0
        %v9508 = vpop.trf.xlu0
        %v9509 = vpop.trf.xlu0
        %v9510 = vpop.trf.xlu0
        %v9511 = vpop.trf.xlu0
        %v9512 = vpop.trf.xlu0
        %v9513 = vpop.trf.xlu0
        %v9514 = vpop.trf.xlu0
        %v9515 = vpop.trf.xlu0
        %v9516 = vpop.trf.xlu0
        %v9517 = vpop.trf.xlu0
        %v9518 = vpop.trf.xlu0
        %v9519 = vpop.trf.xlu0
        %v9520 = vpop.trf.xlu0
        %v9523 = vcombine.low %v9473, %v9505
        %9525 = vst [vmem:[%s259] sm:$0x77] %v9523
        %p9526 = scmp.lt.s32.totalorder %s20, 1
        %s9527 = scalar_select %p9526, %s20, 1
        %s9528 = smul.addr %s9527, 2
        %s9529 = smul.addr %s9528, 4
        %s9530 = scalar_lea.vmem %s5, %s9529
        // Predicated region
        $region49: #{tpu_custom_call.1} parent=39 // pred_check
          %p9531 = pneg %p148
        $region50: #{tpu_custom_call.1} parent=39 // pred_check_branch
          %9533 = sbr.rel (%p9531) target = $region52
        $region51: #{tpu_custom_call.1} parent=39 // pred_region
          _
        $region52: #{tpu_custom_call.1} parent=39 // pred_fallthru
          _
      $region40: #{tpu_custom_call.1} parent=5 // pred_fallthru
        _
      %p9534 = scmp.le.s32.totalorder 2, %s15
      // Predicated region
      $region53: #{tpu_custom_call.1} parent=5 // pred_check
        %p9535 = pneg %p9534
      $region54: #{tpu_custom_call.1} parent=5 // pred_check_branch
        %9537 = sbr.rel (%p9535) target = $region56
      $region55: #{tpu_custom_call.1} parent=5 // pred_region
        %s9538 = ssub.s32 %s15, 2
        // Predicated region
        $region57: #{tpu_custom_call.1} parent=55 // pred_check
          %p9539 = pneg %p154
        $region58: #{tpu_custom_call.1} parent=55 // pred_check_branch
          %9541 = sbr.rel (%p9539) target = $region60
        $region59: #{tpu_custom_call.1} parent=55 // pred_region
          %p9542 = scmp.lt.s32.totalorder %s21, 1
          %s9543 = scalar_select %p9542, %s21, 1
          %s9544 = smul.addr %s9543, 2
          %s9545 = smul.addr %s9544, 4
          %s9546 = scalar_lea.vmem %s5, %s9545
        $region60: #{tpu_custom_call.1} parent=55 // pred_fallthru
          _
      $region56: #{tpu_custom_call.1} parent=5 // pred_fallthru
        _
    $region6: #{tpu_custom_call.1} parent=1 // loop_footer
      %s19 = sadd.s32 1, %s15
    $region7: #{tpu_custom_call.1} parent=1 // loop_footer_branch
      %14 = sbr.rel target = $region3
    $region8: #{tpu_custom_call.1} parent=1 // loop_exit
      _
    %9547 = vsyncpa [#allocation7], 1
    %s9548 = scalar_lea.sflag [#allocation7], 1
    %9549 = vsyncpa %s9548, 1
    %9550 = vsyncpa [#allocation9], 1

</llo_original>
